<compile_context>
chip_gen: v7x
topology: tpu7x:2x2x1
jax: 0.10.0
libtpu: 0.0.40
codegen_flags: <defaults>
</compile_context>

<pallas_src>
import functools

import jax
import jax.numpy as jnp
from jax import lax
from jax.experimental import pallas as pl
from jax.experimental.pallas import tpu as pltpu

N_FILTERS = 1024
LSTM_SIZE = 256
LANE = 128
EB = 8  # environments per grid block == sublane count


def _round_up(n, m):
    return ((n + m - 1) // m) * m


# ----------------------------------------------------------------------------
# Kernel
# ----------------------------------------------------------------------------
def _actor_critic_kernel(
    # inputs
    x_ref, h0_ref, c0_ref,
    w1_ref, b1_ref,
    w2_ref, b2_ref,
    wih_ref, whh_ref, blstm_ref,
    wh1_ref, bh1_ref,
    wh2_ref, bh2_ref,
    # outputs
    out_ref, h_out_ref, c_out_ref,
    # scratch
    gx_ref, h_all_ref,
    *, out_dim, seq_len,
):
    f32 = jnp.float32
    bf16 = jnp.bfloat16

    # ---- Batched feed-forward trunk over all T*EB rows (bf16 MXU, f32 acc) ----
    x = x_ref[...].astype(bf16)                                  # (T*EB, in_dim)
    lin1 = jnp.maximum(
        jnp.dot(x, w1_ref[...], preferred_element_type=f32)
        + b1_ref[...], 0.0)                                      # (T*EB, 1024) f32
    lin2 = jnp.maximum(
        jnp.dot(lin1.astype(bf16), w2_ref[...], preferred_element_type=f32)
        + b2_ref[...], 0.0)                                      # (T*EB, 256) f32

    # Input half of the LSTM gates for every step at once (cuDNN-style fusion):
    # gx[t, e] = lin2[t, e] @ W_ih + (b_ih + b_hh)
    gx_ref[...] = (
        jnp.dot(lin2.astype(bf16), wih_ref[...], preferred_element_type=f32)
        + blstm_ref[...])                                        # (T*EB, 1024) f32

    whh = whh_ref[...]  # bf16, native MXU operand (no f32 copy held in VMEM)

    # ---- Sequential LSTM recurrence (PyTorch gate order: i, f, g, o) ----
    def step(t, carry):
        h, c = carry                                             # (EB, 256) f32
        off = pl.multiple_of(t * EB, EB)
        gates = gx_ref[pl.ds(off, EB), :] + jnp.dot(
            h.astype(bf16), whh, preferred_element_type=f32)     # (EB, 1024) f32
        i_g = jax.nn.sigmoid(gates[:, 0 * LSTM_SIZE:1 * LSTM_SIZE])
        f_g = jax.nn.sigmoid(gates[:, 1 * LSTM_SIZE:2 * LSTM_SIZE])
        g_g = jnp.tanh(gates[:, 2 * LSTM_SIZE:3 * LSTM_SIZE])
        o_g = jax.nn.sigmoid(gates[:, 3 * LSTM_SIZE:4 * LSTM_SIZE])
        c_new = f_g * c + i_g * g_g
        h_new = o_g * jnp.tanh(c_new)
        h_all_ref[pl.ds(off, EB), :] = h_new
        return h_new, c_new

    h_fin, c_fin = lax.fori_loop(
        0, seq_len, step, (h0_ref[...], c0_ref[...]),
        unroll=min(seq_len, 8))
    h_out_ref[...] = h_fin
    c_out_ref[...] = c_fin

    # ---- Fused critic + actor heads, batched over all T*EB rows ----
    h_all = h_all_ref[...].astype(bf16)                          # (T*EB, 256)
    hd1 = jnp.maximum(
        jnp.dot(h_all, wh1_ref[...], preferred_element_type=f32)
        + bh1_ref[...], 0.0)                                     # (T*EB, 512) = [critic | actor]
    pre = (jnp.dot(hd1.astype(bf16), wh2_ref[...], preferred_element_type=f32)
           + bh2_ref[...])                                       # (T*EB, out_pad) lane-dense
    # pre[:, 0] = value, pre[:, 1:1+out_dim] = actor logits, rest = padding.

    lane = lax.broadcasted_iota(jnp.int32, pre.shape, 1)
    is_val = lane == 0
    is_logit = jnp.logical_and(lane >= 1, lane < 1 + out_dim)
    logits = jnp.where(is_logit, pre, jnp.float32(-1e30))
    z = logits - jnp.max(logits, axis=-1, keepdims=True)
    e = jnp.exp(z)                                               # 0 on padded lanes
    probs = e / jnp.sum(e, axis=-1, keepdims=True)               # exact normalization
    out_ref[...] = jnp.where(is_val, pre, probs)


# ----------------------------------------------------------------------------
# Parameters
# ----------------------------------------------------------------------------
def _init_linear(key, fan_in, fan_out):
    """nn.Linear-style init; weight already transposed to (fan_in, fan_out)."""
    k_w, k_b = jax.random.split(key)
    bound = float(fan_in) ** -0.5
    w = jax.random.uniform(k_w, (fan_in, fan_out), jnp.float32, -bound, bound)
    b = jax.random.uniform(k_b, (1, fan_out), jnp.float32, -bound, bound)
    return w, b


def make_actor_critic_params(in_dim, out_dim, seed=0):
    """Raw (un-fused, f32) parameters matching the PyTorch module layers."""
    key = jax.random.PRNGKey(seed)
    ks = jax.random.split(key, 7)
    w1, b1 = _init_linear(ks[0], in_dim, N_FILTERS)
    w2, b2 = _init_linear(ks[1], N_FILTERS, LSTM_SIZE)
    bound = float(LSTM_SIZE) ** -0.5
    k_ih, k_hh, k_bih, k_bhh = jax.random.split(ks[2], 4)
    wih = jax.random.uniform(k_ih, (LSTM_SIZE, 4 * LSTM_SIZE), jnp.float32, -bound, bound)
    whh = jax.random.uniform(k_hh, (LSTM_SIZE, 4 * LSTM_SIZE), jnp.float32, -bound, bound)
    bih = jax.random.uniform(k_bih, (1, 4 * LSTM_SIZE), jnp.float32, -bound, bound)
    bhh = jax.random.uniform(k_bhh, (1, 4 * LSTM_SIZE), jnp.float32, -bound, bound)
    wc1, bc1 = _init_linear(ks[3], LSTM_SIZE, LSTM_SIZE)
    wc2, bc2 = _init_linear(ks[4], LSTM_SIZE, 1)
    wa1, ba1 = _init_linear(ks[5], LSTM_SIZE, LSTM_SIZE)
    wa2, ba2 = _init_linear(ks[6], LSTM_SIZE, out_dim)
    return dict(w1=w1, b1=b1, w2=w2, b2=b2,
                wih=wih, whh=whh, bih=bih, bhh=bhh,
                wc1=wc1, bc1=bc1, wc2=wc2, bc2=bc2,
                wa1=wa1, ba1=ba1, wa2=wa2, ba2=ba2)


def pack_params_for_kernel(p, out_dim):
    """Fuse + cast params for the kernel: bf16 weights, fused LSTM bias, fused heads."""
    assert out_dim >= 1, "out_dim must be >= 1"
    bf16 = jnp.bfloat16
    out_pad = max(LANE, _round_up(1 + out_dim, LANE))

    # Fused head layer 1: [critic_1 | actor_1]  -> (256, 512)
    wh1 = jnp.concatenate([p["wc1"], p["wa1"]], axis=1)
    bh1 = jnp.concatenate([p["bc1"], p["ba1"]], axis=1)

    # Fused head layer 2: block-diagonal (512, out_pad); lane 0 = value,
    # lanes 1..out_dim = actor logits, remaining lanes zero padding.
    wh2 = jnp.zeros((2 * LSTM_SIZE, out_pad), jnp.float32)
    wh2 = wh2.at[:LSTM_SIZE, 0:1].set(p["wc2"])
    wh2 = wh2.at[LSTM_SIZE:, 1:1 + out_dim].set(p["wa2"])
    bh2 = jnp.zeros((1, out_pad), jnp.float32)
    bh2 = bh2.at[:, 0:1].set(p["bc2"])
    bh2 = bh2.at[:, 1:1 + out_dim].set(p["ba2"])

    return dict(
        w1=p["w1"].astype(bf16), b1=p["b1"],
        w2=p["w2"].astype(bf16), b2=p["b2"],
        wih=p["wih"].astype(bf16), whh=p["whh"].astype(bf16),
        blstm=p["bih"] + p["bhh"],
        wh1=wh1.astype(bf16), bh1=bh1,
        wh2=wh2.astype(bf16), bh2=bh2,
        out_pad=out_pad,
    )


# ----------------------------------------------------------------------------
# Wrappers
# ----------------------------------------------------------------------------
def _as_state(s, batch):
    s = jnp.asarray(s, jnp.float32).reshape(-1, LSTM_SIZE)
    if s.shape[0] == 1 and batch > 1:
        s = jnp.broadcast_to(s, (batch, LSTM_SIZE))
    return s


def actor_critic_rollout(packed, xs, hidden_state, cell_state, out_dim):
    """Run T timesteps x B independent environments inside ONE pallas_call.

    xs: (T, B, in_dim); hidden/cell: (B, 256) (or (1,*,256), broadcast for B>1).
    Returns (values (T, B), policies (T, B, out_dim), (h_n, c_n) each (1, B, 256)).
    """
    f32 = jnp.float32
    T, B, in_dim = xs.shape
    out_pad = packed["out_pad"]

    B_pad = _round_up(B, EB)
    nb = B_pad // EB
    pad_b = B_pad - B

    h0 = jnp.pad(_as_state(hidden_state, B), ((0, pad_b), (0, 0)))
    c0 = jnp.pad(_as_state(cell_state, B), ((0, pad_b), (0, 0)))
    xs_p = jnp.pad(xs.astype(f32), ((0, 0), (0, pad_b), (0, 0)))

    # Host-side layout: per env-block, rows are time-major (row = t*EB + e) so
    # the kernel needs no reshapes and recurrence accesses are full (8,N) tiles.
    x_flat = (xs_p.reshape(T, nb, EB, in_dim)
              .transpose(1, 0, 2, 3)
              .reshape(nb, T * EB, in_dim))

    kernel = functools.partial(_actor_critic_kernel, out_dim=out_dim, seq_len=T)

    out_shapes = (
        jax.ShapeDtypeStruct((nb, T * EB, out_pad), f32),   # lane-dense [value|policy|pad]
        jax.ShapeDtypeStruct((B_pad, LSTM_SIZE), f32),      # h_n
        jax.ShapeDtypeStruct((B_pad, LSTM_SIZE), f32),      # c_n
    )

    def _full(arr):  # whole-array block, constant index -> DMA'd once
        return pl.BlockSpec(arr.shape, lambda b: (0, 0))

    weight_keys = ("w1", "b1", "w2", "b2", "wih", "whh", "blstm",
                   "wh1", "bh1", "wh2", "bh2")

    grid_spec = pltpu.PrefetchScalarGridSpec(
        num_scalar_prefetch=0,
        grid=(nb,),
        in_specs=[
            pl.BlockSpec((None, T * EB, in_dim), lambda b: (b, 0, 0)),
            pl.BlockSpec((EB, LSTM_SIZE), lambda b: (b, 0)),
            pl.BlockSpec((EB, LSTM_SIZE), lambda b: (b, 0)),
        ] + [_full(packed[k]) for k in weight_keys],
        out_specs=[
            pl.BlockSpec((None, T * EB, out_pad), lambda b: (b, 0, 0)),
            pl.BlockSpec((EB, LSTM_SIZE), lambda b: (b, 0)),
            pl.BlockSpec((EB, LSTM_SIZE), lambda b: (b, 0)),
        ],
        scratch_shapes=[
            pltpu.VMEM((T * EB, 4 * LSTM_SIZE), f32),   # gx (input half of gates)
            pltpu.VMEM((T * EB, LSTM_SIZE), f32),       # h_all
        ],
    )

    out, h_out, c_out = pl.pallas_call(
        kernel,
        out_shape=out_shapes,
        grid_spec=grid_spec,
        compiler_params=pltpu.CompilerParams(
            dimension_semantics=("parallel",),          # megacore sharding on v7x
            vmem_limit_bytes=48 << 20),
    )(
        x_flat, h0, c0,
        *[packed[k] for k in weight_keys],
    )

    out = (out.reshape(nb, T, EB, out_pad)
           .transpose(1, 0, 2, 3)
           .reshape(T, B_pad, out_pad))[:, :B]
    values = out[..., 0]                                 # (T, B)
    policies = out[..., 1:1 + out_dim]                   # (T, B, out_dim)
    h_n = h_out[:B].reshape(1, B, LSTM_SIZE)
    c_n = c_out[:B].reshape(1, B, LSTM_SIZE)
    return values, policies, (h_n, c_n)


def actor_critic_forward(packed, x, hidden_state, cell_state, out_dim):
    """Single-step, single-env forward with PyTorch-equivalent output shapes:
    value (1,), policy_dist (out_dim,), (h_n, c_n) each (1, 1, 256)."""
    values, policies, (h_n, c_n) = actor_critic_rollout(
        packed, jnp.asarray(x, jnp.float32).reshape(1, 1, -1),
        hidden_state, cell_state, out_dim)
    return values.reshape(1), policies.reshape(out_dim), (h_n, c_n)


# ----------------------------------------------------------------------------
# Pure-JAX reference (mirrors the PyTorch forward + the kernel's bf16 rounding)
# ----------------------------------------------------------------------------
def reference_rollout(raw, xs, hidden_state, cell_state, out_dim):
    f32, bf16 = jnp.float32, jnp.bfloat16

    def bdot(a, b):  # bf16 x bf16 matmul with f32 accumulation, like the kernel
        return jnp.dot(a.astype(bf16), b.astype(bf16), preferred_element_type=f32)

    T, B, _ = xs.shape
    h = _as_state(hidden_state, B)
    c = _as_state(cell_state, B)
    values, policies = [], []
    for t in range(T):
        x = xs[t].astype(f32)
        l1 = jax.nn.relu(bdot(x, raw["w1"]) + raw["b1"])
        l2 = jax.nn.relu(bdot(l1, raw["w2"]) + raw["b2"])
        gates = bdot(l2, raw["wih"]) + raw["bih"] + bdot(h, raw["whh"]) + raw["bhh"]
        i_g = jax.nn.sigmoid(gates[:, 0 * LSTM_SIZE:1 * LSTM_SIZE])
        f_g = jax.nn.sigmoid(gates[:, 1 * LSTM_SIZE:2 * LSTM_SIZE])
        g_g = jnp.tanh(gates[:, 2 * LSTM_SIZE:3 * LSTM_SIZE])
        o_g = jax.nn.sigmoid(gates[:, 3 * LSTM_SIZE:4 * LSTM_SIZE])
        c = f_g * c + i_g * g_g
        h = o_g * jnp.tanh(c)
        cr = jax.nn.relu(bdot(h, raw["wc1"]) + raw["bc1"])
        value = bdot(cr, raw["wc2"]) + raw["bc2"]
        ac = jax.nn.relu(bdot(h, raw["wa1"]) + raw["ba1"])
        logits = bdot(ac, raw["wa2"]) + raw["ba2"]
        values.append(value[:, 0])
        policies.append(jax.nn.softmax(logits, axis=-1))
    return (jnp.stack(values), jnp.stack(policies),
            (h.reshape(1, B, LSTM_SIZE), c.reshape(1, B, LSTM_SIZE)))


# ----------------------------------------------------------------------------
if __name__ == "__main__":
    in_dim, out_dim, T, B = 32, 8, 8, 16
    key = jax.random.PRNGKey(0)
    xs = jax.random.normal(key, (T, B, in_dim), jnp.float32)
    h0 = jnp.zeros((B, LSTM_SIZE), jnp.float32)   # init_hidden_states (batched)
    c0 = jnp.zeros((B, LSTM_SIZE), jnp.float32)

    raw = make_actor_critic_params(in_dim, out_dim, seed=0)
    packed = pack_params_for_kernel(raw, out_dim)

    # Multi-step, multi-env rollout: amortizes weight DMA and fills MXU rows.
    values, policies, (h_n, c_n) = actor_critic_rollout(packed, xs, h0, c0, out_dim)
    jax.block_until_ready((values, policies, h_n, c_n))

    assert values.shape == (T, B)
    assert policies.shape == (T, B, out_dim)
    assert h_n.shape == (1, B, LSTM_SIZE) and c_n.shape == (1, B, LSTM_SIZE)
    assert bool(jnp.all(jnp.abs(jnp.sum(policies, axis=-1) - 1.0) < 1e-3))

    # Cross-check against a pure-JAX reference of the original forward semantics.
    rv, rp, (rh, rc) = reference_rollout(raw, xs, h0, c0, out_dim)
    assert bool(jnp.allclose(values, rv, rtol=2e-2, atol=2e-2))
    assert bool(jnp.allclose(policies, rp, rtol=2e-2, atol=2e-2))
    assert bool(jnp.allclose(h_n, rh, rtol=2e-2, atol=2e-2))
    assert bool(jnp.allclose(c_n, rc, rtol=2e-2, atol=2e-2))

    # Single-step call matching the original PyTorch forward() shapes.
    h1 = jnp.zeros((1, 1, LSTM_SIZE), jnp.float32)
    c1 = jnp.zeros((1, 1, LSTM_SIZE), jnp.float32)
    v1, p1, (hn1, cn1) = actor_critic_forward(packed, xs[0, 0], h1, c1, out_dim)
    jax.block_until_ready((v1, p1, hn1, cn1))
    assert v1.shape == (1,) and p1.shape == (out_dim,)
    assert hn1.shape == (1, 1, LSTM_SIZE) and cn1.shape == (1, 1, LSTM_SIZE)
    assert bool(jnp.allclose(v1[0], values[0, 0], rtol=2e-2, atol=2e-2))
    assert bool(jnp.allclose(p1, policies[0, 0], rtol=2e-2, atol=2e-2))

    print("KERNEL_OK")
</pallas_src>

<mosaic_0001>
module attributes {stable_mosaic.version = 11 : i64} {
  func.func @_actor_critic_kernel(%arg0: i32, %arg1: memref<1x64x32xf32, #tpu.memory_space<vmem>>, %arg2: memref<8x256xf32, #tpu.memory_space<vmem>>, %arg3: memref<8x256xf32, #tpu.memory_space<vmem>>, %arg4: memref<32x1024xbf16, #tpu.memory_space<vmem>>, %arg5: memref<1x1024xf32, #tpu.memory_space<vmem>>, %arg6: memref<1024x256xbf16, #tpu.memory_space<vmem>>, %arg7: memref<1x256xf32, #tpu.memory_space<vmem>>, %arg8: memref<256x1024xbf16, #tpu.memory_space<vmem>>, %arg9: memref<256x1024xbf16, #tpu.memory_space<vmem>>, %arg10: memref<1x1024xf32, #tpu.memory_space<vmem>>, %arg11: memref<256x512xbf16, #tpu.memory_space<vmem>>, %arg12: memref<1x512xf32, #tpu.memory_space<vmem>>, %arg13: memref<512x128xbf16, #tpu.memory_space<vmem>>, %arg14: memref<1x128xf32, #tpu.memory_space<vmem>>, %arg15: memref<1x64x128xf32, #tpu.memory_space<vmem>>, %arg16: memref<8x256xf32, #tpu.memory_space<vmem>>, %arg17: memref<8x256xf32, #tpu.memory_space<vmem>>, %arg18: memref<64x1024xf32, #tpu.memory_space<vmem>>, %arg19: memref<64x256xf32, #tpu.memory_space<vmem>>) attributes {dimension_semantics = [#tpu.dimension_semantics<parallel>], iteration_bounds = array<i64: 2>, scalar_prefetch = 0 : i64, scratch_operands = 2 : i64, tpu.core_type = #tpu.core_type<tc>, window_params = [{transform_indices = @transform_0, window_bounds = array<i64: 1, 64, 32>}, {transform_indices = @transform_1, window_bounds = array<i64: 8, 256>}, {transform_indices = @transform_2, window_bounds = array<i64: 8, 256>}, {pipeline_mode = #tpu.pipeline_mode<synchronous>, transform_indices = @transform_3, window_bounds = array<i64: 32, 1024>}, {pipeline_mode = #tpu.pipeline_mode<synchronous>, transform_indices = @transform_4, window_bounds = array<i64: 1, 1024>}, {pipeline_mode = #tpu.pipeline_mode<synchronous>, transform_indices = @transform_5, window_bounds = array<i64: 1024, 256>}, {pipeline_mode = #tpu.pipeline_mode<synchronous>, transform_indices = @transform_6, window_bounds = array<i64: 1, 256>}, {pipeline_mode = #tpu.pipeline_mode<synchronous>, transform_indices = @transform_7, window_bounds = array<i64: 256, 1024>}, {pipeline_mode = #tpu.pipeline_mode<synchronous>, transform_indices = @transform_8, window_bounds = array<i64: 256, 1024>}, {pipeline_mode = #tpu.pipeline_mode<synchronous>, transform_indices = @transform_9, window_bounds = array<i64: 1, 1024>}, {pipeline_mode = #tpu.pipeline_mode<synchronous>, transform_indices = @transform_10, window_bounds = array<i64: 256, 512>}, {pipeline_mode = #tpu.pipeline_mode<synchronous>, transform_indices = @transform_11, window_bounds = array<i64: 1, 512>}, {pipeline_mode = #tpu.pipeline_mode<synchronous>, transform_indices = @transform_12, window_bounds = array<i64: 512, 128>}, {pipeline_mode = #tpu.pipeline_mode<synchronous>, transform_indices = @transform_13, window_bounds = array<i64: 1, 128>}, {transform_indices = @transform_14, window_bounds = array<i64: 1, 64, 128>}, {transform_indices = @transform_15, window_bounds = array<i64: 8, 256>}, {transform_indices = @transform_16, window_bounds = array<i64: 8, 256>}]} {
    %c0 = arith.constant 0 : index
    %c0_0 = arith.constant 0 : index
    %c0_1 = arith.constant 0 : index
    %0 = vector.load %arg1[%c0, %c0_0, %c0_1] : memref<1x64x32xf32, #tpu.memory_space<vmem>>, vector<1x64x32xf32>
    %1 = vector.shape_cast %0 : vector<1x64x32xf32> to vector<64x32xf32>
    %2 = arith.truncf %1 : vector<64x32xf32> to vector<64x32xbf16>
    %c0_2 = arith.constant 0 : index
    %c0_3 = arith.constant 0 : index
    %3 = vector.load %arg4[%c0_2, %c0_3] : memref<32x1024xbf16, #tpu.memory_space<vmem>>, vector<32x1024xbf16>
    %cst = arith.constant dense<0.000000e+00> : vector<64x1024xf32>
    %4 = tpu.matmul %2, %3, %cst {dimension_numbers = #tpu.dot_dimension_numbers<[1], [0], [0], [1], [0, 0, 1, 1], [], []>} : vector<64x32xbf16>, vector<32x1024xbf16>, vector<64x1024xf32> -> vector<64x1024xf32>
    %c0_4 = arith.constant 0 : index
    %c0_5 = arith.constant 0 : index
    %5 = vector.load %arg5[%c0_4, %c0_5] : memref<1x1024xf32, #tpu.memory_space<vmem>>, vector<1x1024xf32>
    %6 = vector.broadcast %5 : vector<1x1024xf32> to vector<64x1024xf32>
    %7 = arith.addf %4, %6 : vector<64x1024xf32>
    %cst_6 = arith.constant 0.000000e+00 : f32
    %8 = vector.broadcast %cst_6 : f32 to vector<64x1024xf32>
    %9 = arith.maximumf %7, %8 : vector<64x1024xf32>
    %10 = arith.truncf %9 : vector<64x1024xf32> to vector<64x1024xbf16>
    %c0_7 = arith.constant 0 : index
    %c0_8 = arith.constant 0 : index
    %11 = vector.load %arg6[%c0_7, %c0_8] : memref<1024x256xbf16, #tpu.memory_space<vmem>>, vector<1024x256xbf16>
    %cst_9 = arith.constant dense<0.000000e+00> : vector<64x256xf32>
    %12 = tpu.matmul %10, %11, %cst_9 {dimension_numbers = #tpu.dot_dimension_numbers<[1], [0], [0], [1], [0, 0, 1, 1], [], []>} : vector<64x1024xbf16>, vector<1024x256xbf16>, vector<64x256xf32> -> vector<64x256xf32>
    %c0_10 = arith.constant 0 : index
    %c0_11 = arith.constant 0 : index
    %13 = vector.load %arg7[%c0_10, %c0_11] : memref<1x256xf32, #tpu.memory_space<vmem>>, vector<1x256xf32>
    %14 = vector.broadcast %13 : vector<1x256xf32> to vector<64x256xf32>
    %15 = arith.addf %12, %14 : vector<64x256xf32>
    %cst_12 = arith.constant 0.000000e+00 : f32
    %16 = vector.broadcast %cst_12 : f32 to vector<64x256xf32>
    %17 = arith.maximumf %15, %16 : vector<64x256xf32>
    %18 = arith.truncf %17 : vector<64x256xf32> to vector<64x256xbf16>
    %c0_13 = arith.constant 0 : index
    %c0_14 = arith.constant 0 : index
    %19 = vector.load %arg8[%c0_13, %c0_14] : memref<256x1024xbf16, #tpu.memory_space<vmem>>, vector<256x1024xbf16>
    %cst_15 = arith.constant dense<0.000000e+00> : vector<64x1024xf32>
    %20 = tpu.matmul %18, %19, %cst_15 {dimension_numbers = #tpu.dot_dimension_numbers<[1], [0], [0], [1], [0, 0, 1, 1], [], []>} : vector<64x256xbf16>, vector<256x1024xbf16>, vector<64x1024xf32> -> vector<64x1024xf32>
    %c0_16 = arith.constant 0 : index
    %c0_17 = arith.constant 0 : index
    %21 = vector.load %arg10[%c0_16, %c0_17] : memref<1x1024xf32, #tpu.memory_space<vmem>>, vector<1x1024xf32>
    %22 = vector.broadcast %21 : vector<1x1024xf32> to vector<64x1024xf32>
    %23 = arith.addf %20, %22 : vector<64x1024xf32>
    %c0_18 = arith.constant 0 : index
    %c0_19 = arith.constant 0 : index
    %24 = vector.load %arg18[%c0_18, %c0_19] : memref<64x1024xf32, #tpu.memory_space<vmem>>, vector<64x1024xf32>
    tpu.vector_store %arg18[%c0_18, %c0_19], %23 {strides = array<i32>} : memref<64x1024xf32, #tpu.memory_space<vmem>>, vector<64x1024xf32>,
    %c0_20 = arith.constant 0 : index
    %c0_21 = arith.constant 0 : index
    %25 = vector.load %arg9[%c0_20, %c0_21] : memref<256x1024xbf16, #tpu.memory_space<vmem>>, vector<256x1024xbf16>
    %c0_22 = arith.constant 0 : index
    %c0_23 = arith.constant 0 : index
    %26 = vector.load %arg2[%c0_22, %c0_23] : memref<8x256xf32, #tpu.memory_space<vmem>>, vector<8x256xf32>
    %c0_24 = arith.constant 0 : index
    %c0_25 = arith.constant 0 : index
    %27 = vector.load %arg3[%c0_24, %c0_25] : memref<8x256xf32, #tpu.memory_space<vmem>>, vector<8x256xf32>
    %c0_i32 = arith.constant 0 : i32
    %c8_i32 = arith.constant 8 : i32
    %28 = arith.muli %c0_i32, %c8_i32 : i32
    %29 = tpu.assume_multiple %28, 8 : i32
    %30 = arith.index_cast %29 : i32 to index
    %c0_26 = arith.constant 0 : index
    %31 = vector.load %arg18[%30, %c0_26] : memref<64x1024xf32, #tpu.memory_space<vmem>>, vector<8x1024xf32>
    %32 = arith.truncf %26 : vector<8x256xf32> to vector<8x256xbf16>
    %cst_27 = arith.constant dense<0.000000e+00> : vector<8x1024xf32>
    %33 = tpu.matmul %32, %25, %cst_27 {dimension_numbers = #tpu.dot_dimension_numbers<[1], [0], [0], [1], [0, 0, 1, 1], [], []>} : vector<8x256xbf16>, vector<256x1024xbf16>, vector<8x1024xf32> -> vector<8x1024xf32>
    %34 = arith.addf %31, %33 : vector<8x1024xf32>
    %35 = vector.extract_strided_slice %34 {offsets = [0, 0], sizes = [8, 256], strides = [1, 1]} : vector<8x1024xf32> to vector<8x256xf32>
    %36 = arith.negf %35 : vector<8x256xf32>
    %37 = math.exp %36 : vector<8x256xf32>
    %cst_28 = arith.constant 1.000000e+00 : f32
    %38 = vector.broadcast %cst_28 : f32 to vector<8x256xf32>
    %39 = arith.addf %38, %37 : vector<8x256xf32>
    %40 = arith.divf %38, %39 : vector<8x256xf32>
    %41 = vector.extract_strided_slice %34 {offsets = [0, 256], sizes = [8, 256], strides = [1, 1]} : vector<8x1024xf32> to vector<8x256xf32>
    %42 = arith.negf %41 : vector<8x256xf32>
    %43 = math.exp %42 : vector<8x256xf32>
    %cst_29 = arith.constant 1.000000e+00 : f32
    %44 = vector.broadcast %cst_29 : f32 to vector<8x256xf32>
    %45 = arith.addf %44, %43 : vector<8x256xf32>
    %46 = arith.divf %44, %45 : vector<8x256xf32>
    %47 = vector.extract_strided_slice %34 {offsets = [0, 512], sizes = [8, 256], strides = [1, 1]} : vector<8x1024xf32> to vector<8x256xf32>
    %48 = math.tanh %47 : vector<8x256xf32>
    %49 = vector.extract_strided_slice %34 {offsets = [0, 768], sizes = [8, 256], strides = [1, 1]} : vector<8x1024xf32> to vector<8x256xf32>
    %50 = arith.negf %49 : vector<8x256xf32>
    %51 = math.exp %50 : vector<8x256xf32>
    %cst_30 = arith.constant 1.000000e+00 : f32
    %52 = vector.broadcast %cst_30 : f32 to vector<8x256xf32>
    %53 = arith.addf %52, %51 : vector<8x256xf32>
    %54 = arith.divf %52, %53 : vector<8x256xf32>
    %55 = arith.mulf %46, %27 : vector<8x256xf32>
    %56 = arith.mulf %40, %48 : vector<8x256xf32>
    %57 = arith.addf %55, %56 : vector<8x256xf32>
    %58 = math.tanh %57 : vector<8x256xf32>
    %59 = arith.mulf %54, %58 : vector<8x256xf32>
    %60 = arith.index_cast %29 : i32 to index
    %c0_31 = arith.constant 0 : index
    %61 = vector.load %arg19[%60, %c0_31] : memref<64x256xf32, #tpu.memory_space<vmem>>, vector<8x256xf32>
    tpu.vector_store %arg19[%60, %c0_31], %59 {strides = array<i32>} : memref<64x256xf32, #tpu.memory_space<vmem>>, vector<8x256xf32>,
    %c1_i32 = arith.constant 1 : i32
    %c8_i32_32 = arith.constant 8 : i32
    %62 = arith.muli %c1_i32, %c8_i32_32 : i32
    %63 = tpu.assume_multiple %62, 8 : i32
    %64 = arith.index_cast %63 : i32 to index
    %c0_33 = arith.constant 0 : index
    %65 = vector.load %arg18[%64, %c0_33] : memref<64x1024xf32, #tpu.memory_space<vmem>>, vector<8x1024xf32>
    %66 = arith.truncf %59 : vector<8x256xf32> to vector<8x256xbf16>
    %cst_34 = arith.constant dense<0.000000e+00> : vector<8x1024xf32>
    %67 = tpu.matmul %66, %25, %cst_34 {dimension_numbers = #tpu.dot_dimension_numbers<[1], [0], [0], [1], [0, 0, 1, 1], [], []>} : vector<8x256xbf16>, vector<256x1024xbf16>, vector<8x1024xf32> -> vector<8x1024xf32>
    %68 = arith.addf %65, %67 : vector<8x1024xf32>
    %69 = vector.extract_strided_slice %68 {offsets = [0, 0], sizes = [8, 256], strides = [1, 1]} : vector<8x1024xf32> to vector<8x256xf32>
    %70 = arith.negf %69 : vector<8x256xf32>
    %71 = math.exp %70 : vector<8x256xf32>
    %cst_35 = arith.constant 1.000000e+00 : f32
    %72 = vector.broadcast %cst_35 : f32 to vector<8x256xf32>
    %73 = arith.addf %72, %71 : vector<8x256xf32>
    %74 = arith.divf %72, %73 : vector<8x256xf32>
    %75 = vector.extract_strided_slice %68 {offsets = [0, 256], sizes = [8, 256], strides = [1, 1]} : vector<8x1024xf32> to vector<8x256xf32>
    %76 = arith.negf %75 : vector<8x256xf32>
    %77 = math.exp %76 : vector<8x256xf32>
    %cst_36 = arith.constant 1.000000e+00 : f32
    %78 = vector.broadcast %cst_36 : f32 to vector<8x256xf32>
    %79 = arith.addf %78, %77 : vector<8x256xf32>
    %80 = arith.divf %78, %79 : vector<8x256xf32>
    %81 = vector.extract_strided_slice %68 {offsets = [0, 512], sizes = [8, 256], strides = [1, 1]} : vector<8x1024xf32> to vector<8x256xf32>
    %82 = math.tanh %81 : vector<8x256xf32>
    %83 = vector.extract_strided_slice %68 {offsets = [0, 768], sizes = [8, 256], strides = [1, 1]} : vector<8x1024xf32> to vector<8x256xf32>
    %84 = arith.negf %83 : vector<8x256xf32>
    %85 = math.exp %84 : vector<8x256xf32>
    %cst_37 = arith.constant 1.000000e+00 : f32
    %86 = vector.broadcast %cst_37 : f32 to vector<8x256xf32>
    %87 = arith.addf %86, %85 : vector<8x256xf32>
    %88 = arith.divf %86, %87 : vector<8x256xf32>
    %89 = arith.mulf %80, %57 : vector<8x256xf32>
    %90 = arith.mulf %74, %82 : vector<8x256xf32>
    %91 = arith.addf %89, %90 : vector<8x256xf32>
    %92 = math.tanh %91 : vector<8x256xf32>
    %93 = arith.mulf %88, %92 : vector<8x256xf32>
    %94 = arith.index_cast %63 : i32 to index
    %c0_38 = arith.constant 0 : index
    %95 = vector.load %arg19[%94, %c0_38] : memref<64x256xf32, #tpu.memory_space<vmem>>, vector<8x256xf32>
    tpu.vector_store %arg19[%94, %c0_38], %93 {strides = array<i32>} : memref<64x256xf32, #tpu.memory_space<vmem>>, vector<8x256xf32>,
    %c2_i32 = arith.constant 2 : i32
    %c8_i32_39 = arith.constant 8 : i32
    %96 = arith.muli %c2_i32, %c8_i32_39 : i32
    %97 = tpu.assume_multiple %96, 8 : i32
    %98 = arith.index_cast %97 : i32 to index
    %c0_40 = arith.constant 0 : index
    %99 = vector.load %arg18[%98, %c0_40] : memref<64x1024xf32, #tpu.memory_space<vmem>>, vector<8x1024xf32>
    %100 = arith.truncf %93 : vector<8x256xf32> to vector<8x256xbf16>
    %cst_41 = arith.constant dense<0.000000e+00> : vector<8x1024xf32>
    %101 = tpu.matmul %100, %25, %cst_41 {dimension_numbers = #tpu.dot_dimension_numbers<[1], [0], [0], [1], [0, 0, 1, 1], [], []>} : vector<8x256xbf16>, vector<256x1024xbf16>, vector<8x1024xf32> -> vector<8x1024xf32>
    %102 = arith.addf %99, %101 : vector<8x1024xf32>
    %103 = vector.extract_strided_slice %102 {offsets = [0, 0], sizes = [8, 256], strides = [1, 1]} : vector<8x1024xf32> to vector<8x256xf32>
    %104 = arith.negf %103 : vector<8x256xf32>
    %105 = math.exp %104 : vector<8x256xf32>
    %cst_42 = arith.constant 1.000000e+00 : f32
    %106 = vector.broadcast %cst_42 : f32 to vector<8x256xf32>
    %107 = arith.addf %106, %105 : vector<8x256xf32>
    %108 = arith.divf %106, %107 : vector<8x256xf32>
    %109 = vector.extract_strided_slice %102 {offsets = [0, 256], sizes = [8, 256], strides = [1, 1]} : vector<8x1024xf32> to vector<8x256xf32>
    %110 = arith.negf %109 : vector<8x256xf32>
    %111 = math.exp %110 : vector<8x256xf32>
    %cst_43 = arith.constant 1.000000e+00 : f32
    %112 = vector.broadcast %cst_43 : f32 to vector<8x256xf32>
    %113 = arith.addf %112, %111 : vector<8x256xf32>
    %114 = arith.divf %112, %113 : vector<8x256xf32>
    %115 = vector.extract_strided_slice %102 {offsets = [0, 512], sizes = [8, 256], strides = [1, 1]} : vector<8x1024xf32> to vector<8x256xf32>
    %116 = math.tanh %115 : vector<8x256xf32>
    %117 = vector.extract_strided_slice %102 {offsets = [0, 768], sizes = [8, 256], strides = [1, 1]} : vector<8x1024xf32> to vector<8x256xf32>
    %118 = arith.negf %117 : vector<8x256xf32>
    %119 = math.exp %118 : vector<8x256xf32>
    %cst_44 = arith.constant 1.000000e+00 : f32
    %120 = vector.broadcast %cst_44 : f32 to vector<8x256xf32>
    %121 = arith.addf %120, %119 : vector<8x256xf32>
    %122 = arith.divf %120, %121 : vector<8x256xf32>
    %123 = arith.mulf %114, %91 : vector<8x256xf32>
    %124 = arith.mulf %108, %116 : vector<8x256xf32>
    %125 = arith.addf %123, %124 : vector<8x256xf32>
    %126 = math.tanh %125 : vector<8x256xf32>
    %127 = arith.mulf %122, %126 : vector<8x256xf32>
    %128 = arith.index_cast %97 : i32 to index
    %c0_45 = arith.constant 0 : index
    %129 = vector.load %arg19[%128, %c0_45] : memref<64x256xf32, #tpu.memory_space<vmem>>, vector<8x256xf32>
    tpu.vector_store %arg19[%128, %c0_45], %127 {strides = array<i32>} : memref<64x256xf32, #tpu.memory_space<vmem>>, vector<8x256xf32>,
    %c3_i32 = arith.constant 3 : i32
    %c8_i32_46 = arith.constant 8 : i32
    %130 = arith.muli %c3_i32, %c8_i32_46 : i32
    %131 = tpu.assume_multiple %130, 8 : i32
    %132 = arith.index_cast %131 : i32 to index
    %c0_47 = arith.constant 0 : index
    %133 = vector.load %arg18[%132, %c0_47] : memref<64x1024xf32, #tpu.memory_space<vmem>>, vector<8x1024xf32>
    %134 = arith.truncf %127 : vector<8x256xf32> to vector<8x256xbf16>
    %cst_48 = arith.constant dense<0.000000e+00> : vector<8x1024xf32>
    %135 = tpu.matmul %134, %25, %cst_48 {dimension_numbers = #tpu.dot_dimension_numbers<[1], [0], [0], [1], [0, 0, 1, 1], [], []>} : vector<8x256xbf16>, vector<256x1024xbf16>, vector<8x1024xf32> -> vector<8x1024xf32>
    %136 = arith.addf %133, %135 : vector<8x1024xf32>
    %137 = vector.extract_strided_slice %136 {offsets = [0, 0], sizes = [8, 256], strides = [1, 1]} : vector<8x1024xf32> to vector<8x256xf32>
    %138 = arith.negf %137 : vector<8x256xf32>
    %139 = math.exp %138 : vector<8x256xf32>
    %cst_49 = arith.constant 1.000000e+00 : f32
    %140 = vector.broadcast %cst_49 : f32 to vector<8x256xf32>
    %141 = arith.addf %140, %139 : vector<8x256xf32>
    %142 = arith.divf %140, %141 : vector<8x256xf32>
    %143 = vector.extract_strided_slice %136 {offsets = [0, 256], sizes = [8, 256], strides = [1, 1]} : vector<8x1024xf32> to vector<8x256xf32>
    %144 = arith.negf %143 : vector<8x256xf32>
    %145 = math.exp %144 : vector<8x256xf32>
    %cst_50 = arith.constant 1.000000e+00 : f32
    %146 = vector.broadcast %cst_50 : f32 to vector<8x256xf32>
    %147 = arith.addf %146, %145 : vector<8x256xf32>
    %148 = arith.divf %146, %147 : vector<8x256xf32>
    %149 = vector.extract_strided_slice %136 {offsets = [0, 512], sizes = [8, 256], strides = [1, 1]} : vector<8x1024xf32> to vector<8x256xf32>
    %150 = math.tanh %149 : vector<8x256xf32>
    %151 = vector.extract_strided_slice %136 {offsets = [0, 768], sizes = [8, 256], strides = [1, 1]} : vector<8x1024xf32> to vector<8x256xf32>
    %152 = arith.negf %151 : vector<8x256xf32>
    %153 = math.exp %152 : vector<8x256xf32>
    %cst_51 = arith.constant 1.000000e+00 : f32
    %154 = vector.broadcast %cst_51 : f32 to vector<8x256xf32>
    %155 = arith.addf %154, %153 : vector<8x256xf32>
    %156 = arith.divf %154, %155 : vector<8x256xf32>
    %157 = arith.mulf %148, %125 : vector<8x256xf32>
    %158 = arith.mulf %142, %150 : vector<8x256xf32>
    %159 = arith.addf %157, %158 : vector<8x256xf32>
    %160 = math.tanh %159 : vector<8x256xf32>
    %161 = arith.mulf %156, %160 : vector<8x256xf32>
    %162 = arith.index_cast %131 : i32 to index
    %c0_52 = arith.constant 0 : index
    %163 = vector.load %arg19[%162, %c0_52] : memref<64x256xf32, #tpu.memory_space<vmem>>, vector<8x256xf32>
    tpu.vector_store %arg19[%162, %c0_52], %161 {strides = array<i32>} : memref<64x256xf32, #tpu.memory_space<vmem>>, vector<8x256xf32>,
    %c4_i32 = arith.constant 4 : i32
    %c8_i32_53 = arith.constant 8 : i32
    %164 = arith.muli %c4_i32, %c8_i32_53 : i32
    %165 = tpu.assume_multiple %164, 8 : i32
    %166 = arith.index_cast %165 : i32 to index
    %c0_54 = arith.constant 0 : index
    %167 = vector.load %arg18[%166, %c0_54] : memref<64x1024xf32, #tpu.memory_space<vmem>>, vector<8x1024xf32>
    %168 = arith.truncf %161 : vector<8x256xf32> to vector<8x256xbf16>
    %cst_55 = arith.constant dense<0.000000e+00> : vector<8x1024xf32>
    %169 = tpu.matmul %168, %25, %cst_55 {dimension_numbers = #tpu.dot_dimension_numbers<[1], [0], [0], [1], [0, 0, 1, 1], [], []>} : vector<8x256xbf16>, vector<256x1024xbf16>, vector<8x1024xf32> -> vector<8x1024xf32>
    %170 = arith.addf %167, %169 : vector<8x1024xf32>
    %171 = vector.extract_strided_slice %170 {offsets = [0, 0], sizes = [8, 256], strides = [1, 1]} : vector<8x1024xf32> to vector<8x256xf32>
    %172 = arith.negf %171 : vector<8x256xf32>
    %173 = math.exp %172 : vector<8x256xf32>
    %cst_56 = arith.constant 1.000000e+00 : f32
    %174 = vector.broadcast %cst_56 : f32 to vector<8x256xf32>
    %175 = arith.addf %174, %173 : vector<8x256xf32>
    %176 = arith.divf %174, %175 : vector<8x256xf32>
    %177 = vector.extract_strided_slice %170 {offsets = [0, 256], sizes = [8, 256], strides = [1, 1]} : vector<8x1024xf32> to vector<8x256xf32>
    %178 = arith.negf %177 : vector<8x256xf32>
    %179 = math.exp %178 : vector<8x256xf32>
    %cst_57 = arith.constant 1.000000e+00 : f32
    %180 = vector.broadcast %cst_57 : f32 to vector<8x256xf32>
    %181 = arith.addf %180, %179 : vector<8x256xf32>
    %182 = arith.divf %180, %181 : vector<8x256xf32>
    %183 = vector.extract_strided_slice %170 {offsets = [0, 512], sizes = [8, 256], strides = [1, 1]} : vector<8x1024xf32> to vector<8x256xf32>
    %184 = math.tanh %183 : vector<8x256xf32>
    %185 = vector.extract_strided_slice %170 {offsets = [0, 768], sizes = [8, 256], strides = [1, 1]} : vector<8x1024xf32> to vector<8x256xf32>
    %186 = arith.negf %185 : vector<8x256xf32>
    %187 = math.exp %186 : vector<8x256xf32>
    %cst_58 = arith.constant 1.000000e+00 : f32
    %188 = vector.broadcast %cst_58 : f32 to vector<8x256xf32>
    %189 = arith.addf %188, %187 : vector<8x256xf32>
    %190 = arith.divf %188, %189 : vector<8x256xf32>
    %191 = arith.mulf %182, %159 : vector<8x256xf32>
    %192 = arith.mulf %176, %184 : vector<8x256xf32>
    %193 = arith.addf %191, %192 : vector<8x256xf32>
    %194 = math.tanh %193 : vector<8x256xf32>
    %195 = arith.mulf %190, %194 : vector<8x256xf32>
    %196 = arith.index_cast %165 : i32 to index
    %c0_59 = arith.constant 0 : index
    %197 = vector.load %arg19[%196, %c0_59] : memref<64x256xf32, #tpu.memory_space<vmem>>, vector<8x256xf32>
    tpu.vector_store %arg19[%196, %c0_59], %195 {strides = array<i32>} : memref<64x256xf32, #tpu.memory_space<vmem>>, vector<8x256xf32>,
    %c5_i32 = arith.constant 5 : i32
    %c8_i32_60 = arith.constant 8 : i32
    %198 = arith.muli %c5_i32, %c8_i32_60 : i32
    %199 = tpu.assume_multiple %198, 8 : i32
    %200 = arith.index_cast %199 : i32 to index
    %c0_61 = arith.constant 0 : index
    %201 = vector.load %arg18[%200, %c0_61] : memref<64x1024xf32, #tpu.memory_space<vmem>>, vector<8x1024xf32>
    %202 = arith.truncf %195 : vector<8x256xf32> to vector<8x256xbf16>
    %cst_62 = arith.constant dense<0.000000e+00> : vector<8x1024xf32>
    %203 = tpu.matmul %202, %25, %cst_62 {dimension_numbers = #tpu.dot_dimension_numbers<[1], [0], [0], [1], [0, 0, 1, 1], [], []>} : vector<8x256xbf16>, vector<256x1024xbf16>, vector<8x1024xf32> -> vector<8x1024xf32>
    %204 = arith.addf %201, %203 : vector<8x1024xf32>
    %205 = vector.extract_strided_slice %204 {offsets = [0, 0], sizes = [8, 256], strides = [1, 1]} : vector<8x1024xf32> to vector<8x256xf32>
    %206 = arith.negf %205 : vector<8x256xf32>
    %207 = math.exp %206 : vector<8x256xf32>
    %cst_63 = arith.constant 1.000000e+00 : f32
    %208 = vector.broadcast %cst_63 : f32 to vector<8x256xf32>
    %209 = arith.addf %208, %207 : vector<8x256xf32>
    %210 = arith.divf %208, %209 : vector<8x256xf32>
    %211 = vector.extract_strided_slice %204 {offsets = [0, 256], sizes = [8, 256], strides = [1, 1]} : vector<8x1024xf32> to vector<8x256xf32>
    %212 = arith.negf %211 : vector<8x256xf32>
    %213 = math.exp %212 : vector<8x256xf32>
    %cst_64 = arith.constant 1.000000e+00 : f32
    %214 = vector.broadcast %cst_64 : f32 to vector<8x256xf32>
    %215 = arith.addf %214, %213 : vector<8x256xf32>
    %216 = arith.divf %214, %215 : vector<8x256xf32>
    %217 = vector.extract_strided_slice %204 {offsets = [0, 512], sizes = [8, 256], strides = [1, 1]} : vector<8x1024xf32> to vector<8x256xf32>
    %218 = math.tanh %217 : vector<8x256xf32>
    %219 = vector.extract_strided_slice %204 {offsets = [0, 768], sizes = [8, 256], strides = [1, 1]} : vector<8x1024xf32> to vector<8x256xf32>
    %220 = arith.negf %219 : vector<8x256xf32>
    %221 = math.exp %220 : vector<8x256xf32>
    %cst_65 = arith.constant 1.000000e+00 : f32
    %222 = vector.broadcast %cst_65 : f32 to vector<8x256xf32>
    %223 = arith.addf %222, %221 : vector<8x256xf32>
    %224 = arith.divf %222, %223 : vector<8x256xf32>
    %225 = arith.mulf %216, %193 : vector<8x256xf32>
    %226 = arith.mulf %210, %218 : vector<8x256xf32>
    %227 = arith.addf %225, %226 : vector<8x256xf32>
    %228 = math.tanh %227 : vector<8x256xf32>
    %229 = arith.mulf %224, %228 : vector<8x256xf32>
    %230 = arith.index_cast %199 : i32 to index
    %c0_66 = arith.constant 0 : index
    %231 = vector.load %arg19[%230, %c0_66] : memref<64x256xf32, #tpu.memory_space<vmem>>, vector<8x256xf32>
    tpu.vector_store %arg19[%230, %c0_66], %229 {strides = array<i32>} : memref<64x256xf32, #tpu.memory_space<vmem>>, vector<8x256xf32>,
    %c6_i32 = arith.constant 6 : i32
    %c8_i32_67 = arith.constant 8 : i32
    %232 = arith.muli %c6_i32, %c8_i32_67 : i32
    %233 = tpu.assume_multiple %232, 8 : i32
    %234 = arith.index_cast %233 : i32 to index
    %c0_68 = arith.constant 0 : index
    %235 = vector.load %arg18[%234, %c0_68] : memref<64x1024xf32, #tpu.memory_space<vmem>>, vector<8x1024xf32>
    %236 = arith.truncf %229 : vector<8x256xf32> to vector<8x256xbf16>
    %cst_69 = arith.constant dense<0.000000e+00> : vector<8x1024xf32>
    %237 = tpu.matmul %236, %25, %cst_69 {dimension_numbers = #tpu.dot_dimension_numbers<[1], [0], [0], [1], [0, 0, 1, 1], [], []>} : vector<8x256xbf16>, vector<256x1024xbf16>, vector<8x1024xf32> -> vector<8x1024xf32>
    %238 = arith.addf %235, %237 : vector<8x1024xf32>
    %239 = vector.extract_strided_slice %238 {offsets = [0, 0], sizes = [8, 256], strides = [1, 1]} : vector<8x1024xf32> to vector<8x256xf32>
    %240 = arith.negf %239 : vector<8x256xf32>
    %241 = math.exp %240 : vector<8x256xf32>
    %cst_70 = arith.constant 1.000000e+00 : f32
    %242 = vector.broadcast %cst_70 : f32 to vector<8x256xf32>
    %243 = arith.addf %242, %241 : vector<8x256xf32>
    %244 = arith.divf %242, %243 : vector<8x256xf32>
    %245 = vector.extract_strided_slice %238 {offsets = [0, 256], sizes = [8, 256], strides = [1, 1]} : vector<8x1024xf32> to vector<8x256xf32>
    %246 = arith.negf %245 : vector<8x256xf32>
    %247 = math.exp %246 : vector<8x256xf32>
    %cst_71 = arith.constant 1.000000e+00 : f32
    %248 = vector.broadcast %cst_71 : f32 to vector<8x256xf32>
    %249 = arith.addf %248, %247 : vector<8x256xf32>
    %250 = arith.divf %248, %249 : vector<8x256xf32>
    %251 = vector.extract_strided_slice %238 {offsets = [0, 512], sizes = [8, 256], strides = [1, 1]} : vector<8x1024xf32> to vector<8x256xf32>
    %252 = math.tanh %251 : vector<8x256xf32>
    %253 = vector.extract_strided_slice %238 {offsets = [0, 768], sizes = [8, 256], strides = [1, 1]} : vector<8x1024xf32> to vector<8x256xf32>
    %254 = arith.negf %253 : vector<8x256xf32>
    %255 = math.exp %254 : vector<8x256xf32>
    %cst_72 = arith.constant 1.000000e+00 : f32
    %256 = vector.broadcast %cst_72 : f32 to vector<8x256xf32>
    %257 = arith.addf %256, %255 : vector<8x256xf32>
    %258 = arith.divf %256, %257 : vector<8x256xf32>
    %259 = arith.mulf %250, %227 : vector<8x256xf32>
    %260 = arith.mulf %244, %252 : vector<8x256xf32>
    %261 = arith.addf %259, %260 : vector<8x256xf32>
    %262 = math.tanh %261 : vector<8x256xf32>
    %263 = arith.mulf %258, %262 : vector<8x256xf32>
    %264 = arith.index_cast %233 : i32 to index
    %c0_73 = arith.constant 0 : index
    %265 = vector.load %arg19[%264, %c0_73] : memref<64x256xf32, #tpu.memory_space<vmem>>, vector<8x256xf32>
    tpu.vector_store %arg19[%264, %c0_73], %263 {strides = array<i32>} : memref<64x256xf32, #tpu.memory_space<vmem>>, vector<8x256xf32>,
    %c7_i32 = arith.constant 7 : i32
    %c8_i32_74 = arith.constant 8 : i32
    %266 = arith.muli %c7_i32, %c8_i32_74 : i32
    %267 = tpu.assume_multiple %266, 8 : i32
    %268 = arith.index_cast %267 : i32 to index
    %c0_75 = arith.constant 0 : index
    %269 = vector.load %arg18[%268, %c0_75] : memref<64x1024xf32, #tpu.memory_space<vmem>>, vector<8x1024xf32>
    %270 = arith.truncf %263 : vector<8x256xf32> to vector<8x256xbf16>
    %cst_76 = arith.constant dense<0.000000e+00> : vector<8x1024xf32>
    %271 = tpu.matmul %270, %25, %cst_76 {dimension_numbers = #tpu.dot_dimension_numbers<[1], [0], [0], [1], [0, 0, 1, 1], [], []>} : vector<8x256xbf16>, vector<256x1024xbf16>, vector<8x1024xf32> -> vector<8x1024xf32>
    %272 = arith.addf %269, %271 : vector<8x1024xf32>
    %273 = vector.extract_strided_slice %272 {offsets = [0, 0], sizes = [8, 256], strides = [1, 1]} : vector<8x1024xf32> to vector<8x256xf32>
    %274 = arith.negf %273 : vector<8x256xf32>
    %275 = math.exp %274 : vector<8x256xf32>
    %cst_77 = arith.constant 1.000000e+00 : f32
    %276 = vector.broadcast %cst_77 : f32 to vector<8x256xf32>
    %277 = arith.addf %276, %275 : vector<8x256xf32>
    %278 = arith.divf %276, %277 : vector<8x256xf32>
    %279 = vector.extract_strided_slice %272 {offsets = [0, 256], sizes = [8, 256], strides = [1, 1]} : vector<8x1024xf32> to vector<8x256xf32>
    %280 = arith.negf %279 : vector<8x256xf32>
    %281 = math.exp %280 : vector<8x256xf32>
    %cst_78 = arith.constant 1.000000e+00 : f32
    %282 = vector.broadcast %cst_78 : f32 to vector<8x256xf32>
    %283 = arith.addf %282, %281 : vector<8x256xf32>
    %284 = arith.divf %282, %283 : vector<8x256xf32>
    %285 = vector.extract_strided_slice %272 {offsets = [0, 512], sizes = [8, 256], strides = [1, 1]} : vector<8x1024xf32> to vector<8x256xf32>
    %286 = math.tanh %285 : vector<8x256xf32>
    %287 = vector.extract_strided_slice %272 {offsets = [0, 768], sizes = [8, 256], strides = [1, 1]} : vector<8x1024xf32> to vector<8x256xf32>
    %288 = arith.negf %287 : vector<8x256xf32>
    %289 = math.exp %288 : vector<8x256xf32>
    %cst_79 = arith.constant 1.000000e+00 : f32
    %290 = vector.broadcast %cst_79 : f32 to vector<8x256xf32>
    %291 = arith.addf %290, %289 : vector<8x256xf32>
    %292 = arith.divf %290, %291 : vector<8x256xf32>
    %293 = arith.mulf %284, %261 : vector<8x256xf32>
    %294 = arith.mulf %278, %286 : vector<8x256xf32>
    %295 = arith.addf %293, %294 : vector<8x256xf32>
    %296 = math.tanh %295 : vector<8x256xf32>
    %297 = arith.mulf %292, %296 : vector<8x256xf32>
    %298 = arith.index_cast %267 : i32 to index
    %c0_80 = arith.constant 0 : index
    %299 = vector.load %arg19[%298, %c0_80] : memref<64x256xf32, #tpu.memory_space<vmem>>, vector<8x256xf32>
    tpu.vector_store %arg19[%298, %c0_80], %297 {strides = array<i32>} : memref<64x256xf32, #tpu.memory_space<vmem>>, vector<8x256xf32>,
    %c8_i32_81 = arith.constant 8 : i32
    %c0_82 = arith.constant 0 : index
    %c0_83 = arith.constant 0 : index
    %300 = vector.load %arg16[%c0_82, %c0_83] : memref<8x256xf32, #tpu.memory_space<vmem>>, vector<8x256xf32>
    tpu.vector_store %arg16[%c0_82, %c0_83], %297 {strides = array<i32>} : memref<8x256xf32, #tpu.memory_space<vmem>>, vector<8x256xf32>,
    %c0_84 = arith.constant 0 : index
    %c0_85 = arith.constant 0 : index
    %301 = vector.load %arg17[%c0_84, %c0_85] : memref<8x256xf32, #tpu.memory_space<vmem>>, vector<8x256xf32>
    tpu.vector_store %arg17[%c0_84, %c0_85], %295 {strides = array<i32>} : memref<8x256xf32, #tpu.memory_space<vmem>>, vector<8x256xf32>,
    %c0_86 = arith.constant 0 : index
    %c0_87 = arith.constant 0 : index
    %302 = vector.load %arg19[%c0_86, %c0_87] : memref<64x256xf32, #tpu.memory_space<vmem>>, vector<64x256xf32>
    %303 = arith.truncf %302 : vector<64x256xf32> to vector<64x256xbf16>
    %c0_88 = arith.constant 0 : index
    %c0_89 = arith.constant 0 : index
    %304 = vector.load %arg11[%c0_88, %c0_89] : memref<256x512xbf16, #tpu.memory_space<vmem>>, vector<256x512xbf16>
    %cst_90 = arith.constant dense<0.000000e+00> : vector<64x512xf32>
    %305 = tpu.matmul %303, %304, %cst_90 {dimension_numbers = #tpu.dot_dimension_numbers<[1], [0], [0], [1], [0, 0, 1, 1], [], []>} : vector<64x256xbf16>, vector<256x512xbf16>, vector<64x512xf32> -> vector<64x512xf32>
    %c0_91 = arith.constant 0 : index
    %c0_92 = arith.constant 0 : index
    %306 = vector.load %arg12[%c0_91, %c0_92] : memref<1x512xf32, #tpu.memory_space<vmem>>, vector<1x512xf32>
    %307 = vector.broadcast %306 : vector<1x512xf32> to vector<64x512xf32>
    %308 = arith.addf %305, %307 : vector<64x512xf32>
    %cst_93 = arith.constant 0.000000e+00 : f32
    %309 = vector.broadcast %cst_93 : f32 to vector<64x512xf32>
    %310 = arith.maximumf %308, %309 : vector<64x512xf32>
    %311 = arith.truncf %310 : vector<64x512xf32> to vector<64x512xbf16>
    %c0_94 = arith.constant 0 : index
    %c0_95 = arith.constant 0 : index
    %312 = vector.load %arg13[%c0_94, %c0_95] : memref<512x128xbf16, #tpu.memory_space<vmem>>, vector<512x128xbf16>
    %cst_96 = arith.constant dense<0.000000e+00> : vector<64x128xf32>
    %313 = tpu.matmul %311, %312, %cst_96 {dimension_numbers = #tpu.dot_dimension_numbers<[1], [0], [0], [1], [0, 0, 1, 1], [], []>} : vector<64x512xbf16>, vector<512x128xbf16>, vector<64x128xf32> -> vector<64x128xf32>
    %c0_97 = arith.constant 0 : index
    %c0_98 = arith.constant 0 : index
    %314 = vector.load %arg14[%c0_97, %c0_98] : memref<1x128xf32, #tpu.memory_space<vmem>>, vector<1x128xf32>
    %315 = vector.broadcast %314 : vector<1x128xf32> to vector<64x128xf32>
    %316 = arith.addf %313, %315 : vector<64x128xf32>
    %317 = tpu.iota {dimensions = array<i32: 1>} : vector<64x128xi32>
    %c0_i32_99 = arith.constant 0 : i32
    %318 = vector.broadcast %c0_i32_99 : i32 to vector<64x128xi32>
    %319 = arith.cmpi eq, %317, %318 : vector<64x128xi32>
    %c1_i32_100 = arith.constant 1 : i32
    %320 = vector.broadcast %c1_i32_100 : i32 to vector<64x128xi32>
    %321 = arith.cmpi sge, %317, %320 : vector<64x128xi32>
    %c9_i32 = arith.constant 9 : i32
    %322 = vector.broadcast %c9_i32 : i32 to vector<64x128xi32>
    %323 = arith.cmpi slt, %317, %322 : vector<64x128xi32>
    %324 = arith.andi %321, %323 : vector<64x128xi1>
    %cst_101 = arith.constant -1.000000e+30 : f32
    %325 = vector.broadcast %cst_101 : f32 to vector<64x128xf32>
    %326 = arith.select %324, %316, %325 : vector<64x128xi1>, vector<64x128xf32>
    %cst_102 = arith.constant dense<0xFF800000> : vector<64xf32>
    %327 = vector.multi_reduction <maximumf>, %326, %cst_102 [1] : vector<64x128xf32> to vector<64xf32>
    %328 = vector.shape_cast %327 : vector<64xf32> to vector<64x1xf32>
    %329 = vector.broadcast %328 : vector<64x1xf32> to vector<64x128xf32>
    %330 = arith.subf %326, %329 : vector<64x128xf32>
    %331 = math.exp %330 : vector<64x128xf32>
    %cst_103 = arith.constant dense<0.000000e+00> : vector<64xf32>
    %332 = vector.multi_reduction <add>, %331, %cst_103 [1] : vector<64x128xf32> to vector<64xf32>
    %333 = vector.shape_cast %332 : vector<64xf32> to vector<64x1xf32>
    %334 = vector.broadcast %333 : vector<64x1xf32> to vector<64x128xf32>
    %335 = arith.divf %331, %334 : vector<64x128xf32>
    %336 = arith.select %319, %316, %335 : vector<64x128xi1>, vector<64x128xf32>
    %c0_104 = arith.constant 0 : index
    %c0_105 = arith.constant 0 : index
    %c0_106 = arith.constant 0 : index
    %337 = vector.load %arg15[%c0_104, %c0_105, %c0_106] : memref<1x64x128xf32, #tpu.memory_space<vmem>>, vector<1x64x128xf32>
    %338 = vector.shape_cast %337 : vector<1x64x128xf32> to vector<64x128xf32>
    %339 = vector.shape_cast %336 : vector<64x128xf32> to vector<1x64x128xf32>
    tpu.vector_store %arg15[%c0_104, %c0_105, %c0_106], %339 {strides = array<i32>} : memref<1x64x128xf32, #tpu.memory_space<vmem>>, vector<1x64x128xf32>,
    return
  }
  func.func @transform_0(%arg0: i32) -> (i32, i32, i32) {
    %c0_i32 = arith.constant 0 : i32
    %c0_i32_0 = arith.constant 0 : i32
    %c0_i32_1 = arith.constant 0 : i32
    return %arg0, %c0_i32, %c0_i32_0 : i32, i32, i32
  }
  func.func @transform_1(%arg0: i32) -> (i32, i32) {
    %c0_i32 = arith.constant 0 : i32
    %c0_i32_0 = arith.constant 0 : i32
    return %arg0, %c0_i32 : i32, i32
  }
  func.func @transform_2(%arg0: i32) -> (i32, i32) {
    %c0_i32 = arith.constant 0 : i32
    %c0_i32_0 = arith.constant 0 : i32
    return %arg0, %c0_i32 : i32, i32
  }
  func.func @transform_3(%arg0: i32) -> (i32, i32) {
    %c0_i32 = arith.constant 0 : i32
    %c0_i32_0 = arith.constant 0 : i32
    %c0_i32_1 = arith.constant 0 : i32
    return %c0_i32, %c0_i32_0 : i32, i32
  }
  func.func @transform_4(%arg0: i32) -> (i32, i32) {
    %c0_i32 = arith.constant 0 : i32
    %c0_i32_0 = arith.constant 0 : i32
    %c0_i32_1 = arith.constant 0 : i32
    return %c0_i32, %c0_i32_0 : i32, i32
  }
  func.func @transform_5(%arg0: i32) -> (i32, i32) {
    %c0_i32 = arith.constant 0 : i32
    %c0_i32_0 = arith.constant 0 : i32
    %c0_i32_1 = arith.constant 0 : i32
    return %c0_i32, %c0_i32_0 : i32, i32
  }
  func.func @transform_6(%arg0: i32) -> (i32, i32) {
    %c0_i32 = arith.constant 0 : i32
    %c0_i32_0 = arith.constant 0 : i32
    %c0_i32_1 = arith.constant 0 : i32
    return %c0_i32, %c0_i32_0 : i32, i32
  }
  func.func @transform_7(%arg0: i32) -> (i32, i32) {
    %c0_i32 = arith.constant 0 : i32
    %c0_i32_0 = arith.constant 0 : i32
    %c0_i32_1 = arith.constant 0 : i32
    return %c0_i32, %c0_i32_0 : i32, i32
  }
  func.func @transform_8(%arg0: i32) -> (i32, i32) {
    %c0_i32 = arith.constant 0 : i32
    %c0_i32_0 = arith.constant 0 : i32
    %c0_i32_1 = arith.constant 0 : i32
    return %c0_i32, %c0_i32_0 : i32, i32
  }
  func.func @transform_9(%arg0: i32) -> (i32, i32) {
    %c0_i32 = arith.constant 0 : i32
    %c0_i32_0 = arith.constant 0 : i32
    %c0_i32_1 = arith.constant 0 : i32
    return %c0_i32, %c0_i32_0 : i32, i32
  }
  func.func @transform_10(%arg0: i32) -> (i32, i32) {
    %c0_i32 = arith.constant 0 : i32
    %c0_i32_0 = arith.constant 0 : i32
    %c0_i32_1 = arith.constant 0 : i32
    return %c0_i32, %c0_i32_0 : i32, i32
  }
  func.func @transform_11(%arg0: i32) -> (i32, i32) {
    %c0_i32 = arith.constant 0 : i32
    %c0_i32_0 = arith.constant 0 : i32
    %c0_i32_1 = arith.constant 0 : i32
    return %c0_i32, %c0_i32_0 : i32, i32
  }
  func.func @transform_12(%arg0: i32) -> (i32, i32) {
    %c0_i32 = arith.constant 0 : i32
    %c0_i32_0 = arith.constant 0 : i32
    %c0_i32_1 = arith.constant 0 : i32
    return %c0_i32, %c0_i32_0 : i32, i32
  }
  func.func @transform_13(%arg0: i32) -> (i32, i32) {
    %c0_i32 = arith.constant 0 : i32
    %c0_i32_0 = arith.constant 0 : i32
    %c0_i32_1 = arith.constant 0 : i32
    return %c0_i32, %c0_i32_0 : i32, i32
  }
  func.func @transform_14(%arg0: i32) -> (i32, i32, i32) {
    %c0_i32 = arith.constant 0 : i32
    %c0_i32_0 = arith.constant 0 : i32
    %c0_i32_1 = arith.constant 0 : i32
    return %arg0, %c0_i32, %c0_i32_0 : i32, i32, i32
  }
  func.func @transform_15(%arg0: i32) -> (i32, i32) {
    %c0_i32 = arith.constant 0 : i32
    %c0_i32_0 = arith.constant 0 : i32
    return %arg0, %c0_i32 : i32, i32
  }
  func.func @transform_16(%arg0: i32) -> (i32, i32) {
    %c0_i32 = arith.constant 0 : i32
    %c0_i32_0 = arith.constant 0 : i32
    return %arg0, %c0_i32 : i32, i32
  }
}

</mosaic_0001>

<llo_original>
// kernel: tpu_custom_call.1
$region0: #{tpu_custom_call.1}
  #allocation0 [shape = 'u32[]', space=smem, size = 0x4, offset = 0x4, fixed_abs, tag = 'smem constant byte address 0x4 - core index']
  #allocation1 [shape = 'u32[144,128]{1,0:T(1,128)}', space=vmem, size = 0x12000, scoped, tag = 'internal scratch']
  #allocation2 [shape = 'f32[64,1024]{1,0:T(8,128)}', space=vmem, size = 0x40000, scoped, tag = 'scratch operand']
  #allocation3 [shape = 'f32[64,256]{1,0:T(8,128)}', space=vmem, size = 0x10000, scoped, tag = 'scratch operand']
  %s0 = inlined_call_operand.vmem [shape: f32[2,64,32], index: 0, kind: input, shape index: {}]
  %s1 = inlined_call_operand.vmem [shape: f32[16,256], index: 1, kind: input, shape index: {}]
  %s2 = inlined_call_operand.vmem [shape: f32[16,256], index: 2, kind: input, shape index: {}]
  %s3 = inlined_call_operand.vmem [shape: bf16[32,1024], index: 3, kind: input, shape index: {}]
  %s4 = inlined_call_operand.vmem [shape: f32[1,1024], index: 4, kind: input, shape index: {}]
  %s5 = inlined_call_operand.hbm [shape: bf16[1024,256], index: 5, kind: input, shape index: {}]
  %s6 = inlined_call_operand.vmem [shape: f32[1,256], index: 6, kind: input, shape index: {}]
  %s7 = inlined_call_operand.hbm [shape: bf16[256,1024], index: 7, kind: input, shape index: {}]
  %s8 = inlined_call_operand.hbm [shape: bf16[256,1024], index: 8, kind: input, shape index: {}]
  %s9 = inlined_call_operand.vmem [shape: f32[1,1024], index: 9, kind: input, shape index: {}]
  %s10 = inlined_call_operand.hbm [shape: bf16[256,512], index: 10, kind: input, shape index: {}]
  %s11 = inlined_call_operand.vmem [shape: f32[1,512], index: 11, kind: input, shape index: {}]
  %s12 = inlined_call_operand.hbm [shape: bf16[512,128], index: 12, kind: input, shape index: {}]
  %s13 = inlined_call_operand.vmem [shape: f32[1,128], index: 13, kind: input, shape index: {}]
  %s14 = inlined_call_operand.hbm [shape: f32[2,64,128], index: 14, kind: output, shape index: {0}]
  %s15 = inlined_call_operand.hbm [shape: f32[16,256], index: 15, kind: output, shape index: {1}]
  %s16 = inlined_call_operand.hbm [shape: f32[16,256], index: 16, kind: output, shape index: {2}]
  %17 = xla_tuple %s14, %s15, %s16
  %s18 = sld [smem:[#allocation0]]
  $region125: #{tpu_custom_call.1} parent=0
    _
  %s20 = ssub.s32 1, %s18
  %s21 = scalar_select 0, %s20, %s18
  $region1: #{tpu_custom_call.1} parent=0
    #allocation4 [shape = 'u8[524288]{0}', space=vmem, size = 0x80000, scoped, tag = 'input window, operand 5, single buffered']
    #allocation5 [shape = 's32[2]{0}', space=sflag, size = 0x8, scoped, tag = 'scoped memory for tpu_custom_call.1']
    #allocation6 [shape = 's32[2]{0}', space=sflag, size = 0x8, scoped, tag = 'scoped memory for tpu_custom_call.1']
    #allocation7 [shape = 'u8[524288]{0}', space=vmem, size = 0x80000, scoped, tag = 'input window, operand 7, single buffered']
    #allocation8 [shape = 's32[1]{0}', space=sflag, size = 0x4, scoped, tag = 'scoped memory for tpu_custom_call.1']
    #allocation9 [shape = 'u8[524288]{0}', space=vmem, size = 0x80000, scoped, tag = 'input window, operand 8, single buffered']
    #allocation10 [shape = 'u8[262144]{0}', space=vmem, size = 0x40000, scoped, tag = 'input window, operand 10, single buffered']
    #allocation11 [shape = 's32[1]{0}', space=sflag, size = 0x4, scoped, tag = 'scoped memory for tpu_custom_call.1']
    #allocation12 [shape = 'u8[131072]{0}', space=vmem, size = 0x20000, scoped, tag = 'input window, operand 12, single buffered']
    #allocation13 [shape = 'u8[65536]{0}', space=vmem, size = 0x10000, scoped, tag = 'output window, operand 0']
    #allocation14 [shape = 'u8[16384]{0}', space=vmem, size = 0x4000, scoped, tag = 'output window, operand 1']
    #allocation15 [shape = 's32[2]{0}', space=sflag, size = 0x8, scoped, tag = 'scoped memory for tpu_custom_call.1']
    #allocation16 [shape = 'u8[16384]{0}', space=vmem, size = 0x4000, scoped, tag = 'output window, operand 2']
    %22 = vsyncpa [#allocation5], 0
    %23 = vsyncpa [#allocation8], 0
    %24 = vsyncpa [#allocation11], 0
    %25 = vsyncpa [#allocation6], 0
    %s26 = scalar_lea.sflag [#allocation6], 1
    %27 = vsyncpa %s26, 0
    %28 = vsyncpa [#allocation15], 0
    %s29 = scalar_lea.sflag [#allocation15], 1
    %30 = vsyncpa %s29, 0
    loop: start=0, step=1, limit=4
    $region2: #{tpu_custom_call.1} parent=1 // loop_pre_header
      _
    $region3: #{tpu_custom_call.1} parent=1 // loop_header
      %s32 = sphi 0, %s36
      %p33 = scmp.ge.s32.totalorder %s32, 4
      %s42 = sphi 0, %s44
      %s45 = sphi 0, %s42
      %s46 = sphi 0, %s45
      %s62 = sphi 0, %s46
      %s68 = sphi 0, %s70
      %s71 = sphi 0, %s68
      %s72 = sphi 0, %s71
      %s88 = sphi 0, %s72
      %s94 = sphi 0, %s96
      %s97 = sphi 0, %s94
      %s98 = sphi 0, %s97
      %s114 = sphi 0, %s98
      %s118 = sphi 0, %s118
      %s120 = sphi 0, %s118
      %s121 = sphi 0, %s120
      %s135 = sphi 0, %s121
      %s139 = sphi 0, %s139
      %s141 = sphi 0, %s139
      %s142 = sphi 0, %s141
      %s156 = sphi 0, %s142
      %s160 = sphi 0, %s160
      %s162 = sphi 0, %s160
      %s163 = sphi 0, %s162
      %s177 = sphi 0, %s163
      %s181 = sphi 0, %s181
      %s183 = sphi 0, %s181
      %s184 = sphi 0, %s183
      %s198 = sphi 0, %s184
      %s202 = sphi 0, %s202
      %s204 = sphi 0, %s202
      %s205 = sphi 0, %s204
      %s219 = sphi 0, %s205
      %s223 = sphi 0, %s223
      %s225 = sphi 0, %s223
      %s226 = sphi 0, %s225
      %s240 = sphi 0, %s226
      %s244 = sphi 0, %s244
      %s246 = sphi 0, %s244
      %s247 = sphi 0, %s246
      %s261 = sphi 0, %s247
      %s265 = sphi 0, %s265
      %s267 = sphi 0, %s265
      %s268 = sphi 0, %s267
      %s282 = sphi 0, %s268
      %s286 = sphi 0, %s286
      %s288 = sphi 0, %s286
      %s289 = sphi 0, %s288
      %s303 = sphi 0, %s289
      %s307 = sphi 0, %s307
      %s309 = sphi 0, %s307
      %s310 = sphi 0, %s309
      %s324 = sphi 0, %s310
      %s328 = sphi 0, %s328
      %s330 = sphi 0, %s328
      %s331 = sphi 0, %s330
      %s345 = sphi 0, %s331
      %s351 = sphi 0, %s353
      %s354 = sphi 0, %s351
      %s355 = sphi 0, %s354
      %s371 = sphi 0, %s355
      %s377 = sphi 0, %s379
      %s380 = sphi 0, %s377
      %s381 = sphi 0, %s380
      %s397 = sphi 0, %s381
      %s403 = sphi 0, %s405
      %s406 = sphi 0, %s403
      %s407 = sphi 0, %s406
      %s423 = sphi 0, %s407
    $region4: #{tpu_custom_call.1} parent=1 // loop_header_branch
      %35 = sbr.rel (%p33) target = $region8
    $region5: #{tpu_custom_call.1} parent=1 // loop_body
      %s37 = ssub.s32 %s32, 1
      %s38 = ssub.s32 %s32, 2
      %s39 = sadd.s32 %s32, 1
      %s40 = ssub.s32 %s32, %s39
      %p41 = scmp.eq.s32.totalorder %s40, 0
      %s43 = sadd.s32 %s42, 1
      %s44 = scalar_select %p41, %s42, %s43
      %p47 = pneg %p41
      %p48 = scmp.eq.s32.totalorder %s32, 1
      %p49 = por %p47, %p48
      %p50 = scmp.ne.s32.totalorder %s42, %s45
      %p51 = scmp.eq.s32.totalorder %s32, 0
      %p52 = por %p50, %p51
      %p53 = scmp.ne.s32.totalorder %s42, %s45
      %p54 = scmp.eq.s32.totalorder %s37, 1
      %p55 = por %p53, %p54
      %p56 = scmp.ne.s32.totalorder %s45, %s46
      %p57 = scmp.eq.s32.totalorder %s37, 0
      %p58 = por %p56, %p57
      %p59 = scmp.ne.s32.totalorder %s45, %s46
      %p60 = scmp.eq.s32.totalorder %s38, 1
      %p61 = por %p59, %p60
      %p63 = scmp.ne.s32.totalorder %s46, %s62
      %p64 = scmp.eq.s32.totalorder %s38, 0
      %p65 = por %p63, %p64
      %s66 = ssub.s32 %s32, %s39
      %p67 = scmp.eq.s32.totalorder %s66, 0
      %s69 = sadd.s32 %s68, 1
      %s70 = scalar_select %p67, %s68, %s69
      %p73 = pneg %p67
      %p74 = scmp.eq.s32.totalorder %s32, 1
      %p75 = por %p73, %p74
      %p76 = scmp.ne.s32.totalorder %s68, %s71
      %p77 = scmp.eq.s32.totalorder %s32, 0
      %p78 = por %p76, %p77
      %p79 = scmp.ne.s32.totalorder %s68, %s71
      %p80 = scmp.eq.s32.totalorder %s37, 1
      %p81 = por %p79, %p80
      %p82 = scmp.ne.s32.totalorder %s71, %s72
      %p83 = scmp.eq.s32.totalorder %s37, 0
      %p84 = por %p82, %p83
      %p85 = scmp.ne.s32.totalorder %s71, %s72
      %p86 = scmp.eq.s32.totalorder %s38, 1
      %p87 = por %p85, %p86
      %p89 = scmp.ne.s32.totalorder %s72, %s88
      %p90 = scmp.eq.s32.totalorder %s38, 0
      %p91 = por %p89, %p90
      %s92 = ssub.s32 %s32, %s39
      %p93 = scmp.eq.s32.totalorder %s92, 0
      %s95 = sadd.s32 %s94, 1
      %s96 = scalar_select %p93, %s94, %s95
      %p99 = pneg %p93
      %p100 = scmp.eq.s32.totalorder %s32, 1
      %p101 = por %p99, %p100
      %p102 = scmp.ne.s32.totalorder %s94, %s97
      %p103 = scmp.eq.s32.totalorder %s32, 0
      %p104 = por %p102, %p103
      %p105 = scmp.ne.s32.totalorder %s94, %s97
      %p106 = scmp.eq.s32.totalorder %s37, 1
      %p107 = por %p105, %p106
      %p108 = scmp.ne.s32.totalorder %s97, %s98
      %p109 = scmp.eq.s32.totalorder %s37, 0
      %p110 = por %p108, %p109
      %p111 = scmp.ne.s32.totalorder %s97, %s98
      %p112 = scmp.eq.s32.totalorder %s38, 1
      %p113 = por %p111, %p112
      %p115 = scmp.ne.s32.totalorder %s98, %s114
      %p116 = scmp.eq.s32.totalorder %s38, 0
      %p117 = por %p115, %p116
      %s119 = sadd.s32 %s118, 1
      %p122 = scmp.eq.s32.totalorder %s32, 1
      %p123 = scmp.ne.s32.totalorder %s118, %s120
      %p124 = scmp.eq.s32.totalorder %s32, 0
      %p125 = por %p123, %p124
      %p126 = scmp.ne.s32.totalorder %s118, %s120
      %p127 = scmp.eq.s32.totalorder %s37, 1
      %p128 = por %p126, %p127
      %p129 = scmp.ne.s32.totalorder %s120, %s121
      %p130 = scmp.eq.s32.totalorder %s37, 0
      %p131 = por %p129, %p130
      %p132 = scmp.ne.s32.totalorder %s120, %s121
      %p133 = scmp.eq.s32.totalorder %s38, 1
      %p134 = por %p132, %p133
      %p136 = scmp.ne.s32.totalorder %s121, %s135
      %p137 = scmp.eq.s32.totalorder %s38, 0
      %p138 = por %p136, %p137
      %s140 = sadd.s32 %s139, 1
      %p143 = scmp.eq.s32.totalorder %s32, 1
      %p144 = scmp.ne.s32.totalorder %s139, %s141
      %p145 = scmp.eq.s32.totalorder %s32, 0
      %p146 = por %p144, %p145
      %p147 = scmp.ne.s32.totalorder %s139, %s141
      %p148 = scmp.eq.s32.totalorder %s37, 1
      %p149 = por %p147, %p148
      %p150 = scmp.ne.s32.totalorder %s141, %s142
      %p151 = scmp.eq.s32.totalorder %s37, 0
      %p152 = por %p150, %p151
      %p153 = scmp.ne.s32.totalorder %s141, %s142
      %p154 = scmp.eq.s32.totalorder %s38, 1
      %p155 = por %p153, %p154
      %p157 = scmp.ne.s32.totalorder %s142, %s156
      %p158 = scmp.eq.s32.totalorder %s38, 0
      %p159 = por %p157, %p158
      %s161 = sadd.s32 %s160, 1
      %p164 = scmp.eq.s32.totalorder %s32, 1
      %p165 = scmp.ne.s32.totalorder %s160, %s162
      %p166 = scmp.eq.s32.totalorder %s32, 0
      %p167 = por %p165, %p166
      %p168 = scmp.ne.s32.totalorder %s160, %s162
      %p169 = scmp.eq.s32.totalorder %s37, 1
      %p170 = por %p168, %p169
      %p171 = scmp.ne.s32.totalorder %s162, %s163
      %p172 = scmp.eq.s32.totalorder %s37, 0
      %p173 = por %p171, %p172
      %p174 = scmp.ne.s32.totalorder %s162, %s163
      %p175 = scmp.eq.s32.totalorder %s38, 1
      %p176 = por %p174, %p175
      %p178 = scmp.ne.s32.totalorder %s163, %s177
      %p179 = scmp.eq.s32.totalorder %s38, 0
      %p180 = por %p178, %p179
      %s182 = sadd.s32 %s181, 1
      %p185 = scmp.eq.s32.totalorder %s32, 1
      %p186 = scmp.ne.s32.totalorder %s181, %s183
      %p187 = scmp.eq.s32.totalorder %s32, 0
      %p188 = por %p186, %p187
      %p189 = scmp.ne.s32.totalorder %s181, %s183
      %p190 = scmp.eq.s32.totalorder %s37, 1
      %p191 = por %p189, %p190
      %p192 = scmp.ne.s32.totalorder %s183, %s184
      %p193 = scmp.eq.s32.totalorder %s37, 0
      %p194 = por %p192, %p193
      %p195 = scmp.ne.s32.totalorder %s183, %s184
      %p196 = scmp.eq.s32.totalorder %s38, 1
      %p197 = por %p195, %p196
      %p199 = scmp.ne.s32.totalorder %s184, %s198
      %p200 = scmp.eq.s32.totalorder %s38, 0
      %p201 = por %p199, %p200
      %s203 = sadd.s32 %s202, 1
      %p206 = scmp.eq.s32.totalorder %s32, 1
      %p207 = scmp.ne.s32.totalorder %s202, %s204
      %p208 = scmp.eq.s32.totalorder %s32, 0
      %p209 = por %p207, %p208
      %p210 = scmp.ne.s32.totalorder %s202, %s204
      %p211 = scmp.eq.s32.totalorder %s37, 1
      %p212 = por %p210, %p211
      %p213 = scmp.ne.s32.totalorder %s204, %s205
      %p214 = scmp.eq.s32.totalorder %s37, 0
      %p215 = por %p213, %p214
      %p216 = scmp.ne.s32.totalorder %s204, %s205
      %p217 = scmp.eq.s32.totalorder %s38, 1
      %p218 = por %p216, %p217
      %p220 = scmp.ne.s32.totalorder %s205, %s219
      %p221 = scmp.eq.s32.totalorder %s38, 0
      %p222 = por %p220, %p221
      %s224 = sadd.s32 %s223, 1
      %p227 = scmp.eq.s32.totalorder %s32, 1
      %p228 = scmp.ne.s32.totalorder %s223, %s225
      %p229 = scmp.eq.s32.totalorder %s32, 0
      %p230 = por %p228, %p229
      %p231 = scmp.ne.s32.totalorder %s223, %s225
      %p232 = scmp.eq.s32.totalorder %s37, 1
      %p233 = por %p231, %p232
      %p234 = scmp.ne.s32.totalorder %s225, %s226
      %p235 = scmp.eq.s32.totalorder %s37, 0
      %p236 = por %p234, %p235
      %p237 = scmp.ne.s32.totalorder %s225, %s226
      %p238 = scmp.eq.s32.totalorder %s38, 1
      %p239 = por %p237, %p238
      %p241 = scmp.ne.s32.totalorder %s226, %s240
      %p242 = scmp.eq.s32.totalorder %s38, 0
      %p243 = por %p241, %p242
      %s245 = sadd.s32 %s244, 1
      %p248 = scmp.eq.s32.totalorder %s32, 1
      %p249 = scmp.ne.s32.totalorder %s244, %s246
      %p250 = scmp.eq.s32.totalorder %s32, 0
      %p251 = por %p249, %p250
      %p252 = scmp.ne.s32.totalorder %s244, %s246
      %p253 = scmp.eq.s32.totalorder %s37, 1
      %p254 = por %p252, %p253
      %p255 = scmp.ne.s32.totalorder %s246, %s247
      %p256 = scmp.eq.s32.totalorder %s37, 0
      %p257 = por %p255, %p256
      %p258 = scmp.ne.s32.totalorder %s246, %s247
      %p259 = scmp.eq.s32.totalorder %s38, 1
      %p260 = por %p258, %p259
      %p262 = scmp.ne.s32.totalorder %s247, %s261
      %p263 = scmp.eq.s32.totalorder %s38, 0
      %p264 = por %p262, %p263
      %s266 = sadd.s32 %s265, 1
      %p269 = scmp.eq.s32.totalorder %s32, 1
      %p270 = scmp.ne.s32.totalorder %s265, %s267
      %p271 = scmp.eq.s32.totalorder %s32, 0
      %p272 = por %p270, %p271
      %p273 = scmp.ne.s32.totalorder %s265, %s267
      %p274 = scmp.eq.s32.totalorder %s37, 1
      %p275 = por %p273, %p274
      %p276 = scmp.ne.s32.totalorder %s267, %s268
      %p277 = scmp.eq.s32.totalorder %s37, 0
      %p278 = por %p276, %p277
      %p279 = scmp.ne.s32.totalorder %s267, %s268
      %p280 = scmp.eq.s32.totalorder %s38, 1
      %p281 = por %p279, %p280
      %p283 = scmp.ne.s32.totalorder %s268, %s282
      %p284 = scmp.eq.s32.totalorder %s38, 0
      %p285 = por %p283, %p284
      %s287 = sadd.s32 %s286, 1
      %p290 = scmp.eq.s32.totalorder %s32, 1
      %p291 = scmp.ne.s32.totalorder %s286, %s288
      %p292 = scmp.eq.s32.totalorder %s32, 0
      %p293 = por %p291, %p292
      %p294 = scmp.ne.s32.totalorder %s286, %s288
      %p295 = scmp.eq.s32.totalorder %s37, 1
      %p296 = por %p294, %p295
      %p297 = scmp.ne.s32.totalorder %s288, %s289
      %p298 = scmp.eq.s32.totalorder %s37, 0
      %p299 = por %p297, %p298
      %p300 = scmp.ne.s32.totalorder %s288, %s289
      %p301 = scmp.eq.s32.totalorder %s38, 1
      %p302 = por %p300, %p301
      %p304 = scmp.ne.s32.totalorder %s289, %s303
      %p305 = scmp.eq.s32.totalorder %s38, 0
      %p306 = por %p304, %p305
      %s308 = sadd.s32 %s307, 1
      %p311 = scmp.eq.s32.totalorder %s32, 1
      %p312 = scmp.ne.s32.totalorder %s307, %s309
      %p313 = scmp.eq.s32.totalorder %s32, 0
      %p314 = por %p312, %p313
      %p315 = scmp.ne.s32.totalorder %s307, %s309
      %p316 = scmp.eq.s32.totalorder %s37, 1
      %p317 = por %p315, %p316
      %p318 = scmp.ne.s32.totalorder %s309, %s310
      %p319 = scmp.eq.s32.totalorder %s37, 0
      %p320 = por %p318, %p319
      %p321 = scmp.ne.s32.totalorder %s309, %s310
      %p322 = scmp.eq.s32.totalorder %s38, 1
      %p323 = por %p321, %p322
      %p325 = scmp.ne.s32.totalorder %s310, %s324
      %p326 = scmp.eq.s32.totalorder %s38, 0
      %p327 = por %p325, %p326
      %s329 = sadd.s32 %s328, 1
      %p332 = scmp.eq.s32.totalorder %s32, 1
      %p333 = scmp.ne.s32.totalorder %s328, %s330
      %p334 = scmp.eq.s32.totalorder %s32, 0
      %p335 = por %p333, %p334
      %p336 = scmp.ne.s32.totalorder %s328, %s330
      %p337 = scmp.eq.s32.totalorder %s37, 1
      %p338 = por %p336, %p337
      %p339 = scmp.ne.s32.totalorder %s330, %s331
      %p340 = scmp.eq.s32.totalorder %s37, 0
      %p341 = por %p339, %p340
      %p342 = scmp.ne.s32.totalorder %s330, %s331
      %p343 = scmp.eq.s32.totalorder %s38, 1
      %p344 = por %p342, %p343
      %p346 = scmp.ne.s32.totalorder %s331, %s345
      %p347 = scmp.eq.s32.totalorder %s38, 0
      %p348 = por %p346, %p347
      %s349 = ssub.s32 %s32, %s39
      %p350 = scmp.eq.s32.totalorder %s349, 0
      %s352 = sadd.s32 %s351, 1
      %s353 = scalar_select %p350, %s351, %s352
      %p356 = pneg %p350
      %p357 = scmp.eq.s32.totalorder %s32, 1
      %p358 = por %p356, %p357
      %p359 = scmp.ne.s32.totalorder %s351, %s354
      %p360 = scmp.eq.s32.totalorder %s32, 0
      %p361 = por %p359, %p360
      %p362 = scmp.ne.s32.totalorder %s351, %s354
      %p363 = scmp.eq.s32.totalorder %s37, 1
      %p364 = por %p362, %p363
      %p365 = scmp.ne.s32.totalorder %s354, %s355
      %p366 = scmp.eq.s32.totalorder %s37, 0
      %p367 = por %p365, %p366
      %p368 = scmp.ne.s32.totalorder %s354, %s355
      %p369 = scmp.eq.s32.totalorder %s38, 1
      %p370 = por %p368, %p369
      %p372 = scmp.ne.s32.totalorder %s355, %s371
      %p373 = scmp.eq.s32.totalorder %s38, 0
      %p374 = por %p372, %p373
      %s375 = ssub.s32 %s32, %s39
      %p376 = scmp.eq.s32.totalorder %s375, 0
      %s378 = sadd.s32 %s377, 1
      %s379 = scalar_select %p376, %s377, %s378
      %p382 = pneg %p376
      %p383 = scmp.eq.s32.totalorder %s32, 1
      %p384 = por %p382, %p383
      %p385 = scmp.ne.s32.totalorder %s377, %s380
      %p386 = scmp.eq.s32.totalorder %s32, 0
      %p387 = por %p385, %p386
      %p388 = scmp.ne.s32.totalorder %s377, %s380
      %p389 = scmp.eq.s32.totalorder %s37, 1
      %p390 = por %p388, %p389
      %p391 = scmp.ne.s32.totalorder %s380, %s381
      %p392 = scmp.eq.s32.totalorder %s37, 0
      %p393 = por %p391, %p392
      %p394 = scmp.ne.s32.totalorder %s380, %s381
      %p395 = scmp.eq.s32.totalorder %s38, 1
      %p396 = por %p394, %p395
      %p398 = scmp.ne.s32.totalorder %s381, %s397
      %p399 = scmp.eq.s32.totalorder %s38, 0
      %p400 = por %p398, %p399
      %s401 = ssub.s32 %s32, %s39
      %p402 = scmp.eq.s32.totalorder %s401, 0
      %s404 = sadd.s32 %s403, 1
      %s405 = scalar_select %p402, %s403, %s404
      %p408 = pneg %p402
      %p409 = scmp.eq.s32.totalorder %s32, 1
      %p410 = por %p408, %p409
      %p411 = scmp.ne.s32.totalorder %s403, %s406
      %p412 = scmp.eq.s32.totalorder %s32, 0
      %p413 = por %p411, %p412
      %p414 = scmp.ne.s32.totalorder %s403, %s406
      %p415 = scmp.eq.s32.totalorder %s37, 1
      %p416 = por %p414, %p415
      %p417 = scmp.ne.s32.totalorder %s406, %s407
      %p418 = scmp.eq.s32.totalorder %s37, 0
      %p419 = por %p417, %p418
      %p420 = scmp.ne.s32.totalorder %s406, %s407
      %p421 = scmp.eq.s32.totalorder %s38, 1
      %p422 = por %p420, %p421
      %p424 = scmp.ne.s32.totalorder %s407, %s423
      %p425 = scmp.eq.s32.totalorder %s38, 0
      %p426 = por %p424, %p425
      %p427 = scmp.le.s32.totalorder 1, %s32
      %p428 = scmp.lt.s32.totalorder %s32, 3
      %p429 = pnand %p427, %p428
      %p430 = pneg %p429
      // Predicated region
      $region9: #{tpu_custom_call.1} parent=5 // pred_check
        _
      $region10: #{tpu_custom_call.1} parent=5 // pred_check_branch
        %432 = sbr.rel (%p429) target = $region12
      $region11: #{tpu_custom_call.1} parent=5 // pred_region
        %s433 = ssub.s32 %s32, 1
        // Predicated region
        $region13: #{tpu_custom_call.1} parent=11 // pred_check
          %p434 = pneg %p131
        $region14: #{tpu_custom_call.1} parent=11 // pred_check_branch
          %436 = sbr.rel (%p434) target = $region16
        $region15: #{tpu_custom_call.1} parent=11 // pred_region
          _
        $region16: #{tpu_custom_call.1} parent=11 // pred_fallthru
          _
        // Predicated region
        $region17: #{tpu_custom_call.1} parent=11 // pred_check
          %p437 = pneg %p152
        $region18: #{tpu_custom_call.1} parent=11 // pred_check_branch
          %439 = sbr.rel (%p437) target = $region20
        $region19: #{tpu_custom_call.1} parent=11 // pred_region
          _
        $region20: #{tpu_custom_call.1} parent=11 // pred_fallthru
          _
        // Predicated region
        $region21: #{tpu_custom_call.1} parent=11 // pred_check
          %p440 = pneg %p173
        $region22: #{tpu_custom_call.1} parent=11 // pred_check_branch
          %442 = sbr.rel (%p440) target = $region24
        $region23: #{tpu_custom_call.1} parent=11 // pred_region
          %s444 = ssub.s32 16384, 16384
          %445 = vsyncadd [#allocation5], %s444
          %s446 = sshll.u32 [#allocation4], 4
          %s447 = int_to_ptr.vmem [resolvable:$true] %s446
          %452 = dma.hbm_to_vmem [thread:$0]  %s5, 16384, %s447, [#allocation5], 128, 128, 8
        $region24: #{tpu_custom_call.1} parent=11 // pred_fallthru
          _
        // Predicated region
        $region25: #{tpu_custom_call.1} parent=11 // pred_check
          %p453 = pneg %p194
        $region26: #{tpu_custom_call.1} parent=11 // pred_check_branch
          %455 = sbr.rel (%p453) target = $region28
        $region27: #{tpu_custom_call.1} parent=11 // pred_region
          _
        $region28: #{tpu_custom_call.1} parent=11 // pred_fallthru
          _
        // Predicated region
        $region29: #{tpu_custom_call.1} parent=11 // pred_check
          %p456 = pneg %p215
        $region30: #{tpu_custom_call.1} parent=11 // pred_check_branch
          %458 = sbr.rel (%p456) target = $region32
        $region31: #{tpu_custom_call.1} parent=11 // pred_region
          %s460 = ssub.s32 16384, 16384
          %461 = vsyncadd [#allocation8], %s460
          %s462 = sshll.u32 [#allocation7], 4
          %s463 = int_to_ptr.vmem [resolvable:$true] %s462
          %468 = dma.hbm_to_vmem [thread:$0]  %s7, 16384, %s463, [#allocation8], 512, 512, 32
        $region32: #{tpu_custom_call.1} parent=11 // pred_fallthru
          _
        // Predicated region
        $region33: #{tpu_custom_call.1} parent=11 // pred_check
          %p469 = pneg %p236
        $region34: #{tpu_custom_call.1} parent=11 // pred_check_branch
          %471 = sbr.rel (%p469) target = $region36
        $region35: #{tpu_custom_call.1} parent=11 // pred_region
          %s473 = ssub.s32 16384, 16384
          %474 = vsyncadd [#allocation8], %s473
          %s475 = sshll.u32 [#allocation9], 4
          %s476 = int_to_ptr.vmem [resolvable:$true] %s475
          %481 = dma.hbm_to_vmem [thread:$0]  %s8, 16384, %s476, [#allocation8], 512, 512, 32
        $region36: #{tpu_custom_call.1} parent=11 // pred_fallthru
          _
        // Predicated region
        $region37: #{tpu_custom_call.1} parent=11 // pred_check
          %p482 = pneg %p257
        $region38: #{tpu_custom_call.1} parent=11 // pred_check_branch
          %484 = sbr.rel (%p482) target = $region40
        $region39: #{tpu_custom_call.1} parent=11 // pred_region
          _
        $region40: #{tpu_custom_call.1} parent=11 // pred_fallthru
          _
        // Predicated region
        $region41: #{tpu_custom_call.1} parent=11 // pred_check
          %p485 = pneg %p278
        $region42: #{tpu_custom_call.1} parent=11 // pred_check_branch
          %487 = sbr.rel (%p485) target = $region44
        $region43: #{tpu_custom_call.1} parent=11 // pred_region
          %s489 = ssub.s32 8192, 8192
          %490 = vsyncadd [#allocation11], %s489
          %s491 = sshll.u32 [#allocation10], 4
          %s492 = int_to_ptr.vmem [resolvable:$true] %s491
          %497 = dma.hbm_to_vmem [thread:$0]  %s10, 8192, %s492, [#allocation11], 256, 256, 16
        $region44: #{tpu_custom_call.1} parent=11 // pred_fallthru
          _
        // Predicated region
        $region45: #{tpu_custom_call.1} parent=11 // pred_check
          %p498 = pneg %p299
        $region46: #{tpu_custom_call.1} parent=11 // pred_check_branch
          %500 = sbr.rel (%p498) target = $region48
        $region47: #{tpu_custom_call.1} parent=11 // pred_region
          _
        $region48: #{tpu_custom_call.1} parent=11 // pred_fallthru
          _
        // Predicated region
        $region49: #{tpu_custom_call.1} parent=11 // pred_check
          %p501 = pneg %p320
        $region50: #{tpu_custom_call.1} parent=11 // pred_check_branch
          %503 = sbr.rel (%p501) target = $region52
        $region51: #{tpu_custom_call.1} parent=11 // pred_region
          %s505 = ssub.s32 4096, 4096
          %506 = vsyncadd [#allocation11], %s505
          %s507 = sshll.u32 [#allocation12], 4
          %s508 = int_to_ptr.vmem [resolvable:$true] %s507
          %513 = dma.hbm_to_vmem [thread:$0]  %s12, 4096, %s508, [#allocation11], 64, 64, 4
        $region52: #{tpu_custom_call.1} parent=11 // pred_fallthru
          _
        // Predicated region
        $region53: #{tpu_custom_call.1} parent=11 // pred_check
          %p514 = pneg %p341
        $region54: #{tpu_custom_call.1} parent=11 // pred_check_branch
          %516 = sbr.rel (%p514) target = $region56
        $region55: #{tpu_custom_call.1} parent=11 // pred_region
          _
        $region56: #{tpu_custom_call.1} parent=11 // pred_fallthru
          _
      $region12: #{tpu_custom_call.1} parent=5 // pred_fallthru
        _
      %p517 = scmp.lt.s32.totalorder %s32, 2
      // Predicated region
      $region57: #{tpu_custom_call.1} parent=5 // pred_check
        %p518 = pneg %p517
      $region58: #{tpu_custom_call.1} parent=5 // pred_check_branch
        %520 = sbr.rel (%p518) target = $region60
      $region59: #{tpu_custom_call.1} parent=5 // pred_region
        // Predicated region
        $region61: #{tpu_custom_call.1} parent=59 // pred_check
          %p521 = pneg %p52
        $region62: #{tpu_custom_call.1} parent=59 // pred_check_branch
          %523 = sbr.rel (%p521) target = $region64
        $region63: #{tpu_custom_call.1} parent=59 // pred_region
          %p524 = scmp.lt.s32.totalorder %s32, 1
          %s525 = scalar_select %p524, %s32, 1
          %s526 = smul.addr %s525, 8
          %s527 = smul.addr %s526, 8
          %s528 = scalar_lea.vmem %s0, %s527
        $region64: #{tpu_custom_call.1} parent=59 // pred_fallthru
          _
        // Predicated region
        $region65: #{tpu_custom_call.1} parent=59 // pred_check
          %p529 = pneg %p78
        $region66: #{tpu_custom_call.1} parent=59 // pred_check_branch
          %531 = sbr.rel (%p529) target = $region68
        $region67: #{tpu_custom_call.1} parent=59 // pred_region
          %p532 = scmp.lt.s32.totalorder %s32, 1
          %s533 = scalar_select %p532, %s32, 1
          %s534 = smul.addr %s533, 2
          %s535 = smul.addr %s534, 8
          %s536 = scalar_lea.vmem %s1, %s535
        $region68: #{tpu_custom_call.1} parent=59 // pred_fallthru
          _
        // Predicated region
        $region69: #{tpu_custom_call.1} parent=59 // pred_check
          %p537 = pneg %p104
        $region70: #{tpu_custom_call.1} parent=59 // pred_check_branch
          %539 = sbr.rel (%p537) target = $region72
        $region71: #{tpu_custom_call.1} parent=59 // pred_region
          %p540 = scmp.lt.s32.totalorder %s32, 1
          %s541 = scalar_select %p540, %s32, 1
          %s542 = smul.addr %s541, 2
          %s543 = smul.addr %s542, 8
          %s544 = scalar_lea.vmem %s2, %s543
        $region72: #{tpu_custom_call.1} parent=59 // pred_fallthru
          _
      $region60: #{tpu_custom_call.1} parent=5 // pred_fallthru
        _
      %p545 = scmp.le.s32.totalorder 1, %s32
      %p546 = scmp.lt.s32.totalorder %s32, 3
      %p547 = pnand %p545, %p546
      %p548 = pneg %p547
      // Predicated region
      $region73: #{tpu_custom_call.1} parent=5 // pred_check
        _
      $region74: #{tpu_custom_call.1} parent=5 // pred_check_branch
        %550 = sbr.rel (%p547) target = $region76
      $region75: #{tpu_custom_call.1} parent=5 // pred_region
        %s551 = ssub.s32 %s32, 1
        // Predicated region
        $region77: #{tpu_custom_call.1} parent=75 // pred_check
          %p552 = pneg %p173
        $region78: #{tpu_custom_call.1} parent=75 // pred_check_branch
          %554 = sbr.rel (%p552) target = $region80
        $region79: #{tpu_custom_call.1} parent=75 // pred_region
          %555 = dma.done [#allocation5], 16384
        $region80: #{tpu_custom_call.1} parent=75 // pred_fallthru
          _
        // Predicated region
        $region81: #{tpu_custom_call.1} parent=75 // pred_check
          %p556 = pneg %p215
        $region82: #{tpu_custom_call.1} parent=75 // pred_check_branch
          %558 = sbr.rel (%p556) target = $region84
        $region83: #{tpu_custom_call.1} parent=75 // pred_region
          %559 = dma.done [#allocation8], 16384
        $region84: #{tpu_custom_call.1} parent=75 // pred_fallthru
          _
        // Predicated region
        $region85: #{tpu_custom_call.1} parent=75 // pred_check
          %p560 = pneg %p236
        $region86: #{tpu_custom_call.1} parent=75 // pred_check_branch
          %562 = sbr.rel (%p560) target = $region88
        $region87: #{tpu_custom_call.1} parent=75 // pred_region
          %563 = dma.done [#allocation8], 16384
        $region88: #{tpu_custom_call.1} parent=75 // pred_fallthru
          _
        // Predicated region
        $region89: #{tpu_custom_call.1} parent=75 // pred_check
          %p564 = pneg %p278
        $region90: #{tpu_custom_call.1} parent=75 // pred_check_branch
          %566 = sbr.rel (%p564) target = $region92
        $region91: #{tpu_custom_call.1} parent=75 // pred_region
          %567 = dma.done [#allocation11], 8192
        $region92: #{tpu_custom_call.1} parent=75 // pred_fallthru
          _
        // Predicated region
        $region93: #{tpu_custom_call.1} parent=75 // pred_check
          %p568 = pneg %p320
        $region94: #{tpu_custom_call.1} parent=75 // pred_check_branch
          %570 = sbr.rel (%p568) target = $region96
        $region95: #{tpu_custom_call.1} parent=75 // pred_region
          %571 = dma.done [#allocation11], 4096
        $region96: #{tpu_custom_call.1} parent=75 // pred_fallthru
          _
        %p572 = scmp.lt.s32.totalorder %s37, 1
        %s573 = scalar_select %p572, %s37, 1
        %s574 = smul.addr %s573, 8
        %s575 = smul.addr %s574, 8
        %s576 = scalar_lea.vmem %s0, %s575
        %p577 = pneg %p58
        %p578 = pneg %p55
        %p579 = scmp.lt.s32.totalorder %s37, 1
        %s580 = scalar_select %p579, %s37, 1
        %s581 = smul.addr %s580, 2
        %s582 = smul.addr %s581, 8
        %s583 = scalar_lea.vmem %s1, %s582
        %p584 = pneg %p84
        %p585 = pneg %p81
        %p586 = scmp.lt.s32.totalorder %s37, 1
        %s587 = scalar_select %p586, %s37, 1
        %s588 = smul.addr %s587, 2
        %s589 = smul.addr %s588, 8
        %s590 = scalar_lea.vmem %s2, %s589
        %p591 = pneg %p110
        %p592 = pneg %p107
        %p593 = pneg %p131
        %p594 = pneg %p128
        %p595 = pneg %p152
        %p596 = pneg %p149
        %p597 = pneg %p173
        %p598 = pneg %p170
        %p599 = pneg %p194
        %p600 = pneg %p191
        %p601 = pneg %p215
        %p602 = pneg %p212
        %p603 = pneg %p236
        %p604 = pneg %p233
        %p605 = pneg %p257
        %p606 = pneg %p254
        %p607 = pneg %p278
        %p608 = pneg %p275
        %p609 = pneg %p299
        %p610 = pneg %p296
        %p611 = pneg %p320
        %p612 = pneg %p317
        %p613 = pneg %p341
        %p614 = pneg %p338
        %p615 = pneg %p367
        %p616 = pneg %p364
        %s617 = sand.u32 %s354, 1
        %s618 = scalar_lea.sflag [#allocation6], %s617
        %s619 = sand.u32 %s354, 1
        %s620 = smul.addr %s619, 64
        %s621 = scalar_lea.vmem [#allocation13], %s620
        %p622 = pneg %p393
        %p623 = pneg %p390
        %s624 = sand.u32 %s37, 1
        %s625 = scalar_lea.sflag [#allocation15], %s624
        %s626 = sand.u32 %s380, 1
        %s627 = smul.addr %s626, 16
        %s628 = scalar_lea.vmem [#allocation14], %s627
        %p629 = pneg %p419
        %p630 = pneg %p416
        %s631 = sand.u32 %s37, 1
        %s632 = scalar_lea.sflag [#allocation15], %s631
        %s633 = sand.u32 %s406, 1
        %s634 = smul.addr %s633, 16
        %s635 = scalar_lea.vmem [#allocation16], %s634
        %p636 = scmp.lt.s32.totalorder %s37, 1
        %s637 = scalar_select %p636, %s37, 1
        %s638 = smul.addr %s637, 8
        %s639 = smul.addr %s638, 8
        %s640 = scalar_lea.vmem %s0, %s639
        %p641 = scmp.lt.s32.totalorder %s37, 1
        %s642 = scalar_select %p641, %s37, 1
        %s643 = smul.addr %s642, 2
        %s644 = smul.addr %s643, 8
        %s645 = scalar_lea.vmem %s1, %s644
        %p646 = scmp.lt.s32.totalorder %s37, 1
        %s647 = scalar_select %p646, %s37, 1
        %s648 = smul.addr %s647, 2
        %s649 = smul.addr %s648, 8
        %s650 = scalar_lea.vmem %s2, %s649
        %v652 = vld [vmem:[%s640] sm:$0xff]
        %v653 = vld [vmem:[%s640 + $0x8] sm:$0xff]
        %v654 = vld [vmem:[%s640 + $0x10] sm:$0xff]
        %v655 = vld [vmem:[%s640 + $0x18] sm:$0xff]
        %v656 = vld [vmem:[%s640 + $0x20] sm:$0xff]
        %v657 = vld [vmem:[%s640 + $0x28] sm:$0xff]
        %v658 = vld [vmem:[%s640 + $0x30] sm:$0xff]
        %v659 = vld [vmem:[%s640 + $0x38] sm:$0xff]
        %v660 = vpack.c.bf16 %v653, %v652
        %v661 = vpack.c.bf16 %v655, %v654
        %v662 = vpack.c.bf16 %v657, %v656
        %v663 = vpack.c.bf16 %v659, %v658
        %v664 = vld [vmem:[%s3] sm:$0xff]
        %v665 = vld [vmem:[%s3 + $0x8] sm:$0xff]
        %v666 = vld [vmem:[%s3 + $0x10] sm:$0xff]
        %v667 = vld [vmem:[%s3 + $0x18] sm:$0xff]
        %v668 = vld [vmem:[%s3 + $0x20] sm:$0xff]
        %v669 = vld [vmem:[%s3 + $0x28] sm:$0xff]
        %v670 = vld [vmem:[%s3 + $0x30] sm:$0xff]
        %v671 = vld [vmem:[%s3 + $0x38] sm:$0xff]
        %v672 = vld [vmem:[%s3 + $0x40] sm:$0xff]
        %v673 = vld [vmem:[%s3 + $0x48] sm:$0xff]
        %v674 = vld [vmem:[%s3 + $0x50] sm:$0xff]
        %v675 = vld [vmem:[%s3 + $0x58] sm:$0xff]
        %v676 = vld [vmem:[%s3 + $0x60] sm:$0xff]
        %v677 = vld [vmem:[%s3 + $0x68] sm:$0xff]
        %v678 = vld [vmem:[%s3 + $0x70] sm:$0xff]
        %v679 = vld [vmem:[%s3 + $0x78] sm:$0xff]
        %v680 = vld [vmem:[%s4] sm:$0xff]
        %v682 = vlaneseq
        %v683 = vshrl.u32 %v682, 7
        %v684 = vsub.s32 0, %v683
        %v685 = vrot.slane %v680, %v684
        %v686 = vlaneseq
        %v687 = vshrl.u32 %v686, 7
        %v688 = vsub.s32 1, %v687
        %v689 = vrot.slane %v680, %v688
        %v690 = vlaneseq
        %v691 = vshrl.u32 %v690, 7
        %v692 = vsub.s32 2, %v691
        %v693 = vrot.slane %v680, %v692
        %v694 = vlaneseq
        %v695 = vshrl.u32 %v694, 7
        %v696 = vsub.s32 3, %v695
        %v697 = vrot.slane %v680, %v696
        %v698 = vlaneseq
        %v699 = vshrl.u32 %v698, 7
        %v700 = vsub.s32 4, %v699
        %v701 = vrot.slane %v680, %v700
        %v702 = vlaneseq
        %v703 = vshrl.u32 %v702, 7
        %v704 = vsub.s32 5, %v703
        %v705 = vrot.slane %v680, %v704
        %v706 = vlaneseq
        %v707 = vshrl.u32 %v706, 7
        %v708 = vsub.s32 6, %v707
        %v709 = vrot.slane %v680, %v708
        %v710 = vlaneseq
        %v711 = vshrl.u32 %v710, 7
        %v712 = vsub.s32 7, %v711
        %v713 = vrot.slane %v680, %v712
        %v738 = vunpack.c.l.b16 %v664
        %v739 = vunpack.c.h.b16 %v664
        %v740 = vunpack.c.l.b16 %v665
        %v741 = vunpack.c.h.b16 %v665
        %v742 = vunpack.c.l.b16 %v666
        %v743 = vunpack.c.h.b16 %v666
        %v744 = vunpack.c.l.b16 %v667
        %v745 = vunpack.c.h.b16 %v667
        %v746 = vunpack.c.l.b16 %v668
        %v747 = vunpack.c.h.b16 %v668
        %v748 = vunpack.c.l.b16 %v669
        %v749 = vunpack.c.h.b16 %v669
        %v750 = vunpack.c.l.b16 %v670
        %v751 = vunpack.c.h.b16 %v670
        %v752 = vunpack.c.l.b16 %v671
        %v753 = vunpack.c.h.b16 %v671
        %v754 = vunpack.c.l.b16 %v672
        %v755 = vunpack.c.h.b16 %v672
        %v756 = vunpack.c.l.b16 %v673
        %v757 = vunpack.c.h.b16 %v673
        %v758 = vunpack.c.l.b16 %v674
        %v759 = vunpack.c.h.b16 %v674
        %v760 = vunpack.c.l.b16 %v675
        %v761 = vunpack.c.h.b16 %v675
        %v762 = vunpack.c.l.b16 %v676
        %v763 = vunpack.c.h.b16 %v676
        %v764 = vunpack.c.l.b16 %v677
        %v765 = vunpack.c.h.b16 %v677
        %v766 = vunpack.c.l.b16 %v678
        %v767 = vunpack.c.h.b16 %v678
        %v768 = vunpack.c.l.b16 %v679
        %v769 = vunpack.c.h.b16 %v679
        %v770 = vpack.c.b16 %v746, %v738
        %v771 = vpack.c.b16 %v747, %v739
        %v772 = vpack.c.b16 %v748, %v740
        %v773 = vpack.c.b16 %v749, %v741
        %v774 = vpack.c.b16 %v750, %v742
        %v775 = vpack.c.b16 %v751, %v743
        %v776 = vpack.c.b16 %v752, %v744
        %v777 = vpack.c.b16 %v753, %v745
        %v778 = vpack.c.b16 %v762, %v754
        %v779 = vpack.c.b16 %v763, %v755
        %v780 = vpack.c.b16 %v764, %v756
        %v781 = vpack.c.b16 %v765, %v757
        %v782 = vpack.c.b16 %v766, %v758
        %v783 = vpack.c.b16 %v767, %v759
        %v784 = vpack.c.b16 %v768, %v760
        %v785 = vpack.c.b16 %v769, %v761
        %vm802 = vcmask 261120
        %v804 = vsel %vm802, %v660, 0
        %v807 = vsel %vm802, %v661, 0
        %v810 = vsel %vm802, %v662, 0
        %v813 = vsel %vm802, %v663, 0
        %815 = vmatprep.subr.bf16.mxu0 %v771
        %816 = vmatpush1.bf16.msra.mxu0 %v770
        %817 = vmatprep.subr.bf16.mxu0 %v779
        %818 = vmatpush1.bf16.msra.mxu0 %v778
        %819 = vmatprep.subr.bf16.mxu0 0
        %820 = vmatpush1.bf16.msra.mxu0 0
        %821 = vmatprep.subr.bf16.mxu0 0
        %822 = vmatpush1.bf16.msra.mxu0 0
        %823 = vmatprep.subr.bf16.mxu0 0
        %824 = vmatpush1.bf16.msra.mxu0 0
        %825 = vmatprep.subr.bf16.mxu0 0
        %826 = vmatpush1.bf16.msra.mxu0 0
        %827 = vmatprep.subr.bf16.mxu0 0
        %828 = vmatpush1.bf16.msra.mxu0 0
        %829 = vmatprep.subr.bf16.mxu0 0
        %830 = vmatpush1.bf16.msra.mxu0 0
        %831 = vmatprep.subr.bf16.mxu0 0
        %832 = vmatpush1.bf16.msra.mxu0 0
        %833 = vmatprep.subr.bf16.mxu0 0
        %834 = vmatpush1.bf16.msra.mxu0 0
        %835 = vmatprep.subr.bf16.mxu0 0
        %836 = vmatpush1.bf16.msra.mxu0 0
        %837 = vmatprep.subr.bf16.mxu0 0
        %838 = vmatpush1.bf16.msra.mxu0 0
        %839 = vmatprep.subr.bf16.mxu0 0
        %840 = vmatpush1.bf16.msra.mxu0 0
        %841 = vmatprep.subr.bf16.mxu0 0
        %842 = vmatpush1.bf16.msra.mxu0 0
        %843 = vmatprep.subr.bf16.mxu0 0
        %844 = vmatpush1.bf16.msra.mxu0 0
        %845 = vmatprep.subr.bf16.mxu0 0
        %846 = vmatpush1.bf16.msra.mxu0 0
        %847 = vmatprep.mubr.bf16.mxu0 0
        %848 = vmatmul.mubr.bf16.gmra.mrb[0].mxu0 %v804
        %v849 = vpop.f32.mrb[0].mxu0
        %v850 = vadd.f32 %v685, %v849
        %v851 = vpop.f32.mrb[0].mxu0
        %v852 = vadd.f32 %v689, %v851
        %v853 = vpop.f32.mrb[0].mxu0
        %v854 = vadd.f32 %v685, %v853
        %v855 = vpop.f32.mrb[0].mxu0
        %v856 = vadd.f32 %v689, %v855
        %857 = vmatprep.mubr.bf16.mxu0 0
        %858 = vmatmul.mubr.bf16.gmra.mrb[0].mxu0 %v807
        %v859 = vpop.f32.mrb[0].mxu0
        %v860 = vadd.f32 %v685, %v859
        %v861 = vpop.f32.mrb[0].mxu0
        %v862 = vadd.f32 %v689, %v861
        %v863 = vpop.f32.mrb[0].mxu0
        %v864 = vadd.f32 %v685, %v863
        %v865 = vpop.f32.mrb[0].mxu0
        %v866 = vadd.f32 %v689, %v865
        %867 = vmatprep.mubr.bf16.mxu0 0
        %868 = vmatmul.mubr.bf16.gmra.mrb[0].mxu0 %v810
        %v869 = vpop.f32.mrb[0].mxu0
        %v870 = vadd.f32 %v685, %v869
        %v871 = vpop.f32.mrb[0].mxu0
        %v872 = vadd.f32 %v689, %v871
        %v873 = vpop.f32.mrb[0].mxu0
        %v874 = vadd.f32 %v685, %v873
        %v875 = vpop.f32.mrb[0].mxu0
        %v876 = vadd.f32 %v689, %v875
        %877 = vmatprep.mubr.bf16.mxu0 0
        %878 = vmatmul.mubr.bf16.gmra.mrb[0].mxu0 %v813
        %v879 = vpop.f32.mrb[0].mxu0
        %v880 = vadd.f32 %v685, %v879
        %v881 = vpop.f32.mrb[0].mxu0
        %v882 = vadd.f32 %v689, %v881
        %v883 = vpop.f32.mrb[0].mxu0
        %v884 = vadd.f32 %v685, %v883
        %v885 = vpop.f32.mrb[0].mxu0
        %v886 = vadd.f32 %v689, %v885
        %887 = vdwg.mxu0
        %888 = vmatprep.subr.bf16.mxu0 %v773
        %889 = vmatpush1.bf16.msra.mxu0 %v772
        %890 = vmatprep.subr.bf16.mxu0 %v781
        %891 = vmatpush1.bf16.msra.mxu0 %v780
        %892 = vmatprep.subr.bf16.mxu0 0
        %893 = vmatpush1.bf16.msra.mxu0 0
        %894 = vmatprep.subr.bf16.mxu0 0
        %895 = vmatpush1.bf16.msra.mxu0 0
        %896 = vmatprep.subr.bf16.mxu0 0
        %897 = vmatpush1.bf16.msra.mxu0 0
        %898 = vmatprep.subr.bf16.mxu0 0
        %899 = vmatpush1.bf16.msra.mxu0 0
        %900 = vmatprep.subr.bf16.mxu0 0
        %901 = vmatpush1.bf16.msra.mxu0 0
        %902 = vmatprep.subr.bf16.mxu0 0
        %903 = vmatpush1.bf16.msra.mxu0 0
        %904 = vmatprep.subr.bf16.mxu0 0
        %905 = vmatpush1.bf16.msra.mxu0 0
        %906 = vmatprep.subr.bf16.mxu0 0
        %907 = vmatpush1.bf16.msra.mxu0 0
        %908 = vmatprep.subr.bf16.mxu0 0
        %909 = vmatpush1.bf16.msra.mxu0 0
        %910 = vmatprep.subr.bf16.mxu0 0
        %911 = vmatpush1.bf16.msra.mxu0 0
        %912 = vmatprep.subr.bf16.mxu0 0
        %913 = vmatpush1.bf16.msra.mxu0 0
        %914 = vmatprep.subr.bf16.mxu0 0
        %915 = vmatpush1.bf16.msra.mxu0 0
        %916 = vmatprep.subr.bf16.mxu0 0
        %917 = vmatpush1.bf16.msra.mxu0 0
        %918 = vmatprep.subr.bf16.mxu0 0
        %919 = vmatpush1.bf16.msra.mxu0 0
        %920 = vmatprep.mubr.bf16.mxu0 0
        %921 = vmatmul.mubr.bf16.gmra.mrb[0].mxu0 %v804
        %v922 = vpop.f32.mrb[0].mxu0
        %v923 = vadd.f32 %v693, %v922
        %v924 = vpop.f32.mrb[0].mxu0
        %v925 = vadd.f32 %v697, %v924
        %v926 = vpop.f32.mrb[0].mxu0
        %v927 = vadd.f32 %v693, %v926
        %v928 = vpop.f32.mrb[0].mxu0
        %v929 = vadd.f32 %v697, %v928
        %930 = vmatprep.mubr.bf16.mxu0 0
        %931 = vmatmul.mubr.bf16.gmra.mrb[0].mxu0 %v807
        %v932 = vpop.f32.mrb[0].mxu0
        %v933 = vadd.f32 %v693, %v932
        %v934 = vpop.f32.mrb[0].mxu0
        %v935 = vadd.f32 %v697, %v934
        %v936 = vpop.f32.mrb[0].mxu0
        %v937 = vadd.f32 %v693, %v936
        %v938 = vpop.f32.mrb[0].mxu0
        %v939 = vadd.f32 %v697, %v938
        %940 = vmatprep.mubr.bf16.mxu0 0
        %941 = vmatmul.mubr.bf16.gmra.mrb[0].mxu0 %v810
        %v942 = vpop.f32.mrb[0].mxu0
        %v943 = vadd.f32 %v693, %v942
        %v944 = vpop.f32.mrb[0].mxu0
        %v945 = vadd.f32 %v697, %v944
        %v946 = vpop.f32.mrb[0].mxu0
        %v947 = vadd.f32 %v693, %v946
        %v948 = vpop.f32.mrb[0].mxu0
        %v949 = vadd.f32 %v697, %v948
        %950 = vmatprep.mubr.bf16.mxu0 0
        %951 = vmatmul.mubr.bf16.gmra.mrb[0].mxu0 %v813
        %v952 = vpop.f32.mrb[0].mxu0
        %v953 = vadd.f32 %v693, %v952
        %v954 = vpop.f32.mrb[0].mxu0
        %v955 = vadd.f32 %v697, %v954
        %v956 = vpop.f32.mrb[0].mxu0
        %v957 = vadd.f32 %v693, %v956
        %v958 = vpop.f32.mrb[0].mxu0
        %v959 = vadd.f32 %v697, %v958
        %960 = vdwg.mxu0
        %961 = vmatprep.subr.bf16.mxu0 %v775
        %962 = vmatpush1.bf16.msra.mxu0 %v774
        %963 = vmatprep.subr.bf16.mxu0 %v783
        %964 = vmatpush1.bf16.msra.mxu0 %v782
        %965 = vmatprep.subr.bf16.mxu0 0
        %966 = vmatpush1.bf16.msra.mxu0 0
        %967 = vmatprep.subr.bf16.mxu0 0
        %968 = vmatpush1.bf16.msra.mxu0 0
        %969 = vmatprep.subr.bf16.mxu0 0
        %970 = vmatpush1.bf16.msra.mxu0 0
        %971 = vmatprep.subr.bf16.mxu0 0
        %972 = vmatpush1.bf16.msra.mxu0 0
        %973 = vmatprep.subr.bf16.mxu0 0
        %974 = vmatpush1.bf16.msra.mxu0 0
        %975 = vmatprep.subr.bf16.mxu0 0
        %976 = vmatpush1.bf16.msra.mxu0 0
        %977 = vmatprep.subr.bf16.mxu0 0
        %978 = vmatpush1.bf16.msra.mxu0 0
        %979 = vmatprep.subr.bf16.mxu0 0
        %980 = vmatpush1.bf16.msra.mxu0 0
        %981 = vmatprep.subr.bf16.mxu0 0
        %982 = vmatpush1.bf16.msra.mxu0 0
        %983 = vmatprep.subr.bf16.mxu0 0
        %984 = vmatpush1.bf16.msra.mxu0 0
        %985 = vmatprep.subr.bf16.mxu0 0
        %986 = vmatpush1.bf16.msra.mxu0 0
        %987 = vmatprep.subr.bf16.mxu0 0
        %988 = vmatpush1.bf16.msra.mxu0 0
        %989 = vmatprep.subr.bf16.mxu0 0
        %990 = vmatpush1.bf16.msra.mxu0 0
        %991 = vmatprep.subr.bf16.mxu0 0
        %992 = vmatpush1.bf16.msra.mxu0 0
        %993 = vmatprep.mubr.bf16.mxu0 0
        %994 = vmatmul.mubr.bf16.gmra.mrb[0].mxu0 %v804
        %v995 = vpop.f32.mrb[0].mxu0
        %v996 = vadd.f32 %v701, %v995
        %v997 = vpop.f32.mrb[0].mxu0
        %v998 = vadd.f32 %v705, %v997
        %v999 = vpop.f32.mrb[0].mxu0
        %v1000 = vadd.f32 %v701, %v999
        %v1001 = vpop.f32.mrb[0].mxu0
        %v1002 = vadd.f32 %v705, %v1001
        %1003 = vmatprep.mubr.bf16.mxu0 0
        %1004 = vmatmul.mubr.bf16.gmra.mrb[0].mxu0 %v807
        %v1005 = vpop.f32.mrb[0].mxu0
        %v1006 = vadd.f32 %v701, %v1005
        %v1007 = vpop.f32.mrb[0].mxu0
        %v1008 = vadd.f32 %v705, %v1007
        %v1009 = vpop.f32.mrb[0].mxu0
        %v1010 = vadd.f32 %v701, %v1009
        %v1011 = vpop.f32.mrb[0].mxu0
        %v1012 = vadd.f32 %v705, %v1011
        %1013 = vmatprep.mubr.bf16.mxu0 0
        %1014 = vmatmul.mubr.bf16.gmra.mrb[0].mxu0 %v810
        %v1015 = vpop.f32.mrb[0].mxu0
        %v1016 = vadd.f32 %v701, %v1015
        %v1017 = vpop.f32.mrb[0].mxu0
        %v1018 = vadd.f32 %v705, %v1017
        %v1019 = vpop.f32.mrb[0].mxu0
        %v1020 = vadd.f32 %v701, %v1019
        %v1021 = vpop.f32.mrb[0].mxu0
        %v1022 = vadd.f32 %v705, %v1021
        %1023 = vmatprep.mubr.bf16.mxu0 0
        %1024 = vmatmul.mubr.bf16.gmra.mrb[0].mxu0 %v813
        %v1025 = vpop.f32.mrb[0].mxu0
        %v1026 = vadd.f32 %v701, %v1025
        %v1027 = vpop.f32.mrb[0].mxu0
        %v1028 = vadd.f32 %v705, %v1027
        %v1029 = vpop.f32.mrb[0].mxu0
        %v1030 = vadd.f32 %v701, %v1029
        %v1031 = vpop.f32.mrb[0].mxu0
        %v1032 = vadd.f32 %v705, %v1031
        %1033 = vdwg.mxu0
        %1034 = vmatprep.subr.bf16.mxu0 %v777
        %1035 = vmatpush1.bf16.msra.mxu0 %v776
        %1036 = vmatprep.subr.bf16.mxu0 %v785
        %1037 = vmatpush1.bf16.msra.mxu0 %v784
        %1038 = vmatprep.subr.bf16.mxu0 0
        %1039 = vmatpush1.bf16.msra.mxu0 0
        %1040 = vmatprep.subr.bf16.mxu0 0
        %1041 = vmatpush1.bf16.msra.mxu0 0
        %1042 = vmatprep.subr.bf16.mxu0 0
        %1043 = vmatpush1.bf16.msra.mxu0 0
        %1044 = vmatprep.subr.bf16.mxu0 0
        %1045 = vmatpush1.bf16.msra.mxu0 0
        %1046 = vmatprep.subr.bf16.mxu0 0
        %1047 = vmatpush1.bf16.msra.mxu0 0
        %1048 = vmatprep.subr.bf16.mxu0 0
        %1049 = vmatpush1.bf16.msra.mxu0 0
        %1050 = vmatprep.subr.bf16.mxu0 0
        %1051 = vmatpush1.bf16.msra.mxu0 0
        %1052 = vmatprep.subr.bf16.mxu0 0
        %1053 = vmatpush1.bf16.msra.mxu0 0
        %1054 = vmatprep.subr.bf16.mxu0 0
        %1055 = vmatpush1.bf16.msra.mxu0 0
        %1056 = vmatprep.subr.bf16.mxu0 0
        %1057 = vmatpush1.bf16.msra.mxu0 0
        %1058 = vmatprep.subr.bf16.mxu0 0
        %1059 = vmatpush1.bf16.msra.mxu0 0
        %1060 = vmatprep.subr.bf16.mxu0 0
        %1061 = vmatpush1.bf16.msra.mxu0 0
        %1062 = vmatprep.subr.bf16.mxu0 0
        %1063 = vmatpush1.bf16.msra.mxu0 0
        %1064 = vmatprep.subr.bf16.mxu0 0
        %1065 = vmatpush1.bf16.msra.mxu0 0
        %1066 = vmatprep.mubr.bf16.mxu0 0
        %1067 = vmatmul.mubr.bf16.gmra.mrb[0].mxu0 %v804
        %v1068 = vpop.f32.mrb[0].mxu0
        %v1069 = vadd.f32 %v709, %v1068
        %v1070 = vpop.f32.mrb[0].mxu0
        %v1071 = vadd.f32 %v713, %v1070
        %v1072 = vpop.f32.mrb[0].mxu0
        %v1073 = vadd.f32 %v709, %v1072
        %v1074 = vpop.f32.mrb[0].mxu0
        %v1075 = vadd.f32 %v713, %v1074
        %1076 = vmatprep.mubr.bf16.mxu0 0
        %1077 = vmatmul.mubr.bf16.gmra.mrb[0].mxu0 %v807
        %v1078 = vpop.f32.mrb[0].mxu0
        %v1079 = vadd.f32 %v709, %v1078
        %v1080 = vpop.f32.mrb[0].mxu0
        %v1081 = vadd.f32 %v713, %v1080
        %v1082 = vpop.f32.mrb[0].mxu0
        %v1083 = vadd.f32 %v709, %v1082
        %v1084 = vpop.f32.mrb[0].mxu0
        %v1085 = vadd.f32 %v713, %v1084
        %1086 = vmatprep.mubr.bf16.mxu0 0
        %1087 = vmatmul.mubr.bf16.gmra.mrb[0].mxu0 %v810
        %v1088 = vpop.f32.mrb[0].mxu0
        %v1089 = vadd.f32 %v709, %v1088
        %v1090 = vpop.f32.mrb[0].mxu0
        %v1091 = vadd.f32 %v713, %v1090
        %v1092 = vpop.f32.mrb[0].mxu0
        %v1093 = vadd.f32 %v709, %v1092
        %v1094 = vpop.f32.mrb[0].mxu0
        %v1095 = vadd.f32 %v713, %v1094
        %1096 = vmatprep.mubr.bf16.mxu0 0
        %1097 = vmatmul.mubr.bf16.gmra.mrb[0].mxu0 %v813
        %v1098 = vpop.f32.mrb[0].mxu0
        %v1099 = vadd.f32 %v709, %v1098
        %v1100 = vpop.f32.mrb[0].mxu0
        %v1101 = vadd.f32 %v713, %v1100
        %v1102 = vpop.f32.mrb[0].mxu0
        %v1103 = vadd.f32 %v709, %v1102
        %v1104 = vpop.f32.mrb[0].mxu0
        %v1105 = vadd.f32 %v713, %v1104
        %1106 = vdwg.mxu0
        %v1107 = vmax.f32 %v850, 0.0
        %v1108 = vmax.f32 %v852, 0.0
        %v1109 = vmax.f32 %v923, 0.0
        %v1110 = vmax.f32 %v925, 0.0
        %v1111 = vmax.f32 %v996, 0.0
        %v1112 = vmax.f32 %v998, 0.0
        %v1113 = vmax.f32 %v1069, 0.0
        %v1114 = vmax.f32 %v1071, 0.0
        %v1115 = vmax.f32 %v854, 0.0
        %v1116 = vmax.f32 %v856, 0.0
        %v1117 = vmax.f32 %v927, 0.0
        %v1118 = vmax.f32 %v929, 0.0
        %v1119 = vmax.f32 %v1000, 0.0
        %v1120 = vmax.f32 %v1002, 0.0
        %v1121 = vmax.f32 %v1073, 0.0
        %v1122 = vmax.f32 %v1075, 0.0
        %v1123 = vmax.f32 %v860, 0.0
        %v1124 = vmax.f32 %v862, 0.0
        %v1125 = vmax.f32 %v933, 0.0
        %v1126 = vmax.f32 %v935, 0.0
        %v1127 = vmax.f32 %v1006, 0.0
        %v1128 = vmax.f32 %v1008, 0.0
        %v1129 = vmax.f32 %v1079, 0.0
        %v1130 = vmax.f32 %v1081, 0.0
        %v1131 = vmax.f32 %v864, 0.0
        %v1132 = vmax.f32 %v866, 0.0
        %v1133 = vmax.f32 %v937, 0.0
        %v1134 = vmax.f32 %v939, 0.0
        %v1135 = vmax.f32 %v1010, 0.0
        %v1136 = vmax.f32 %v1012, 0.0
        %v1137 = vmax.f32 %v1083, 0.0
        %v1138 = vmax.f32 %v1085, 0.0
        %v1139 = vmax.f32 %v870, 0.0
        %v1140 = vmax.f32 %v872, 0.0
        %v1141 = vmax.f32 %v943, 0.0
        %v1142 = vmax.f32 %v945, 0.0
        %v1143 = vmax.f32 %v1016, 0.0
        %v1144 = vmax.f32 %v1018, 0.0
        %v1145 = vmax.f32 %v1089, 0.0
        %v1146 = vmax.f32 %v1091, 0.0
        %v1147 = vmax.f32 %v874, 0.0
        %v1148 = vmax.f32 %v876, 0.0
        %v1149 = vmax.f32 %v947, 0.0
        %v1150 = vmax.f32 %v949, 0.0
        %v1151 = vmax.f32 %v1020, 0.0
        %v1152 = vmax.f32 %v1022, 0.0
        %v1153 = vmax.f32 %v1093, 0.0
        %v1154 = vmax.f32 %v1095, 0.0
        %v1155 = vmax.f32 %v880, 0.0
        %v1156 = vmax.f32 %v882, 0.0
        %v1157 = vmax.f32 %v953, 0.0
        %v1158 = vmax.f32 %v955, 0.0
        %v1159 = vmax.f32 %v1026, 0.0
        %v1160 = vmax.f32 %v1028, 0.0
        %v1161 = vmax.f32 %v1099, 0.0
        %v1162 = vmax.f32 %v1101, 0.0
        %v1163 = vmax.f32 %v884, 0.0
        %v1164 = vmax.f32 %v886, 0.0
        %v1165 = vmax.f32 %v957, 0.0
        %v1166 = vmax.f32 %v959, 0.0
        %v1167 = vmax.f32 %v1030, 0.0
        %v1168 = vmax.f32 %v1032, 0.0
        %v1169 = vmax.f32 %v1103, 0.0
        %v1170 = vmax.f32 %v1105, 0.0
        %v1171 = vpack.c.bf16 %v1115, %v1107
        %v1172 = vpack.c.bf16 %v1116, %v1108
        %v1173 = vpack.c.bf16 %v1117, %v1109
        %v1174 = vpack.c.bf16 %v1118, %v1110
        %v1175 = vpack.c.bf16 %v1119, %v1111
        %v1176 = vpack.c.bf16 %v1120, %v1112
        %v1177 = vpack.c.bf16 %v1121, %v1113
        %v1178 = vpack.c.bf16 %v1122, %v1114
        %v1179 = vpack.c.bf16 %v1131, %v1123
        %v1180 = vpack.c.bf16 %v1132, %v1124
        %v1181 = vpack.c.bf16 %v1133, %v1125
        %v1182 = vpack.c.bf16 %v1134, %v1126
        %v1183 = vpack.c.bf16 %v1135, %v1127
        %v1184 = vpack.c.bf16 %v1136, %v1128
        %v1185 = vpack.c.bf16 %v1137, %v1129
        %v1186 = vpack.c.bf16 %v1138, %v1130
        %v1187 = vpack.c.bf16 %v1147, %v1139
        %v1188 = vpack.c.bf16 %v1148, %v1140
        %v1189 = vpack.c.bf16 %v1149, %v1141
        %v1190 = vpack.c.bf16 %v1150, %v1142
        %v1191 = vpack.c.bf16 %v1151, %v1143
        %v1192 = vpack.c.bf16 %v1152, %v1144
        %v1193 = vpack.c.bf16 %v1153, %v1145
        %v1194 = vpack.c.bf16 %v1154, %v1146
        %v1195 = vpack.c.bf16 %v1163, %v1155
        %v1196 = vpack.c.bf16 %v1164, %v1156
        %v1197 = vpack.c.bf16 %v1165, %v1157
        %v1198 = vpack.c.bf16 %v1166, %v1158
        %v1199 = vpack.c.bf16 %v1167, %v1159
        %v1200 = vpack.c.bf16 %v1168, %v1160
        %v1201 = vpack.c.bf16 %v1169, %v1161
        %v1202 = vpack.c.bf16 %v1170, %v1162
        %v1203 = vld [vmem:[#allocation4] sm:$0xff]
        %v1204 = vld [vmem:[#allocation4 + $0x8] sm:$0xff]
        %v1205 = vld [vmem:[#allocation4 + $0x10] sm:$0xff]
        %v1206 = vld [vmem:[#allocation4 + $0x18] sm:$0xff]
        %v1207 = vld [vmem:[#allocation4 + $0x20] sm:$0xff]
        %v1208 = vld [vmem:[#allocation4 + $0x28] sm:$0xff]
        %v1209 = vld [vmem:[#allocation4 + $0x30] sm:$0xff]
        %v1210 = vld [vmem:[#allocation4 + $0x38] sm:$0xff]
        %v1211 = vld [vmem:[#allocation4 + $0x40] sm:$0xff]
        %v1212 = vld [vmem:[#allocation4 + $0x48] sm:$0xff]
        %v1213 = vld [vmem:[#allocation4 + $0x50] sm:$0xff]
        %v1214 = vld [vmem:[#allocation4 + $0x58] sm:$0xff]
        %v1215 = vld [vmem:[#allocation4 + $0x60] sm:$0xff]
        %v1216 = vld [vmem:[#allocation4 + $0x68] sm:$0xff]
        %v1217 = vld [vmem:[#allocation4 + $0x70] sm:$0xff]
        %v1218 = vld [vmem:[#allocation4 + $0x78] sm:$0xff]
        %v1219 = vld [vmem:[#allocation4 + $0x80] sm:$0xff]
        %v1220 = vld [vmem:[#allocation4 + $0x88] sm:$0xff]
        %v1221 = vld [vmem:[#allocation4 + $0x90] sm:$0xff]
        %v1222 = vld [vmem:[#allocation4 + $0x98] sm:$0xff]
        %v1223 = vld [vmem:[#allocation4 + $0xa0] sm:$0xff]
        %v1224 = vld [vmem:[#allocation4 + $0xa8] sm:$0xff]
        %v1225 = vld [vmem:[#allocation4 + $0xb0] sm:$0xff]
        %v1226 = vld [vmem:[#allocation4 + $0xb8] sm:$0xff]
        %v1227 = vld [vmem:[#allocation4 + $0xc0] sm:$0xff]
        %v1228 = vld [vmem:[#allocation4 + $0xc8] sm:$0xff]
        %v1229 = vld [vmem:[#allocation4 + $0xd0] sm:$0xff]
        %v1230 = vld [vmem:[#allocation4 + $0xd8] sm:$0xff]
        %v1231 = vld [vmem:[#allocation4 + $0xe0] sm:$0xff]
        %v1232 = vld [vmem:[#allocation4 + $0xe8] sm:$0xff]
        %v1233 = vld [vmem:[#allocation4 + $0xf0] sm:$0xff]
        %v1234 = vld [vmem:[#allocation4 + $0xf8] sm:$0xff]
        %v1235 = vld [vmem:[#allocation4 + $0x100] sm:$0xff]
        %v1236 = vld [vmem:[#allocation4 + $0x108] sm:$0xff]
        %v1237 = vld [vmem:[#allocation4 + $0x110] sm:$0xff]
        %v1238 = vld [vmem:[#allocation4 + $0x118] sm:$0xff]
        %v1239 = vld [vmem:[#allocation4 + $0x120] sm:$0xff]
        %v1240 = vld [vmem:[#allocation4 + $0x128] sm:$0xff]
        %v1241 = vld [vmem:[#allocation4 + $0x130] sm:$0xff]
        %v1242 = vld [vmem:[#allocation4 + $0x138] sm:$0xff]
        %v1243 = vld [vmem:[#allocation4 + $0x140] sm:$0xff]
        %v1244 = vld [vmem:[#allocation4 + $0x148] sm:$0xff]
        %v1245 = vld [vmem:[#allocation4 + $0x150] sm:$0xff]
        %v1246 = vld [vmem:[#allocation4 + $0x158] sm:$0xff]
        %v1247 = vld [vmem:[#allocation4 + $0x160] sm:$0xff]
        %v1248 = vld [vmem:[#allocation4 + $0x168] sm:$0xff]
        %v1249 = vld [vmem:[#allocation4 + $0x170] sm:$0xff]
        %v1250 = vld [vmem:[#allocation4 + $0x178] sm:$0xff]
        %v1251 = vld [vmem:[#allocation4 + $0x180] sm:$0xff]
        %v1252 = vld [vmem:[#allocation4 + $0x188] sm:$0xff]
        %v1253 = vld [vmem:[#allocation4 + $0x190] sm:$0xff]
        %v1254 = vld [vmem:[#allocation4 + $0x198] sm:$0xff]
        %v1255 = vld [vmem:[#allocation4 + $0x1a0] sm:$0xff]
        %v1256 = vld [vmem:[#allocation4 + $0x1a8] sm:$0xff]
        %v1257 = vld [vmem:[#allocation4 + $0x1b0] sm:$0xff]
        %v1258 = vld [vmem:[#allocation4 + $0x1b8] sm:$0xff]
        %v1259 = vld [vmem:[#allocation4 + $0x1c0] sm:$0xff]
        %v1260 = vld [vmem:[#allocation4 + $0x1c8] sm:$0xff]
        %v1261 = vld [vmem:[#allocation4 + $0x1d0] sm:$0xff]
        %v1262 = vld [vmem:[#allocation4 + $0x1d8] sm:$0xff]
        %v1263 = vld [vmem:[#allocation4 + $0x1e0] sm:$0xff]
        %v1264 = vld [vmem:[#allocation4 + $0x1e8] sm:$0xff]
        %v1265 = vld [vmem:[#allocation4 + $0x1f0] sm:$0xff]
        %v1266 = vld [vmem:[#allocation4 + $0x1f8] sm:$0xff]
        %v1267 = vld [vmem:[#allocation4 + $0x200] sm:$0xff]
        %v1268 = vld [vmem:[#allocation4 + $0x208] sm:$0xff]
        %v1269 = vld [vmem:[#allocation4 + $0x210] sm:$0xff]
        %v1270 = vld [vmem:[#allocation4 + $0x218] sm:$0xff]
        %v1271 = vld [vmem:[#allocation4 + $0x220] sm:$0xff]
        %v1272 = vld [vmem:[#allocation4 + $0x228] sm:$0xff]
        %v1273 = vld [vmem:[#allocation4 + $0x230] sm:$0xff]
        %v1274 = vld [vmem:[#allocation4 + $0x238] sm:$0xff]
        %v1275 = vld [vmem:[#allocation4 + $0x240] sm:$0xff]
        %v1276 = vld [vmem:[#allocation4 + $0x248] sm:$0xff]
        %v1277 = vld [vmem:[#allocation4 + $0x250] sm:$0xff]
        %v1278 = vld [vmem:[#allocation4 + $0x258] sm:$0xff]
        %v1279 = vld [vmem:[#allocation4 + $0x260] sm:$0xff]
        %v1280 = vld [vmem:[#allocation4 + $0x268] sm:$0xff]
        %v1281 = vld [vmem:[#allocation4 + $0x270] sm:$0xff]
        %v1282 = vld [vmem:[#allocation4 + $0x278] sm:$0xff]
        %v1283 = vld [vmem:[#allocation4 + $0x280] sm:$0xff]
        %v1284 = vld [vmem:[#allocation4 + $0x288] sm:$0xff]
        %v1285 = vld [vmem:[#allocation4 + $0x290] sm:$0xff]
        %v1286 = vld [vmem:[#allocation4 + $0x298] sm:$0xff]
        %v1287 = vld [vmem:[#allocation4 + $0x2a0] sm:$0xff]
        %v1288 = vld [vmem:[#allocation4 + $0x2a8] sm:$0xff]
        %v1289 = vld [vmem:[#allocation4 + $0x2b0] sm:$0xff]
        %v1290 = vld [vmem:[#allocation4 + $0x2b8] sm:$0xff]
        %v1291 = vld [vmem:[#allocation4 + $0x2c0] sm:$0xff]
        %v1292 = vld [vmem:[#allocation4 + $0x2c8] sm:$0xff]
        %v1293 = vld [vmem:[#allocation4 + $0x2d0] sm:$0xff]
        %v1294 = vld [vmem:[#allocation4 + $0x2d8] sm:$0xff]
        %v1295 = vld [vmem:[#allocation4 + $0x2e0] sm:$0xff]
        %v1296 = vld [vmem:[#allocation4 + $0x2e8] sm:$0xff]
        %v1297 = vld [vmem:[#allocation4 + $0x2f0] sm:$0xff]
        %v1298 = vld [vmem:[#allocation4 + $0x2f8] sm:$0xff]
        %v1299 = vld [vmem:[#allocation4 + $0x300] sm:$0xff]
        %v1300 = vld [vmem:[#allocation4 + $0x308] sm:$0xff]
        %v1301 = vld [vmem:[#allocation4 + $0x310] sm:$0xff]
        %v1302 = vld [vmem:[#allocation4 + $0x318] sm:$0xff]
        %v1303 = vld [vmem:[#allocation4 + $0x320] sm:$0xff]
        %v1304 = vld [vmem:[#allocation4 + $0x328] sm:$0xff]
        %v1305 = vld [vmem:[#allocation4 + $0x330] sm:$0xff]
        %v1306 = vld [vmem:[#allocation4 + $0x338] sm:$0xff]
        %v1307 = vld [vmem:[#allocation4 + $0x340] sm:$0xff]
        %v1308 = vld [vmem:[#allocation4 + $0x348] sm:$0xff]
        %v1309 = vld [vmem:[#allocation4 + $0x350] sm:$0xff]
        %v1310 = vld [vmem:[#allocation4 + $0x358] sm:$0xff]
        %v1311 = vld [vmem:[#allocation4 + $0x360] sm:$0xff]
        %v1312 = vld [vmem:[#allocation4 + $0x368] sm:$0xff]
        %v1313 = vld [vmem:[#allocation4 + $0x370] sm:$0xff]
        %v1314 = vld [vmem:[#allocation4 + $0x378] sm:$0xff]
        %v1315 = vld [vmem:[#allocation4 + $0x380] sm:$0xff]
        %v1316 = vld [vmem:[#allocation4 + $0x388] sm:$0xff]
        %v1317 = vld [vmem:[#allocation4 + $0x390] sm:$0xff]
        %v1318 = vld [vmem:[#allocation4 + $0x398] sm:$0xff]
        %v1319 = vld [vmem:[#allocation4 + $0x3a0] sm:$0xff]
        %v1320 = vld [vmem:[#allocation4 + $0x3a8] sm:$0xff]
        %v1321 = vld [vmem:[#allocation4 + $0x3b0] sm:$0xff]
        %v1322 = vld [vmem:[#allocation4 + $0x3b8] sm:$0xff]
        %v1323 = vld [vmem:[#allocation4 + $0x3c0] sm:$0xff]
        %v1324 = vld [vmem:[#allocation4 + $0x3c8] sm:$0xff]
        %v1325 = vld [vmem:[#allocation4 + $0x3d0] sm:$0xff]
        %v1326 = vld [vmem:[#allocation4 + $0x3d8] sm:$0xff]
        %v1327 = vld [vmem:[#allocation4 + $0x3e0] sm:$0xff]
        %v1328 = vld [vmem:[#allocation4 + $0x3e8] sm:$0xff]
        %v1329 = vld [vmem:[#allocation4 + $0x3f0] sm:$0xff]
        %v1330 = vld [vmem:[#allocation4 + $0x3f8] sm:$0xff]
        %v1331 = vld [vmem:[%s6] sm:$0x3]
        %v1333 = vlaneseq
        %v1334 = vshrl.u32 %v1333, 7
        %v1335 = vsub.s32 0, %v1334
        %v1336 = vrot.slane %v1331, %v1335
        %v1337 = vlaneseq
        %v1338 = vshrl.u32 %v1337, 7
        %v1339 = vsub.s32 1, %v1338
        %v1340 = vrot.slane %v1331, %v1339
        %v1471 = vunpack.c.l.b16 %v1203
        %v1472 = vunpack.c.h.b16 %v1203
        %v1473 = vunpack.c.l.b16 %v1204
        %v1474 = vunpack.c.h.b16 %v1204
        %v1475 = vunpack.c.l.b16 %v1205
        %v1476 = vunpack.c.h.b16 %v1205
        %v1477 = vunpack.c.l.b16 %v1206
        %v1478 = vunpack.c.h.b16 %v1206
        %v1479 = vunpack.c.l.b16 %v1207
        %v1480 = vunpack.c.h.b16 %v1207
        %v1481 = vunpack.c.l.b16 %v1208
        %v1482 = vunpack.c.h.b16 %v1208
        %v1483 = vunpack.c.l.b16 %v1209
        %v1484 = vunpack.c.h.b16 %v1209
        %v1485 = vunpack.c.l.b16 %v1210
        %v1486 = vunpack.c.h.b16 %v1210
        %v1487 = vunpack.c.l.b16 %v1211
        %v1488 = vunpack.c.h.b16 %v1211
        %v1489 = vunpack.c.l.b16 %v1212
        %v1490 = vunpack.c.h.b16 %v1212
        %v1491 = vunpack.c.l.b16 %v1213
        %v1492 = vunpack.c.h.b16 %v1213
        %v1493 = vunpack.c.l.b16 %v1214
        %v1494 = vunpack.c.h.b16 %v1214
        %v1495 = vunpack.c.l.b16 %v1215
        %v1496 = vunpack.c.h.b16 %v1215
        %v1497 = vunpack.c.l.b16 %v1216
        %v1498 = vunpack.c.h.b16 %v1216
        %v1499 = vunpack.c.l.b16 %v1217
        %v1500 = vunpack.c.h.b16 %v1217
        %v1501 = vunpack.c.l.b16 %v1218
        %v1502 = vunpack.c.h.b16 %v1218
        %v1503 = vunpack.c.l.b16 %v1219
        %v1504 = vunpack.c.h.b16 %v1219
        %v1505 = vunpack.c.l.b16 %v1220
        %v1506 = vunpack.c.h.b16 %v1220
        %v1507 = vunpack.c.l.b16 %v1221
        %v1508 = vunpack.c.h.b16 %v1221
        %v1509 = vunpack.c.l.b16 %v1222
        %v1510 = vunpack.c.h.b16 %v1222
        %v1511 = vunpack.c.l.b16 %v1223
        %v1512 = vunpack.c.h.b16 %v1223
        %v1513 = vunpack.c.l.b16 %v1224
        %v1514 = vunpack.c.h.b16 %v1224
        %v1515 = vunpack.c.l.b16 %v1225
        %v1516 = vunpack.c.h.b16 %v1225
        %v1517 = vunpack.c.l.b16 %v1226
        %v1518 = vunpack.c.h.b16 %v1226
        %v1519 = vunpack.c.l.b16 %v1227
        %v1520 = vunpack.c.h.b16 %v1227
        %v1521 = vunpack.c.l.b16 %v1228
        %v1522 = vunpack.c.h.b16 %v1228
        %v1523 = vunpack.c.l.b16 %v1229
        %v1524 = vunpack.c.h.b16 %v1229
        %v1525 = vunpack.c.l.b16 %v1230
        %v1526 = vunpack.c.h.b16 %v1230
        %v1527 = vunpack.c.l.b16 %v1231
        %v1528 = vunpack.c.h.b16 %v1231
        %v1529 = vunpack.c.l.b16 %v1232
        %v1530 = vunpack.c.h.b16 %v1232
        %v1531 = vunpack.c.l.b16 %v1233
        %v1532 = vunpack.c.h.b16 %v1233
        %v1533 = vunpack.c.l.b16 %v1234
        %v1534 = vunpack.c.h.b16 %v1234
        %v1535 = vunpack.c.l.b16 %v1235
        %v1536 = vunpack.c.h.b16 %v1235
        %v1537 = vunpack.c.l.b16 %v1236
        %v1538 = vunpack.c.h.b16 %v1236
        %v1539 = vunpack.c.l.b16 %v1237
        %v1540 = vunpack.c.h.b16 %v1237
        %v1541 = vunpack.c.l.b16 %v1238
        %v1542 = vunpack.c.h.b16 %v1238
        %v1543 = vunpack.c.l.b16 %v1239
        %v1544 = vunpack.c.h.b16 %v1239
        %v1545 = vunpack.c.l.b16 %v1240
        %v1546 = vunpack.c.h.b16 %v1240
        %v1547 = vunpack.c.l.b16 %v1241
        %v1548 = vunpack.c.h.b16 %v1241
        %v1549 = vunpack.c.l.b16 %v1242
        %v1550 = vunpack.c.h.b16 %v1242
        %v1551 = vunpack.c.l.b16 %v1243
        %v1552 = vunpack.c.h.b16 %v1243
        %v1553 = vunpack.c.l.b16 %v1244
        %v1554 = vunpack.c.h.b16 %v1244
        %v1555 = vunpack.c.l.b16 %v1245
        %v1556 = vunpack.c.h.b16 %v1245
        %v1557 = vunpack.c.l.b16 %v1246
        %v1558 = vunpack.c.h.b16 %v1246
        %v1559 = vunpack.c.l.b16 %v1247
        %v1560 = vunpack.c.h.b16 %v1247
        %v1561 = vunpack.c.l.b16 %v1248
        %v1562 = vunpack.c.h.b16 %v1248
        %v1563 = vunpack.c.l.b16 %v1249
        %v1564 = vunpack.c.h.b16 %v1249
        %v1565 = vunpack.c.l.b16 %v1250
        %v1566 = vunpack.c.h.b16 %v1250
        %v1567 = vunpack.c.l.b16 %v1251
        %v1568 = vunpack.c.h.b16 %v1251
        %v1569 = vunpack.c.l.b16 %v1252
        %v1570 = vunpack.c.h.b16 %v1252
        %v1571 = vunpack.c.l.b16 %v1253
        %v1572 = vunpack.c.h.b16 %v1253
        %v1573 = vunpack.c.l.b16 %v1254
        %v1574 = vunpack.c.h.b16 %v1254
        %v1575 = vunpack.c.l.b16 %v1255
        %v1576 = vunpack.c.h.b16 %v1255
        %v1577 = vunpack.c.l.b16 %v1256
        %v1578 = vunpack.c.h.b16 %v1256
        %v1579 = vunpack.c.l.b16 %v1257
        %v1580 = vunpack.c.h.b16 %v1257
        %v1581 = vunpack.c.l.b16 %v1258
        %v1582 = vunpack.c.h.b16 %v1258
        %v1583 = vunpack.c.l.b16 %v1259
        %v1584 = vunpack.c.h.b16 %v1259
        %v1585 = vunpack.c.l.b16 %v1260
        %v1586 = vunpack.c.h.b16 %v1260
        %v1587 = vunpack.c.l.b16 %v1261
        %v1588 = vunpack.c.h.b16 %v1261
        %v1589 = vunpack.c.l.b16 %v1262
        %v1590 = vunpack.c.h.b16 %v1262
        %v1591 = vunpack.c.l.b16 %v1263
        %v1592 = vunpack.c.h.b16 %v1263
        %v1593 = vunpack.c.l.b16 %v1264
        %v1594 = vunpack.c.h.b16 %v1264
        %v1595 = vunpack.c.l.b16 %v1265
        %v1596 = vunpack.c.h.b16 %v1265
        %v1597 = vunpack.c.l.b16 %v1266
        %v1598 = vunpack.c.h.b16 %v1266
        %v1599 = vunpack.c.l.b16 %v1267
        %v1600 = vunpack.c.h.b16 %v1267
        %v1601 = vunpack.c.l.b16 %v1268
        %v1602 = vunpack.c.h.b16 %v1268
        %v1603 = vunpack.c.l.b16 %v1269
        %v1604 = vunpack.c.h.b16 %v1269
        %v1605 = vunpack.c.l.b16 %v1270
        %v1606 = vunpack.c.h.b16 %v1270
        %v1607 = vunpack.c.l.b16 %v1271
        %v1608 = vunpack.c.h.b16 %v1271
        %v1609 = vunpack.c.l.b16 %v1272
        %v1610 = vunpack.c.h.b16 %v1272
        %v1611 = vunpack.c.l.b16 %v1273
        %v1612 = vunpack.c.h.b16 %v1273
        %v1613 = vunpack.c.l.b16 %v1274
        %v1614 = vunpack.c.h.b16 %v1274
        %v1615 = vunpack.c.l.b16 %v1275
        %v1616 = vunpack.c.h.b16 %v1275
        %v1617 = vunpack.c.l.b16 %v1276
        %v1618 = vunpack.c.h.b16 %v1276
        %v1619 = vunpack.c.l.b16 %v1277
        %v1620 = vunpack.c.h.b16 %v1277
        %v1621 = vunpack.c.l.b16 %v1278
        %v1622 = vunpack.c.h.b16 %v1278
        %v1623 = vunpack.c.l.b16 %v1279
        %v1624 = vunpack.c.h.b16 %v1279
        %v1625 = vunpack.c.l.b16 %v1280
        %v1626 = vunpack.c.h.b16 %v1280
        %v1627 = vunpack.c.l.b16 %v1281
        %v1628 = vunpack.c.h.b16 %v1281
        %v1629 = vunpack.c.l.b16 %v1282
        %v1630 = vunpack.c.h.b16 %v1282
        %v1631 = vunpack.c.l.b16 %v1283
        %v1632 = vunpack.c.h.b16 %v1283
        %v1633 = vunpack.c.l.b16 %v1284
        %v1634 = vunpack.c.h.b16 %v1284
        %v1635 = vunpack.c.l.b16 %v1285
        %v1636 = vunpack.c.h.b16 %v1285
        %v1637 = vunpack.c.l.b16 %v1286
        %v1638 = vunpack.c.h.b16 %v1286
        %v1639 = vunpack.c.l.b16 %v1287
        %v1640 = vunpack.c.h.b16 %v1287
        %v1641 = vunpack.c.l.b16 %v1288
        %v1642 = vunpack.c.h.b16 %v1288
        %v1643 = vunpack.c.l.b16 %v1289
        %v1644 = vunpack.c.h.b16 %v1289
        %v1645 = vunpack.c.l.b16 %v1290
        %v1646 = vunpack.c.h.b16 %v1290
        %v1647 = vunpack.c.l.b16 %v1291
        %v1648 = vunpack.c.h.b16 %v1291
        %v1649 = vunpack.c.l.b16 %v1292
        %v1650 = vunpack.c.h.b16 %v1292
        %v1651 = vunpack.c.l.b16 %v1293
        %v1652 = vunpack.c.h.b16 %v1293
        %v1653 = vunpack.c.l.b16 %v1294
        %v1654 = vunpack.c.h.b16 %v1294
        %v1655 = vunpack.c.l.b16 %v1295
        %v1656 = vunpack.c.h.b16 %v1295
        %v1657 = vunpack.c.l.b16 %v1296
        %v1658 = vunpack.c.h.b16 %v1296
        %v1659 = vunpack.c.l.b16 %v1297
        %v1660 = vunpack.c.h.b16 %v1297
        %v1661 = vunpack.c.l.b16 %v1298
        %v1662 = vunpack.c.h.b16 %v1298
        %v1663 = vunpack.c.l.b16 %v1299
        %v1664 = vunpack.c.h.b16 %v1299
        %v1665 = vunpack.c.l.b16 %v1300
        %v1666 = vunpack.c.h.b16 %v1300
        %v1667 = vunpack.c.l.b16 %v1301
        %v1668 = vunpack.c.h.b16 %v1301
        %v1669 = vunpack.c.l.b16 %v1302
        %v1670 = vunpack.c.h.b16 %v1302
        %v1671 = vunpack.c.l.b16 %v1303
        %v1672 = vunpack.c.h.b16 %v1303
        %v1673 = vunpack.c.l.b16 %v1304
        %v1674 = vunpack.c.h.b16 %v1304
        %v1675 = vunpack.c.l.b16 %v1305
        %v1676 = vunpack.c.h.b16 %v1305
        %v1677 = vunpack.c.l.b16 %v1306
        %v1678 = vunpack.c.h.b16 %v1306
        %v1679 = vunpack.c.l.b16 %v1307
        %v1680 = vunpack.c.h.b16 %v1307
        %v1681 = vunpack.c.l.b16 %v1308
        %v1682 = vunpack.c.h.b16 %v1308
        %v1683 = vunpack.c.l.b16 %v1309
        %v1684 = vunpack.c.h.b16 %v1309
        %v1685 = vunpack.c.l.b16 %v1310
        %v1686 = vunpack.c.h.b16 %v1310
        %v1687 = vunpack.c.l.b16 %v1311
        %v1688 = vunpack.c.h.b16 %v1311
        %v1689 = vunpack.c.l.b16 %v1312
        %v1690 = vunpack.c.h.b16 %v1312
        %v1691 = vunpack.c.l.b16 %v1313
        %v1692 = vunpack.c.h.b16 %v1313
        %v1693 = vunpack.c.l.b16 %v1314
        %v1694 = vunpack.c.h.b16 %v1314
        %v1695 = vunpack.c.l.b16 %v1315
        %v1696 = vunpack.c.h.b16 %v1315
        %v1697 = vunpack.c.l.b16 %v1316
        %v1698 = vunpack.c.h.b16 %v1316
        %v1699 = vunpack.c.l.b16 %v1317
        %v1700 = vunpack.c.h.b16 %v1317
        %v1701 = vunpack.c.l.b16 %v1318
        %v1702 = vunpack.c.h.b16 %v1318
        %v1703 = vunpack.c.l.b16 %v1319
        %v1704 = vunpack.c.h.b16 %v1319
        %v1705 = vunpack.c.l.b16 %v1320
        %v1706 = vunpack.c.h.b16 %v1320
        %v1707 = vunpack.c.l.b16 %v1321
        %v1708 = vunpack.c.h.b16 %v1321
        %v1709 = vunpack.c.l.b16 %v1322
        %v1710 = vunpack.c.h.b16 %v1322
        %v1711 = vunpack.c.l.b16 %v1323
        %v1712 = vunpack.c.h.b16 %v1323
        %v1713 = vunpack.c.l.b16 %v1324
        %v1714 = vunpack.c.h.b16 %v1324
        %v1715 = vunpack.c.l.b16 %v1325
        %v1716 = vunpack.c.h.b16 %v1325
        %v1717 = vunpack.c.l.b16 %v1326
        %v1718 = vunpack.c.h.b16 %v1326
        %v1719 = vunpack.c.l.b16 %v1327
        %v1720 = vunpack.c.h.b16 %v1327
        %v1721 = vunpack.c.l.b16 %v1328
        %v1722 = vunpack.c.h.b16 %v1328
        %v1723 = vunpack.c.l.b16 %v1329
        %v1724 = vunpack.c.h.b16 %v1329
        %v1725 = vunpack.c.l.b16 %v1330
        %v1726 = vunpack.c.h.b16 %v1330
        %v1727 = vpack.c.b16 %v1473, %v1471
        %v1728 = vpack.c.b16 %v1474, %v1472
        %v1729 = vpack.c.b16 %v1477, %v1475
        %v1730 = vpack.c.b16 %v1478, %v1476
        %v1731 = vpack.c.b16 %v1481, %v1479
        %v1732 = vpack.c.b16 %v1482, %v1480
        %v1733 = vpack.c.b16 %v1485, %v1483
        %v1734 = vpack.c.b16 %v1486, %v1484
        %v1735 = vpack.c.b16 %v1489, %v1487
        %v1736 = vpack.c.b16 %v1490, %v1488
        %v1737 = vpack.c.b16 %v1493, %v1491
        %v1738 = vpack.c.b16 %v1494, %v1492
        %v1739 = vpack.c.b16 %v1497, %v1495
        %v1740 = vpack.c.b16 %v1498, %v1496
        %v1741 = vpack.c.b16 %v1501, %v1499
        %v1742 = vpack.c.b16 %v1502, %v1500
        %v1743 = vpack.c.b16 %v1505, %v1503
        %v1744 = vpack.c.b16 %v1506, %v1504
        %v1745 = vpack.c.b16 %v1509, %v1507
        %v1746 = vpack.c.b16 %v1510, %v1508
        %v1747 = vpack.c.b16 %v1513, %v1511
        %v1748 = vpack.c.b16 %v1514, %v1512
        %v1749 = vpack.c.b16 %v1517, %v1515
        %v1750 = vpack.c.b16 %v1518, %v1516
        %v1751 = vpack.c.b16 %v1521, %v1519
        %v1752 = vpack.c.b16 %v1522, %v1520
        %v1753 = vpack.c.b16 %v1525, %v1523
        %v1754 = vpack.c.b16 %v1526, %v1524
        %v1755 = vpack.c.b16 %v1529, %v1527
        %v1756 = vpack.c.b16 %v1530, %v1528
        %v1757 = vpack.c.b16 %v1533, %v1531
        %v1758 = vpack.c.b16 %v1534, %v1532
        %v1759 = vpack.c.b16 %v1537, %v1535
        %v1760 = vpack.c.b16 %v1538, %v1536
        %v1761 = vpack.c.b16 %v1541, %v1539
        %v1762 = vpack.c.b16 %v1542, %v1540
        %v1763 = vpack.c.b16 %v1545, %v1543
        %v1764 = vpack.c.b16 %v1546, %v1544
        %v1765 = vpack.c.b16 %v1549, %v1547
        %v1766 = vpack.c.b16 %v1550, %v1548
        %v1767 = vpack.c.b16 %v1553, %v1551
        %v1768 = vpack.c.b16 %v1554, %v1552
        %v1769 = vpack.c.b16 %v1557, %v1555
        %v1770 = vpack.c.b16 %v1558, %v1556
        %v1771 = vpack.c.b16 %v1561, %v1559
        %v1772 = vpack.c.b16 %v1562, %v1560
        %v1773 = vpack.c.b16 %v1565, %v1563
        %v1774 = vpack.c.b16 %v1566, %v1564
        %v1775 = vpack.c.b16 %v1569, %v1567
        %v1776 = vpack.c.b16 %v1570, %v1568
        %v1777 = vpack.c.b16 %v1573, %v1571
        %v1778 = vpack.c.b16 %v1574, %v1572
        %v1779 = vpack.c.b16 %v1577, %v1575
        %v1780 = vpack.c.b16 %v1578, %v1576
        %v1781 = vpack.c.b16 %v1581, %v1579
        %v1782 = vpack.c.b16 %v1582, %v1580
        %v1783 = vpack.c.b16 %v1585, %v1583
        %v1784 = vpack.c.b16 %v1586, %v1584
        %v1785 = vpack.c.b16 %v1589, %v1587
        %v1786 = vpack.c.b16 %v1590, %v1588
        %v1787 = vpack.c.b16 %v1593, %v1591
        %v1788 = vpack.c.b16 %v1594, %v1592
        %v1789 = vpack.c.b16 %v1597, %v1595
        %v1790 = vpack.c.b16 %v1598, %v1596
        %v1791 = vpack.c.b16 %v1601, %v1599
        %v1792 = vpack.c.b16 %v1602, %v1600
        %v1793 = vpack.c.b16 %v1605, %v1603
        %v1794 = vpack.c.b16 %v1606, %v1604
        %v1795 = vpack.c.b16 %v1609, %v1607
        %v1796 = vpack.c.b16 %v1610, %v1608
        %v1797 = vpack.c.b16 %v1613, %v1611
        %v1798 = vpack.c.b16 %v1614, %v1612
        %v1799 = vpack.c.b16 %v1617, %v1615
        %v1800 = vpack.c.b16 %v1618, %v1616
        %v1801 = vpack.c.b16 %v1621, %v1619
        %v1802 = vpack.c.b16 %v1622, %v1620
        %v1803 = vpack.c.b16 %v1625, %v1623
        %v1804 = vpack.c.b16 %v1626, %v1624
        %v1805 = vpack.c.b16 %v1629, %v1627
        %v1806 = vpack.c.b16 %v1630, %v1628
        %v1807 = vpack.c.b16 %v1633, %v1631
        %v1808 = vpack.c.b16 %v1634, %v1632
        %v1809 = vpack.c.b16 %v1637, %v1635
        %v1810 = vpack.c.b16 %v1638, %v1636
        %v1811 = vpack.c.b16 %v1641, %v1639
        %v1812 = vpack.c.b16 %v1642, %v1640
        %v1813 = vpack.c.b16 %v1645, %v1643
        %v1814 = vpack.c.b16 %v1646, %v1644
        %v1815 = vpack.c.b16 %v1649, %v1647
        %v1816 = vpack.c.b16 %v1650, %v1648
        %v1817 = vpack.c.b16 %v1653, %v1651
        %v1818 = vpack.c.b16 %v1654, %v1652
        %v1819 = vpack.c.b16 %v1657, %v1655
        %v1820 = vpack.c.b16 %v1658, %v1656
        %v1821 = vpack.c.b16 %v1661, %v1659
        %v1822 = vpack.c.b16 %v1662, %v1660
        %v1823 = vpack.c.b16 %v1665, %v1663
        %v1824 = vpack.c.b16 %v1666, %v1664
        %v1825 = vpack.c.b16 %v1669, %v1667
        %v1826 = vpack.c.b16 %v1670, %v1668
        %v1827 = vpack.c.b16 %v1673, %v1671
        %v1828 = vpack.c.b16 %v1674, %v1672
        %v1829 = vpack.c.b16 %v1677, %v1675
        %v1830 = vpack.c.b16 %v1678, %v1676
        %v1831 = vpack.c.b16 %v1681, %v1679
        %v1832 = vpack.c.b16 %v1682, %v1680
        %v1833 = vpack.c.b16 %v1685, %v1683
        %v1834 = vpack.c.b16 %v1686, %v1684
        %v1835 = vpack.c.b16 %v1689, %v1687
        %v1836 = vpack.c.b16 %v1690, %v1688
        %v1837 = vpack.c.b16 %v1693, %v1691
        %v1838 = vpack.c.b16 %v1694, %v1692
        %v1839 = vpack.c.b16 %v1697, %v1695
        %v1840 = vpack.c.b16 %v1698, %v1696
        %v1841 = vpack.c.b16 %v1701, %v1699
        %v1842 = vpack.c.b16 %v1702, %v1700
        %v1843 = vpack.c.b16 %v1705, %v1703
        %v1844 = vpack.c.b16 %v1706, %v1704
        %v1845 = vpack.c.b16 %v1709, %v1707
        %v1846 = vpack.c.b16 %v1710, %v1708
        %v1847 = vpack.c.b16 %v1713, %v1711
        %v1848 = vpack.c.b16 %v1714, %v1712
        %v1849 = vpack.c.b16 %v1717, %v1715
        %v1850 = vpack.c.b16 %v1718, %v1716
        %v1851 = vpack.c.b16 %v1721, %v1719
        %v1852 = vpack.c.b16 %v1722, %v1720
        %v1853 = vpack.c.b16 %v1725, %v1723
        %v1854 = vpack.c.b16 %v1726, %v1724
        %1983 = vmatprep.subr.bf16.mxu0 %v1728
        %1984 = vmatpush1.bf16.msra.mxu0 %v1727
        %1985 = vmatprep.subr.bf16.mxu0 %v1730
        %1986 = vmatpush1.bf16.msra.mxu0 %v1729
        %1987 = vmatprep.subr.bf16.mxu0 %v1732
        %1988 = vmatpush1.bf16.msra.mxu0 %v1731
        %1989 = vmatprep.subr.bf16.mxu0 %v1734
        %1990 = vmatpush1.bf16.msra.mxu0 %v1733
        %1991 = vmatprep.subr.bf16.mxu0 %v1736
        %1992 = vmatpush1.bf16.msra.mxu0 %v1735
        %1993 = vmatprep.subr.bf16.mxu0 %v1738
        %1994 = vmatpush1.bf16.msra.mxu0 %v1737
        %1995 = vmatprep.subr.bf16.mxu0 %v1740
        %1996 = vmatpush1.bf16.msra.mxu0 %v1739
        %1997 = vmatprep.subr.bf16.mxu0 %v1742
        %1998 = vmatpush1.bf16.msra.mxu0 %v1741
        %1999 = vmatprep.subr.bf16.mxu0 %v1744
        %2000 = vmatpush1.bf16.msra.mxu0 %v1743
        %2001 = vmatprep.subr.bf16.mxu0 %v1746
        %2002 = vmatpush1.bf16.msra.mxu0 %v1745
        %2003 = vmatprep.subr.bf16.mxu0 %v1748
        %2004 = vmatpush1.bf16.msra.mxu0 %v1747
        %2005 = vmatprep.subr.bf16.mxu0 %v1750
        %2006 = vmatpush1.bf16.msra.mxu0 %v1749
        %2007 = vmatprep.subr.bf16.mxu0 %v1752
        %2008 = vmatpush1.bf16.msra.mxu0 %v1751
        %2009 = vmatprep.subr.bf16.mxu0 %v1754
        %2010 = vmatpush1.bf16.msra.mxu0 %v1753
        %2011 = vmatprep.subr.bf16.mxu0 %v1756
        %2012 = vmatpush1.bf16.msra.mxu0 %v1755
        %2013 = vmatprep.subr.bf16.mxu0 %v1758
        %2014 = vmatpush1.bf16.msra.mxu0 %v1757
        %2015 = vmatprep.mubr.bf16.mxu0 %v1172
        %2016 = vmatmul.mubr.bf16.gmra.mrb[0].mxu0 %v1171
        %v2017 = vpop.f32.mrb[0].mxu0
        %v2018 = vadd.f32 %v1336, %v2017
        %v2019 = vpop.f32.mrb[0].mxu0
        %v2020 = vadd.f32 %v1340, %v2019
        %v2021 = vpop.f32.mrb[0].mxu0
        %v2022 = vadd.f32 %v1336, %v2021
        %v2023 = vpop.f32.mrb[0].mxu0
        %v2024 = vadd.f32 %v1340, %v2023
        %2025 = vmatprep.mubr.bf16.mxu0 %v1180
        %2026 = vmatmul.mubr.bf16.gmra.mrb[0].mxu0 %v1179
        %v2027 = vpop.f32.mrb[0].mxu0
        %v2028 = vadd.f32 %v1336, %v2027
        %v2029 = vpop.f32.mrb[0].mxu0
        %v2030 = vadd.f32 %v1340, %v2029
        %v2031 = vpop.f32.mrb[0].mxu0
        %v2032 = vadd.f32 %v1336, %v2031
        %v2033 = vpop.f32.mrb[0].mxu0
        %v2034 = vadd.f32 %v1340, %v2033
        %2035 = vmatprep.mubr.bf16.mxu0 %v1188
        %2036 = vmatmul.mubr.bf16.gmra.mrb[0].mxu0 %v1187
        %v2037 = vpop.f32.mrb[0].mxu0
        %v2038 = vadd.f32 %v1336, %v2037
        %v2039 = vpop.f32.mrb[0].mxu0
        %v2040 = vadd.f32 %v1340, %v2039
        %v2041 = vpop.f32.mrb[0].mxu0
        %v2042 = vadd.f32 %v1336, %v2041
        %v2043 = vpop.f32.mrb[0].mxu0
        %v2044 = vadd.f32 %v1340, %v2043
        %2045 = vmatprep.mubr.bf16.mxu0 %v1196
        %2046 = vmatmul.mubr.bf16.gmra.mrb[0].mxu0 %v1195
        %v2047 = vpop.f32.mrb[0].mxu0
        %v2048 = vadd.f32 %v1336, %v2047
        %v2049 = vpop.f32.mrb[0].mxu0
        %v2050 = vadd.f32 %v1340, %v2049
        %v2051 = vpop.f32.mrb[0].mxu0
        %v2052 = vadd.f32 %v1336, %v2051
        %v2053 = vpop.f32.mrb[0].mxu0
        %v2054 = vadd.f32 %v1340, %v2053
        %2055 = vdwg.mxu0
        %2056 = vmatprep.subr.bf16.mxu0 %v1760
        %2057 = vmatpush1.bf16.msra.mxu0 %v1759
        %2058 = vmatprep.subr.bf16.mxu0 %v1762
        %2059 = vmatpush1.bf16.msra.mxu0 %v1761
        %2060 = vmatprep.subr.bf16.mxu0 %v1764
        %2061 = vmatpush1.bf16.msra.mxu0 %v1763
        %2062 = vmatprep.subr.bf16.mxu0 %v1766
        %2063 = vmatpush1.bf16.msra.mxu0 %v1765
        %2064 = vmatprep.subr.bf16.mxu0 %v1768
        %2065 = vmatpush1.bf16.msra.mxu0 %v1767
        %2066 = vmatprep.subr.bf16.mxu0 %v1770
        %2067 = vmatpush1.bf16.msra.mxu0 %v1769
        %2068 = vmatprep.subr.bf16.mxu0 %v1772
        %2069 = vmatpush1.bf16.msra.mxu0 %v1771
        %2070 = vmatprep.subr.bf16.mxu0 %v1774
        %2071 = vmatpush1.bf16.msra.mxu0 %v1773
        %2072 = vmatprep.subr.bf16.mxu0 %v1776
        %2073 = vmatpush1.bf16.msra.mxu0 %v1775
        %2074 = vmatprep.subr.bf16.mxu0 %v1778
        %2075 = vmatpush1.bf16.msra.mxu0 %v1777
        %2076 = vmatprep.subr.bf16.mxu0 %v1780
        %2077 = vmatpush1.bf16.msra.mxu0 %v1779
        %2078 = vmatprep.subr.bf16.mxu0 %v1782
        %2079 = vmatpush1.bf16.msra.mxu0 %v1781
        %2080 = vmatprep.subr.bf16.mxu0 %v1784
        %2081 = vmatpush1.bf16.msra.mxu0 %v1783
        %2082 = vmatprep.subr.bf16.mxu0 %v1786
        %2083 = vmatpush1.bf16.msra.mxu0 %v1785
        %2084 = vmatprep.subr.bf16.mxu0 %v1788
        %2085 = vmatpush1.bf16.msra.mxu0 %v1787
        %2086 = vmatprep.subr.bf16.mxu0 %v1790
        %2087 = vmatpush1.bf16.msra.mxu0 %v1789
        %2088 = vmatprep.mubr.bf16.mxu0 %v1174
        %2089 = vmatmul.mubr.bf16.gmra.mrb[0].mxu0 %v1173
        %v2090 = vpop.f32.mrb[0].mxu0
        %v2091 = vadd.f32 %v2018, %v2090
        %v2092 = vpop.f32.mrb[0].mxu0
        %v2093 = vadd.f32 %v2020, %v2092
        %v2094 = vpop.f32.mrb[0].mxu0
        %v2095 = vadd.f32 %v2022, %v2094
        %v2096 = vpop.f32.mrb[0].mxu0
        %v2097 = vadd.f32 %v2024, %v2096
        %2098 = vmatprep.mubr.bf16.mxu0 %v1182
        %2099 = vmatmul.mubr.bf16.gmra.mrb[0].mxu0 %v1181
        %v2100 = vpop.f32.mrb[0].mxu0
        %v2101 = vadd.f32 %v2028, %v2100
        %v2102 = vpop.f32.mrb[0].mxu0
        %v2103 = vadd.f32 %v2030, %v2102
        %v2104 = vpop.f32.mrb[0].mxu0
        %v2105 = vadd.f32 %v2032, %v2104
        %v2106 = vpop.f32.mrb[0].mxu0
        %v2107 = vadd.f32 %v2034, %v2106
        %2108 = vmatprep.mubr.bf16.mxu0 %v1190
        %2109 = vmatmul.mubr.bf16.gmra.mrb[0].mxu0 %v1189
        %v2110 = vpop.f32.mrb[0].mxu0
        %v2111 = vadd.f32 %v2038, %v2110
        %v2112 = vpop.f32.mrb[0].mxu0
        %v2113 = vadd.f32 %v2040, %v2112
        %v2114 = vpop.f32.mrb[0].mxu0
        %v2115 = vadd.f32 %v2042, %v2114
        %v2116 = vpop.f32.mrb[0].mxu0
        %v2117 = vadd.f32 %v2044, %v2116
        %2118 = vmatprep.mubr.bf16.mxu0 %v1198
        %2119 = vmatmul.mubr.bf16.gmra.mrb[0].mxu0 %v1197
        %v2120 = vpop.f32.mrb[0].mxu0
        %v2121 = vadd.f32 %v2048, %v2120
        %v2122 = vpop.f32.mrb[0].mxu0
        %v2123 = vadd.f32 %v2050, %v2122
        %v2124 = vpop.f32.mrb[0].mxu0
        %v2125 = vadd.f32 %v2052, %v2124
        %v2126 = vpop.f32.mrb[0].mxu0
        %v2127 = vadd.f32 %v2054, %v2126
        %2128 = vdwg.mxu0
        %2129 = vmatprep.subr.bf16.mxu0 %v1792
        %2130 = vmatpush1.bf16.msra.mxu0 %v1791
        %2131 = vmatprep.subr.bf16.mxu0 %v1794
        %2132 = vmatpush1.bf16.msra.mxu0 %v1793
        %2133 = vmatprep.subr.bf16.mxu0 %v1796
        %2134 = vmatpush1.bf16.msra.mxu0 %v1795
        %2135 = vmatprep.subr.bf16.mxu0 %v1798
        %2136 = vmatpush1.bf16.msra.mxu0 %v1797
        %2137 = vmatprep.subr.bf16.mxu0 %v1800
        %2138 = vmatpush1.bf16.msra.mxu0 %v1799
        %2139 = vmatprep.subr.bf16.mxu0 %v1802
        %2140 = vmatpush1.bf16.msra.mxu0 %v1801
        %2141 = vmatprep.subr.bf16.mxu0 %v1804
        %2142 = vmatpush1.bf16.msra.mxu0 %v1803
        %2143 = vmatprep.subr.bf16.mxu0 %v1806
        %2144 = vmatpush1.bf16.msra.mxu0 %v1805
        %2145 = vmatprep.subr.bf16.mxu0 %v1808
        %2146 = vmatpush1.bf16.msra.mxu0 %v1807
        %2147 = vmatprep.subr.bf16.mxu0 %v1810
        %2148 = vmatpush1.bf16.msra.mxu0 %v1809
        %2149 = vmatprep.subr.bf16.mxu0 %v1812
        %2150 = vmatpush1.bf16.msra.mxu0 %v1811
        %2151 = vmatprep.subr.bf16.mxu0 %v1814
        %2152 = vmatpush1.bf16.msra.mxu0 %v1813
        %2153 = vmatprep.subr.bf16.mxu0 %v1816
        %2154 = vmatpush1.bf16.msra.mxu0 %v1815
        %2155 = vmatprep.subr.bf16.mxu0 %v1818
        %2156 = vmatpush1.bf16.msra.mxu0 %v1817
        %2157 = vmatprep.subr.bf16.mxu0 %v1820
        %2158 = vmatpush1.bf16.msra.mxu0 %v1819
        %2159 = vmatprep.subr.bf16.mxu0 %v1822
        %2160 = vmatpush1.bf16.msra.mxu0 %v1821
        %2161 = vmatprep.mubr.bf16.mxu0 %v1176
        %2162 = vmatmul.mubr.bf16.gmra.mrb[0].mxu0 %v1175
        %v2163 = vpop.f32.mrb[0].mxu0
        %v2164 = vadd.f32 %v2091, %v2163
        %v2165 = vpop.f32.mrb[0].mxu0
        %v2166 = vadd.f32 %v2093, %v2165
        %v2167 = vpop.f32.mrb[0].mxu0
        %v2168 = vadd.f32 %v2095, %v2167
        %v2169 = vpop.f32.mrb[0].mxu0
        %v2170 = vadd.f32 %v2097, %v2169
        %2171 = vmatprep.mubr.bf16.mxu0 %v1184
        %2172 = vmatmul.mubr.bf16.gmra.mrb[0].mxu0 %v1183
        %v2173 = vpop.f32.mrb[0].mxu0
        %v2174 = vadd.f32 %v2101, %v2173
        %v2175 = vpop.f32.mrb[0].mxu0
        %v2176 = vadd.f32 %v2103, %v2175
        %v2177 = vpop.f32.mrb[0].mxu0
        %v2178 = vadd.f32 %v2105, %v2177
        %v2179 = vpop.f32.mrb[0].mxu0
        %v2180 = vadd.f32 %v2107, %v2179
        %2181 = vmatprep.mubr.bf16.mxu0 %v1192
        %2182 = vmatmul.mubr.bf16.gmra.mrb[0].mxu0 %v1191
        %v2183 = vpop.f32.mrb[0].mxu0
        %v2184 = vadd.f32 %v2111, %v2183
        %v2185 = vpop.f32.mrb[0].mxu0
        %v2186 = vadd.f32 %v2113, %v2185
        %v2187 = vpop.f32.mrb[0].mxu0
        %v2188 = vadd.f32 %v2115, %v2187
        %v2189 = vpop.f32.mrb[0].mxu0
        %v2190 = vadd.f32 %v2117, %v2189
        %2191 = vmatprep.mubr.bf16.mxu0 %v1200
        %2192 = vmatmul.mubr.bf16.gmra.mrb[0].mxu0 %v1199
        %v2193 = vpop.f32.mrb[0].mxu0
        %v2194 = vadd.f32 %v2121, %v2193
        %v2195 = vpop.f32.mrb[0].mxu0
        %v2196 = vadd.f32 %v2123, %v2195
        %v2197 = vpop.f32.mrb[0].mxu0
        %v2198 = vadd.f32 %v2125, %v2197
        %v2199 = vpop.f32.mrb[0].mxu0
        %v2200 = vadd.f32 %v2127, %v2199
        %2201 = vdwg.mxu0
        %2202 = vmatprep.subr.bf16.mxu0 %v1824
        %2203 = vmatpush1.bf16.msra.mxu0 %v1823
        %2204 = vmatprep.subr.bf16.mxu0 %v1826
        %2205 = vmatpush1.bf16.msra.mxu0 %v1825
        %2206 = vmatprep.subr.bf16.mxu0 %v1828
        %2207 = vmatpush1.bf16.msra.mxu0 %v1827
        %2208 = vmatprep.subr.bf16.mxu0 %v1830
        %2209 = vmatpush1.bf16.msra.mxu0 %v1829
        %2210 = vmatprep.subr.bf16.mxu0 %v1832
        %2211 = vmatpush1.bf16.msra.mxu0 %v1831
        %2212 = vmatprep.subr.bf16.mxu0 %v1834
        %2213 = vmatpush1.bf16.msra.mxu0 %v1833
        %2214 = vmatprep.subr.bf16.mxu0 %v1836
        %2215 = vmatpush1.bf16.msra.mxu0 %v1835
        %2216 = vmatprep.subr.bf16.mxu0 %v1838
        %2217 = vmatpush1.bf16.msra.mxu0 %v1837
        %2218 = vmatprep.subr.bf16.mxu0 %v1840
        %2219 = vmatpush1.bf16.msra.mxu0 %v1839
        %2220 = vmatprep.subr.bf16.mxu0 %v1842
        %2221 = vmatpush1.bf16.msra.mxu0 %v1841
        %2222 = vmatprep.subr.bf16.mxu0 %v1844
        %2223 = vmatpush1.bf16.msra.mxu0 %v1843
        %2224 = vmatprep.subr.bf16.mxu0 %v1846
        %2225 = vmatpush1.bf16.msra.mxu0 %v1845
        %2226 = vmatprep.subr.bf16.mxu0 %v1848
        %2227 = vmatpush1.bf16.msra.mxu0 %v1847
        %2228 = vmatprep.subr.bf16.mxu0 %v1850
        %2229 = vmatpush1.bf16.msra.mxu0 %v1849
        %2230 = vmatprep.subr.bf16.mxu0 %v1852
        %2231 = vmatpush1.bf16.msra.mxu0 %v1851
        %2232 = vmatprep.subr.bf16.mxu0 %v1854
        %2233 = vmatpush1.bf16.msra.mxu0 %v1853
        %2234 = vmatprep.mubr.bf16.mxu0 %v1178
        %2235 = vmatmul.mubr.bf16.gmra.mrb[0].mxu0 %v1177
        %v2236 = vpop.f32.mrb[0].mxu0
        %v2237 = vadd.f32 %v2164, %v2236
        %v2238 = vpop.f32.mrb[0].mxu0
        %v2239 = vadd.f32 %v2166, %v2238
        %v2240 = vpop.f32.mrb[0].mxu0
        %v2241 = vadd.f32 %v2168, %v2240
        %v2242 = vpop.f32.mrb[0].mxu0
        %v2243 = vadd.f32 %v2170, %v2242
        %2244 = vmatprep.mubr.bf16.mxu0 %v1186
        %2245 = vmatmul.mubr.bf16.gmra.mrb[0].mxu0 %v1185
        %v2246 = vpop.f32.mrb[0].mxu0
        %v2247 = vadd.f32 %v2174, %v2246
        %v2248 = vpop.f32.mrb[0].mxu0
        %v2249 = vadd.f32 %v2176, %v2248
        %v2250 = vpop.f32.mrb[0].mxu0
        %v2251 = vadd.f32 %v2178, %v2250
        %v2252 = vpop.f32.mrb[0].mxu0
        %v2253 = vadd.f32 %v2180, %v2252
        %2254 = vmatprep.mubr.bf16.mxu0 %v1194
        %2255 = vmatmul.mubr.bf16.gmra.mrb[0].mxu0 %v1193
        %v2256 = vpop.f32.mrb[0].mxu0
        %v2257 = vadd.f32 %v2184, %v2256
        %v2258 = vpop.f32.mrb[0].mxu0
        %v2259 = vadd.f32 %v2186, %v2258
        %v2260 = vpop.f32.mrb[0].mxu0
        %v2261 = vadd.f32 %v2188, %v2260
        %v2262 = vpop.f32.mrb[0].mxu0
        %v2263 = vadd.f32 %v2190, %v2262
        %2264 = vmatprep.mubr.bf16.mxu0 %v1202
        %2265 = vmatmul.mubr.bf16.gmra.mrb[0].mxu0 %v1201
        %v2266 = vpop.f32.mrb[0].mxu0
        %v2267 = vadd.f32 %v2194, %v2266
        %v2268 = vpop.f32.mrb[0].mxu0
        %v2269 = vadd.f32 %v2196, %v2268
        %v2270 = vpop.f32.mrb[0].mxu0
        %v2271 = vadd.f32 %v2198, %v2270
        %v2272 = vpop.f32.mrb[0].mxu0
        %v2273 = vadd.f32 %v2200, %v2272
        %2274 = vdwg.mxu0
        %v2275 = vmax.f32 %v2237, 0.0
        %v2276 = vmax.f32 %v2239, 0.0
        %v2277 = vmax.f32 %v2241, 0.0
        %v2278 = vmax.f32 %v2243, 0.0
        %v2279 = vmax.f32 %v2247, 0.0
        %v2280 = vmax.f32 %v2249, 0.0
        %v2281 = vmax.f32 %v2251, 0.0
        %v2282 = vmax.f32 %v2253, 0.0
        %v2283 = vmax.f32 %v2257, 0.0
        %v2284 = vmax.f32 %v2259, 0.0
        %v2285 = vmax.f32 %v2261, 0.0
        %v2286 = vmax.f32 %v2263, 0.0
        %v2287 = vmax.f32 %v2267, 0.0
        %v2288 = vmax.f32 %v2269, 0.0
        %v2289 = vmax.f32 %v2271, 0.0
        %v2290 = vmax.f32 %v2273, 0.0
        %v2291 = vpack.c.bf16 %v2277, %v2275
        %v2292 = vpack.c.bf16 %v2278, %v2276
        %v2293 = vpack.c.bf16 %v2281, %v2279
        %v2294 = vpack.c.bf16 %v2282, %v2280
        %v2295 = vpack.c.bf16 %v2285, %v2283
        %v2296 = vpack.c.bf16 %v2286, %v2284
        %v2297 = vpack.c.bf16 %v2289, %v2287
        %v2298 = vpack.c.bf16 %v2290, %v2288
        %v2299 = vld [vmem:[#allocation7] sm:$0xff]
        %v2300 = vld [vmem:[#allocation7 + $0x8] sm:$0xff]
        %v2301 = vld [vmem:[#allocation7 + $0x10] sm:$0xff]
        %v2302 = vld [vmem:[#allocation7 + $0x18] sm:$0xff]
        %v2303 = vld [vmem:[#allocation7 + $0x20] sm:$0xff]
        %v2304 = vld [vmem:[#allocation7 + $0x28] sm:$0xff]
        %v2305 = vld [vmem:[#allocation7 + $0x30] sm:$0xff]
        %v2306 = vld [vmem:[#allocation7 + $0x38] sm:$0xff]
        %v2307 = vld [vmem:[#allocation7 + $0x40] sm:$0xff]
        %v2308 = vld [vmem:[#allocation7 + $0x48] sm:$0xff]
        %v2309 = vld [vmem:[#allocation7 + $0x50] sm:$0xff]
        %v2310 = vld [vmem:[#allocation7 + $0x58] sm:$0xff]
        %v2311 = vld [vmem:[#allocation7 + $0x60] sm:$0xff]
        %v2312 = vld [vmem:[#allocation7 + $0x68] sm:$0xff]
        %v2313 = vld [vmem:[#allocation7 + $0x70] sm:$0xff]
        %v2314 = vld [vmem:[#allocation7 + $0x78] sm:$0xff]
        %v2315 = vld [vmem:[#allocation7 + $0x80] sm:$0xff]
        %v2316 = vld [vmem:[#allocation7 + $0x88] sm:$0xff]
        %v2317 = vld [vmem:[#allocation7 + $0x90] sm:$0xff]
        %v2318 = vld [vmem:[#allocation7 + $0x98] sm:$0xff]
        %v2319 = vld [vmem:[#allocation7 + $0xa0] sm:$0xff]
        %v2320 = vld [vmem:[#allocation7 + $0xa8] sm:$0xff]
        %v2321 = vld [vmem:[#allocation7 + $0xb0] sm:$0xff]
        %v2322 = vld [vmem:[#allocation7 + $0xb8] sm:$0xff]
        %v2323 = vld [vmem:[#allocation7 + $0xc0] sm:$0xff]
        %v2324 = vld [vmem:[#allocation7 + $0xc8] sm:$0xff]
        %v2325 = vld [vmem:[#allocation7 + $0xd0] sm:$0xff]
        %v2326 = vld [vmem:[#allocation7 + $0xd8] sm:$0xff]
        %v2327 = vld [vmem:[#allocation7 + $0xe0] sm:$0xff]
        %v2328 = vld [vmem:[#allocation7 + $0xe8] sm:$0xff]
        %v2329 = vld [vmem:[#allocation7 + $0xf0] sm:$0xff]
        %v2330 = vld [vmem:[#allocation7 + $0xf8] sm:$0xff]
        %v2331 = vld [vmem:[#allocation7 + $0x100] sm:$0xff]
        %v2332 = vld [vmem:[#allocation7 + $0x108] sm:$0xff]
        %v2333 = vld [vmem:[#allocation7 + $0x110] sm:$0xff]
        %v2334 = vld [vmem:[#allocation7 + $0x118] sm:$0xff]
        %v2335 = vld [vmem:[#allocation7 + $0x120] sm:$0xff]
        %v2336 = vld [vmem:[#allocation7 + $0x128] sm:$0xff]
        %v2337 = vld [vmem:[#allocation7 + $0x130] sm:$0xff]
        %v2338 = vld [vmem:[#allocation7 + $0x138] sm:$0xff]
        %v2339 = vld [vmem:[#allocation7 + $0x140] sm:$0xff]
        %v2340 = vld [vmem:[#allocation7 + $0x148] sm:$0xff]
        %v2341 = vld [vmem:[#allocation7 + $0x150] sm:$0xff]
        %v2342 = vld [vmem:[#allocation7 + $0x158] sm:$0xff]
        %v2343 = vld [vmem:[#allocation7 + $0x160] sm:$0xff]
        %v2344 = vld [vmem:[#allocation7 + $0x168] sm:$0xff]
        %v2345 = vld [vmem:[#allocation7 + $0x170] sm:$0xff]
        %v2346 = vld [vmem:[#allocation7 + $0x178] sm:$0xff]
        %v2347 = vld [vmem:[#allocation7 + $0x180] sm:$0xff]
        %v2348 = vld [vmem:[#allocation7 + $0x188] sm:$0xff]
        %v2349 = vld [vmem:[#allocation7 + $0x190] sm:$0xff]
        %v2350 = vld [vmem:[#allocation7 + $0x198] sm:$0xff]
        %v2351 = vld [vmem:[#allocation7 + $0x1a0] sm:$0xff]
        %v2352 = vld [vmem:[#allocation7 + $0x1a8] sm:$0xff]
        %v2353 = vld [vmem:[#allocation7 + $0x1b0] sm:$0xff]
        %v2354 = vld [vmem:[#allocation7 + $0x1b8] sm:$0xff]
        %v2355 = vld [vmem:[#allocation7 + $0x1c0] sm:$0xff]
        %v2356 = vld [vmem:[#allocation7 + $0x1c8] sm:$0xff]
        %v2357 = vld [vmem:[#allocation7 + $0x1d0] sm:$0xff]
        %v2358 = vld [vmem:[#allocation7 + $0x1d8] sm:$0xff]
        %v2359 = vld [vmem:[#allocation7 + $0x1e0] sm:$0xff]
        %v2360 = vld [vmem:[#allocation7 + $0x1e8] sm:$0xff]
        %v2361 = vld [vmem:[#allocation7 + $0x1f0] sm:$0xff]
        %v2362 = vld [vmem:[#allocation7 + $0x1f8] sm:$0xff]
        %v2363 = vld [vmem:[#allocation7 + $0x200] sm:$0xff]
        %v2364 = vld [vmem:[#allocation7 + $0x208] sm:$0xff]
        %v2365 = vld [vmem:[#allocation7 + $0x210] sm:$0xff]
        %v2366 = vld [vmem:[#allocation7 + $0x218] sm:$0xff]
        %v2367 = vld [vmem:[#allocation7 + $0x220] sm:$0xff]
        %v2368 = vld [vmem:[#allocation7 + $0x228] sm:$0xff]
        %v2369 = vld [vmem:[#allocation7 + $0x230] sm:$0xff]
        %v2370 = vld [vmem:[#allocation7 + $0x238] sm:$0xff]
        %v2371 = vld [vmem:[#allocation7 + $0x240] sm:$0xff]
        %v2372 = vld [vmem:[#allocation7 + $0x248] sm:$0xff]
        %v2373 = vld [vmem:[#allocation7 + $0x250] sm:$0xff]
        %v2374 = vld [vmem:[#allocation7 + $0x258] sm:$0xff]
        %v2375 = vld [vmem:[#allocation7 + $0x260] sm:$0xff]
        %v2376 = vld [vmem:[#allocation7 + $0x268] sm:$0xff]
        %v2377 = vld [vmem:[#allocation7 + $0x270] sm:$0xff]
        %v2378 = vld [vmem:[#allocation7 + $0x278] sm:$0xff]
        %v2379 = vld [vmem:[#allocation7 + $0x280] sm:$0xff]
        %v2380 = vld [vmem:[#allocation7 + $0x288] sm:$0xff]
        %v2381 = vld [vmem:[#allocation7 + $0x290] sm:$0xff]
        %v2382 = vld [vmem:[#allocation7 + $0x298] sm:$0xff]
        %v2383 = vld [vmem:[#allocation7 + $0x2a0] sm:$0xff]
        %v2384 = vld [vmem:[#allocation7 + $0x2a8] sm:$0xff]
        %v2385 = vld [vmem:[#allocation7 + $0x2b0] sm:$0xff]
        %v2386 = vld [vmem:[#allocation7 + $0x2b8] sm:$0xff]
        %v2387 = vld [vmem:[#allocation7 + $0x2c0] sm:$0xff]
        %v2388 = vld [vmem:[#allocation7 + $0x2c8] sm:$0xff]
        %v2389 = vld [vmem:[#allocation7 + $0x2d0] sm:$0xff]
        %v2390 = vld [vmem:[#allocation7 + $0x2d8] sm:$0xff]
        %v2391 = vld [vmem:[#allocation7 + $0x2e0] sm:$0xff]
        %v2392 = vld [vmem:[#allocation7 + $0x2e8] sm:$0xff]
        %v2393 = vld [vmem:[#allocation7 + $0x2f0] sm:$0xff]
        %v2394 = vld [vmem:[#allocation7 + $0x2f8] sm:$0xff]
        %v2395 = vld [vmem:[#allocation7 + $0x300] sm:$0xff]
        %v2396 = vld [vmem:[#allocation7 + $0x308] sm:$0xff]
        %v2397 = vld [vmem:[#allocation7 + $0x310] sm:$0xff]
        %v2398 = vld [vmem:[#allocation7 + $0x318] sm:$0xff]
        %v2399 = vld [vmem:[#allocation7 + $0x320] sm:$0xff]
        %v2400 = vld [vmem:[#allocation7 + $0x328] sm:$0xff]
        %v2401 = vld [vmem:[#allocation7 + $0x330] sm:$0xff]
        %v2402 = vld [vmem:[#allocation7 + $0x338] sm:$0xff]
        %v2403 = vld [vmem:[#allocation7 + $0x340] sm:$0xff]
        %v2404 = vld [vmem:[#allocation7 + $0x348] sm:$0xff]
        %v2405 = vld [vmem:[#allocation7 + $0x350] sm:$0xff]
        %v2406 = vld [vmem:[#allocation7 + $0x358] sm:$0xff]
        %v2407 = vld [vmem:[#allocation7 + $0x360] sm:$0xff]
        %v2408 = vld [vmem:[#allocation7 + $0x368] sm:$0xff]
        %v2409 = vld [vmem:[#allocation7 + $0x370] sm:$0xff]
        %v2410 = vld [vmem:[#allocation7 + $0x378] sm:$0xff]
        %v2411 = vld [vmem:[#allocation7 + $0x380] sm:$0xff]
        %v2412 = vld [vmem:[#allocation7 + $0x388] sm:$0xff]
        %v2413 = vld [vmem:[#allocation7 + $0x390] sm:$0xff]
        %v2414 = vld [vmem:[#allocation7 + $0x398] sm:$0xff]
        %v2415 = vld [vmem:[#allocation7 + $0x3a0] sm:$0xff]
        %v2416 = vld [vmem:[#allocation7 + $0x3a8] sm:$0xff]
        %v2417 = vld [vmem:[#allocation7 + $0x3b0] sm:$0xff]
        %v2418 = vld [vmem:[#allocation7 + $0x3b8] sm:$0xff]
        %v2419 = vld [vmem:[#allocation7 + $0x3c0] sm:$0xff]
        %v2420 = vld [vmem:[#allocation7 + $0x3c8] sm:$0xff]
        %v2421 = vld [vmem:[#allocation7 + $0x3d0] sm:$0xff]
        %v2422 = vld [vmem:[#allocation7 + $0x3d8] sm:$0xff]
        %v2423 = vld [vmem:[#allocation7 + $0x3e0] sm:$0xff]
        %v2424 = vld [vmem:[#allocation7 + $0x3e8] sm:$0xff]
        %v2425 = vld [vmem:[#allocation7 + $0x3f0] sm:$0xff]
        %v2426 = vld [vmem:[#allocation7 + $0x3f8] sm:$0xff]
        %v2427 = vld [vmem:[%s9] sm:$0xff]
        %v2429 = vlaneseq
        %v2430 = vshrl.u32 %v2429, 7
        %v2431 = vsub.s32 0, %v2430
        %v2432 = vrot.slane %v2427, %v2431
        %v2433 = vlaneseq
        %v2434 = vshrl.u32 %v2433, 7
        %v2435 = vsub.s32 1, %v2434
        %v2436 = vrot.slane %v2427, %v2435
        %v2437 = vlaneseq
        %v2438 = vshrl.u32 %v2437, 7
        %v2439 = vsub.s32 2, %v2438
        %v2440 = vrot.slane %v2427, %v2439
        %v2441 = vlaneseq
        %v2442 = vshrl.u32 %v2441, 7
        %v2443 = vsub.s32 3, %v2442
        %v2444 = vrot.slane %v2427, %v2443
        %v2445 = vlaneseq
        %v2446 = vshrl.u32 %v2445, 7
        %v2447 = vsub.s32 4, %v2446
        %v2448 = vrot.slane %v2427, %v2447
        %v2449 = vlaneseq
        %v2450 = vshrl.u32 %v2449, 7
        %v2451 = vsub.s32 5, %v2450
        %v2452 = vrot.slane %v2427, %v2451
        %v2453 = vlaneseq
        %v2454 = vshrl.u32 %v2453, 7
        %v2455 = vsub.s32 6, %v2454
        %v2456 = vrot.slane %v2427, %v2455
        %v2457 = vlaneseq
        %v2458 = vshrl.u32 %v2457, 7
        %v2459 = vsub.s32 7, %v2458
        %v2460 = vrot.slane %v2427, %v2459
        %v2597 = vunpack.c.l.b16 %v2299
        %v2598 = vunpack.c.h.b16 %v2299
        %v2599 = vunpack.c.l.b16 %v2300
        %v2600 = vunpack.c.h.b16 %v2300
        %v2601 = vunpack.c.l.b16 %v2301
        %v2602 = vunpack.c.h.b16 %v2301
        %v2603 = vunpack.c.l.b16 %v2302
        %v2604 = vunpack.c.h.b16 %v2302
        %v2605 = vunpack.c.l.b16 %v2303
        %v2606 = vunpack.c.h.b16 %v2303
        %v2607 = vunpack.c.l.b16 %v2304
        %v2608 = vunpack.c.h.b16 %v2304
        %v2609 = vunpack.c.l.b16 %v2305
        %v2610 = vunpack.c.h.b16 %v2305
        %v2611 = vunpack.c.l.b16 %v2306
        %v2612 = vunpack.c.h.b16 %v2306
        %v2613 = vunpack.c.l.b16 %v2307
        %v2614 = vunpack.c.h.b16 %v2307
        %v2615 = vunpack.c.l.b16 %v2308
        %v2616 = vunpack.c.h.b16 %v2308
        %v2617 = vunpack.c.l.b16 %v2309
        %v2618 = vunpack.c.h.b16 %v2309
        %v2619 = vunpack.c.l.b16 %v2310
        %v2620 = vunpack.c.h.b16 %v2310
        %v2621 = vunpack.c.l.b16 %v2311
        %v2622 = vunpack.c.h.b16 %v2311
        %v2623 = vunpack.c.l.b16 %v2312
        %v2624 = vunpack.c.h.b16 %v2312
        %v2625 = vunpack.c.l.b16 %v2313
        %v2626 = vunpack.c.h.b16 %v2313
        %v2627 = vunpack.c.l.b16 %v2314
        %v2628 = vunpack.c.h.b16 %v2314
        %v2629 = vunpack.c.l.b16 %v2315
        %v2630 = vunpack.c.h.b16 %v2315
        %v2631 = vunpack.c.l.b16 %v2316
        %v2632 = vunpack.c.h.b16 %v2316
        %v2633 = vunpack.c.l.b16 %v2317
        %v2634 = vunpack.c.h.b16 %v2317
        %v2635 = vunpack.c.l.b16 %v2318
        %v2636 = vunpack.c.h.b16 %v2318
        %v2637 = vunpack.c.l.b16 %v2319
        %v2638 = vunpack.c.h.b16 %v2319
        %v2639 = vunpack.c.l.b16 %v2320
        %v2640 = vunpack.c.h.b16 %v2320
        %v2641 = vunpack.c.l.b16 %v2321
        %v2642 = vunpack.c.h.b16 %v2321
        %v2643 = vunpack.c.l.b16 %v2322
        %v2644 = vunpack.c.h.b16 %v2322
        %v2645 = vunpack.c.l.b16 %v2323
        %v2646 = vunpack.c.h.b16 %v2323
        %v2647 = vunpack.c.l.b16 %v2324
        %v2648 = vunpack.c.h.b16 %v2324
        %v2649 = vunpack.c.l.b16 %v2325
        %v2650 = vunpack.c.h.b16 %v2325
        %v2651 = vunpack.c.l.b16 %v2326
        %v2652 = vunpack.c.h.b16 %v2326
        %v2653 = vunpack.c.l.b16 %v2327
        %v2654 = vunpack.c.h.b16 %v2327
        %v2655 = vunpack.c.l.b16 %v2328
        %v2656 = vunpack.c.h.b16 %v2328
        %v2657 = vunpack.c.l.b16 %v2329
        %v2658 = vunpack.c.h.b16 %v2329
        %v2659 = vunpack.c.l.b16 %v2330
        %v2660 = vunpack.c.h.b16 %v2330
        %v2661 = vunpack.c.l.b16 %v2331
        %v2662 = vunpack.c.h.b16 %v2331
        %v2663 = vunpack.c.l.b16 %v2332
        %v2664 = vunpack.c.h.b16 %v2332
        %v2665 = vunpack.c.l.b16 %v2333
        %v2666 = vunpack.c.h.b16 %v2333
        %v2667 = vunpack.c.l.b16 %v2334
        %v2668 = vunpack.c.h.b16 %v2334
        %v2669 = vunpack.c.l.b16 %v2335
        %v2670 = vunpack.c.h.b16 %v2335
        %v2671 = vunpack.c.l.b16 %v2336
        %v2672 = vunpack.c.h.b16 %v2336
        %v2673 = vunpack.c.l.b16 %v2337
        %v2674 = vunpack.c.h.b16 %v2337
        %v2675 = vunpack.c.l.b16 %v2338
        %v2676 = vunpack.c.h.b16 %v2338
        %v2677 = vunpack.c.l.b16 %v2339
        %v2678 = vunpack.c.h.b16 %v2339
        %v2679 = vunpack.c.l.b16 %v2340
        %v2680 = vunpack.c.h.b16 %v2340
        %v2681 = vunpack.c.l.b16 %v2341
        %v2682 = vunpack.c.h.b16 %v2341
        %v2683 = vunpack.c.l.b16 %v2342
        %v2684 = vunpack.c.h.b16 %v2342
        %v2685 = vunpack.c.l.b16 %v2343
        %v2686 = vunpack.c.h.b16 %v2343
        %v2687 = vunpack.c.l.b16 %v2344
        %v2688 = vunpack.c.h.b16 %v2344
        %v2689 = vunpack.c.l.b16 %v2345
        %v2690 = vunpack.c.h.b16 %v2345
        %v2691 = vunpack.c.l.b16 %v2346
        %v2692 = vunpack.c.h.b16 %v2346
        %v2693 = vunpack.c.l.b16 %v2347
        %v2694 = vunpack.c.h.b16 %v2347
        %v2695 = vunpack.c.l.b16 %v2348
        %v2696 = vunpack.c.h.b16 %v2348
        %v2697 = vunpack.c.l.b16 %v2349
        %v2698 = vunpack.c.h.b16 %v2349
        %v2699 = vunpack.c.l.b16 %v2350
        %v2700 = vunpack.c.h.b16 %v2350
        %v2701 = vunpack.c.l.b16 %v2351
        %v2702 = vunpack.c.h.b16 %v2351
        %v2703 = vunpack.c.l.b16 %v2352
        %v2704 = vunpack.c.h.b16 %v2352
        %v2705 = vunpack.c.l.b16 %v2353
        %v2706 = vunpack.c.h.b16 %v2353
        %v2707 = vunpack.c.l.b16 %v2354
        %v2708 = vunpack.c.h.b16 %v2354
        %v2709 = vunpack.c.l.b16 %v2355
        %v2710 = vunpack.c.h.b16 %v2355
        %v2711 = vunpack.c.l.b16 %v2356
        %v2712 = vunpack.c.h.b16 %v2356
        %v2713 = vunpack.c.l.b16 %v2357
        %v2714 = vunpack.c.h.b16 %v2357
        %v2715 = vunpack.c.l.b16 %v2358
        %v2716 = vunpack.c.h.b16 %v2358
        %v2717 = vunpack.c.l.b16 %v2359
        %v2718 = vunpack.c.h.b16 %v2359
        %v2719 = vunpack.c.l.b16 %v2360
        %v2720 = vunpack.c.h.b16 %v2360
        %v2721 = vunpack.c.l.b16 %v2361
        %v2722 = vunpack.c.h.b16 %v2361
        %v2723 = vunpack.c.l.b16 %v2362
        %v2724 = vunpack.c.h.b16 %v2362
        %v2725 = vunpack.c.l.b16 %v2363
        %v2726 = vunpack.c.h.b16 %v2363
        %v2727 = vunpack.c.l.b16 %v2364
        %v2728 = vunpack.c.h.b16 %v2364
        %v2729 = vunpack.c.l.b16 %v2365
        %v2730 = vunpack.c.h.b16 %v2365
        %v2731 = vunpack.c.l.b16 %v2366
        %v2732 = vunpack.c.h.b16 %v2366
        %v2733 = vunpack.c.l.b16 %v2367
        %v2734 = vunpack.c.h.b16 %v2367
        %v2735 = vunpack.c.l.b16 %v2368
        %v2736 = vunpack.c.h.b16 %v2368
        %v2737 = vunpack.c.l.b16 %v2369
        %v2738 = vunpack.c.h.b16 %v2369
        %v2739 = vunpack.c.l.b16 %v2370
        %v2740 = vunpack.c.h.b16 %v2370
        %v2741 = vunpack.c.l.b16 %v2371
        %v2742 = vunpack.c.h.b16 %v2371
        %v2743 = vunpack.c.l.b16 %v2372
        %v2744 = vunpack.c.h.b16 %v2372
        %v2745 = vunpack.c.l.b16 %v2373
        %v2746 = vunpack.c.h.b16 %v2373
        %v2747 = vunpack.c.l.b16 %v2374
        %v2748 = vunpack.c.h.b16 %v2374
        %v2749 = vunpack.c.l.b16 %v2375
        %v2750 = vunpack.c.h.b16 %v2375
        %v2751 = vunpack.c.l.b16 %v2376
        %v2752 = vunpack.c.h.b16 %v2376
        %v2753 = vunpack.c.l.b16 %v2377
        %v2754 = vunpack.c.h.b16 %v2377
        %v2755 = vunpack.c.l.b16 %v2378
        %v2756 = vunpack.c.h.b16 %v2378
        %v2757 = vunpack.c.l.b16 %v2379
        %v2758 = vunpack.c.h.b16 %v2379
        %v2759 = vunpack.c.l.b16 %v2380
        %v2760 = vunpack.c.h.b16 %v2380
        %v2761 = vunpack.c.l.b16 %v2381
        %v2762 = vunpack.c.h.b16 %v2381
        %v2763 = vunpack.c.l.b16 %v2382
        %v2764 = vunpack.c.h.b16 %v2382
        %v2765 = vunpack.c.l.b16 %v2383
        %v2766 = vunpack.c.h.b16 %v2383
        %v2767 = vunpack.c.l.b16 %v2384
        %v2768 = vunpack.c.h.b16 %v2384
        %v2769 = vunpack.c.l.b16 %v2385
        %v2770 = vunpack.c.h.b16 %v2385
        %v2771 = vunpack.c.l.b16 %v2386
        %v2772 = vunpack.c.h.b16 %v2386
        %v2773 = vunpack.c.l.b16 %v2387
        %v2774 = vunpack.c.h.b16 %v2387
        %v2775 = vunpack.c.l.b16 %v2388
        %v2776 = vunpack.c.h.b16 %v2388
        %v2777 = vunpack.c.l.b16 %v2389
        %v2778 = vunpack.c.h.b16 %v2389
        %v2779 = vunpack.c.l.b16 %v2390
        %v2780 = vunpack.c.h.b16 %v2390
        %v2781 = vunpack.c.l.b16 %v2391
        %v2782 = vunpack.c.h.b16 %v2391
        %v2783 = vunpack.c.l.b16 %v2392
        %v2784 = vunpack.c.h.b16 %v2392
        %v2785 = vunpack.c.l.b16 %v2393
        %v2786 = vunpack.c.h.b16 %v2393
        %v2787 = vunpack.c.l.b16 %v2394
        %v2788 = vunpack.c.h.b16 %v2394
        %v2789 = vunpack.c.l.b16 %v2395
        %v2790 = vunpack.c.h.b16 %v2395
        %v2791 = vunpack.c.l.b16 %v2396
        %v2792 = vunpack.c.h.b16 %v2396
        %v2793 = vunpack.c.l.b16 %v2397
        %v2794 = vunpack.c.h.b16 %v2397
        %v2795 = vunpack.c.l.b16 %v2398
        %v2796 = vunpack.c.h.b16 %v2398
        %v2797 = vunpack.c.l.b16 %v2399
        %v2798 = vunpack.c.h.b16 %v2399
        %v2799 = vunpack.c.l.b16 %v2400
        %v2800 = vunpack.c.h.b16 %v2400
        %v2801 = vunpack.c.l.b16 %v2401
        %v2802 = vunpack.c.h.b16 %v2401
        %v2803 = vunpack.c.l.b16 %v2402
        %v2804 = vunpack.c.h.b16 %v2402
        %v2805 = vunpack.c.l.b16 %v2403
        %v2806 = vunpack.c.h.b16 %v2403
        %v2807 = vunpack.c.l.b16 %v2404
        %v2808 = vunpack.c.h.b16 %v2404
        %v2809 = vunpack.c.l.b16 %v2405
        %v2810 = vunpack.c.h.b16 %v2405
        %v2811 = vunpack.c.l.b16 %v2406
        %v2812 = vunpack.c.h.b16 %v2406
        %v2813 = vunpack.c.l.b16 %v2407
        %v2814 = vunpack.c.h.b16 %v2407
        %v2815 = vunpack.c.l.b16 %v2408
        %v2816 = vunpack.c.h.b16 %v2408
        %v2817 = vunpack.c.l.b16 %v2409
        %v2818 = vunpack.c.h.b16 %v2409
        %v2819 = vunpack.c.l.b16 %v2410
        %v2820 = vunpack.c.h.b16 %v2410
        %v2821 = vunpack.c.l.b16 %v2411
        %v2822 = vunpack.c.h.b16 %v2411
        %v2823 = vunpack.c.l.b16 %v2412
        %v2824 = vunpack.c.h.b16 %v2412
        %v2825 = vunpack.c.l.b16 %v2413
        %v2826 = vunpack.c.h.b16 %v2413
        %v2827 = vunpack.c.l.b16 %v2414
        %v2828 = vunpack.c.h.b16 %v2414
        %v2829 = vunpack.c.l.b16 %v2415
        %v2830 = vunpack.c.h.b16 %v2415
        %v2831 = vunpack.c.l.b16 %v2416
        %v2832 = vunpack.c.h.b16 %v2416
        %v2833 = vunpack.c.l.b16 %v2417
        %v2834 = vunpack.c.h.b16 %v2417
        %v2835 = vunpack.c.l.b16 %v2418
        %v2836 = vunpack.c.h.b16 %v2418
        %v2837 = vunpack.c.l.b16 %v2419
        %v2838 = vunpack.c.h.b16 %v2419
        %v2839 = vunpack.c.l.b16 %v2420
        %v2840 = vunpack.c.h.b16 %v2420
        %v2841 = vunpack.c.l.b16 %v2421
        %v2842 = vunpack.c.h.b16 %v2421
        %v2843 = vunpack.c.l.b16 %v2422
        %v2844 = vunpack.c.h.b16 %v2422
        %v2845 = vunpack.c.l.b16 %v2423
        %v2846 = vunpack.c.h.b16 %v2423
        %v2847 = vunpack.c.l.b16 %v2424
        %v2848 = vunpack.c.h.b16 %v2424
        %v2849 = vunpack.c.l.b16 %v2425
        %v2850 = vunpack.c.h.b16 %v2425
        %v2851 = vunpack.c.l.b16 %v2426
        %v2852 = vunpack.c.h.b16 %v2426
        %v2853 = vpack.c.b16 %v2605, %v2597
        %v2854 = vpack.c.b16 %v2606, %v2598
        %v2855 = vpack.c.b16 %v2607, %v2599
        %v2856 = vpack.c.b16 %v2608, %v2600
        %v2857 = vpack.c.b16 %v2609, %v2601
        %v2858 = vpack.c.b16 %v2610, %v2602
        %v2859 = vpack.c.b16 %v2611, %v2603
        %v2860 = vpack.c.b16 %v2612, %v2604
        %v2861 = vpack.c.b16 %v2621, %v2613
        %v2862 = vpack.c.b16 %v2622, %v2614
        %v2863 = vpack.c.b16 %v2623, %v2615
        %v2864 = vpack.c.b16 %v2624, %v2616
        %v2865 = vpack.c.b16 %v2625, %v2617
        %v2866 = vpack.c.b16 %v2626, %v2618
        %v2867 = vpack.c.b16 %v2627, %v2619
        %v2868 = vpack.c.b16 %v2628, %v2620
        %v2869 = vpack.c.b16 %v2637, %v2629
        %v2870 = vpack.c.b16 %v2638, %v2630
        %v2871 = vpack.c.b16 %v2639, %v2631
        %v2872 = vpack.c.b16 %v2640, %v2632
        %v2873 = vpack.c.b16 %v2641, %v2633
        %v2874 = vpack.c.b16 %v2642, %v2634
        %v2875 = vpack.c.b16 %v2643, %v2635
        %v2876 = vpack.c.b16 %v2644, %v2636
        %v2877 = vpack.c.b16 %v2653, %v2645
        %v2878 = vpack.c.b16 %v2654, %v2646
        %v2879 = vpack.c.b16 %v2655, %v2647
        %v2880 = vpack.c.b16 %v2656, %v2648
        %v2881 = vpack.c.b16 %v2657, %v2649
        %v2882 = vpack.c.b16 %v2658, %v2650
        %v2883 = vpack.c.b16 %v2659, %v2651
        %v2884 = vpack.c.b16 %v2660, %v2652
        %v2885 = vpack.c.b16 %v2669, %v2661
        %v2886 = vpack.c.b16 %v2670, %v2662
        %v2887 = vpack.c.b16 %v2671, %v2663
        %v2888 = vpack.c.b16 %v2672, %v2664
        %v2889 = vpack.c.b16 %v2673, %v2665
        %v2890 = vpack.c.b16 %v2674, %v2666
        %v2891 = vpack.c.b16 %v2675, %v2667
        %v2892 = vpack.c.b16 %v2676, %v2668
        %v2893 = vpack.c.b16 %v2685, %v2677
        %v2894 = vpack.c.b16 %v2686, %v2678
        %v2895 = vpack.c.b16 %v2687, %v2679
        %v2896 = vpack.c.b16 %v2688, %v2680
        %v2897 = vpack.c.b16 %v2689, %v2681
        %v2898 = vpack.c.b16 %v2690, %v2682
        %v2899 = vpack.c.b16 %v2691, %v2683
        %v2900 = vpack.c.b16 %v2692, %v2684
        %v2901 = vpack.c.b16 %v2701, %v2693
        %v2902 = vpack.c.b16 %v2702, %v2694
        %v2903 = vpack.c.b16 %v2703, %v2695
        %v2904 = vpack.c.b16 %v2704, %v2696
        %v2905 = vpack.c.b16 %v2705, %v2697
        %v2906 = vpack.c.b16 %v2706, %v2698
        %v2907 = vpack.c.b16 %v2707, %v2699
        %v2908 = vpack.c.b16 %v2708, %v2700
        %v2909 = vpack.c.b16 %v2717, %v2709
        %v2910 = vpack.c.b16 %v2718, %v2710
        %v2911 = vpack.c.b16 %v2719, %v2711
        %v2912 = vpack.c.b16 %v2720, %v2712
        %v2913 = vpack.c.b16 %v2721, %v2713
        %v2914 = vpack.c.b16 %v2722, %v2714
        %v2915 = vpack.c.b16 %v2723, %v2715
        %v2916 = vpack.c.b16 %v2724, %v2716
        %v2917 = vpack.c.b16 %v2733, %v2725
        %v2918 = vpack.c.b16 %v2734, %v2726
        %v2919 = vpack.c.b16 %v2735, %v2727
        %v2920 = vpack.c.b16 %v2736, %v2728
        %v2921 = vpack.c.b16 %v2737, %v2729
        %v2922 = vpack.c.b16 %v2738, %v2730
        %v2923 = vpack.c.b16 %v2739, %v2731
        %v2924 = vpack.c.b16 %v2740, %v2732
        %v2925 = vpack.c.b16 %v2749, %v2741
        %v2926 = vpack.c.b16 %v2750, %v2742
        %v2927 = vpack.c.b16 %v2751, %v2743
        %v2928 = vpack.c.b16 %v2752, %v2744
        %v2929 = vpack.c.b16 %v2753, %v2745
        %v2930 = vpack.c.b16 %v2754, %v2746
        %v2931 = vpack.c.b16 %v2755, %v2747
        %v2932 = vpack.c.b16 %v2756, %v2748
        %v2933 = vpack.c.b16 %v2765, %v2757
        %v2934 = vpack.c.b16 %v2766, %v2758
        %v2935 = vpack.c.b16 %v2767, %v2759
        %v2936 = vpack.c.b16 %v2768, %v2760
        %v2937 = vpack.c.b16 %v2769, %v2761
        %v2938 = vpack.c.b16 %v2770, %v2762
        %v2939 = vpack.c.b16 %v2771, %v2763
        %v2940 = vpack.c.b16 %v2772, %v2764
        %v2941 = vpack.c.b16 %v2781, %v2773
        %v2942 = vpack.c.b16 %v2782, %v2774
        %v2943 = vpack.c.b16 %v2783, %v2775
        %v2944 = vpack.c.b16 %v2784, %v2776
        %v2945 = vpack.c.b16 %v2785, %v2777
        %v2946 = vpack.c.b16 %v2786, %v2778
        %v2947 = vpack.c.b16 %v2787, %v2779
        %v2948 = vpack.c.b16 %v2788, %v2780
        %v2949 = vpack.c.b16 %v2797, %v2789
        %v2950 = vpack.c.b16 %v2798, %v2790
        %v2951 = vpack.c.b16 %v2799, %v2791
        %v2952 = vpack.c.b16 %v2800, %v2792
        %v2953 = vpack.c.b16 %v2801, %v2793
        %v2954 = vpack.c.b16 %v2802, %v2794
        %v2955 = vpack.c.b16 %v2803, %v2795
        %v2956 = vpack.c.b16 %v2804, %v2796
        %v2957 = vpack.c.b16 %v2813, %v2805
        %v2958 = vpack.c.b16 %v2814, %v2806
        %v2959 = vpack.c.b16 %v2815, %v2807
        %v2960 = vpack.c.b16 %v2816, %v2808
        %v2961 = vpack.c.b16 %v2817, %v2809
        %v2962 = vpack.c.b16 %v2818, %v2810
        %v2963 = vpack.c.b16 %v2819, %v2811
        %v2964 = vpack.c.b16 %v2820, %v2812
        %v2965 = vpack.c.b16 %v2829, %v2821
        %v2966 = vpack.c.b16 %v2830, %v2822
        %v2967 = vpack.c.b16 %v2831, %v2823
        %v2968 = vpack.c.b16 %v2832, %v2824
        %v2969 = vpack.c.b16 %v2833, %v2825
        %v2970 = vpack.c.b16 %v2834, %v2826
        %v2971 = vpack.c.b16 %v2835, %v2827
        %v2972 = vpack.c.b16 %v2836, %v2828
        %v2973 = vpack.c.b16 %v2845, %v2837
        %v2974 = vpack.c.b16 %v2846, %v2838
        %v2975 = vpack.c.b16 %v2847, %v2839
        %v2976 = vpack.c.b16 %v2848, %v2840
        %v2977 = vpack.c.b16 %v2849, %v2841
        %v2978 = vpack.c.b16 %v2850, %v2842
        %v2979 = vpack.c.b16 %v2851, %v2843
        %v2980 = vpack.c.b16 %v2852, %v2844
        %3109 = vmatprep.subr.bf16.mxu0 %v2854
        %3110 = vmatpush1.bf16.msra.mxu0 %v2853
        %3111 = vmatprep.subr.bf16.mxu0 %v2862
        %3112 = vmatpush1.bf16.msra.mxu0 %v2861
        %3113 = vmatprep.subr.bf16.mxu0 %v2870
        %3114 = vmatpush1.bf16.msra.mxu0 %v2869
        %3115 = vmatprep.subr.bf16.mxu0 %v2878
        %3116 = vmatpush1.bf16.msra.mxu0 %v2877
        %3117 = vmatprep.subr.bf16.mxu0 %v2886
        %3118 = vmatpush1.bf16.msra.mxu0 %v2885
        %3119 = vmatprep.subr.bf16.mxu0 %v2894
        %3120 = vmatpush1.bf16.msra.mxu0 %v2893
        %3121 = vmatprep.subr.bf16.mxu0 %v2902
        %3122 = vmatpush1.bf16.msra.mxu0 %v2901
        %3123 = vmatprep.subr.bf16.mxu0 %v2910
        %3124 = vmatpush1.bf16.msra.mxu0 %v2909
        %3125 = vmatprep.subr.bf16.mxu0 %v2918
        %3126 = vmatpush1.bf16.msra.mxu0 %v2917
        %3127 = vmatprep.subr.bf16.mxu0 %v2926
        %3128 = vmatpush1.bf16.msra.mxu0 %v2925
        %3129 = vmatprep.subr.bf16.mxu0 %v2934
        %3130 = vmatpush1.bf16.msra.mxu0 %v2933
        %3131 = vmatprep.subr.bf16.mxu0 %v2942
        %3132 = vmatpush1.bf16.msra.mxu0 %v2941
        %3133 = vmatprep.subr.bf16.mxu0 %v2950
        %3134 = vmatpush1.bf16.msra.mxu0 %v2949
        %3135 = vmatprep.subr.bf16.mxu0 %v2958
        %3136 = vmatpush1.bf16.msra.mxu0 %v2957
        %3137 = vmatprep.subr.bf16.mxu0 %v2966
        %3138 = vmatpush1.bf16.msra.mxu0 %v2965
        %3139 = vmatprep.subr.bf16.mxu0 %v2974
        %3140 = vmatpush1.bf16.msra.mxu0 %v2973
        %3141 = vmatprep.mubr.bf16.mxu0 %v2292
        %3142 = vmatmul.mubr.bf16.gmra.mrb[0].mxu0 %v2291
        %v3143 = vpop.f32.mrb[0].mxu0
        %v3144 = vadd.f32 %v2432, %v3143
        %v3145 = vpop.f32.mrb[0].mxu0
        %v3146 = vadd.f32 %v2436, %v3145
        %v3147 = vpop.f32.mrb[0].mxu0
        %v3148 = vadd.f32 %v2432, %v3147
        %v3149 = vpop.f32.mrb[0].mxu0
        %v3150 = vadd.f32 %v2436, %v3149
        %3151 = vmatprep.mubr.bf16.mxu0 %v2294
        %3152 = vmatmul.mubr.bf16.gmra.mrb[0].mxu0 %v2293
        %v3153 = vpop.f32.mrb[0].mxu0
        %v3154 = vadd.f32 %v2432, %v3153
        %v3155 = vpop.f32.mrb[0].mxu0
        %v3156 = vadd.f32 %v2436, %v3155
        %v3157 = vpop.f32.mrb[0].mxu0
        %v3158 = vadd.f32 %v2432, %v3157
        %v3159 = vpop.f32.mrb[0].mxu0
        %v3160 = vadd.f32 %v2436, %v3159
        %3161 = vmatprep.mubr.bf16.mxu0 %v2296
        %3162 = vmatmul.mubr.bf16.gmra.mrb[0].mxu0 %v2295
        %v3163 = vpop.f32.mrb[0].mxu0
        %v3164 = vadd.f32 %v2432, %v3163
        %v3165 = vpop.f32.mrb[0].mxu0
        %v3166 = vadd.f32 %v2436, %v3165
        %v3167 = vpop.f32.mrb[0].mxu0
        %v3168 = vadd.f32 %v2432, %v3167
        %v3169 = vpop.f32.mrb[0].mxu0
        %v3170 = vadd.f32 %v2436, %v3169
        %3171 = vmatprep.mubr.bf16.mxu0 %v2298
        %3172 = vmatmul.mubr.bf16.gmra.mrb[0].mxu0 %v2297
        %v3173 = vpop.f32.mrb[0].mxu0
        %v3174 = vadd.f32 %v2432, %v3173
        %v3175 = vpop.f32.mrb[0].mxu0
        %v3176 = vadd.f32 %v2436, %v3175
        %v3177 = vpop.f32.mrb[0].mxu0
        %v3178 = vadd.f32 %v2432, %v3177
        %v3179 = vpop.f32.mrb[0].mxu0
        %v3180 = vadd.f32 %v2436, %v3179
        %3181 = vdwg.mxu0
        %3182 = vmatprep.subr.bf16.mxu0 %v2856
        %3183 = vmatpush1.bf16.msra.mxu0 %v2855
        %3184 = vmatprep.subr.bf16.mxu0 %v2864
        %3185 = vmatpush1.bf16.msra.mxu0 %v2863
        %3186 = vmatprep.subr.bf16.mxu0 %v2872
        %3187 = vmatpush1.bf16.msra.mxu0 %v2871
        %3188 = vmatprep.subr.bf16.mxu0 %v2880
        %3189 = vmatpush1.bf16.msra.mxu0 %v2879
        %3190 = vmatprep.subr.bf16.mxu0 %v2888
        %3191 = vmatpush1.bf16.msra.mxu0 %v2887
        %3192 = vmatprep.subr.bf16.mxu0 %v2896
        %3193 = vmatpush1.bf16.msra.mxu0 %v2895
        %3194 = vmatprep.subr.bf16.mxu0 %v2904
        %3195 = vmatpush1.bf16.msra.mxu0 %v2903
        %3196 = vmatprep.subr.bf16.mxu0 %v2912
        %3197 = vmatpush1.bf16.msra.mxu0 %v2911
        %3198 = vmatprep.subr.bf16.mxu0 %v2920
        %3199 = vmatpush1.bf16.msra.mxu0 %v2919
        %3200 = vmatprep.subr.bf16.mxu0 %v2928
        %3201 = vmatpush1.bf16.msra.mxu0 %v2927
        %3202 = vmatprep.subr.bf16.mxu0 %v2936
        %3203 = vmatpush1.bf16.msra.mxu0 %v2935
        %3204 = vmatprep.subr.bf16.mxu0 %v2944
        %3205 = vmatpush1.bf16.msra.mxu0 %v2943
        %3206 = vmatprep.subr.bf16.mxu0 %v2952
        %3207 = vmatpush1.bf16.msra.mxu0 %v2951
        %3208 = vmatprep.subr.bf16.mxu0 %v2960
        %3209 = vmatpush1.bf16.msra.mxu0 %v2959
        %3210 = vmatprep.subr.bf16.mxu0 %v2968
        %3211 = vmatpush1.bf16.msra.mxu0 %v2967
        %3212 = vmatprep.subr.bf16.mxu0 %v2976
        %3213 = vmatpush1.bf16.msra.mxu0 %v2975
        %3214 = vmatprep.mubr.bf16.mxu0 %v2292
        %3215 = vmatmul.mubr.bf16.gmra.mrb[0].mxu0 %v2291
        %v3216 = vpop.f32.mrb[0].mxu0
        %v3217 = vadd.f32 %v2440, %v3216
        %v3218 = vpop.f32.mrb[0].mxu0
        %v3219 = vadd.f32 %v2444, %v3218
        %v3220 = vpop.f32.mrb[0].mxu0
        %v3221 = vadd.f32 %v2440, %v3220
        %v3222 = vpop.f32.mrb[0].mxu0
        %v3223 = vadd.f32 %v2444, %v3222
        %3224 = vmatprep.mubr.bf16.mxu0 %v2294
        %3225 = vmatmul.mubr.bf16.gmra.mrb[0].mxu0 %v2293
        %v3226 = vpop.f32.mrb[0].mxu0
        %v3227 = vadd.f32 %v2440, %v3226
        %v3228 = vpop.f32.mrb[0].mxu0
        %v3229 = vadd.f32 %v2444, %v3228
        %v3230 = vpop.f32.mrb[0].mxu0
        %v3231 = vadd.f32 %v2440, %v3230
        %v3232 = vpop.f32.mrb[0].mxu0
        %v3233 = vadd.f32 %v2444, %v3232
        %3234 = vmatprep.mubr.bf16.mxu0 %v2296
        %3235 = vmatmul.mubr.bf16.gmra.mrb[0].mxu0 %v2295
        %v3236 = vpop.f32.mrb[0].mxu0
        %v3237 = vadd.f32 %v2440, %v3236
        %v3238 = vpop.f32.mrb[0].mxu0
        %v3239 = vadd.f32 %v2444, %v3238
        %v3240 = vpop.f32.mrb[0].mxu0
        %v3241 = vadd.f32 %v2440, %v3240
        %v3242 = vpop.f32.mrb[0].mxu0
        %v3243 = vadd.f32 %v2444, %v3242
        %3244 = vmatprep.mubr.bf16.mxu0 %v2298
        %3245 = vmatmul.mubr.bf16.gmra.mrb[0].mxu0 %v2297
        %v3246 = vpop.f32.mrb[0].mxu0
        %v3247 = vadd.f32 %v2440, %v3246
        %v3248 = vpop.f32.mrb[0].mxu0
        %v3249 = vadd.f32 %v2444, %v3248
        %v3250 = vpop.f32.mrb[0].mxu0
        %v3251 = vadd.f32 %v2440, %v3250
        %v3252 = vpop.f32.mrb[0].mxu0
        %v3253 = vadd.f32 %v2444, %v3252
        %3254 = vdwg.mxu0
        %3255 = vmatprep.subr.bf16.mxu0 %v2858
        %3256 = vmatpush1.bf16.msra.mxu0 %v2857
        %3257 = vmatprep.subr.bf16.mxu0 %v2866
        %3258 = vmatpush1.bf16.msra.mxu0 %v2865
        %3259 = vmatprep.subr.bf16.mxu0 %v2874
        %3260 = vmatpush1.bf16.msra.mxu0 %v2873
        %3261 = vmatprep.subr.bf16.mxu0 %v2882
        %3262 = vmatpush1.bf16.msra.mxu0 %v2881
        %3263 = vmatprep.subr.bf16.mxu0 %v2890
        %3264 = vmatpush1.bf16.msra.mxu0 %v2889
        %3265 = vmatprep.subr.bf16.mxu0 %v2898
        %3266 = vmatpush1.bf16.msra.mxu0 %v2897
        %3267 = vmatprep.subr.bf16.mxu0 %v2906
        %3268 = vmatpush1.bf16.msra.mxu0 %v2905
        %3269 = vmatprep.subr.bf16.mxu0 %v2914
        %3270 = vmatpush1.bf16.msra.mxu0 %v2913
        %3271 = vmatprep.subr.bf16.mxu0 %v2922
        %3272 = vmatpush1.bf16.msra.mxu0 %v2921
        %3273 = vmatprep.subr.bf16.mxu0 %v2930
        %3274 = vmatpush1.bf16.msra.mxu0 %v2929
        %3275 = vmatprep.subr.bf16.mxu0 %v2938
        %3276 = vmatpush1.bf16.msra.mxu0 %v2937
        %3277 = vmatprep.subr.bf16.mxu0 %v2946
        %3278 = vmatpush1.bf16.msra.mxu0 %v2945
        %3279 = vmatprep.subr.bf16.mxu0 %v2954
        %3280 = vmatpush1.bf16.msra.mxu0 %v2953
        %3281 = vmatprep.subr.bf16.mxu0 %v2962
        %3282 = vmatpush1.bf16.msra.mxu0 %v2961
        %3283 = vmatprep.subr.bf16.mxu0 %v2970
        %3284 = vmatpush1.bf16.msra.mxu0 %v2969
        %3285 = vmatprep.subr.bf16.mxu0 %v2978
        %3286 = vmatpush1.bf16.msra.mxu0 %v2977
        %3287 = vmatprep.mubr.bf16.mxu0 %v2292
        %3288 = vmatmul.mubr.bf16.gmra.mrb[0].mxu0 %v2291
        %v3289 = vpop.f32.mrb[0].mxu0
        %v3290 = vadd.f32 %v2448, %v3289
        %v3291 = vpop.f32.mrb[0].mxu0
        %v3292 = vadd.f32 %v2452, %v3291
        %v3293 = vpop.f32.mrb[0].mxu0
        %v3294 = vadd.f32 %v2448, %v3293
        %v3295 = vpop.f32.mrb[0].mxu0
        %v3296 = vadd.f32 %v2452, %v3295
        %3297 = vmatprep.mubr.bf16.mxu0 %v2294
        %3298 = vmatmul.mubr.bf16.gmra.mrb[0].mxu0 %v2293
        %v3299 = vpop.f32.mrb[0].mxu0
        %v3300 = vadd.f32 %v2448, %v3299
        %v3301 = vpop.f32.mrb[0].mxu0
        %v3302 = vadd.f32 %v2452, %v3301
        %v3303 = vpop.f32.mrb[0].mxu0
        %v3304 = vadd.f32 %v2448, %v3303
        %v3305 = vpop.f32.mrb[0].mxu0
        %v3306 = vadd.f32 %v2452, %v3305
        %3307 = vmatprep.mubr.bf16.mxu0 %v2296
        %3308 = vmatmul.mubr.bf16.gmra.mrb[0].mxu0 %v2295
        %v3309 = vpop.f32.mrb[0].mxu0
        %v3310 = vadd.f32 %v2448, %v3309
        %v3311 = vpop.f32.mrb[0].mxu0
        %v3312 = vadd.f32 %v2452, %v3311
        %v3313 = vpop.f32.mrb[0].mxu0
        %v3314 = vadd.f32 %v2448, %v3313
        %v3315 = vpop.f32.mrb[0].mxu0
        %v3316 = vadd.f32 %v2452, %v3315
        %3317 = vmatprep.mubr.bf16.mxu0 %v2298
        %3318 = vmatmul.mubr.bf16.gmra.mrb[0].mxu0 %v2297
        %v3319 = vpop.f32.mrb[0].mxu0
        %v3320 = vadd.f32 %v2448, %v3319
        %v3321 = vpop.f32.mrb[0].mxu0
        %v3322 = vadd.f32 %v2452, %v3321
        %v3323 = vpop.f32.mrb[0].mxu0
        %v3324 = vadd.f32 %v2448, %v3323
        %v3325 = vpop.f32.mrb[0].mxu0
        %v3326 = vadd.f32 %v2452, %v3325
        %3327 = vdwg.mxu0
        %3328 = vmatprep.subr.bf16.mxu0 %v2860
        %3329 = vmatpush1.bf16.msra.mxu0 %v2859
        %3330 = vmatprep.subr.bf16.mxu0 %v2868
        %3331 = vmatpush1.bf16.msra.mxu0 %v2867
        %3332 = vmatprep.subr.bf16.mxu0 %v2876
        %3333 = vmatpush1.bf16.msra.mxu0 %v2875
        %3334 = vmatprep.subr.bf16.mxu0 %v2884
        %3335 = vmatpush1.bf16.msra.mxu0 %v2883
        %3336 = vmatprep.subr.bf16.mxu0 %v2892
        %3337 = vmatpush1.bf16.msra.mxu0 %v2891
        %3338 = vmatprep.subr.bf16.mxu0 %v2900
        %3339 = vmatpush1.bf16.msra.mxu0 %v2899
        %3340 = vmatprep.subr.bf16.mxu0 %v2908
        %3341 = vmatpush1.bf16.msra.mxu0 %v2907
        %3342 = vmatprep.subr.bf16.mxu0 %v2916
        %3343 = vmatpush1.bf16.msra.mxu0 %v2915
        %3344 = vmatprep.subr.bf16.mxu0 %v2924
        %3345 = vmatpush1.bf16.msra.mxu0 %v2923
        %3346 = vmatprep.subr.bf16.mxu0 %v2932
        %3347 = vmatpush1.bf16.msra.mxu0 %v2931
        %3348 = vmatprep.subr.bf16.mxu0 %v2940
        %3349 = vmatpush1.bf16.msra.mxu0 %v2939
        %3350 = vmatprep.subr.bf16.mxu0 %v2948
        %3351 = vmatpush1.bf16.msra.mxu0 %v2947
        %3352 = vmatprep.subr.bf16.mxu0 %v2956
        %3353 = vmatpush1.bf16.msra.mxu0 %v2955
        %3354 = vmatprep.subr.bf16.mxu0 %v2964
        %3355 = vmatpush1.bf16.msra.mxu0 %v2963
        %3356 = vmatprep.subr.bf16.mxu0 %v2972
        %3357 = vmatpush1.bf16.msra.mxu0 %v2971
        %3358 = vmatprep.subr.bf16.mxu0 %v2980
        %3359 = vmatpush1.bf16.msra.mxu0 %v2979
        %3360 = vmatprep.mubr.bf16.mxu0 %v2292
        %3361 = vmatmul.mubr.bf16.gmra.mrb[0].mxu0 %v2291
        %v3362 = vpop.f32.mrb[0].mxu0
        %v3363 = vadd.f32 %v2456, %v3362
        %v3364 = vpop.f32.mrb[0].mxu0
        %v3365 = vadd.f32 %v2460, %v3364
        %v3366 = vpop.f32.mrb[0].mxu0
        %v3367 = vadd.f32 %v2456, %v3366
        %v3368 = vpop.f32.mrb[0].mxu0
        %v3369 = vadd.f32 %v2460, %v3368
        %3370 = vmatprep.mubr.bf16.mxu0 %v2294
        %3371 = vmatmul.mubr.bf16.gmra.mrb[0].mxu0 %v2293
        %v3372 = vpop.f32.mrb[0].mxu0
        %v3373 = vadd.f32 %v2456, %v3372
        %v3374 = vpop.f32.mrb[0].mxu0
        %v3375 = vadd.f32 %v2460, %v3374
        %v3376 = vpop.f32.mrb[0].mxu0
        %v3377 = vadd.f32 %v2456, %v3376
        %v3378 = vpop.f32.mrb[0].mxu0
        %v3379 = vadd.f32 %v2460, %v3378
        %3380 = vmatprep.mubr.bf16.mxu0 %v2296
        %3381 = vmatmul.mubr.bf16.gmra.mrb[0].mxu0 %v2295
        %v3382 = vpop.f32.mrb[0].mxu0
        %v3383 = vadd.f32 %v2456, %v3382
        %v3384 = vpop.f32.mrb[0].mxu0
        %v3385 = vadd.f32 %v2460, %v3384
        %v3386 = vpop.f32.mrb[0].mxu0
        %v3387 = vadd.f32 %v2456, %v3386
        %v3388 = vpop.f32.mrb[0].mxu0
        %v3389 = vadd.f32 %v2460, %v3388
        %3390 = vmatprep.mubr.bf16.mxu0 %v2298
        %3391 = vmatmul.mubr.bf16.gmra.mrb[0].mxu0 %v2297
        %v3392 = vpop.f32.mrb[0].mxu0
        %v3393 = vadd.f32 %v2456, %v3392
        %v3394 = vpop.f32.mrb[0].mxu0
        %v3395 = vadd.f32 %v2460, %v3394
        %v3396 = vpop.f32.mrb[0].mxu0
        %v3397 = vadd.f32 %v2456, %v3396
        %v3398 = vpop.f32.mrb[0].mxu0
        %v3399 = vadd.f32 %v2460, %v3398
        %3400 = vdwg.mxu0
        %3401 = vst [vmem:[#allocation2] sm:$0xff] %v3144
        %3402 = vst [vmem:[#allocation2 + $0x8] sm:$0xff] %v3146
        %3403 = vst [vmem:[#allocation2 + $0x10] sm:$0xff] %v3217
        %3404 = vst [vmem:[#allocation2 + $0x18] sm:$0xff] %v3219
        %3405 = vst [vmem:[#allocation2 + $0x20] sm:$0xff] %v3290
        %3406 = vst [vmem:[#allocation2 + $0x28] sm:$0xff] %v3292
        %3407 = vst [vmem:[#allocation2 + $0x30] sm:$0xff] %v3363
        %3408 = vst [vmem:[#allocation2 + $0x38] sm:$0xff] %v3365
        %3409 = vst [vmem:[#allocation2 + $0x40] sm:$0xff] %v3148
        %3410 = vst [vmem:[#allocation2 + $0x48] sm:$0xff] %v3150
        %3411 = vst [vmem:[#allocation2 + $0x50] sm:$0xff] %v3221
        %3412 = vst [vmem:[#allocation2 + $0x58] sm:$0xff] %v3223
        %3413 = vst [vmem:[#allocation2 + $0x60] sm:$0xff] %v3294
        %3414 = vst [vmem:[#allocation2 + $0x68] sm:$0xff] %v3296
        %3415 = vst [vmem:[#allocation2 + $0x70] sm:$0xff] %v3367
        %3416 = vst [vmem:[#allocation2 + $0x78] sm:$0xff] %v3369
        %3417 = vst [vmem:[#allocation2 + $0x80] sm:$0xff] %v3154
        %3418 = vst [vmem:[#allocation2 + $0x88] sm:$0xff] %v3156
        %3419 = vst [vmem:[#allocation2 + $0x90] sm:$0xff] %v3227
        %3420 = vst [vmem:[#allocation2 + $0x98] sm:$0xff] %v3229
        %3421 = vst [vmem:[#allocation2 + $0xa0] sm:$0xff] %v3300
        %3422 = vst [vmem:[#allocation2 + $0xa8] sm:$0xff] %v3302
        %3423 = vst [vmem:[#allocation2 + $0xb0] sm:$0xff] %v3373
        %3424 = vst [vmem:[#allocation2 + $0xb8] sm:$0xff] %v3375
        %3425 = vst [vmem:[#allocation2 + $0xc0] sm:$0xff] %v3158
        %3426 = vst [vmem:[#allocation2 + $0xc8] sm:$0xff] %v3160
        %3427 = vst [vmem:[#allocation2 + $0xd0] sm:$0xff] %v3231
        %3428 = vst [vmem:[#allocation2 + $0xd8] sm:$0xff] %v3233
        %3429 = vst [vmem:[#allocation2 + $0xe0] sm:$0xff] %v3304
        %3430 = vst [vmem:[#allocation2 + $0xe8] sm:$0xff] %v3306
        %3431 = vst [vmem:[#allocation2 + $0xf0] sm:$0xff] %v3377
        %3432 = vst [vmem:[#allocation2 + $0xf8] sm:$0xff] %v3379
        %3433 = vst [vmem:[#allocation2 + $0x100] sm:$0xff] %v3164
        %3434 = vst [vmem:[#allocation2 + $0x108] sm:$0xff] %v3166
        %3435 = vst [vmem:[#allocation2 + $0x110] sm:$0xff] %v3237
        %3436 = vst [vmem:[#allocation2 + $0x118] sm:$0xff] %v3239
        %3437 = vst [vmem:[#allocation2 + $0x120] sm:$0xff] %v3310
        %3438 = vst [vmem:[#allocation2 + $0x128] sm:$0xff] %v3312
        %3439 = vst [vmem:[#allocation2 + $0x130] sm:$0xff] %v3383
        %3440 = vst [vmem:[#allocation2 + $0x138] sm:$0xff] %v3385
        %3441 = vst [vmem:[#allocation2 + $0x140] sm:$0xff] %v3168
        %3442 = vst [vmem:[#allocation2 + $0x148] sm:$0xff] %v3170
        %3443 = vst [vmem:[#allocation2 + $0x150] sm:$0xff] %v3241
        %3444 = vst [vmem:[#allocation2 + $0x158] sm:$0xff] %v3243
        %3445 = vst [vmem:[#allocation2 + $0x160] sm:$0xff] %v3314
        %3446 = vst [vmem:[#allocation2 + $0x168] sm:$0xff] %v3316
        %3447 = vst [vmem:[#allocation2 + $0x170] sm:$0xff] %v3387
        %3448 = vst [vmem:[#allocation2 + $0x178] sm:$0xff] %v3389
        %3449 = vst [vmem:[#allocation2 + $0x180] sm:$0xff] %v3174
        %3450 = vst [vmem:[#allocation2 + $0x188] sm:$0xff] %v3176
        %3451 = vst [vmem:[#allocation2 + $0x190] sm:$0xff] %v3247
        %3452 = vst [vmem:[#allocation2 + $0x198] sm:$0xff] %v3249
        %3453 = vst [vmem:[#allocation2 + $0x1a0] sm:$0xff] %v3320
        %3454 = vst [vmem:[#allocation2 + $0x1a8] sm:$0xff] %v3322
        %3455 = vst [vmem:[#allocation2 + $0x1b0] sm:$0xff] %v3393
        %3456 = vst [vmem:[#allocation2 + $0x1b8] sm:$0xff] %v3395
        %3457 = vst [vmem:[#allocation2 + $0x1c0] sm:$0xff] %v3178
        %3458 = vst [vmem:[#allocation2 + $0x1c8] sm:$0xff] %v3180
        %3459 = vst [vmem:[#allocation2 + $0x1d0] sm:$0xff] %v3251
        %3460 = vst [vmem:[#allocation2 + $0x1d8] sm:$0xff] %v3253
        %3461 = vst [vmem:[#allocation2 + $0x1e0] sm:$0xff] %v3324
        %3462 = vst [vmem:[#allocation2 + $0x1e8] sm:$0xff] %v3326
        %3463 = vst [vmem:[#allocation2 + $0x1f0] sm:$0xff] %v3397
        %3464 = vst [vmem:[#allocation2 + $0x1f8] sm:$0xff] %v3399
        %v3465 = vld [vmem:[#allocation9] sm:$0xff]
        %v3466 = vld [vmem:[#allocation9 + $0x8] sm:$0xff]
        %v3467 = vld [vmem:[#allocation9 + $0x10] sm:$0xff]
        %v3468 = vld [vmem:[#allocation9 + $0x18] sm:$0xff]
        %v3469 = vld [vmem:[#allocation9 + $0x20] sm:$0xff]
        %v3470 = vld [vmem:[#allocation9 + $0x28] sm:$0xff]
        %v3471 = vld [vmem:[#allocation9 + $0x30] sm:$0xff]
        %v3472 = vld [vmem:[#allocation9 + $0x38] sm:$0xff]
        %v3473 = vld [vmem:[#allocation9 + $0x40] sm:$0xff]
        %v3474 = vld [vmem:[#allocation9 + $0x48] sm:$0xff]
        %v3475 = vld [vmem:[#allocation9 + $0x50] sm:$0xff]
        %v3476 = vld [vmem:[#allocation9 + $0x58] sm:$0xff]
        %v3477 = vld [vmem:[#allocation9 + $0x60] sm:$0xff]
        %v3478 = vld [vmem:[#allocation9 + $0x68] sm:$0xff]
        %v3479 = vld [vmem:[#allocation9 + $0x70] sm:$0xff]
        %v3480 = vld [vmem:[#allocation9 + $0x78] sm:$0xff]
        %v3481 = vld [vmem:[#allocation9 + $0x80] sm:$0xff]
        %v3482 = vld [vmem:[#allocation9 + $0x88] sm:$0xff]
        %v3483 = vld [vmem:[#allocation9 + $0x90] sm:$0xff]
        %v3484 = vld [vmem:[#allocation9 + $0x98] sm:$0xff]
        %v3485 = vld [vmem:[#allocation9 + $0xa0] sm:$0xff]
        %v3486 = vld [vmem:[#allocation9 + $0xa8] sm:$0xff]
        %v3487 = vld [vmem:[#allocation9 + $0xb0] sm:$0xff]
        %v3488 = vld [vmem:[#allocation9 + $0xb8] sm:$0xff]
        %v3489 = vld [vmem:[#allocation9 + $0xc0] sm:$0xff]
        %v3490 = vld [vmem:[#allocation9 + $0xc8] sm:$0xff]
        %v3491 = vld [vmem:[#allocation9 + $0xd0] sm:$0xff]
        %v3492 = vld [vmem:[#allocation9 + $0xd8] sm:$0xff]
        %v3493 = vld [vmem:[#allocation9 + $0xe0] sm:$0xff]
        %v3494 = vld [vmem:[#allocation9 + $0xe8] sm:$0xff]
        %v3495 = vld [vmem:[#allocation9 + $0xf0] sm:$0xff]
        %v3496 = vld [vmem:[#allocation9 + $0xf8] sm:$0xff]
        %v3497 = vld [vmem:[#allocation9 + $0x100] sm:$0xff]
        %v3498 = vld [vmem:[#allocation9 + $0x108] sm:$0xff]
        %v3499 = vld [vmem:[#allocation9 + $0x110] sm:$0xff]
        %v3500 = vld [vmem:[#allocation9 + $0x118] sm:$0xff]
        %v3501 = vld [vmem:[#allocation9 + $0x120] sm:$0xff]
        %v3502 = vld [vmem:[#allocation9 + $0x128] sm:$0xff]
        %v3503 = vld [vmem:[#allocation9 + $0x130] sm:$0xff]
        %v3504 = vld [vmem:[#allocation9 + $0x138] sm:$0xff]
        %v3505 = vld [vmem:[#allocation9 + $0x140] sm:$0xff]
        %v3506 = vld [vmem:[#allocation9 + $0x148] sm:$0xff]
        %v3507 = vld [vmem:[#allocation9 + $0x150] sm:$0xff]
        %v3508 = vld [vmem:[#allocation9 + $0x158] sm:$0xff]
        %v3509 = vld [vmem:[#allocation9 + $0x160] sm:$0xff]
        %v3510 = vld [vmem:[#allocation9 + $0x168] sm:$0xff]
        %v3511 = vld [vmem:[#allocation9 + $0x170] sm:$0xff]
        %v3512 = vld [vmem:[#allocation9 + $0x178] sm:$0xff]
        %v3513 = vld [vmem:[#allocation9 + $0x180] sm:$0xff]
        %v3514 = vld [vmem:[#allocation9 + $0x188] sm:$0xff]
        %v3515 = vld [vmem:[#allocation9 + $0x190] sm:$0xff]
        %v3516 = vld [vmem:[#allocation9 + $0x198] sm:$0xff]
        %v3517 = vld [vmem:[#allocation9 + $0x1a0] sm:$0xff]
        %v3518 = vld [vmem:[#allocation9 + $0x1a8] sm:$0xff]
        %v3519 = vld [vmem:[#allocation9 + $0x1b0] sm:$0xff]
        %v3520 = vld [vmem:[#allocation9 + $0x1b8] sm:$0xff]
        %v3521 = vld [vmem:[#allocation9 + $0x1c0] sm:$0xff]
        %v3522 = vld [vmem:[#allocation9 + $0x1c8] sm:$0xff]
        %v3523 = vld [vmem:[#allocation9 + $0x1d0] sm:$0xff]
        %v3524 = vld [vmem:[#allocation9 + $0x1d8] sm:$0xff]
        %v3525 = vld [vmem:[#allocation9 + $0x1e0] sm:$0xff]
        %v3526 = vld [vmem:[#allocation9 + $0x1e8] sm:$0xff]
        %v3527 = vld [vmem:[#allocation9 + $0x1f0] sm:$0xff]
        %v3528 = vld [vmem:[#allocation9 + $0x1f8] sm:$0xff]
        %v3529 = vld [vmem:[#allocation9 + $0x200] sm:$0xff]
        %v3530 = vld [vmem:[#allocation9 + $0x208] sm:$0xff]
        %v3531 = vld [vmem:[#allocation9 + $0x210] sm:$0xff]
        %v3532 = vld [vmem:[#allocation9 + $0x218] sm:$0xff]
        %v3533 = vld [vmem:[#allocation9 + $0x220] sm:$0xff]
        %v3534 = vld [vmem:[#allocation9 + $0x228] sm:$0xff]
        %v3535 = vld [vmem:[#allocation9 + $0x230] sm:$0xff]
        %v3536 = vld [vmem:[#allocation9 + $0x238] sm:$0xff]
        %v3537 = vld [vmem:[#allocation9 + $0x240] sm:$0xff]
        %v3538 = vld [vmem:[#allocation9 + $0x248] sm:$0xff]
        %v3539 = vld [vmem:[#allocation9 + $0x250] sm:$0xff]
        %v3540 = vld [vmem:[#allocation9 + $0x258] sm:$0xff]
        %v3541 = vld [vmem:[#allocation9 + $0x260] sm:$0xff]
        %v3542 = vld [vmem:[#allocation9 + $0x268] sm:$0xff]
        %v3543 = vld [vmem:[#allocation9 + $0x270] sm:$0xff]
        %v3544 = vld [vmem:[#allocation9 + $0x278] sm:$0xff]
        %v3545 = vld [vmem:[#allocation9 + $0x280] sm:$0xff]
        %v3546 = vld [vmem:[#allocation9 + $0x288] sm:$0xff]
        %v3547 = vld [vmem:[#allocation9 + $0x290] sm:$0xff]
        %v3548 = vld [vmem:[#allocation9 + $0x298] sm:$0xff]
        %v3549 = vld [vmem:[#allocation9 + $0x2a0] sm:$0xff]
        %v3550 = vld [vmem:[#allocation9 + $0x2a8] sm:$0xff]
        %v3551 = vld [vmem:[#allocation9 + $0x2b0] sm:$0xff]
        %v3552 = vld [vmem:[#allocation9 + $0x2b8] sm:$0xff]
        %v3553 = vld [vmem:[#allocation9 + $0x2c0] sm:$0xff]
        %v3554 = vld [vmem:[#allocation9 + $0x2c8] sm:$0xff]
        %v3555 = vld [vmem:[#allocation9 + $0x2d0] sm:$0xff]
        %v3556 = vld [vmem:[#allocation9 + $0x2d8] sm:$0xff]
        %v3557 = vld [vmem:[#allocation9 + $0x2e0] sm:$0xff]
        %v3558 = vld [vmem:[#allocation9 + $0x2e8] sm:$0xff]
        %v3559 = vld [vmem:[#allocation9 + $0x2f0] sm:$0xff]
        %v3560 = vld [vmem:[#allocation9 + $0x2f8] sm:$0xff]
        %v3561 = vld [vmem:[#allocation9 + $0x300] sm:$0xff]
        %v3562 = vld [vmem:[#allocation9 + $0x308] sm:$0xff]
        %v3563 = vld [vmem:[#allocation9 + $0x310] sm:$0xff]
        %v3564 = vld [vmem:[#allocation9 + $0x318] sm:$0xff]
        %v3565 = vld [vmem:[#allocation9 + $0x320] sm:$0xff]
        %v3566 = vld [vmem:[#allocation9 + $0x328] sm:$0xff]
        %v3567 = vld [vmem:[#allocation9 + $0x330] sm:$0xff]
        %v3568 = vld [vmem:[#allocation9 + $0x338] sm:$0xff]
        %v3569 = vld [vmem:[#allocation9 + $0x340] sm:$0xff]
        %v3570 = vld [vmem:[#allocation9 + $0x348] sm:$0xff]
        %v3571 = vld [vmem:[#allocation9 + $0x350] sm:$0xff]
        %v3572 = vld [vmem:[#allocation9 + $0x358] sm:$0xff]
        %v3573 = vld [vmem:[#allocation9 + $0x360] sm:$0xff]
        %v3574 = vld [vmem:[#allocation9 + $0x368] sm:$0xff]
        %v3575 = vld [vmem:[#allocation9 + $0x370] sm:$0xff]
        %v3576 = vld [vmem:[#allocation9 + $0x378] sm:$0xff]
        %v3577 = vld [vmem:[#allocation9 + $0x380] sm:$0xff]
        %v3578 = vld [vmem:[#allocation9 + $0x388] sm:$0xff]
        %v3579 = vld [vmem:[#allocation9 + $0x390] sm:$0xff]
        %v3580 = vld [vmem:[#allocation9 + $0x398] sm:$0xff]
        %v3581 = vld [vmem:[#allocation9 + $0x3a0] sm:$0xff]
        %v3582 = vld [vmem:[#allocation9 + $0x3a8] sm:$0xff]
        %v3583 = vld [vmem:[#allocation9 + $0x3b0] sm:$0xff]
        %v3584 = vld [vmem:[#allocation9 + $0x3b8] sm:$0xff]
        %v3585 = vld [vmem:[#allocation9 + $0x3c0] sm:$0xff]
        %v3586 = vld [vmem:[#allocation9 + $0x3c8] sm:$0xff]
        %v3587 = vld [vmem:[#allocation9 + $0x3d0] sm:$0xff]
        %v3588 = vld [vmem:[#allocation9 + $0x3d8] sm:$0xff]
        %v3589 = vld [vmem:[#allocation9 + $0x3e0] sm:$0xff]
        %v3590 = vld [vmem:[#allocation9 + $0x3e8] sm:$0xff]
        %v3591 = vld [vmem:[#allocation9 + $0x3f0] sm:$0xff]
        %v3592 = vld [vmem:[#allocation9 + $0x3f8] sm:$0xff]
        %v3593 = vld [vmem:[%s645] sm:$0xff]
        %v3594 = vld [vmem:[%s645 + $0x8] sm:$0xff]
        %v3595 = vld [vmem:[%s650] sm:$0xff]
        %v3596 = vld [vmem:[%s650 + $0x8] sm:$0xff]
        %s3597 = smul.u32 0, 8
        %s3598 = smul.addr %s3597, 8
        %s3599 = scalar_lea.vmem [#allocation2], %s3598
        %v3600 = vld [vmem:[%s3599] sm:$0xff]
        %v3601 = vld [vmem:[%s3599 + $0x8] sm:$0xff]
        %v3602 = vld [vmem:[%s3599 + $0x10] sm:$0xff]
        %v3603 = vld [vmem:[%s3599 + $0x18] sm:$0xff]
        %v3604 = vld [vmem:[%s3599 + $0x20] sm:$0xff]
        %v3605 = vld [vmem:[%s3599 + $0x28] sm:$0xff]
        %v3606 = vld [vmem:[%s3599 + $0x30] sm:$0xff]
        %v3607 = vld [vmem:[%s3599 + $0x38] sm:$0xff]
        %v3608 = vpack.c.bf16 %v3593, %v3593
        %v3609 = vpack.c.bf16 %v3594, %v3594
        %v3738 = vunpack.c.l.b16 %v3465
        %v3739 = vunpack.c.h.b16 %v3465
        %v3740 = vunpack.c.l.b16 %v3466
        %v3741 = vunpack.c.h.b16 %v3466
        %v3742 = vunpack.c.l.b16 %v3467
        %v3743 = vunpack.c.h.b16 %v3467
        %v3744 = vunpack.c.l.b16 %v3468
        %v3745 = vunpack.c.h.b16 %v3468
        %v3746 = vunpack.c.l.b16 %v3469
        %v3747 = vunpack.c.h.b16 %v3469
        %v3748 = vunpack.c.l.b16 %v3470
        %v3749 = vunpack.c.h.b16 %v3470
        %v3750 = vunpack.c.l.b16 %v3471
        %v3751 = vunpack.c.h.b16 %v3471
        %v3752 = vunpack.c.l.b16 %v3472
        %v3753 = vunpack.c.h.b16 %v3472
        %v3754 = vunpack.c.l.b16 %v3473
        %v3755 = vunpack.c.h.b16 %v3473
        %v3756 = vunpack.c.l.b16 %v3474
        %v3757 = vunpack.c.h.b16 %v3474
        %v3758 = vunpack.c.l.b16 %v3475
        %v3759 = vunpack.c.h.b16 %v3475
        %v3760 = vunpack.c.l.b16 %v3476
        %v3761 = vunpack.c.h.b16 %v3476
        %v3762 = vunpack.c.l.b16 %v3477
        %v3763 = vunpack.c.h.b16 %v3477
        %v3764 = vunpack.c.l.b16 %v3478
        %v3765 = vunpack.c.h.b16 %v3478
        %v3766 = vunpack.c.l.b16 %v3479
        %v3767 = vunpack.c.h.b16 %v3479
        %v3768 = vunpack.c.l.b16 %v3480
        %v3769 = vunpack.c.h.b16 %v3480
        %v3770 = vunpack.c.l.b16 %v3481
        %v3771 = vunpack.c.h.b16 %v3481
        %v3772 = vunpack.c.l.b16 %v3482
        %v3773 = vunpack.c.h.b16 %v3482
        %v3774 = vunpack.c.l.b16 %v3483
        %v3775 = vunpack.c.h.b16 %v3483
        %v3776 = vunpack.c.l.b16 %v3484
        %v3777 = vunpack.c.h.b16 %v3484
        %v3778 = vunpack.c.l.b16 %v3485
        %v3779 = vunpack.c.h.b16 %v3485
        %v3780 = vunpack.c.l.b16 %v3486
        %v3781 = vunpack.c.h.b16 %v3486
        %v3782 = vunpack.c.l.b16 %v3487
        %v3783 = vunpack.c.h.b16 %v3487
        %v3784 = vunpack.c.l.b16 %v3488
        %v3785 = vunpack.c.h.b16 %v3488
        %v3786 = vunpack.c.l.b16 %v3489
        %v3787 = vunpack.c.h.b16 %v3489
        %v3788 = vunpack.c.l.b16 %v3490
        %v3789 = vunpack.c.h.b16 %v3490
        %v3790 = vunpack.c.l.b16 %v3491
        %v3791 = vunpack.c.h.b16 %v3491
        %v3792 = vunpack.c.l.b16 %v3492
        %v3793 = vunpack.c.h.b16 %v3492
        %v3794 = vunpack.c.l.b16 %v3493
        %v3795 = vunpack.c.h.b16 %v3493
        %v3796 = vunpack.c.l.b16 %v3494
        %v3797 = vunpack.c.h.b16 %v3494
        %v3798 = vunpack.c.l.b16 %v3495
        %v3799 = vunpack.c.h.b16 %v3495
        %v3800 = vunpack.c.l.b16 %v3496
        %v3801 = vunpack.c.h.b16 %v3496
        %v3802 = vunpack.c.l.b16 %v3497
        %v3803 = vunpack.c.h.b16 %v3497
        %v3804 = vunpack.c.l.b16 %v3498
        %v3805 = vunpack.c.h.b16 %v3498
        %v3806 = vunpack.c.l.b16 %v3499
        %v3807 = vunpack.c.h.b16 %v3499
        %v3808 = vunpack.c.l.b16 %v3500
        %v3809 = vunpack.c.h.b16 %v3500
        %v3810 = vunpack.c.l.b16 %v3501
        %v3811 = vunpack.c.h.b16 %v3501
        %v3812 = vunpack.c.l.b16 %v3502
        %v3813 = vunpack.c.h.b16 %v3502
        %v3814 = vunpack.c.l.b16 %v3503
        %v3815 = vunpack.c.h.b16 %v3503
        %v3816 = vunpack.c.l.b16 %v3504
        %v3817 = vunpack.c.h.b16 %v3504
        %v3818 = vunpack.c.l.b16 %v3505
        %v3819 = vunpack.c.h.b16 %v3505
        %v3820 = vunpack.c.l.b16 %v3506
        %v3821 = vunpack.c.h.b16 %v3506
        %v3822 = vunpack.c.l.b16 %v3507
        %v3823 = vunpack.c.h.b16 %v3507
        %v3824 = vunpack.c.l.b16 %v3508
        %v3825 = vunpack.c.h.b16 %v3508
        %v3826 = vunpack.c.l.b16 %v3509
        %v3827 = vunpack.c.h.b16 %v3509
        %v3828 = vunpack.c.l.b16 %v3510
        %v3829 = vunpack.c.h.b16 %v3510
        %v3830 = vunpack.c.l.b16 %v3511
        %v3831 = vunpack.c.h.b16 %v3511
        %v3832 = vunpack.c.l.b16 %v3512
        %v3833 = vunpack.c.h.b16 %v3512
        %v3834 = vunpack.c.l.b16 %v3513
        %v3835 = vunpack.c.h.b16 %v3513
        %v3836 = vunpack.c.l.b16 %v3514
        %v3837 = vunpack.c.h.b16 %v3514
        %v3838 = vunpack.c.l.b16 %v3515
        %v3839 = vunpack.c.h.b16 %v3515
        %v3840 = vunpack.c.l.b16 %v3516
        %v3841 = vunpack.c.h.b16 %v3516
        %v3842 = vunpack.c.l.b16 %v3517
        %v3843 = vunpack.c.h.b16 %v3517
        %v3844 = vunpack.c.l.b16 %v3518
        %v3845 = vunpack.c.h.b16 %v3518
        %v3846 = vunpack.c.l.b16 %v3519
        %v3847 = vunpack.c.h.b16 %v3519
        %v3848 = vunpack.c.l.b16 %v3520
        %v3849 = vunpack.c.h.b16 %v3520
        %v3850 = vunpack.c.l.b16 %v3521
        %v3851 = vunpack.c.h.b16 %v3521
        %v3852 = vunpack.c.l.b16 %v3522
        %v3853 = vunpack.c.h.b16 %v3522
        %v3854 = vunpack.c.l.b16 %v3523
        %v3855 = vunpack.c.h.b16 %v3523
        %v3856 = vunpack.c.l.b16 %v3524
        %v3857 = vunpack.c.h.b16 %v3524
        %v3858 = vunpack.c.l.b16 %v3525
        %v3859 = vunpack.c.h.b16 %v3525
        %v3860 = vunpack.c.l.b16 %v3526
        %v3861 = vunpack.c.h.b16 %v3526
        %v3862 = vunpack.c.l.b16 %v3527
        %v3863 = vunpack.c.h.b16 %v3527
        %v3864 = vunpack.c.l.b16 %v3528
        %v3865 = vunpack.c.h.b16 %v3528
        %v3866 = vunpack.c.l.b16 %v3529
        %v3867 = vunpack.c.h.b16 %v3529
        %v3868 = vunpack.c.l.b16 %v3530
        %v3869 = vunpack.c.h.b16 %v3530
        %v3870 = vunpack.c.l.b16 %v3531
        %v3871 = vunpack.c.h.b16 %v3531
        %v3872 = vunpack.c.l.b16 %v3532
        %v3873 = vunpack.c.h.b16 %v3532
        %v3874 = vunpack.c.l.b16 %v3533
        %v3875 = vunpack.c.h.b16 %v3533
        %v3876 = vunpack.c.l.b16 %v3534
        %v3877 = vunpack.c.h.b16 %v3534
        %v3878 = vunpack.c.l.b16 %v3535
        %v3879 = vunpack.c.h.b16 %v3535
        %v3880 = vunpack.c.l.b16 %v3536
        %v3881 = vunpack.c.h.b16 %v3536
        %v3882 = vunpack.c.l.b16 %v3537
        %v3883 = vunpack.c.h.b16 %v3537
        %v3884 = vunpack.c.l.b16 %v3538
        %v3885 = vunpack.c.h.b16 %v3538
        %v3886 = vunpack.c.l.b16 %v3539
        %v3887 = vunpack.c.h.b16 %v3539
        %v3888 = vunpack.c.l.b16 %v3540
        %v3889 = vunpack.c.h.b16 %v3540
        %v3890 = vunpack.c.l.b16 %v3541
        %v3891 = vunpack.c.h.b16 %v3541
        %v3892 = vunpack.c.l.b16 %v3542
        %v3893 = vunpack.c.h.b16 %v3542
        %v3894 = vunpack.c.l.b16 %v3543
        %v3895 = vunpack.c.h.b16 %v3543
        %v3896 = vunpack.c.l.b16 %v3544
        %v3897 = vunpack.c.h.b16 %v3544
        %v3898 = vunpack.c.l.b16 %v3545
        %v3899 = vunpack.c.h.b16 %v3545
        %v3900 = vunpack.c.l.b16 %v3546
        %v3901 = vunpack.c.h.b16 %v3546
        %v3902 = vunpack.c.l.b16 %v3547
        %v3903 = vunpack.c.h.b16 %v3547
        %v3904 = vunpack.c.l.b16 %v3548
        %v3905 = vunpack.c.h.b16 %v3548
        %v3906 = vunpack.c.l.b16 %v3549
        %v3907 = vunpack.c.h.b16 %v3549
        %v3908 = vunpack.c.l.b16 %v3550
        %v3909 = vunpack.c.h.b16 %v3550
        %v3910 = vunpack.c.l.b16 %v3551
        %v3911 = vunpack.c.h.b16 %v3551
        %v3912 = vunpack.c.l.b16 %v3552
        %v3913 = vunpack.c.h.b16 %v3552
        %v3914 = vunpack.c.l.b16 %v3553
        %v3915 = vunpack.c.h.b16 %v3553
        %v3916 = vunpack.c.l.b16 %v3554
        %v3917 = vunpack.c.h.b16 %v3554
        %v3918 = vunpack.c.l.b16 %v3555
        %v3919 = vunpack.c.h.b16 %v3555
        %v3920 = vunpack.c.l.b16 %v3556
        %v3921 = vunpack.c.h.b16 %v3556
        %v3922 = vunpack.c.l.b16 %v3557
        %v3923 = vunpack.c.h.b16 %v3557
        %v3924 = vunpack.c.l.b16 %v3558
        %v3925 = vunpack.c.h.b16 %v3558
        %v3926 = vunpack.c.l.b16 %v3559
        %v3927 = vunpack.c.h.b16 %v3559
        %v3928 = vunpack.c.l.b16 %v3560
        %v3929 = vunpack.c.h.b16 %v3560
        %v3930 = vunpack.c.l.b16 %v3561
        %v3931 = vunpack.c.h.b16 %v3561
        %v3932 = vunpack.c.l.b16 %v3562
        %v3933 = vunpack.c.h.b16 %v3562
        %v3934 = vunpack.c.l.b16 %v3563
        %v3935 = vunpack.c.h.b16 %v3563
        %v3936 = vunpack.c.l.b16 %v3564
        %v3937 = vunpack.c.h.b16 %v3564
        %v3938 = vunpack.c.l.b16 %v3565
        %v3939 = vunpack.c.h.b16 %v3565
        %v3940 = vunpack.c.l.b16 %v3566
        %v3941 = vunpack.c.h.b16 %v3566
        %v3942 = vunpack.c.l.b16 %v3567
        %v3943 = vunpack.c.h.b16 %v3567
        %v3944 = vunpack.c.l.b16 %v3568
        %v3945 = vunpack.c.h.b16 %v3568
        %v3946 = vunpack.c.l.b16 %v3569
        %v3947 = vunpack.c.h.b16 %v3569
        %v3948 = vunpack.c.l.b16 %v3570
        %v3949 = vunpack.c.h.b16 %v3570
        %v3950 = vunpack.c.l.b16 %v3571
        %v3951 = vunpack.c.h.b16 %v3571
        %v3952 = vunpack.c.l.b16 %v3572
        %v3953 = vunpack.c.h.b16 %v3572
        %v3954 = vunpack.c.l.b16 %v3573
        %v3955 = vunpack.c.h.b16 %v3573
        %v3956 = vunpack.c.l.b16 %v3574
        %v3957 = vunpack.c.h.b16 %v3574
        %v3958 = vunpack.c.l.b16 %v3575
        %v3959 = vunpack.c.h.b16 %v3575
        %v3960 = vunpack.c.l.b16 %v3576
        %v3961 = vunpack.c.h.b16 %v3576
        %v3962 = vunpack.c.l.b16 %v3577
        %v3963 = vunpack.c.h.b16 %v3577
        %v3964 = vunpack.c.l.b16 %v3578
        %v3965 = vunpack.c.h.b16 %v3578
        %v3966 = vunpack.c.l.b16 %v3579
        %v3967 = vunpack.c.h.b16 %v3579
        %v3968 = vunpack.c.l.b16 %v3580
        %v3969 = vunpack.c.h.b16 %v3580
        %v3970 = vunpack.c.l.b16 %v3581
        %v3971 = vunpack.c.h.b16 %v3581
        %v3972 = vunpack.c.l.b16 %v3582
        %v3973 = vunpack.c.h.b16 %v3582
        %v3974 = vunpack.c.l.b16 %v3583
        %v3975 = vunpack.c.h.b16 %v3583
        %v3976 = vunpack.c.l.b16 %v3584
        %v3977 = vunpack.c.h.b16 %v3584
        %v3978 = vunpack.c.l.b16 %v3585
        %v3979 = vunpack.c.h.b16 %v3585
        %v3980 = vunpack.c.l.b16 %v3586
        %v3981 = vunpack.c.h.b16 %v3586
        %v3982 = vunpack.c.l.b16 %v3587
        %v3983 = vunpack.c.h.b16 %v3587
        %v3984 = vunpack.c.l.b16 %v3588
        %v3985 = vunpack.c.h.b16 %v3588
        %v3986 = vunpack.c.l.b16 %v3589
        %v3987 = vunpack.c.h.b16 %v3589
        %v3988 = vunpack.c.l.b16 %v3590
        %v3989 = vunpack.c.h.b16 %v3590
        %v3990 = vunpack.c.l.b16 %v3591
        %v3991 = vunpack.c.h.b16 %v3591
        %v3992 = vunpack.c.l.b16 %v3592
        %v3993 = vunpack.c.h.b16 %v3592
        %v3994 = vpack.c.b16 %v3746, %v3738
        %v3995 = vpack.c.b16 %v3747, %v3739
        %v3996 = vpack.c.b16 %v3748, %v3740
        %v3997 = vpack.c.b16 %v3749, %v3741
        %v3998 = vpack.c.b16 %v3750, %v3742
        %v3999 = vpack.c.b16 %v3751, %v3743
        %v4000 = vpack.c.b16 %v3752, %v3744
        %v4001 = vpack.c.b16 %v3753, %v3745
        %v4002 = vpack.c.b16 %v3762, %v3754
        %v4003 = vpack.c.b16 %v3763, %v3755
        %v4004 = vpack.c.b16 %v3764, %v3756
        %v4005 = vpack.c.b16 %v3765, %v3757
        %v4006 = vpack.c.b16 %v3766, %v3758
        %v4007 = vpack.c.b16 %v3767, %v3759
        %v4008 = vpack.c.b16 %v3768, %v3760
        %v4009 = vpack.c.b16 %v3769, %v3761
        %v4010 = vpack.c.b16 %v3778, %v3770
        %v4011 = vpack.c.b16 %v3779, %v3771
        %v4012 = vpack.c.b16 %v3780, %v3772
        %v4013 = vpack.c.b16 %v3781, %v3773
        %v4014 = vpack.c.b16 %v3782, %v3774
        %v4015 = vpack.c.b16 %v3783, %v3775
        %v4016 = vpack.c.b16 %v3784, %v3776
        %v4017 = vpack.c.b16 %v3785, %v3777
        %v4018 = vpack.c.b16 %v3794, %v3786
        %v4019 = vpack.c.b16 %v3795, %v3787
        %v4020 = vpack.c.b16 %v3796, %v3788
        %v4021 = vpack.c.b16 %v3797, %v3789
        %v4022 = vpack.c.b16 %v3798, %v3790
        %v4023 = vpack.c.b16 %v3799, %v3791
        %v4024 = vpack.c.b16 %v3800, %v3792
        %v4025 = vpack.c.b16 %v3801, %v3793
        %v4026 = vpack.c.b16 %v3810, %v3802
        %v4027 = vpack.c.b16 %v3811, %v3803
        %v4028 = vpack.c.b16 %v3812, %v3804
        %v4029 = vpack.c.b16 %v3813, %v3805
        %v4030 = vpack.c.b16 %v3814, %v3806
        %v4031 = vpack.c.b16 %v3815, %v3807
        %v4032 = vpack.c.b16 %v3816, %v3808
        %v4033 = vpack.c.b16 %v3817, %v3809
        %v4034 = vpack.c.b16 %v3826, %v3818
        %v4035 = vpack.c.b16 %v3827, %v3819
        %v4036 = vpack.c.b16 %v3828, %v3820
        %v4037 = vpack.c.b16 %v3829, %v3821
        %v4038 = vpack.c.b16 %v3830, %v3822
        %v4039 = vpack.c.b16 %v3831, %v3823
        %v4040 = vpack.c.b16 %v3832, %v3824
        %v4041 = vpack.c.b16 %v3833, %v3825
        %v4042 = vpack.c.b16 %v3842, %v3834
        %v4043 = vpack.c.b16 %v3843, %v3835
        %v4044 = vpack.c.b16 %v3844, %v3836
        %v4045 = vpack.c.b16 %v3845, %v3837
        %v4046 = vpack.c.b16 %v3846, %v3838
        %v4047 = vpack.c.b16 %v3847, %v3839
        %v4048 = vpack.c.b16 %v3848, %v3840
        %v4049 = vpack.c.b16 %v3849, %v3841
        %v4050 = vpack.c.b16 %v3858, %v3850
        %v4051 = vpack.c.b16 %v3859, %v3851
        %v4052 = vpack.c.b16 %v3860, %v3852
        %v4053 = vpack.c.b16 %v3861, %v3853
        %v4054 = vpack.c.b16 %v3862, %v3854
        %v4055 = vpack.c.b16 %v3863, %v3855
        %v4056 = vpack.c.b16 %v3864, %v3856
        %v4057 = vpack.c.b16 %v3865, %v3857
        %v4058 = vpack.c.b16 %v3874, %v3866
        %v4059 = vpack.c.b16 %v3875, %v3867
        %v4060 = vpack.c.b16 %v3876, %v3868
        %v4061 = vpack.c.b16 %v3877, %v3869
        %v4062 = vpack.c.b16 %v3878, %v3870
        %v4063 = vpack.c.b16 %v3879, %v3871
        %v4064 = vpack.c.b16 %v3880, %v3872
        %v4065 = vpack.c.b16 %v3881, %v3873
        %v4066 = vpack.c.b16 %v3890, %v3882
        %v4067 = vpack.c.b16 %v3891, %v3883
        %v4068 = vpack.c.b16 %v3892, %v3884
        %v4069 = vpack.c.b16 %v3893, %v3885
        %v4070 = vpack.c.b16 %v3894, %v3886
        %v4071 = vpack.c.b16 %v3895, %v3887
        %v4072 = vpack.c.b16 %v3896, %v3888
        %v4073 = vpack.c.b16 %v3897, %v3889
        %v4074 = vpack.c.b16 %v3906, %v3898
        %v4075 = vpack.c.b16 %v3907, %v3899
        %v4076 = vpack.c.b16 %v3908, %v3900
        %v4077 = vpack.c.b16 %v3909, %v3901
        %v4078 = vpack.c.b16 %v3910, %v3902
        %v4079 = vpack.c.b16 %v3911, %v3903
        %v4080 = vpack.c.b16 %v3912, %v3904
        %v4081 = vpack.c.b16 %v3913, %v3905
        %v4082 = vpack.c.b16 %v3922, %v3914
        %v4083 = vpack.c.b16 %v3923, %v3915
        %v4084 = vpack.c.b16 %v3924, %v3916
        %v4085 = vpack.c.b16 %v3925, %v3917
        %v4086 = vpack.c.b16 %v3926, %v3918
        %v4087 = vpack.c.b16 %v3927, %v3919
        %v4088 = vpack.c.b16 %v3928, %v3920
        %v4089 = vpack.c.b16 %v3929, %v3921
        %v4090 = vpack.c.b16 %v3938, %v3930
        %v4091 = vpack.c.b16 %v3939, %v3931
        %v4092 = vpack.c.b16 %v3940, %v3932
        %v4093 = vpack.c.b16 %v3941, %v3933
        %v4094 = vpack.c.b16 %v3942, %v3934
        %v4095 = vpack.c.b16 %v3943, %v3935
        %v4096 = vpack.c.b16 %v3944, %v3936
        %v4097 = vpack.c.b16 %v3945, %v3937
        %v4098 = vpack.c.b16 %v3954, %v3946
        %v4099 = vpack.c.b16 %v3955, %v3947
        %v4100 = vpack.c.b16 %v3956, %v3948
        %v4101 = vpack.c.b16 %v3957, %v3949
        %v4102 = vpack.c.b16 %v3958, %v3950
        %v4103 = vpack.c.b16 %v3959, %v3951
        %v4104 = vpack.c.b16 %v3960, %v3952
        %v4105 = vpack.c.b16 %v3961, %v3953
        %v4106 = vpack.c.b16 %v3970, %v3962
        %v4107 = vpack.c.b16 %v3971, %v3963
        %v4108 = vpack.c.b16 %v3972, %v3964
        %v4109 = vpack.c.b16 %v3973, %v3965
        %v4110 = vpack.c.b16 %v3974, %v3966
        %v4111 = vpack.c.b16 %v3975, %v3967
        %v4112 = vpack.c.b16 %v3976, %v3968
        %v4113 = vpack.c.b16 %v3977, %v3969
        %v4114 = vpack.c.b16 %v3986, %v3978
        %v4115 = vpack.c.b16 %v3987, %v3979
        %v4116 = vpack.c.b16 %v3988, %v3980
        %v4117 = vpack.c.b16 %v3989, %v3981
        %v4118 = vpack.c.b16 %v3990, %v3982
        %v4119 = vpack.c.b16 %v3991, %v3983
        %v4120 = vpack.c.b16 %v3992, %v3984
        %v4121 = vpack.c.b16 %v3993, %v3985
        %4250 = vmatprep.subr.bf16.mxu0 %v3995
        %4251 = vmatpush1.bf16.msra.mxu0 %v3994
        %4252 = vmatprep.subr.bf16.mxu0 %v4003
        %4253 = vmatpush1.bf16.msra.mxu0 %v4002
        %4254 = vmatprep.subr.bf16.mxu0 %v4011
        %4255 = vmatpush1.bf16.msra.mxu0 %v4010
        %4256 = vmatprep.subr.bf16.mxu0 %v4019
        %4257 = vmatpush1.bf16.msra.mxu0 %v4018
        %4258 = vmatprep.subr.bf16.mxu0 %v4027
        %4259 = vmatpush1.bf16.msra.mxu0 %v4026
        %4260 = vmatprep.subr.bf16.mxu0 %v4035
        %4261 = vmatpush1.bf16.msra.mxu0 %v4034
        %4262 = vmatprep.subr.bf16.mxu0 %v4043
        %4263 = vmatpush1.bf16.msra.mxu0 %v4042
        %4264 = vmatprep.subr.bf16.mxu0 %v4051
        %4265 = vmatpush1.bf16.msra.mxu0 %v4050
        %4266 = vmatprep.subr.bf16.mxu0 %v4059
        %4267 = vmatpush1.bf16.msra.mxu0 %v4058
        %4268 = vmatprep.subr.bf16.mxu0 %v4067
        %4269 = vmatpush1.bf16.msra.mxu0 %v4066
        %4270 = vmatprep.subr.bf16.mxu0 %v4075
        %4271 = vmatpush1.bf16.msra.mxu0 %v4074
        %4272 = vmatprep.subr.bf16.mxu0 %v4083
        %4273 = vmatpush1.bf16.msra.mxu0 %v4082
        %4274 = vmatprep.subr.bf16.mxu0 %v4091
        %4275 = vmatpush1.bf16.msra.mxu0 %v4090
        %4276 = vmatprep.subr.bf16.mxu0 %v4099
        %4277 = vmatpush1.bf16.msra.mxu0 %v4098
        %4278 = vmatprep.subr.bf16.mxu0 %v4107
        %4279 = vmatpush1.bf16.msra.mxu0 %v4106
        %4280 = vmatprep.subr.bf16.mxu0 %v4115
        %4281 = vmatpush1.bf16.msra.mxu0 %v4114
        %4282 = vmatprep.mubr.bf16.mxu0 %v3609
        %4283 = vmatmul.mubr.bf16.gmra.mrb[0].mxu0 %v3608
        %v4284 = vpop.f32.mrb[0].mxu0
        %v4285 = vadd.f32 0.0, %v4284
        %v4286 = vpop.f32.mrb[0].mxu0
        %v4287 = vadd.f32 0.0, %v4286
        %v4288 = vpop.f32.mrb[0].mxu0
        %v4289 = vpop.f32.mrb[0].mxu0
        %4290 = vdwg.mxu0
        %4291 = vmatprep.subr.bf16.mxu0 %v3997
        %4292 = vmatpush1.bf16.msra.mxu0 %v3996
        %4293 = vmatprep.subr.bf16.mxu0 %v4005
        %4294 = vmatpush1.bf16.msra.mxu0 %v4004
        %4295 = vmatprep.subr.bf16.mxu0 %v4013
        %4296 = vmatpush1.bf16.msra.mxu0 %v4012
        %4297 = vmatprep.subr.bf16.mxu0 %v4021
        %4298 = vmatpush1.bf16.msra.mxu0 %v4020
        %4299 = vmatprep.subr.bf16.mxu0 %v4029
        %4300 = vmatpush1.bf16.msra.mxu0 %v4028
        %4301 = vmatprep.subr.bf16.mxu0 %v4037
        %4302 = vmatpush1.bf16.msra.mxu0 %v4036
        %4303 = vmatprep.subr.bf16.mxu0 %v4045
        %4304 = vmatpush1.bf16.msra.mxu0 %v4044
        %4305 = vmatprep.subr.bf16.mxu0 %v4053
        %4306 = vmatpush1.bf16.msra.mxu0 %v4052
        %4307 = vmatprep.subr.bf16.mxu0 %v4061
        %4308 = vmatpush1.bf16.msra.mxu0 %v4060
        %4309 = vmatprep.subr.bf16.mxu0 %v4069
        %4310 = vmatpush1.bf16.msra.mxu0 %v4068
        %4311 = vmatprep.subr.bf16.mxu0 %v4077
        %4312 = vmatpush1.bf16.msra.mxu0 %v4076
        %4313 = vmatprep.subr.bf16.mxu0 %v4085
        %4314 = vmatpush1.bf16.msra.mxu0 %v4084
        %4315 = vmatprep.subr.bf16.mxu0 %v4093
        %4316 = vmatpush1.bf16.msra.mxu0 %v4092
        %4317 = vmatprep.subr.bf16.mxu0 %v4101
        %4318 = vmatpush1.bf16.msra.mxu0 %v4100
        %4319 = vmatprep.subr.bf16.mxu0 %v4109
        %4320 = vmatpush1.bf16.msra.mxu0 %v4108
        %4321 = vmatprep.subr.bf16.mxu0 %v4117
        %4322 = vmatpush1.bf16.msra.mxu0 %v4116
        %4323 = vmatprep.mubr.bf16.mxu0 %v3609
        %4324 = vmatmul.mubr.bf16.gmra.mrb[0].mxu0 %v3608
        %v4325 = vpop.f32.mrb[0].mxu0
        %v4326 = vadd.f32 0.0, %v4325
        %v4327 = vpop.f32.mrb[0].mxu0
        %v4328 = vadd.f32 0.0, %v4327
        %v4329 = vpop.f32.mrb[0].mxu0
        %v4330 = vpop.f32.mrb[0].mxu0
        %4331 = vdwg.mxu0
        %4332 = vmatprep.subr.bf16.mxu0 %v3999
        %4333 = vmatpush1.bf16.msra.mxu0 %v3998
        %4334 = vmatprep.subr.bf16.mxu0 %v4007
        %4335 = vmatpush1.bf16.msra.mxu0 %v4006
        %4336 = vmatprep.subr.bf16.mxu0 %v4015
        %4337 = vmatpush1.bf16.msra.mxu0 %v4014
        %4338 = vmatprep.subr.bf16.mxu0 %v4023
        %4339 = vmatpush1.bf16.msra.mxu0 %v4022
        %4340 = vmatprep.subr.bf16.mxu0 %v4031
        %4341 = vmatpush1.bf16.msra.mxu0 %v4030
        %4342 = vmatprep.subr.bf16.mxu0 %v4039
        %4343 = vmatpush1.bf16.msra.mxu0 %v4038
        %4344 = vmatprep.subr.bf16.mxu0 %v4047
        %4345 = vmatpush1.bf16.msra.mxu0 %v4046
        %4346 = vmatprep.subr.bf16.mxu0 %v4055
        %4347 = vmatpush1.bf16.msra.mxu0 %v4054
        %4348 = vmatprep.subr.bf16.mxu0 %v4063
        %4349 = vmatpush1.bf16.msra.mxu0 %v4062
        %4350 = vmatprep.subr.bf16.mxu0 %v4071
        %4351 = vmatpush1.bf16.msra.mxu0 %v4070
        %4352 = vmatprep.subr.bf16.mxu0 %v4079
        %4353 = vmatpush1.bf16.msra.mxu0 %v4078
        %4354 = vmatprep.subr.bf16.mxu0 %v4087
        %4355 = vmatpush1.bf16.msra.mxu0 %v4086
        %4356 = vmatprep.subr.bf16.mxu0 %v4095
        %4357 = vmatpush1.bf16.msra.mxu0 %v4094
        %4358 = vmatprep.subr.bf16.mxu0 %v4103
        %4359 = vmatpush1.bf16.msra.mxu0 %v4102
        %4360 = vmatprep.subr.bf16.mxu0 %v4111
        %4361 = vmatpush1.bf16.msra.mxu0 %v4110
        %4362 = vmatprep.subr.bf16.mxu0 %v4119
        %4363 = vmatpush1.bf16.msra.mxu0 %v4118
        %4364 = vmatprep.mubr.bf16.mxu0 %v3609
        %4365 = vmatmul.mubr.bf16.gmra.mrb[0].mxu0 %v3608
        %v4366 = vpop.f32.mrb[0].mxu0
        %v4367 = vadd.f32 0.0, %v4366
        %v4368 = vpop.f32.mrb[0].mxu0
        %v4369 = vadd.f32 0.0, %v4368
        %v4370 = vpop.f32.mrb[0].mxu0
        %v4371 = vpop.f32.mrb[0].mxu0
        %4372 = vdwg.mxu0
        %4373 = vmatprep.subr.bf16.mxu0 %v4001
        %4374 = vmatpush1.bf16.msra.mxu0 %v4000
        %4375 = vmatprep.subr.bf16.mxu0 %v4009
        %4376 = vmatpush1.bf16.msra.mxu0 %v4008
        %4377 = vmatprep.subr.bf16.mxu0 %v4017
        %4378 = vmatpush1.bf16.msra.mxu0 %v4016
        %4379 = vmatprep.subr.bf16.mxu0 %v4025
        %4380 = vmatpush1.bf16.msra.mxu0 %v4024
        %4381 = vmatprep.subr.bf16.mxu0 %v4033
        %4382 = vmatpush1.bf16.msra.mxu0 %v4032
        %4383 = vmatprep.subr.bf16.mxu0 %v4041
        %4384 = vmatpush1.bf16.msra.mxu0 %v4040
        %4385 = vmatprep.subr.bf16.mxu0 %v4049
        %4386 = vmatpush1.bf16.msra.mxu0 %v4048
        %4387 = vmatprep.subr.bf16.mxu0 %v4057
        %4388 = vmatpush1.bf16.msra.mxu0 %v4056
        %4389 = vmatprep.subr.bf16.mxu0 %v4065
        %4390 = vmatpush1.bf16.msra.mxu0 %v4064
        %4391 = vmatprep.subr.bf16.mxu0 %v4073
        %4392 = vmatpush1.bf16.msra.mxu0 %v4072
        %4393 = vmatprep.subr.bf16.mxu0 %v4081
        %4394 = vmatpush1.bf16.msra.mxu0 %v4080
        %4395 = vmatprep.subr.bf16.mxu0 %v4089
        %4396 = vmatpush1.bf16.msra.mxu0 %v4088
        %4397 = vmatprep.subr.bf16.mxu0 %v4097
        %4398 = vmatpush1.bf16.msra.mxu0 %v4096
        %4399 = vmatprep.subr.bf16.mxu0 %v4105
        %4400 = vmatpush1.bf16.msra.mxu0 %v4104
        %4401 = vmatprep.subr.bf16.mxu0 %v4113
        %4402 = vmatpush1.bf16.msra.mxu0 %v4112
        %4403 = vmatprep.subr.bf16.mxu0 %v4121
        %4404 = vmatpush1.bf16.msra.mxu0 %v4120
        %4405 = vmatprep.mubr.bf16.mxu0 %v3609
        %4406 = vmatmul.mubr.bf16.gmra.mrb[0].mxu0 %v3608
        %v4407 = vpop.f32.mrb[0].mxu0
        %v4408 = vadd.f32 0.0, %v4407
        %v4409 = vpop.f32.mrb[0].mxu0
        %v4410 = vadd.f32 0.0, %v4409
        %v4411 = vpop.f32.mrb[0].mxu0
        %v4412 = vpop.f32.mrb[0].mxu0
        %4413 = vdwg.mxu0
        %v4414 = vadd.f32 %v3600, %v4285
        %v4415 = vadd.f32 %v3601, %v4287
        %v4416 = vadd.f32 %v3602, %v4326
        %v4417 = vadd.f32 %v3603, %v4328
        %v4418 = vadd.f32 %v3604, %v4367
        %v4419 = vadd.f32 %v3605, %v4369
        %v4420 = vadd.f32 %v3606, %v4408
        %v4421 = vadd.f32 %v3607, %v4410
        %v4422 = vxor.u32 %v4414, 2147483648
        %v4423 = vxor.u32 %v4415, 2147483648
        %v4424 = vmul.f32 %v4422, 1.442695
        %v4425 = vpow.pop %v4424
        %v4426 = vmul.f32 %v4423, 1.442695
        %v4427 = vpow.pop %v4426
        %v4428 = vadd.f32 %v4425, 1.0
        %v4429 = vadd.f32 %v4427, 1.0
        %v4430 = vrcp.pop %v4428
        %v4431 = vmul.f32 1.0, %v4430
        %v4432 = vrcp.pop %v4429
        %v4433 = vmul.f32 1.0, %v4432
        %v4434 = vxor.u32 %v4416, 2147483648
        %v4435 = vxor.u32 %v4417, 2147483648
        %v4436 = vmul.f32 %v4434, 1.442695
        %v4437 = vpow.pop %v4436
        %v4438 = vmul.f32 %v4435, 1.442695
        %v4439 = vpow.pop %v4438
        %v4440 = vadd.f32 %v4437, 1.0
        %v4441 = vadd.f32 %v4439, 1.0
        %v4442 = vrcp.pop %v4440
        %v4443 = vmul.f32 1.0, %v4442
        %v4444 = vrcp.pop %v4441
        %v4445 = vmul.f32 1.0, %v4444
        %v4446 = vtanh.pop %v4418
        %v4447 = vtanh.pop %v4419
        %v4448 = vxor.u32 %v4420, 2147483648
        %v4449 = vxor.u32 %v4421, 2147483648
        %v4450 = vmul.f32 %v4448, 1.442695
        %v4451 = vpow.pop %v4450
        %v4452 = vmul.f32 %v4449, 1.442695
        %v4453 = vpow.pop %v4452
        %v4454 = vadd.f32 %v4451, 1.0
        %v4455 = vadd.f32 %v4453, 1.0
        %v4456 = vrcp.pop %v4454
        %v4457 = vmul.f32 1.0, %v4456
        %v4458 = vrcp.pop %v4455
        %v4459 = vmul.f32 1.0, %v4458
        %v4460 = vmul.f32 %v4443, %v3595
        %v4461 = vmul.f32 %v4445, %v3596
        %v4462 = vmul.f32 %v4431, %v4446
        %v4463 = vmul.f32 %v4433, %v4447
        %v4464 = vadd.f32 %v4460, %v4462
        %v4465 = vadd.f32 %v4461, %v4463
        %v4466 = vtanh.pop %v4464
        %v4467 = vtanh.pop %v4465
        %v4468 = vmul.f32 %v4457, %v4466
        %v4469 = vmul.f32 %v4459, %v4467
        %s4470 = smul.u32 0, 2
        %s4471 = smul.addr %s4470, 8
        %s4472 = scalar_lea.vmem [#allocation3], %s4471
        %4473 = vst [vmem:[%s4472] sm:$0xff] %v4468
        %4474 = vst [vmem:[%s4472 + $0x8] sm:$0xff] %v4469
        %s4475 = smul.u32 1, 8
        %s4476 = smul.addr %s4475, 8
        %s4477 = scalar_lea.vmem [#allocation2], %s4476
        %v4478 = vld [vmem:[%s4477] sm:$0xff]
        %v4479 = vld [vmem:[%s4477 + $0x8] sm:$0xff]
        %v4480 = vld [vmem:[%s4477 + $0x10] sm:$0xff]
        %v4481 = vld [vmem:[%s4477 + $0x18] sm:$0xff]
        %v4482 = vld [vmem:[%s4477 + $0x20] sm:$0xff]
        %v4483 = vld [vmem:[%s4477 + $0x28] sm:$0xff]
        %v4484 = vld [vmem:[%s4477 + $0x30] sm:$0xff]
        %v4485 = vld [vmem:[%s4477 + $0x38] sm:$0xff]
        %v4486 = vpack.c.bf16 %v4468, %v4468
        %v4487 = vpack.c.bf16 %v4469, %v4469
        %4488 = vmatprep.subr.bf16.mxu0 %v3995
        %4489 = vmatpush1.bf16.msra.mxu0 %v3994
        %4490 = vmatprep.subr.bf16.mxu0 %v4003
        %4491 = vmatpush1.bf16.msra.mxu0 %v4002
        %4492 = vmatprep.subr.bf16.mxu0 %v4011
        %4493 = vmatpush1.bf16.msra.mxu0 %v4010
        %4494 = vmatprep.subr.bf16.mxu0 %v4019
        %4495 = vmatpush1.bf16.msra.mxu0 %v4018
        %4496 = vmatprep.subr.bf16.mxu0 %v4027
        %4497 = vmatpush1.bf16.msra.mxu0 %v4026
        %4498 = vmatprep.subr.bf16.mxu0 %v4035
        %4499 = vmatpush1.bf16.msra.mxu0 %v4034
        %4500 = vmatprep.subr.bf16.mxu0 %v4043
        %4501 = vmatpush1.bf16.msra.mxu0 %v4042
        %4502 = vmatprep.subr.bf16.mxu0 %v4051
        %4503 = vmatpush1.bf16.msra.mxu0 %v4050
        %4504 = vmatprep.subr.bf16.mxu0 %v4059
        %4505 = vmatpush1.bf16.msra.mxu0 %v4058
        %4506 = vmatprep.subr.bf16.mxu0 %v4067
        %4507 = vmatpush1.bf16.msra.mxu0 %v4066
        %4508 = vmatprep.subr.bf16.mxu0 %v4075
        %4509 = vmatpush1.bf16.msra.mxu0 %v4074
        %4510 = vmatprep.subr.bf16.mxu0 %v4083
        %4511 = vmatpush1.bf16.msra.mxu0 %v4082
        %4512 = vmatprep.subr.bf16.mxu0 %v4091
        %4513 = vmatpush1.bf16.msra.mxu0 %v4090
        %4514 = vmatprep.subr.bf16.mxu0 %v4099
        %4515 = vmatpush1.bf16.msra.mxu0 %v4098
        %4516 = vmatprep.subr.bf16.mxu0 %v4107
        %4517 = vmatpush1.bf16.msra.mxu0 %v4106
        %4518 = vmatprep.subr.bf16.mxu0 %v4115
        %4519 = vmatpush1.bf16.msra.mxu0 %v4114
        %4520 = vmatprep.mubr.bf16.mxu0 %v4487
        %4521 = vmatmul.mubr.bf16.gmra.mrb[0].mxu0 %v4486
        %v4522 = vpop.f32.mrb[0].mxu0
        %v4523 = vadd.f32 0.0, %v4522
        %v4524 = vpop.f32.mrb[0].mxu0
        %v4525 = vadd.f32 0.0, %v4524
        %v4526 = vpop.f32.mrb[0].mxu0
        %v4527 = vpop.f32.mrb[0].mxu0
        %4528 = vdwg.mxu0
        %4529 = vmatprep.subr.bf16.mxu0 %v3997
        %4530 = vmatpush1.bf16.msra.mxu0 %v3996
        %4531 = vmatprep.subr.bf16.mxu0 %v4005
        %4532 = vmatpush1.bf16.msra.mxu0 %v4004
        %4533 = vmatprep.subr.bf16.mxu0 %v4013
        %4534 = vmatpush1.bf16.msra.mxu0 %v4012
        %4535 = vmatprep.subr.bf16.mxu0 %v4021
        %4536 = vmatpush1.bf16.msra.mxu0 %v4020
        %4537 = vmatprep.subr.bf16.mxu0 %v4029
        %4538 = vmatpush1.bf16.msra.mxu0 %v4028
        %4539 = vmatprep.subr.bf16.mxu0 %v4037
        %4540 = vmatpush1.bf16.msra.mxu0 %v4036
        %4541 = vmatprep.subr.bf16.mxu0 %v4045
        %4542 = vmatpush1.bf16.msra.mxu0 %v4044
        %4543 = vmatprep.subr.bf16.mxu0 %v4053
        %4544 = vmatpush1.bf16.msra.mxu0 %v4052
        %4545 = vmatprep.subr.bf16.mxu0 %v4061
        %4546 = vmatpush1.bf16.msra.mxu0 %v4060
        %4547 = vmatprep.subr.bf16.mxu0 %v4069
        %4548 = vmatpush1.bf16.msra.mxu0 %v4068
        %4549 = vmatprep.subr.bf16.mxu0 %v4077
        %4550 = vmatpush1.bf16.msra.mxu0 %v4076
        %4551 = vmatprep.subr.bf16.mxu0 %v4085
        %4552 = vmatpush1.bf16.msra.mxu0 %v4084
        %4553 = vmatprep.subr.bf16.mxu0 %v4093
        %4554 = vmatpush1.bf16.msra.mxu0 %v4092
        %4555 = vmatprep.subr.bf16.mxu0 %v4101
        %4556 = vmatpush1.bf16.msra.mxu0 %v4100
        %4557 = vmatprep.subr.bf16.mxu0 %v4109
        %4558 = vmatpush1.bf16.msra.mxu0 %v4108
        %4559 = vmatprep.subr.bf16.mxu0 %v4117
        %4560 = vmatpush1.bf16.msra.mxu0 %v4116
        %4561 = vmatprep.mubr.bf16.mxu0 %v4487
        %4562 = vmatmul.mubr.bf16.gmra.mrb[0].mxu0 %v4486
        %v4563 = vpop.f32.mrb[0].mxu0
        %v4564 = vadd.f32 0.0, %v4563
        %v4565 = vpop.f32.mrb[0].mxu0
        %v4566 = vadd.f32 0.0, %v4565
        %v4567 = vpop.f32.mrb[0].mxu0
        %v4568 = vpop.f32.mrb[0].mxu0
        %4569 = vdwg.mxu0
        %4570 = vmatprep.subr.bf16.mxu0 %v3999
        %4571 = vmatpush1.bf16.msra.mxu0 %v3998
        %4572 = vmatprep.subr.bf16.mxu0 %v4007
        %4573 = vmatpush1.bf16.msra.mxu0 %v4006
        %4574 = vmatprep.subr.bf16.mxu0 %v4015
        %4575 = vmatpush1.bf16.msra.mxu0 %v4014
        %4576 = vmatprep.subr.bf16.mxu0 %v4023
        %4577 = vmatpush1.bf16.msra.mxu0 %v4022
        %4578 = vmatprep.subr.bf16.mxu0 %v4031
        %4579 = vmatpush1.bf16.msra.mxu0 %v4030
        %4580 = vmatprep.subr.bf16.mxu0 %v4039
        %4581 = vmatpush1.bf16.msra.mxu0 %v4038
        %4582 = vmatprep.subr.bf16.mxu0 %v4047
        %4583 = vmatpush1.bf16.msra.mxu0 %v4046
        %4584 = vmatprep.subr.bf16.mxu0 %v4055
        %4585 = vmatpush1.bf16.msra.mxu0 %v4054
        %4586 = vmatprep.subr.bf16.mxu0 %v4063
        %4587 = vmatpush1.bf16.msra.mxu0 %v4062
        %4588 = vmatprep.subr.bf16.mxu0 %v4071
        %4589 = vmatpush1.bf16.msra.mxu0 %v4070
        %4590 = vmatprep.subr.bf16.mxu0 %v4079
        %4591 = vmatpush1.bf16.msra.mxu0 %v4078
        %4592 = vmatprep.subr.bf16.mxu0 %v4087
        %4593 = vmatpush1.bf16.msra.mxu0 %v4086
        %4594 = vmatprep.subr.bf16.mxu0 %v4095
        %4595 = vmatpush1.bf16.msra.mxu0 %v4094
        %4596 = vmatprep.subr.bf16.mxu0 %v4103
        %4597 = vmatpush1.bf16.msra.mxu0 %v4102
        %4598 = vmatprep.subr.bf16.mxu0 %v4111
        %4599 = vmatpush1.bf16.msra.mxu0 %v4110
        %4600 = vmatprep.subr.bf16.mxu0 %v4119
        %4601 = vmatpush1.bf16.msra.mxu0 %v4118
        %4602 = vmatprep.mubr.bf16.mxu0 %v4487
        %4603 = vmatmul.mubr.bf16.gmra.mrb[0].mxu0 %v4486
        %v4604 = vpop.f32.mrb[0].mxu0
        %v4605 = vadd.f32 0.0, %v4604
        %v4606 = vpop.f32.mrb[0].mxu0
        %v4607 = vadd.f32 0.0, %v4606
        %v4608 = vpop.f32.mrb[0].mxu0
        %v4609 = vpop.f32.mrb[0].mxu0
        %4610 = vdwg.mxu0
        %4611 = vmatprep.subr.bf16.mxu0 %v4001
        %4612 = vmatpush1.bf16.msra.mxu0 %v4000
        %4613 = vmatprep.subr.bf16.mxu0 %v4009
        %4614 = vmatpush1.bf16.msra.mxu0 %v4008
        %4615 = vmatprep.subr.bf16.mxu0 %v4017
        %4616 = vmatpush1.bf16.msra.mxu0 %v4016
        %4617 = vmatprep.subr.bf16.mxu0 %v4025
        %4618 = vmatpush1.bf16.msra.mxu0 %v4024
        %4619 = vmatprep.subr.bf16.mxu0 %v4033
        %4620 = vmatpush1.bf16.msra.mxu0 %v4032
        %4621 = vmatprep.subr.bf16.mxu0 %v4041
        %4622 = vmatpush1.bf16.msra.mxu0 %v4040
        %4623 = vmatprep.subr.bf16.mxu0 %v4049
        %4624 = vmatpush1.bf16.msra.mxu0 %v4048
        %4625 = vmatprep.subr.bf16.mxu0 %v4057
        %4626 = vmatpush1.bf16.msra.mxu0 %v4056
        %4627 = vmatprep.subr.bf16.mxu0 %v4065
        %4628 = vmatpush1.bf16.msra.mxu0 %v4064
        %4629 = vmatprep.subr.bf16.mxu0 %v4073
        %4630 = vmatpush1.bf16.msra.mxu0 %v4072
        %4631 = vmatprep.subr.bf16.mxu0 %v4081
        %4632 = vmatpush1.bf16.msra.mxu0 %v4080
        %4633 = vmatprep.subr.bf16.mxu0 %v4089
        %4634 = vmatpush1.bf16.msra.mxu0 %v4088
        %4635 = vmatprep.subr.bf16.mxu0 %v4097
        %4636 = vmatpush1.bf16.msra.mxu0 %v4096
        %4637 = vmatprep.subr.bf16.mxu0 %v4105
        %4638 = vmatpush1.bf16.msra.mxu0 %v4104
        %4639 = vmatprep.subr.bf16.mxu0 %v4113
        %4640 = vmatpush1.bf16.msra.mxu0 %v4112
        %4641 = vmatprep.subr.bf16.mxu0 %v4121
        %4642 = vmatpush1.bf16.msra.mxu0 %v4120
        %4643 = vmatprep.mubr.bf16.mxu0 %v4487
        %4644 = vmatmul.mubr.bf16.gmra.mrb[0].mxu0 %v4486
        %v4645 = vpop.f32.mrb[0].mxu0
        %v4646 = vadd.f32 0.0, %v4645
        %v4647 = vpop.f32.mrb[0].mxu0
        %v4648 = vadd.f32 0.0, %v4647
        %v4649 = vpop.f32.mrb[0].mxu0
        %v4650 = vpop.f32.mrb[0].mxu0
        %4651 = vdwg.mxu0
        %v4652 = vadd.f32 %v4478, %v4523
        %v4653 = vadd.f32 %v4479, %v4525
        %v4654 = vadd.f32 %v4480, %v4564
        %v4655 = vadd.f32 %v4481, %v4566
        %v4656 = vadd.f32 %v4482, %v4605
        %v4657 = vadd.f32 %v4483, %v4607
        %v4658 = vadd.f32 %v4484, %v4646
        %v4659 = vadd.f32 %v4485, %v4648
        %v4660 = vxor.u32 %v4652, 2147483648
        %v4661 = vxor.u32 %v4653, 2147483648
        %v4662 = vmul.f32 %v4660, 1.442695
        %v4663 = vpow.pop %v4662
        %v4664 = vmul.f32 %v4661, 1.442695
        %v4665 = vpow.pop %v4664
        %v4666 = vadd.f32 %v4663, 1.0
        %v4667 = vadd.f32 %v4665, 1.0
        %v4668 = vrcp.pop %v4666
        %v4669 = vmul.f32 1.0, %v4668
        %v4670 = vrcp.pop %v4667
        %v4671 = vmul.f32 1.0, %v4670
        %v4672 = vxor.u32 %v4654, 2147483648
        %v4673 = vxor.u32 %v4655, 2147483648
        %v4674 = vmul.f32 %v4672, 1.442695
        %v4675 = vpow.pop %v4674
        %v4676 = vmul.f32 %v4673, 1.442695
        %v4677 = vpow.pop %v4676
        %v4678 = vadd.f32 %v4675, 1.0
        %v4679 = vadd.f32 %v4677, 1.0
        %v4680 = vrcp.pop %v4678
        %v4681 = vmul.f32 1.0, %v4680
        %v4682 = vrcp.pop %v4679
        %v4683 = vmul.f32 1.0, %v4682
        %v4684 = vtanh.pop %v4656
        %v4685 = vtanh.pop %v4657
        %v4686 = vxor.u32 %v4658, 2147483648
        %v4687 = vxor.u32 %v4659, 2147483648
        %v4688 = vmul.f32 %v4686, 1.442695
        %v4689 = vpow.pop %v4688
        %v4690 = vmul.f32 %v4687, 1.442695
        %v4691 = vpow.pop %v4690
        %v4692 = vadd.f32 %v4689, 1.0
        %v4693 = vadd.f32 %v4691, 1.0
        %v4694 = vrcp.pop %v4692
        %v4695 = vmul.f32 1.0, %v4694
        %v4696 = vrcp.pop %v4693
        %v4697 = vmul.f32 1.0, %v4696
        %v4698 = vmul.f32 %v4681, %v4464
        %v4699 = vmul.f32 %v4683, %v4465
        %v4700 = vmul.f32 %v4669, %v4684
        %v4701 = vmul.f32 %v4671, %v4685
        %v4702 = vadd.f32 %v4698, %v4700
        %v4703 = vadd.f32 %v4699, %v4701
        %v4704 = vtanh.pop %v4702
        %v4705 = vtanh.pop %v4703
        %v4706 = vmul.f32 %v4695, %v4704
        %v4707 = vmul.f32 %v4697, %v4705
        %s4708 = smul.u32 1, 2
        %s4709 = smul.addr %s4708, 8
        %s4710 = scalar_lea.vmem [#allocation3], %s4709
        %4711 = vst [vmem:[%s4710] sm:$0xff] %v4706
        %4712 = vst [vmem:[%s4710 + $0x8] sm:$0xff] %v4707
        %s4713 = smul.u32 2, 8
        %s4714 = smul.addr %s4713, 8
        %s4715 = scalar_lea.vmem [#allocation2], %s4714
        %v4716 = vld [vmem:[%s4715] sm:$0xff]
        %v4717 = vld [vmem:[%s4715 + $0x8] sm:$0xff]
        %v4718 = vld [vmem:[%s4715 + $0x10] sm:$0xff]
        %v4719 = vld [vmem:[%s4715 + $0x18] sm:$0xff]
        %v4720 = vld [vmem:[%s4715 + $0x20] sm:$0xff]
        %v4721 = vld [vmem:[%s4715 + $0x28] sm:$0xff]
        %v4722 = vld [vmem:[%s4715 + $0x30] sm:$0xff]
        %v4723 = vld [vmem:[%s4715 + $0x38] sm:$0xff]
        %v4724 = vpack.c.bf16 %v4706, %v4706
        %v4725 = vpack.c.bf16 %v4707, %v4707
        %4726 = vmatprep.subr.bf16.mxu0 %v3995
        %4727 = vmatpush1.bf16.msra.mxu0 %v3994
        %4728 = vmatprep.subr.bf16.mxu0 %v4003
        %4729 = vmatpush1.bf16.msra.mxu0 %v4002
        %4730 = vmatprep.subr.bf16.mxu0 %v4011
        %4731 = vmatpush1.bf16.msra.mxu0 %v4010
        %4732 = vmatprep.subr.bf16.mxu0 %v4019
        %4733 = vmatpush1.bf16.msra.mxu0 %v4018
        %4734 = vmatprep.subr.bf16.mxu0 %v4027
        %4735 = vmatpush1.bf16.msra.mxu0 %v4026
        %4736 = vmatprep.subr.bf16.mxu0 %v4035
        %4737 = vmatpush1.bf16.msra.mxu0 %v4034
        %4738 = vmatprep.subr.bf16.mxu0 %v4043
        %4739 = vmatpush1.bf16.msra.mxu0 %v4042
        %4740 = vmatprep.subr.bf16.mxu0 %v4051
        %4741 = vmatpush1.bf16.msra.mxu0 %v4050
        %4742 = vmatprep.subr.bf16.mxu0 %v4059
        %4743 = vmatpush1.bf16.msra.mxu0 %v4058
        %4744 = vmatprep.subr.bf16.mxu0 %v4067
        %4745 = vmatpush1.bf16.msra.mxu0 %v4066
        %4746 = vmatprep.subr.bf16.mxu0 %v4075
        %4747 = vmatpush1.bf16.msra.mxu0 %v4074
        %4748 = vmatprep.subr.bf16.mxu0 %v4083
        %4749 = vmatpush1.bf16.msra.mxu0 %v4082
        %4750 = vmatprep.subr.bf16.mxu0 %v4091
        %4751 = vmatpush1.bf16.msra.mxu0 %v4090
        %4752 = vmatprep.subr.bf16.mxu0 %v4099
        %4753 = vmatpush1.bf16.msra.mxu0 %v4098
        %4754 = vmatprep.subr.bf16.mxu0 %v4107
        %4755 = vmatpush1.bf16.msra.mxu0 %v4106
        %4756 = vmatprep.subr.bf16.mxu0 %v4115
        %4757 = vmatpush1.bf16.msra.mxu0 %v4114
        %4758 = vmatprep.mubr.bf16.mxu0 %v4725
        %4759 = vmatmul.mubr.bf16.gmra.mrb[0].mxu0 %v4724
        %v4760 = vpop.f32.mrb[0].mxu0
        %v4761 = vadd.f32 0.0, %v4760
        %v4762 = vpop.f32.mrb[0].mxu0
        %v4763 = vadd.f32 0.0, %v4762
        %v4764 = vpop.f32.mrb[0].mxu0
        %v4765 = vpop.f32.mrb[0].mxu0
        %4766 = vdwg.mxu0
        %4767 = vmatprep.subr.bf16.mxu0 %v3997
        %4768 = vmatpush1.bf16.msra.mxu0 %v3996
        %4769 = vmatprep.subr.bf16.mxu0 %v4005
        %4770 = vmatpush1.bf16.msra.mxu0 %v4004
        %4771 = vmatprep.subr.bf16.mxu0 %v4013
        %4772 = vmatpush1.bf16.msra.mxu0 %v4012
        %4773 = vmatprep.subr.bf16.mxu0 %v4021
        %4774 = vmatpush1.bf16.msra.mxu0 %v4020
        %4775 = vmatprep.subr.bf16.mxu0 %v4029
        %4776 = vmatpush1.bf16.msra.mxu0 %v4028
        %4777 = vmatprep.subr.bf16.mxu0 %v4037
        %4778 = vmatpush1.bf16.msra.mxu0 %v4036
        %4779 = vmatprep.subr.bf16.mxu0 %v4045
        %4780 = vmatpush1.bf16.msra.mxu0 %v4044
        %4781 = vmatprep.subr.bf16.mxu0 %v4053
        %4782 = vmatpush1.bf16.msra.mxu0 %v4052
        %4783 = vmatprep.subr.bf16.mxu0 %v4061
        %4784 = vmatpush1.bf16.msra.mxu0 %v4060
        %4785 = vmatprep.subr.bf16.mxu0 %v4069
        %4786 = vmatpush1.bf16.msra.mxu0 %v4068
        %4787 = vmatprep.subr.bf16.mxu0 %v4077
        %4788 = vmatpush1.bf16.msra.mxu0 %v4076
        %4789 = vmatprep.subr.bf16.mxu0 %v4085
        %4790 = vmatpush1.bf16.msra.mxu0 %v4084
        %4791 = vmatprep.subr.bf16.mxu0 %v4093
        %4792 = vmatpush1.bf16.msra.mxu0 %v4092
        %4793 = vmatprep.subr.bf16.mxu0 %v4101
        %4794 = vmatpush1.bf16.msra.mxu0 %v4100
        %4795 = vmatprep.subr.bf16.mxu0 %v4109
        %4796 = vmatpush1.bf16.msra.mxu0 %v4108
        %4797 = vmatprep.subr.bf16.mxu0 %v4117
        %4798 = vmatpush1.bf16.msra.mxu0 %v4116
        %4799 = vmatprep.mubr.bf16.mxu0 %v4725
        %4800 = vmatmul.mubr.bf16.gmra.mrb[0].mxu0 %v4724
        %v4801 = vpop.f32.mrb[0].mxu0
        %v4802 = vadd.f32 0.0, %v4801
        %v4803 = vpop.f32.mrb[0].mxu0
        %v4804 = vadd.f32 0.0, %v4803
        %v4805 = vpop.f32.mrb[0].mxu0
        %v4806 = vpop.f32.mrb[0].mxu0
        %4807 = vdwg.mxu0
        %4808 = vmatprep.subr.bf16.mxu0 %v3999
        %4809 = vmatpush1.bf16.msra.mxu0 %v3998
        %4810 = vmatprep.subr.bf16.mxu0 %v4007
        %4811 = vmatpush1.bf16.msra.mxu0 %v4006
        %4812 = vmatprep.subr.bf16.mxu0 %v4015
        %4813 = vmatpush1.bf16.msra.mxu0 %v4014
        %4814 = vmatprep.subr.bf16.mxu0 %v4023
        %4815 = vmatpush1.bf16.msra.mxu0 %v4022
        %4816 = vmatprep.subr.bf16.mxu0 %v4031
        %4817 = vmatpush1.bf16.msra.mxu0 %v4030
        %4818 = vmatprep.subr.bf16.mxu0 %v4039
        %4819 = vmatpush1.bf16.msra.mxu0 %v4038
        %4820 = vmatprep.subr.bf16.mxu0 %v4047
        %4821 = vmatpush1.bf16.msra.mxu0 %v4046
        %4822 = vmatprep.subr.bf16.mxu0 %v4055
        %4823 = vmatpush1.bf16.msra.mxu0 %v4054
        %4824 = vmatprep.subr.bf16.mxu0 %v4063
        %4825 = vmatpush1.bf16.msra.mxu0 %v4062
        %4826 = vmatprep.subr.bf16.mxu0 %v4071
        %4827 = vmatpush1.bf16.msra.mxu0 %v4070
        %4828 = vmatprep.subr.bf16.mxu0 %v4079
        %4829 = vmatpush1.bf16.msra.mxu0 %v4078
        %4830 = vmatprep.subr.bf16.mxu0 %v4087
        %4831 = vmatpush1.bf16.msra.mxu0 %v4086
        %4832 = vmatprep.subr.bf16.mxu0 %v4095
        %4833 = vmatpush1.bf16.msra.mxu0 %v4094
        %4834 = vmatprep.subr.bf16.mxu0 %v4103
        %4835 = vmatpush1.bf16.msra.mxu0 %v4102
        %4836 = vmatprep.subr.bf16.mxu0 %v4111
        %4837 = vmatpush1.bf16.msra.mxu0 %v4110
        %4838 = vmatprep.subr.bf16.mxu0 %v4119
        %4839 = vmatpush1.bf16.msra.mxu0 %v4118
        %4840 = vmatprep.mubr.bf16.mxu0 %v4725
        %4841 = vmatmul.mubr.bf16.gmra.mrb[0].mxu0 %v4724
        %v4842 = vpop.f32.mrb[0].mxu0
        %v4843 = vadd.f32 0.0, %v4842
        %v4844 = vpop.f32.mrb[0].mxu0
        %v4845 = vadd.f32 0.0, %v4844
        %v4846 = vpop.f32.mrb[0].mxu0
        %v4847 = vpop.f32.mrb[0].mxu0
        %4848 = vdwg.mxu0
        %4849 = vmatprep.subr.bf16.mxu0 %v4001
        %4850 = vmatpush1.bf16.msra.mxu0 %v4000
        %4851 = vmatprep.subr.bf16.mxu0 %v4009
        %4852 = vmatpush1.bf16.msra.mxu0 %v4008
        %4853 = vmatprep.subr.bf16.mxu0 %v4017
        %4854 = vmatpush1.bf16.msra.mxu0 %v4016
        %4855 = vmatprep.subr.bf16.mxu0 %v4025
        %4856 = vmatpush1.bf16.msra.mxu0 %v4024
        %4857 = vmatprep.subr.bf16.mxu0 %v4033
        %4858 = vmatpush1.bf16.msra.mxu0 %v4032
        %4859 = vmatprep.subr.bf16.mxu0 %v4041
        %4860 = vmatpush1.bf16.msra.mxu0 %v4040
        %4861 = vmatprep.subr.bf16.mxu0 %v4049
        %4862 = vmatpush1.bf16.msra.mxu0 %v4048
        %4863 = vmatprep.subr.bf16.mxu0 %v4057
        %4864 = vmatpush1.bf16.msra.mxu0 %v4056
        %4865 = vmatprep.subr.bf16.mxu0 %v4065
        %4866 = vmatpush1.bf16.msra.mxu0 %v4064
        %4867 = vmatprep.subr.bf16.mxu0 %v4073
        %4868 = vmatpush1.bf16.msra.mxu0 %v4072
        %4869 = vmatprep.subr.bf16.mxu0 %v4081
        %4870 = vmatpush1.bf16.msra.mxu0 %v4080
        %4871 = vmatprep.subr.bf16.mxu0 %v4089
        %4872 = vmatpush1.bf16.msra.mxu0 %v4088
        %4873 = vmatprep.subr.bf16.mxu0 %v4097
        %4874 = vmatpush1.bf16.msra.mxu0 %v4096
        %4875 = vmatprep.subr.bf16.mxu0 %v4105
        %4876 = vmatpush1.bf16.msra.mxu0 %v4104
        %4877 = vmatprep.subr.bf16.mxu0 %v4113
        %4878 = vmatpush1.bf16.msra.mxu0 %v4112
        %4879 = vmatprep.subr.bf16.mxu0 %v4121
        %4880 = vmatpush1.bf16.msra.mxu0 %v4120
        %4881 = vmatprep.mubr.bf16.mxu0 %v4725
        %4882 = vmatmul.mubr.bf16.gmra.mrb[0].mxu0 %v4724
        %v4883 = vpop.f32.mrb[0].mxu0
        %v4884 = vadd.f32 0.0, %v4883
        %v4885 = vpop.f32.mrb[0].mxu0
        %v4886 = vadd.f32 0.0, %v4885
        %v4887 = vpop.f32.mrb[0].mxu0
        %v4888 = vpop.f32.mrb[0].mxu0
        %4889 = vdwg.mxu0
        %v4890 = vadd.f32 %v4716, %v4761
        %v4891 = vadd.f32 %v4717, %v4763
        %v4892 = vadd.f32 %v4718, %v4802
        %v4893 = vadd.f32 %v4719, %v4804
        %v4894 = vadd.f32 %v4720, %v4843
        %v4895 = vadd.f32 %v4721, %v4845
        %v4896 = vadd.f32 %v4722, %v4884
        %v4897 = vadd.f32 %v4723, %v4886
        %v4898 = vxor.u32 %v4890, 2147483648
        %v4899 = vxor.u32 %v4891, 2147483648
        %v4900 = vmul.f32 %v4898, 1.442695
        %v4901 = vpow.pop %v4900
        %v4902 = vmul.f32 %v4899, 1.442695
        %v4903 = vpow.pop %v4902
        %v4904 = vadd.f32 %v4901, 1.0
        %v4905 = vadd.f32 %v4903, 1.0
        %v4906 = vrcp.pop %v4904
        %v4907 = vmul.f32 1.0, %v4906
        %v4908 = vrcp.pop %v4905
        %v4909 = vmul.f32 1.0, %v4908
        %v4910 = vxor.u32 %v4892, 2147483648
        %v4911 = vxor.u32 %v4893, 2147483648
        %v4912 = vmul.f32 %v4910, 1.442695
        %v4913 = vpow.pop %v4912
        %v4914 = vmul.f32 %v4911, 1.442695
        %v4915 = vpow.pop %v4914
        %v4916 = vadd.f32 %v4913, 1.0
        %v4917 = vadd.f32 %v4915, 1.0
        %v4918 = vrcp.pop %v4916
        %v4919 = vmul.f32 1.0, %v4918
        %v4920 = vrcp.pop %v4917
        %v4921 = vmul.f32 1.0, %v4920
        %v4922 = vtanh.pop %v4894
        %v4923 = vtanh.pop %v4895
        %v4924 = vxor.u32 %v4896, 2147483648
        %v4925 = vxor.u32 %v4897, 2147483648
        %v4926 = vmul.f32 %v4924, 1.442695
        %v4927 = vpow.pop %v4926
        %v4928 = vmul.f32 %v4925, 1.442695
        %v4929 = vpow.pop %v4928
        %v4930 = vadd.f32 %v4927, 1.0
        %v4931 = vadd.f32 %v4929, 1.0
        %v4932 = vrcp.pop %v4930
        %v4933 = vmul.f32 1.0, %v4932
        %v4934 = vrcp.pop %v4931
        %v4935 = vmul.f32 1.0, %v4934
        %v4936 = vmul.f32 %v4919, %v4702
        %v4937 = vmul.f32 %v4921, %v4703
        %v4938 = vmul.f32 %v4907, %v4922
        %v4939 = vmul.f32 %v4909, %v4923
        %v4940 = vadd.f32 %v4936, %v4938
        %v4941 = vadd.f32 %v4937, %v4939
        %v4942 = vtanh.pop %v4940
        %v4943 = vtanh.pop %v4941
        %v4944 = vmul.f32 %v4933, %v4942
        %v4945 = vmul.f32 %v4935, %v4943
        %s4946 = smul.u32 2, 2
        %s4947 = smul.addr %s4946, 8
        %s4948 = scalar_lea.vmem [#allocation3], %s4947
        %4949 = vst [vmem:[%s4948] sm:$0xff] %v4944
        %4950 = vst [vmem:[%s4948 + $0x8] sm:$0xff] %v4945
        %s4951 = smul.u32 3, 8
        %s4952 = smul.addr %s4951, 8
        %s4953 = scalar_lea.vmem [#allocation2], %s4952
        %v4954 = vld [vmem:[%s4953] sm:$0xff]
        %v4955 = vld [vmem:[%s4953 + $0x8] sm:$0xff]
        %v4956 = vld [vmem:[%s4953 + $0x10] sm:$0xff]
        %v4957 = vld [vmem:[%s4953 + $0x18] sm:$0xff]
        %v4958 = vld [vmem:[%s4953 + $0x20] sm:$0xff]
        %v4959 = vld [vmem:[%s4953 + $0x28] sm:$0xff]
        %v4960 = vld [vmem:[%s4953 + $0x30] sm:$0xff]
        %v4961 = vld [vmem:[%s4953 + $0x38] sm:$0xff]
        %v4962 = vpack.c.bf16 %v4944, %v4944
        %v4963 = vpack.c.bf16 %v4945, %v4945
        %4964 = vmatprep.subr.bf16.mxu0 %v3995
        %4965 = vmatpush1.bf16.msra.mxu0 %v3994
        %4966 = vmatprep.subr.bf16.mxu0 %v4003
        %4967 = vmatpush1.bf16.msra.mxu0 %v4002
        %4968 = vmatprep.subr.bf16.mxu0 %v4011
        %4969 = vmatpush1.bf16.msra.mxu0 %v4010
        %4970 = vmatprep.subr.bf16.mxu0 %v4019
        %4971 = vmatpush1.bf16.msra.mxu0 %v4018
        %4972 = vmatprep.subr.bf16.mxu0 %v4027
        %4973 = vmatpush1.bf16.msra.mxu0 %v4026
        %4974 = vmatprep.subr.bf16.mxu0 %v4035
        %4975 = vmatpush1.bf16.msra.mxu0 %v4034
        %4976 = vmatprep.subr.bf16.mxu0 %v4043
        %4977 = vmatpush1.bf16.msra.mxu0 %v4042
        %4978 = vmatprep.subr.bf16.mxu0 %v4051
        %4979 = vmatpush1.bf16.msra.mxu0 %v4050
        %4980 = vmatprep.subr.bf16.mxu0 %v4059
        %4981 = vmatpush1.bf16.msra.mxu0 %v4058
        %4982 = vmatprep.subr.bf16.mxu0 %v4067
        %4983 = vmatpush1.bf16.msra.mxu0 %v4066
        %4984 = vmatprep.subr.bf16.mxu0 %v4075
        %4985 = vmatpush1.bf16.msra.mxu0 %v4074
        %4986 = vmatprep.subr.bf16.mxu0 %v4083
        %4987 = vmatpush1.bf16.msra.mxu0 %v4082
        %4988 = vmatprep.subr.bf16.mxu0 %v4091
        %4989 = vmatpush1.bf16.msra.mxu0 %v4090
        %4990 = vmatprep.subr.bf16.mxu0 %v4099
        %4991 = vmatpush1.bf16.msra.mxu0 %v4098
        %4992 = vmatprep.subr.bf16.mxu0 %v4107
        %4993 = vmatpush1.bf16.msra.mxu0 %v4106
        %4994 = vmatprep.subr.bf16.mxu0 %v4115
        %4995 = vmatpush1.bf16.msra.mxu0 %v4114
        %4996 = vmatprep.mubr.bf16.mxu0 %v4963
        %4997 = vmatmul.mubr.bf16.gmra.mrb[0].mxu0 %v4962
        %v4998 = vpop.f32.mrb[0].mxu0
        %v4999 = vadd.f32 0.0, %v4998
        %v5000 = vpop.f32.mrb[0].mxu0
        %v5001 = vadd.f32 0.0, %v5000
        %v5002 = vpop.f32.mrb[0].mxu0
        %v5003 = vpop.f32.mrb[0].mxu0
        %5004 = vdwg.mxu0
        %5005 = vmatprep.subr.bf16.mxu0 %v3997
        %5006 = vmatpush1.bf16.msra.mxu0 %v3996
        %5007 = vmatprep.subr.bf16.mxu0 %v4005
        %5008 = vmatpush1.bf16.msra.mxu0 %v4004
        %5009 = vmatprep.subr.bf16.mxu0 %v4013
        %5010 = vmatpush1.bf16.msra.mxu0 %v4012
        %5011 = vmatprep.subr.bf16.mxu0 %v4021
        %5012 = vmatpush1.bf16.msra.mxu0 %v4020
        %5013 = vmatprep.subr.bf16.mxu0 %v4029
        %5014 = vmatpush1.bf16.msra.mxu0 %v4028
        %5015 = vmatprep.subr.bf16.mxu0 %v4037
        %5016 = vmatpush1.bf16.msra.mxu0 %v4036
        %5017 = vmatprep.subr.bf16.mxu0 %v4045
        %5018 = vmatpush1.bf16.msra.mxu0 %v4044
        %5019 = vmatprep.subr.bf16.mxu0 %v4053
        %5020 = vmatpush1.bf16.msra.mxu0 %v4052
        %5021 = vmatprep.subr.bf16.mxu0 %v4061
        %5022 = vmatpush1.bf16.msra.mxu0 %v4060
        %5023 = vmatprep.subr.bf16.mxu0 %v4069
        %5024 = vmatpush1.bf16.msra.mxu0 %v4068
        %5025 = vmatprep.subr.bf16.mxu0 %v4077
        %5026 = vmatpush1.bf16.msra.mxu0 %v4076
        %5027 = vmatprep.subr.bf16.mxu0 %v4085
        %5028 = vmatpush1.bf16.msra.mxu0 %v4084
        %5029 = vmatprep.subr.bf16.mxu0 %v4093
        %5030 = vmatpush1.bf16.msra.mxu0 %v4092
        %5031 = vmatprep.subr.bf16.mxu0 %v4101
        %5032 = vmatpush1.bf16.msra.mxu0 %v4100
        %5033 = vmatprep.subr.bf16.mxu0 %v4109
        %5034 = vmatpush1.bf16.msra.mxu0 %v4108
        %5035 = vmatprep.subr.bf16.mxu0 %v4117
        %5036 = vmatpush1.bf16.msra.mxu0 %v4116
        %5037 = vmatprep.mubr.bf16.mxu0 %v4963
        %5038 = vmatmul.mubr.bf16.gmra.mrb[0].mxu0 %v4962
        %v5039 = vpop.f32.mrb[0].mxu0
        %v5040 = vadd.f32 0.0, %v5039
        %v5041 = vpop.f32.mrb[0].mxu0
        %v5042 = vadd.f32 0.0, %v5041
        %v5043 = vpop.f32.mrb[0].mxu0
        %v5044 = vpop.f32.mrb[0].mxu0
        %5045 = vdwg.mxu0
        %5046 = vmatprep.subr.bf16.mxu0 %v3999
        %5047 = vmatpush1.bf16.msra.mxu0 %v3998
        %5048 = vmatprep.subr.bf16.mxu0 %v4007
        %5049 = vmatpush1.bf16.msra.mxu0 %v4006
        %5050 = vmatprep.subr.bf16.mxu0 %v4015
        %5051 = vmatpush1.bf16.msra.mxu0 %v4014
        %5052 = vmatprep.subr.bf16.mxu0 %v4023
        %5053 = vmatpush1.bf16.msra.mxu0 %v4022
        %5054 = vmatprep.subr.bf16.mxu0 %v4031
        %5055 = vmatpush1.bf16.msra.mxu0 %v4030
        %5056 = vmatprep.subr.bf16.mxu0 %v4039
        %5057 = vmatpush1.bf16.msra.mxu0 %v4038
        %5058 = vmatprep.subr.bf16.mxu0 %v4047
        %5059 = vmatpush1.bf16.msra.mxu0 %v4046
        %5060 = vmatprep.subr.bf16.mxu0 %v4055
        %5061 = vmatpush1.bf16.msra.mxu0 %v4054
        %5062 = vmatprep.subr.bf16.mxu0 %v4063
        %5063 = vmatpush1.bf16.msra.mxu0 %v4062
        %5064 = vmatprep.subr.bf16.mxu0 %v4071
        %5065 = vmatpush1.bf16.msra.mxu0 %v4070
        %5066 = vmatprep.subr.bf16.mxu0 %v4079
        %5067 = vmatpush1.bf16.msra.mxu0 %v4078
        %5068 = vmatprep.subr.bf16.mxu0 %v4087
        %5069 = vmatpush1.bf16.msra.mxu0 %v4086
        %5070 = vmatprep.subr.bf16.mxu0 %v4095
        %5071 = vmatpush1.bf16.msra.mxu0 %v4094
        %5072 = vmatprep.subr.bf16.mxu0 %v4103
        %5073 = vmatpush1.bf16.msra.mxu0 %v4102
        %5074 = vmatprep.subr.bf16.mxu0 %v4111
        %5075 = vmatpush1.bf16.msra.mxu0 %v4110
        %5076 = vmatprep.subr.bf16.mxu0 %v4119
        %5077 = vmatpush1.bf16.msra.mxu0 %v4118
        %5078 = vmatprep.mubr.bf16.mxu0 %v4963
        %5079 = vmatmul.mubr.bf16.gmra.mrb[0].mxu0 %v4962
        %v5080 = vpop.f32.mrb[0].mxu0
        %v5081 = vadd.f32 0.0, %v5080
        %v5082 = vpop.f32.mrb[0].mxu0
        %v5083 = vadd.f32 0.0, %v5082
        %v5084 = vpop.f32.mrb[0].mxu0
        %v5085 = vpop.f32.mrb[0].mxu0
        %5086 = vdwg.mxu0
        %5087 = vmatprep.subr.bf16.mxu0 %v4001
        %5088 = vmatpush1.bf16.msra.mxu0 %v4000
        %5089 = vmatprep.subr.bf16.mxu0 %v4009
        %5090 = vmatpush1.bf16.msra.mxu0 %v4008
        %5091 = vmatprep.subr.bf16.mxu0 %v4017
        %5092 = vmatpush1.bf16.msra.mxu0 %v4016
        %5093 = vmatprep.subr.bf16.mxu0 %v4025
        %5094 = vmatpush1.bf16.msra.mxu0 %v4024
        %5095 = vmatprep.subr.bf16.mxu0 %v4033
        %5096 = vmatpush1.bf16.msra.mxu0 %v4032
        %5097 = vmatprep.subr.bf16.mxu0 %v4041
        %5098 = vmatpush1.bf16.msra.mxu0 %v4040
        %5099 = vmatprep.subr.bf16.mxu0 %v4049
        %5100 = vmatpush1.bf16.msra.mxu0 %v4048
        %5101 = vmatprep.subr.bf16.mxu0 %v4057
        %5102 = vmatpush1.bf16.msra.mxu0 %v4056
        %5103 = vmatprep.subr.bf16.mxu0 %v4065
        %5104 = vmatpush1.bf16.msra.mxu0 %v4064
        %5105 = vmatprep.subr.bf16.mxu0 %v4073
        %5106 = vmatpush1.bf16.msra.mxu0 %v4072
        %5107 = vmatprep.subr.bf16.mxu0 %v4081
        %5108 = vmatpush1.bf16.msra.mxu0 %v4080
        %5109 = vmatprep.subr.bf16.mxu0 %v4089
        %5110 = vmatpush1.bf16.msra.mxu0 %v4088
        %5111 = vmatprep.subr.bf16.mxu0 %v4097
        %5112 = vmatpush1.bf16.msra.mxu0 %v4096
        %5113 = vmatprep.subr.bf16.mxu0 %v4105
        %5114 = vmatpush1.bf16.msra.mxu0 %v4104
        %5115 = vmatprep.subr.bf16.mxu0 %v4113
        %5116 = vmatpush1.bf16.msra.mxu0 %v4112
        %5117 = vmatprep.subr.bf16.mxu0 %v4121
        %5118 = vmatpush1.bf16.msra.mxu0 %v4120
        %5119 = vmatprep.mubr.bf16.mxu0 %v4963
        %5120 = vmatmul.mubr.bf16.gmra.mrb[0].mxu0 %v4962
        %v5121 = vpop.f32.mrb[0].mxu0
        %v5122 = vadd.f32 0.0, %v5121
        %v5123 = vpop.f32.mrb[0].mxu0
        %v5124 = vadd.f32 0.0, %v5123
        %v5125 = vpop.f32.mrb[0].mxu0
        %v5126 = vpop.f32.mrb[0].mxu0
        %5127 = vdwg.mxu0
        %v5128 = vadd.f32 %v4954, %v4999
        %v5129 = vadd.f32 %v4955, %v5001
        %v5130 = vadd.f32 %v4956, %v5040
        %v5131 = vadd.f32 %v4957, %v5042
        %v5132 = vadd.f32 %v4958, %v5081
        %v5133 = vadd.f32 %v4959, %v5083
        %v5134 = vadd.f32 %v4960, %v5122
        %v5135 = vadd.f32 %v4961, %v5124
        %v5136 = vxor.u32 %v5128, 2147483648
        %v5137 = vxor.u32 %v5129, 2147483648
        %v5138 = vmul.f32 %v5136, 1.442695
        %v5139 = vpow.pop %v5138
        %v5140 = vmul.f32 %v5137, 1.442695
        %v5141 = vpow.pop %v5140
        %v5142 = vadd.f32 %v5139, 1.0
        %v5143 = vadd.f32 %v5141, 1.0
        %v5144 = vrcp.pop %v5142
        %v5145 = vmul.f32 1.0, %v5144
        %v5146 = vrcp.pop %v5143
        %v5147 = vmul.f32 1.0, %v5146
        %v5148 = vxor.u32 %v5130, 2147483648
        %v5149 = vxor.u32 %v5131, 2147483648
        %v5150 = vmul.f32 %v5148, 1.442695
        %v5151 = vpow.pop %v5150
        %v5152 = vmul.f32 %v5149, 1.442695
        %v5153 = vpow.pop %v5152
        %v5154 = vadd.f32 %v5151, 1.0
        %v5155 = vadd.f32 %v5153, 1.0
        %v5156 = vrcp.pop %v5154
        %v5157 = vmul.f32 1.0, %v5156
        %v5158 = vrcp.pop %v5155
        %v5159 = vmul.f32 1.0, %v5158
        %v5160 = vtanh.pop %v5132
        %v5161 = vtanh.pop %v5133
        %v5162 = vxor.u32 %v5134, 2147483648
        %v5163 = vxor.u32 %v5135, 2147483648
        %v5164 = vmul.f32 %v5162, 1.442695
        %v5165 = vpow.pop %v5164
        %v5166 = vmul.f32 %v5163, 1.442695
        %v5167 = vpow.pop %v5166
        %v5168 = vadd.f32 %v5165, 1.0
        %v5169 = vadd.f32 %v5167, 1.0
        %v5170 = vrcp.pop %v5168
        %v5171 = vmul.f32 1.0, %v5170
        %v5172 = vrcp.pop %v5169
        %v5173 = vmul.f32 1.0, %v5172
        %v5174 = vmul.f32 %v5157, %v4940
        %v5175 = vmul.f32 %v5159, %v4941
        %v5176 = vmul.f32 %v5145, %v5160
        %v5177 = vmul.f32 %v5147, %v5161
        %v5178 = vadd.f32 %v5174, %v5176
        %v5179 = vadd.f32 %v5175, %v5177
        %v5180 = vtanh.pop %v5178
        %v5181 = vtanh.pop %v5179
        %v5182 = vmul.f32 %v5171, %v5180
        %v5183 = vmul.f32 %v5173, %v5181
        %s5184 = smul.u32 3, 2
        %s5185 = smul.addr %s5184, 8
        %s5186 = scalar_lea.vmem [#allocation3], %s5185
        %5187 = vst [vmem:[%s5186] sm:$0xff] %v5182
        %5188 = vst [vmem:[%s5186 + $0x8] sm:$0xff] %v5183
        %s5189 = smul.u32 4, 8
        %s5190 = smul.addr %s5189, 8
        %s5191 = scalar_lea.vmem [#allocation2], %s5190
        %v5192 = vld [vmem:[%s5191] sm:$0xff]
        %v5193 = vld [vmem:[%s5191 + $0x8] sm:$0xff]
        %v5194 = vld [vmem:[%s5191 + $0x10] sm:$0xff]
        %v5195 = vld [vmem:[%s5191 + $0x18] sm:$0xff]
        %v5196 = vld [vmem:[%s5191 + $0x20] sm:$0xff]
        %v5197 = vld [vmem:[%s5191 + $0x28] sm:$0xff]
        %v5198 = vld [vmem:[%s5191 + $0x30] sm:$0xff]
        %v5199 = vld [vmem:[%s5191 + $0x38] sm:$0xff]
        %v5200 = vpack.c.bf16 %v5182, %v5182
        %v5201 = vpack.c.bf16 %v5183, %v5183
        %5202 = vmatprep.subr.bf16.mxu0 %v3995
        %5203 = vmatpush1.bf16.msra.mxu0 %v3994
        %5204 = vmatprep.subr.bf16.mxu0 %v4003
        %5205 = vmatpush1.bf16.msra.mxu0 %v4002
        %5206 = vmatprep.subr.bf16.mxu0 %v4011
        %5207 = vmatpush1.bf16.msra.mxu0 %v4010
        %5208 = vmatprep.subr.bf16.mxu0 %v4019
        %5209 = vmatpush1.bf16.msra.mxu0 %v4018
        %5210 = vmatprep.subr.bf16.mxu0 %v4027
        %5211 = vmatpush1.bf16.msra.mxu0 %v4026
        %5212 = vmatprep.subr.bf16.mxu0 %v4035
        %5213 = vmatpush1.bf16.msra.mxu0 %v4034
        %5214 = vmatprep.subr.bf16.mxu0 %v4043
        %5215 = vmatpush1.bf16.msra.mxu0 %v4042
        %5216 = vmatprep.subr.bf16.mxu0 %v4051
        %5217 = vmatpush1.bf16.msra.mxu0 %v4050
        %5218 = vmatprep.subr.bf16.mxu0 %v4059
        %5219 = vmatpush1.bf16.msra.mxu0 %v4058
        %5220 = vmatprep.subr.bf16.mxu0 %v4067
        %5221 = vmatpush1.bf16.msra.mxu0 %v4066
        %5222 = vmatprep.subr.bf16.mxu0 %v4075
        %5223 = vmatpush1.bf16.msra.mxu0 %v4074
        %5224 = vmatprep.subr.bf16.mxu0 %v4083
        %5225 = vmatpush1.bf16.msra.mxu0 %v4082
        %5226 = vmatprep.subr.bf16.mxu0 %v4091
        %5227 = vmatpush1.bf16.msra.mxu0 %v4090
        %5228 = vmatprep.subr.bf16.mxu0 %v4099
        %5229 = vmatpush1.bf16.msra.mxu0 %v4098
        %5230 = vmatprep.subr.bf16.mxu0 %v4107
        %5231 = vmatpush1.bf16.msra.mxu0 %v4106
        %5232 = vmatprep.subr.bf16.mxu0 %v4115
        %5233 = vmatpush1.bf16.msra.mxu0 %v4114
        %5234 = vmatprep.mubr.bf16.mxu0 %v5201
        %5235 = vmatmul.mubr.bf16.gmra.mrb[0].mxu0 %v5200
        %v5236 = vpop.f32.mrb[0].mxu0
        %v5237 = vadd.f32 0.0, %v5236
        %v5238 = vpop.f32.mrb[0].mxu0
        %v5239 = vadd.f32 0.0, %v5238
        %v5240 = vpop.f32.mrb[0].mxu0
        %v5241 = vpop.f32.mrb[0].mxu0
        %5242 = vdwg.mxu0
        %5243 = vmatprep.subr.bf16.mxu0 %v3997
        %5244 = vmatpush1.bf16.msra.mxu0 %v3996
        %5245 = vmatprep.subr.bf16.mxu0 %v4005
        %5246 = vmatpush1.bf16.msra.mxu0 %v4004
        %5247 = vmatprep.subr.bf16.mxu0 %v4013
        %5248 = vmatpush1.bf16.msra.mxu0 %v4012
        %5249 = vmatprep.subr.bf16.mxu0 %v4021
        %5250 = vmatpush1.bf16.msra.mxu0 %v4020
        %5251 = vmatprep.subr.bf16.mxu0 %v4029
        %5252 = vmatpush1.bf16.msra.mxu0 %v4028
        %5253 = vmatprep.subr.bf16.mxu0 %v4037
        %5254 = vmatpush1.bf16.msra.mxu0 %v4036
        %5255 = vmatprep.subr.bf16.mxu0 %v4045
        %5256 = vmatpush1.bf16.msra.mxu0 %v4044
        %5257 = vmatprep.subr.bf16.mxu0 %v4053
        %5258 = vmatpush1.bf16.msra.mxu0 %v4052
        %5259 = vmatprep.subr.bf16.mxu0 %v4061
        %5260 = vmatpush1.bf16.msra.mxu0 %v4060
        %5261 = vmatprep.subr.bf16.mxu0 %v4069
        %5262 = vmatpush1.bf16.msra.mxu0 %v4068
        %5263 = vmatprep.subr.bf16.mxu0 %v4077
        %5264 = vmatpush1.bf16.msra.mxu0 %v4076
        %5265 = vmatprep.subr.bf16.mxu0 %v4085
        %5266 = vmatpush1.bf16.msra.mxu0 %v4084
        %5267 = vmatprep.subr.bf16.mxu0 %v4093
        %5268 = vmatpush1.bf16.msra.mxu0 %v4092
        %5269 = vmatprep.subr.bf16.mxu0 %v4101
        %5270 = vmatpush1.bf16.msra.mxu0 %v4100
        %5271 = vmatprep.subr.bf16.mxu0 %v4109
        %5272 = vmatpush1.bf16.msra.mxu0 %v4108
        %5273 = vmatprep.subr.bf16.mxu0 %v4117
        %5274 = vmatpush1.bf16.msra.mxu0 %v4116
        %5275 = vmatprep.mubr.bf16.mxu0 %v5201
        %5276 = vmatmul.mubr.bf16.gmra.mrb[0].mxu0 %v5200
        %v5277 = vpop.f32.mrb[0].mxu0
        %v5278 = vadd.f32 0.0, %v5277
        %v5279 = vpop.f32.mrb[0].mxu0
        %v5280 = vadd.f32 0.0, %v5279
        %v5281 = vpop.f32.mrb[0].mxu0
        %v5282 = vpop.f32.mrb[0].mxu0
        %5283 = vdwg.mxu0
        %5284 = vmatprep.subr.bf16.mxu0 %v3999
        %5285 = vmatpush1.bf16.msra.mxu0 %v3998
        %5286 = vmatprep.subr.bf16.mxu0 %v4007
        %5287 = vmatpush1.bf16.msra.mxu0 %v4006
        %5288 = vmatprep.subr.bf16.mxu0 %v4015
        %5289 = vmatpush1.bf16.msra.mxu0 %v4014
        %5290 = vmatprep.subr.bf16.mxu0 %v4023
        %5291 = vmatpush1.bf16.msra.mxu0 %v4022
        %5292 = vmatprep.subr.bf16.mxu0 %v4031
        %5293 = vmatpush1.bf16.msra.mxu0 %v4030
        %5294 = vmatprep.subr.bf16.mxu0 %v4039
        %5295 = vmatpush1.bf16.msra.mxu0 %v4038
        %5296 = vmatprep.subr.bf16.mxu0 %v4047
        %5297 = vmatpush1.bf16.msra.mxu0 %v4046
        %5298 = vmatprep.subr.bf16.mxu0 %v4055
        %5299 = vmatpush1.bf16.msra.mxu0 %v4054
        %5300 = vmatprep.subr.bf16.mxu0 %v4063
        %5301 = vmatpush1.bf16.msra.mxu0 %v4062
        %5302 = vmatprep.subr.bf16.mxu0 %v4071
        %5303 = vmatpush1.bf16.msra.mxu0 %v4070
        %5304 = vmatprep.subr.bf16.mxu0 %v4079
        %5305 = vmatpush1.bf16.msra.mxu0 %v4078
        %5306 = vmatprep.subr.bf16.mxu0 %v4087
        %5307 = vmatpush1.bf16.msra.mxu0 %v4086
        %5308 = vmatprep.subr.bf16.mxu0 %v4095
        %5309 = vmatpush1.bf16.msra.mxu0 %v4094
        %5310 = vmatprep.subr.bf16.mxu0 %v4103
        %5311 = vmatpush1.bf16.msra.mxu0 %v4102
        %5312 = vmatprep.subr.bf16.mxu0 %v4111
        %5313 = vmatpush1.bf16.msra.mxu0 %v4110
        %5314 = vmatprep.subr.bf16.mxu0 %v4119
        %5315 = vmatpush1.bf16.msra.mxu0 %v4118
        %5316 = vmatprep.mubr.bf16.mxu0 %v5201
        %5317 = vmatmul.mubr.bf16.gmra.mrb[0].mxu0 %v5200
        %v5318 = vpop.f32.mrb[0].mxu0
        %v5319 = vadd.f32 0.0, %v5318
        %v5320 = vpop.f32.mrb[0].mxu0
        %v5321 = vadd.f32 0.0, %v5320
        %v5322 = vpop.f32.mrb[0].mxu0
        %v5323 = vpop.f32.mrb[0].mxu0
        %5324 = vdwg.mxu0
        %5325 = vmatprep.subr.bf16.mxu0 %v4001
        %5326 = vmatpush1.bf16.msra.mxu0 %v4000
        %5327 = vmatprep.subr.bf16.mxu0 %v4009
        %5328 = vmatpush1.bf16.msra.mxu0 %v4008
        %5329 = vmatprep.subr.bf16.mxu0 %v4017
        %5330 = vmatpush1.bf16.msra.mxu0 %v4016
        %5331 = vmatprep.subr.bf16.mxu0 %v4025
        %5332 = vmatpush1.bf16.msra.mxu0 %v4024
        %5333 = vmatprep.subr.bf16.mxu0 %v4033
        %5334 = vmatpush1.bf16.msra.mxu0 %v4032
        %5335 = vmatprep.subr.bf16.mxu0 %v4041
        %5336 = vmatpush1.bf16.msra.mxu0 %v4040
        %5337 = vmatprep.subr.bf16.mxu0 %v4049
        %5338 = vmatpush1.bf16.msra.mxu0 %v4048
        %5339 = vmatprep.subr.bf16.mxu0 %v4057
        %5340 = vmatpush1.bf16.msra.mxu0 %v4056
        %5341 = vmatprep.subr.bf16.mxu0 %v4065
        %5342 = vmatpush1.bf16.msra.mxu0 %v4064
        %5343 = vmatprep.subr.bf16.mxu0 %v4073
        %5344 = vmatpush1.bf16.msra.mxu0 %v4072
        %5345 = vmatprep.subr.bf16.mxu0 %v4081
        %5346 = vmatpush1.bf16.msra.mxu0 %v4080
        %5347 = vmatprep.subr.bf16.mxu0 %v4089
        %5348 = vmatpush1.bf16.msra.mxu0 %v4088
        %5349 = vmatprep.subr.bf16.mxu0 %v4097
        %5350 = vmatpush1.bf16.msra.mxu0 %v4096
        %5351 = vmatprep.subr.bf16.mxu0 %v4105
        %5352 = vmatpush1.bf16.msra.mxu0 %v4104
        %5353 = vmatprep.subr.bf16.mxu0 %v4113
        %5354 = vmatpush1.bf16.msra.mxu0 %v4112
        %5355 = vmatprep.subr.bf16.mxu0 %v4121
        %5356 = vmatpush1.bf16.msra.mxu0 %v4120
        %5357 = vmatprep.mubr.bf16.mxu0 %v5201
        %5358 = vmatmul.mubr.bf16.gmra.mrb[0].mxu0 %v5200
        %v5359 = vpop.f32.mrb[0].mxu0
        %v5360 = vadd.f32 0.0, %v5359
        %v5361 = vpop.f32.mrb[0].mxu0
        %v5362 = vadd.f32 0.0, %v5361
        %v5363 = vpop.f32.mrb[0].mxu0
        %v5364 = vpop.f32.mrb[0].mxu0
        %5365 = vdwg.mxu0
        %v5366 = vadd.f32 %v5192, %v5237
        %v5367 = vadd.f32 %v5193, %v5239
        %v5368 = vadd.f32 %v5194, %v5278
        %v5369 = vadd.f32 %v5195, %v5280
        %v5370 = vadd.f32 %v5196, %v5319
        %v5371 = vadd.f32 %v5197, %v5321
        %v5372 = vadd.f32 %v5198, %v5360
        %v5373 = vadd.f32 %v5199, %v5362
        %v5374 = vxor.u32 %v5366, 2147483648
        %v5375 = vxor.u32 %v5367, 2147483648
        %v5376 = vmul.f32 %v5374, 1.442695
        %v5377 = vpow.pop %v5376
        %v5378 = vmul.f32 %v5375, 1.442695
        %v5379 = vpow.pop %v5378
        %v5380 = vadd.f32 %v5377, 1.0
        %v5381 = vadd.f32 %v5379, 1.0
        %v5382 = vrcp.pop %v5380
        %v5383 = vmul.f32 1.0, %v5382
        %v5384 = vrcp.pop %v5381
        %v5385 = vmul.f32 1.0, %v5384
        %v5386 = vxor.u32 %v5368, 2147483648
        %v5387 = vxor.u32 %v5369, 2147483648
        %v5388 = vmul.f32 %v5386, 1.442695
        %v5389 = vpow.pop %v5388
        %v5390 = vmul.f32 %v5387, 1.442695
        %v5391 = vpow.pop %v5390
        %v5392 = vadd.f32 %v5389, 1.0
        %v5393 = vadd.f32 %v5391, 1.0
        %v5394 = vrcp.pop %v5392
        %v5395 = vmul.f32 1.0, %v5394
        %v5396 = vrcp.pop %v5393
        %v5397 = vmul.f32 1.0, %v5396
        %v5398 = vtanh.pop %v5370
        %v5399 = vtanh.pop %v5371
        %v5400 = vxor.u32 %v5372, 2147483648
        %v5401 = vxor.u32 %v5373, 2147483648
        %v5402 = vmul.f32 %v5400, 1.442695
        %v5403 = vpow.pop %v5402
        %v5404 = vmul.f32 %v5401, 1.442695
        %v5405 = vpow.pop %v5404
        %v5406 = vadd.f32 %v5403, 1.0
        %v5407 = vadd.f32 %v5405, 1.0
        %v5408 = vrcp.pop %v5406
        %v5409 = vmul.f32 1.0, %v5408
        %v5410 = vrcp.pop %v5407
        %v5411 = vmul.f32 1.0, %v5410
        %v5412 = vmul.f32 %v5395, %v5178
        %v5413 = vmul.f32 %v5397, %v5179
        %v5414 = vmul.f32 %v5383, %v5398
        %v5415 = vmul.f32 %v5385, %v5399
        %v5416 = vadd.f32 %v5412, %v5414
        %v5417 = vadd.f32 %v5413, %v5415
        %v5418 = vtanh.pop %v5416
        %v5419 = vtanh.pop %v5417
        %v5420 = vmul.f32 %v5409, %v5418
        %v5421 = vmul.f32 %v5411, %v5419
        %s5422 = smul.u32 4, 2
        %s5423 = smul.addr %s5422, 8
        %s5424 = scalar_lea.vmem [#allocation3], %s5423
        %5425 = vst [vmem:[%s5424] sm:$0xff] %v5420
        %5426 = vst [vmem:[%s5424 + $0x8] sm:$0xff] %v5421
        %s5427 = smul.u32 5, 8
        %s5428 = smul.addr %s5427, 8
        %s5429 = scalar_lea.vmem [#allocation2], %s5428
        %v5430 = vld [vmem:[%s5429] sm:$0xff]
        %v5431 = vld [vmem:[%s5429 + $0x8] sm:$0xff]
        %v5432 = vld [vmem:[%s5429 + $0x10] sm:$0xff]
        %v5433 = vld [vmem:[%s5429 + $0x18] sm:$0xff]
        %v5434 = vld [vmem:[%s5429 + $0x20] sm:$0xff]
        %v5435 = vld [vmem:[%s5429 + $0x28] sm:$0xff]
        %v5436 = vld [vmem:[%s5429 + $0x30] sm:$0xff]
        %v5437 = vld [vmem:[%s5429 + $0x38] sm:$0xff]
        %v5438 = vpack.c.bf16 %v5420, %v5420
        %v5439 = vpack.c.bf16 %v5421, %v5421
        %5440 = vmatprep.subr.bf16.mxu0 %v3995
        %5441 = vmatpush1.bf16.msra.mxu0 %v3994
        %5442 = vmatprep.subr.bf16.mxu0 %v4003
        %5443 = vmatpush1.bf16.msra.mxu0 %v4002
        %5444 = vmatprep.subr.bf16.mxu0 %v4011
        %5445 = vmatpush1.bf16.msra.mxu0 %v4010
        %5446 = vmatprep.subr.bf16.mxu0 %v4019
        %5447 = vmatpush1.bf16.msra.mxu0 %v4018
        %5448 = vmatprep.subr.bf16.mxu0 %v4027
        %5449 = vmatpush1.bf16.msra.mxu0 %v4026
        %5450 = vmatprep.subr.bf16.mxu0 %v4035
        %5451 = vmatpush1.bf16.msra.mxu0 %v4034
        %5452 = vmatprep.subr.bf16.mxu0 %v4043
        %5453 = vmatpush1.bf16.msra.mxu0 %v4042
        %5454 = vmatprep.subr.bf16.mxu0 %v4051
        %5455 = vmatpush1.bf16.msra.mxu0 %v4050
        %5456 = vmatprep.subr.bf16.mxu0 %v4059
        %5457 = vmatpush1.bf16.msra.mxu0 %v4058
        %5458 = vmatprep.subr.bf16.mxu0 %v4067
        %5459 = vmatpush1.bf16.msra.mxu0 %v4066
        %5460 = vmatprep.subr.bf16.mxu0 %v4075
        %5461 = vmatpush1.bf16.msra.mxu0 %v4074
        %5462 = vmatprep.subr.bf16.mxu0 %v4083
        %5463 = vmatpush1.bf16.msra.mxu0 %v4082
        %5464 = vmatprep.subr.bf16.mxu0 %v4091
        %5465 = vmatpush1.bf16.msra.mxu0 %v4090
        %5466 = vmatprep.subr.bf16.mxu0 %v4099
        %5467 = vmatpush1.bf16.msra.mxu0 %v4098
        %5468 = vmatprep.subr.bf16.mxu0 %v4107
        %5469 = vmatpush1.bf16.msra.mxu0 %v4106
        %5470 = vmatprep.subr.bf16.mxu0 %v4115
        %5471 = vmatpush1.bf16.msra.mxu0 %v4114
        %5472 = vmatprep.mubr.bf16.mxu0 %v5439
        %5473 = vmatmul.mubr.bf16.gmra.mrb[0].mxu0 %v5438
        %v5474 = vpop.f32.mrb[0].mxu0
        %v5475 = vadd.f32 0.0, %v5474
        %v5476 = vpop.f32.mrb[0].mxu0
        %v5477 = vadd.f32 0.0, %v5476
        %v5478 = vpop.f32.mrb[0].mxu0
        %v5479 = vpop.f32.mrb[0].mxu0
        %5480 = vdwg.mxu0
        %5481 = vmatprep.subr.bf16.mxu0 %v3997
        %5482 = vmatpush1.bf16.msra.mxu0 %v3996
        %5483 = vmatprep.subr.bf16.mxu0 %v4005
        %5484 = vmatpush1.bf16.msra.mxu0 %v4004
        %5485 = vmatprep.subr.bf16.mxu0 %v4013
        %5486 = vmatpush1.bf16.msra.mxu0 %v4012
        %5487 = vmatprep.subr.bf16.mxu0 %v4021
        %5488 = vmatpush1.bf16.msra.mxu0 %v4020
        %5489 = vmatprep.subr.bf16.mxu0 %v4029
        %5490 = vmatpush1.bf16.msra.mxu0 %v4028
        %5491 = vmatprep.subr.bf16.mxu0 %v4037
        %5492 = vmatpush1.bf16.msra.mxu0 %v4036
        %5493 = vmatprep.subr.bf16.mxu0 %v4045
        %5494 = vmatpush1.bf16.msra.mxu0 %v4044
        %5495 = vmatprep.subr.bf16.mxu0 %v4053
        %5496 = vmatpush1.bf16.msra.mxu0 %v4052
        %5497 = vmatprep.subr.bf16.mxu0 %v4061
        %5498 = vmatpush1.bf16.msra.mxu0 %v4060
        %5499 = vmatprep.subr.bf16.mxu0 %v4069
        %5500 = vmatpush1.bf16.msra.mxu0 %v4068
        %5501 = vmatprep.subr.bf16.mxu0 %v4077
        %5502 = vmatpush1.bf16.msra.mxu0 %v4076
        %5503 = vmatprep.subr.bf16.mxu0 %v4085
        %5504 = vmatpush1.bf16.msra.mxu0 %v4084
        %5505 = vmatprep.subr.bf16.mxu0 %v4093
        %5506 = vmatpush1.bf16.msra.mxu0 %v4092
        %5507 = vmatprep.subr.bf16.mxu0 %v4101
        %5508 = vmatpush1.bf16.msra.mxu0 %v4100
        %5509 = vmatprep.subr.bf16.mxu0 %v4109
        %5510 = vmatpush1.bf16.msra.mxu0 %v4108
        %5511 = vmatprep.subr.bf16.mxu0 %v4117
        %5512 = vmatpush1.bf16.msra.mxu0 %v4116
        %5513 = vmatprep.mubr.bf16.mxu0 %v5439
        %5514 = vmatmul.mubr.bf16.gmra.mrb[0].mxu0 %v5438
        %v5515 = vpop.f32.mrb[0].mxu0
        %v5516 = vadd.f32 0.0, %v5515
        %v5517 = vpop.f32.mrb[0].mxu0
        %v5518 = vadd.f32 0.0, %v5517
        %v5519 = vpop.f32.mrb[0].mxu0
        %v5520 = vpop.f32.mrb[0].mxu0
        %5521 = vdwg.mxu0
        %5522 = vmatprep.subr.bf16.mxu0 %v3999
        %5523 = vmatpush1.bf16.msra.mxu0 %v3998
        %5524 = vmatprep.subr.bf16.mxu0 %v4007
        %5525 = vmatpush1.bf16.msra.mxu0 %v4006
        %5526 = vmatprep.subr.bf16.mxu0 %v4015
        %5527 = vmatpush1.bf16.msra.mxu0 %v4014
        %5528 = vmatprep.subr.bf16.mxu0 %v4023
        %5529 = vmatpush1.bf16.msra.mxu0 %v4022
        %5530 = vmatprep.subr.bf16.mxu0 %v4031
        %5531 = vmatpush1.bf16.msra.mxu0 %v4030
        %5532 = vmatprep.subr.bf16.mxu0 %v4039
        %5533 = vmatpush1.bf16.msra.mxu0 %v4038
        %5534 = vmatprep.subr.bf16.mxu0 %v4047
        %5535 = vmatpush1.bf16.msra.mxu0 %v4046
        %5536 = vmatprep.subr.bf16.mxu0 %v4055
        %5537 = vmatpush1.bf16.msra.mxu0 %v4054
        %5538 = vmatprep.subr.bf16.mxu0 %v4063
        %5539 = vmatpush1.bf16.msra.mxu0 %v4062
        %5540 = vmatprep.subr.bf16.mxu0 %v4071
        %5541 = vmatpush1.bf16.msra.mxu0 %v4070
        %5542 = vmatprep.subr.bf16.mxu0 %v4079
        %5543 = vmatpush1.bf16.msra.mxu0 %v4078
        %5544 = vmatprep.subr.bf16.mxu0 %v4087
        %5545 = vmatpush1.bf16.msra.mxu0 %v4086
        %5546 = vmatprep.subr.bf16.mxu0 %v4095
        %5547 = vmatpush1.bf16.msra.mxu0 %v4094
        %5548 = vmatprep.subr.bf16.mxu0 %v4103
        %5549 = vmatpush1.bf16.msra.mxu0 %v4102
        %5550 = vmatprep.subr.bf16.mxu0 %v4111
        %5551 = vmatpush1.bf16.msra.mxu0 %v4110
        %5552 = vmatprep.subr.bf16.mxu0 %v4119
        %5553 = vmatpush1.bf16.msra.mxu0 %v4118
        %5554 = vmatprep.mubr.bf16.mxu0 %v5439
        %5555 = vmatmul.mubr.bf16.gmra.mrb[0].mxu0 %v5438
        %v5556 = vpop.f32.mrb[0].mxu0
        %v5557 = vadd.f32 0.0, %v5556
        %v5558 = vpop.f32.mrb[0].mxu0
        %v5559 = vadd.f32 0.0, %v5558
        %v5560 = vpop.f32.mrb[0].mxu0
        %v5561 = vpop.f32.mrb[0].mxu0
        %5562 = vdwg.mxu0
        %5563 = vmatprep.subr.bf16.mxu0 %v4001
        %5564 = vmatpush1.bf16.msra.mxu0 %v4000
        %5565 = vmatprep.subr.bf16.mxu0 %v4009
        %5566 = vmatpush1.bf16.msra.mxu0 %v4008
        %5567 = vmatprep.subr.bf16.mxu0 %v4017
        %5568 = vmatpush1.bf16.msra.mxu0 %v4016
        %5569 = vmatprep.subr.bf16.mxu0 %v4025
        %5570 = vmatpush1.bf16.msra.mxu0 %v4024
        %5571 = vmatprep.subr.bf16.mxu0 %v4033
        %5572 = vmatpush1.bf16.msra.mxu0 %v4032
        %5573 = vmatprep.subr.bf16.mxu0 %v4041
        %5574 = vmatpush1.bf16.msra.mxu0 %v4040
        %5575 = vmatprep.subr.bf16.mxu0 %v4049
        %5576 = vmatpush1.bf16.msra.mxu0 %v4048
        %5577 = vmatprep.subr.bf16.mxu0 %v4057
        %5578 = vmatpush1.bf16.msra.mxu0 %v4056
        %5579 = vmatprep.subr.bf16.mxu0 %v4065
        %5580 = vmatpush1.bf16.msra.mxu0 %v4064
        %5581 = vmatprep.subr.bf16.mxu0 %v4073
        %5582 = vmatpush1.bf16.msra.mxu0 %v4072
        %5583 = vmatprep.subr.bf16.mxu0 %v4081
        %5584 = vmatpush1.bf16.msra.mxu0 %v4080
        %5585 = vmatprep.subr.bf16.mxu0 %v4089
        %5586 = vmatpush1.bf16.msra.mxu0 %v4088
        %5587 = vmatprep.subr.bf16.mxu0 %v4097
        %5588 = vmatpush1.bf16.msra.mxu0 %v4096
        %5589 = vmatprep.subr.bf16.mxu0 %v4105
        %5590 = vmatpush1.bf16.msra.mxu0 %v4104
        %5591 = vmatprep.subr.bf16.mxu0 %v4113
        %5592 = vmatpush1.bf16.msra.mxu0 %v4112
        %5593 = vmatprep.subr.bf16.mxu0 %v4121
        %5594 = vmatpush1.bf16.msra.mxu0 %v4120
        %5595 = vmatprep.mubr.bf16.mxu0 %v5439
        %5596 = vmatmul.mubr.bf16.gmra.mrb[0].mxu0 %v5438
        %v5597 = vpop.f32.mrb[0].mxu0
        %v5598 = vadd.f32 0.0, %v5597
        %v5599 = vpop.f32.mrb[0].mxu0
        %v5600 = vadd.f32 0.0, %v5599
        %v5601 = vpop.f32.mrb[0].mxu0
        %v5602 = vpop.f32.mrb[0].mxu0
        %5603 = vdwg.mxu0
        %v5604 = vadd.f32 %v5430, %v5475
        %v5605 = vadd.f32 %v5431, %v5477
        %v5606 = vadd.f32 %v5432, %v5516
        %v5607 = vadd.f32 %v5433, %v5518
        %v5608 = vadd.f32 %v5434, %v5557
        %v5609 = vadd.f32 %v5435, %v5559
        %v5610 = vadd.f32 %v5436, %v5598
        %v5611 = vadd.f32 %v5437, %v5600
        %v5612 = vxor.u32 %v5604, 2147483648
        %v5613 = vxor.u32 %v5605, 2147483648
        %v5614 = vmul.f32 %v5612, 1.442695
        %v5615 = vpow.pop %v5614
        %v5616 = vmul.f32 %v5613, 1.442695
        %v5617 = vpow.pop %v5616
        %v5618 = vadd.f32 %v5615, 1.0
        %v5619 = vadd.f32 %v5617, 1.0
        %v5620 = vrcp.pop %v5618
        %v5621 = vmul.f32 1.0, %v5620
        %v5622 = vrcp.pop %v5619
        %v5623 = vmul.f32 1.0, %v5622
        %v5624 = vxor.u32 %v5606, 2147483648
        %v5625 = vxor.u32 %v5607, 2147483648
        %v5626 = vmul.f32 %v5624, 1.442695
        %v5627 = vpow.pop %v5626
        %v5628 = vmul.f32 %v5625, 1.442695
        %v5629 = vpow.pop %v5628
        %v5630 = vadd.f32 %v5627, 1.0
        %v5631 = vadd.f32 %v5629, 1.0
        %v5632 = vrcp.pop %v5630
        %v5633 = vmul.f32 1.0, %v5632
        %v5634 = vrcp.pop %v5631
        %v5635 = vmul.f32 1.0, %v5634
        %v5636 = vtanh.pop %v5608
        %v5637 = vtanh.pop %v5609
        %v5638 = vxor.u32 %v5610, 2147483648
        %v5639 = vxor.u32 %v5611, 2147483648
        %v5640 = vmul.f32 %v5638, 1.442695
        %v5641 = vpow.pop %v5640
        %v5642 = vmul.f32 %v5639, 1.442695
        %v5643 = vpow.pop %v5642
        %v5644 = vadd.f32 %v5641, 1.0
        %v5645 = vadd.f32 %v5643, 1.0
        %v5646 = vrcp.pop %v5644
        %v5647 = vmul.f32 1.0, %v5646
        %v5648 = vrcp.pop %v5645
        %v5649 = vmul.f32 1.0, %v5648
        %v5650 = vmul.f32 %v5633, %v5416
        %v5651 = vmul.f32 %v5635, %v5417
        %v5652 = vmul.f32 %v5621, %v5636
        %v5653 = vmul.f32 %v5623, %v5637
        %v5654 = vadd.f32 %v5650, %v5652
        %v5655 = vadd.f32 %v5651, %v5653
        %v5656 = vtanh.pop %v5654
        %v5657 = vtanh.pop %v5655
        %v5658 = vmul.f32 %v5647, %v5656
        %v5659 = vmul.f32 %v5649, %v5657
        %s5660 = smul.u32 5, 2
        %s5661 = smul.addr %s5660, 8
        %s5662 = scalar_lea.vmem [#allocation3], %s5661
        %5663 = vst [vmem:[%s5662] sm:$0xff] %v5658
        %5664 = vst [vmem:[%s5662 + $0x8] sm:$0xff] %v5659
        %s5665 = smul.u32 6, 8
        %s5666 = smul.addr %s5665, 8
        %s5667 = scalar_lea.vmem [#allocation2], %s5666
        %v5668 = vld [vmem:[%s5667] sm:$0xff]
        %v5669 = vld [vmem:[%s5667 + $0x8] sm:$0xff]
        %v5670 = vld [vmem:[%s5667 + $0x10] sm:$0xff]
        %v5671 = vld [vmem:[%s5667 + $0x18] sm:$0xff]
        %v5672 = vld [vmem:[%s5667 + $0x20] sm:$0xff]
        %v5673 = vld [vmem:[%s5667 + $0x28] sm:$0xff]
        %v5674 = vld [vmem:[%s5667 + $0x30] sm:$0xff]
        %v5675 = vld [vmem:[%s5667 + $0x38] sm:$0xff]
        %v5676 = vpack.c.bf16 %v5658, %v5658
        %v5677 = vpack.c.bf16 %v5659, %v5659
        %5678 = vmatprep.subr.bf16.mxu0 %v3995
        %5679 = vmatpush1.bf16.msra.mxu0 %v3994
        %5680 = vmatprep.subr.bf16.mxu0 %v4003
        %5681 = vmatpush1.bf16.msra.mxu0 %v4002
        %5682 = vmatprep.subr.bf16.mxu0 %v4011
        %5683 = vmatpush1.bf16.msra.mxu0 %v4010
        %5684 = vmatprep.subr.bf16.mxu0 %v4019
        %5685 = vmatpush1.bf16.msra.mxu0 %v4018
        %5686 = vmatprep.subr.bf16.mxu0 %v4027
        %5687 = vmatpush1.bf16.msra.mxu0 %v4026
        %5688 = vmatprep.subr.bf16.mxu0 %v4035
        %5689 = vmatpush1.bf16.msra.mxu0 %v4034
        %5690 = vmatprep.subr.bf16.mxu0 %v4043
        %5691 = vmatpush1.bf16.msra.mxu0 %v4042
        %5692 = vmatprep.subr.bf16.mxu0 %v4051
        %5693 = vmatpush1.bf16.msra.mxu0 %v4050
        %5694 = vmatprep.subr.bf16.mxu0 %v4059
        %5695 = vmatpush1.bf16.msra.mxu0 %v4058
        %5696 = vmatprep.subr.bf16.mxu0 %v4067
        %5697 = vmatpush1.bf16.msra.mxu0 %v4066
        %5698 = vmatprep.subr.bf16.mxu0 %v4075
        %5699 = vmatpush1.bf16.msra.mxu0 %v4074
        %5700 = vmatprep.subr.bf16.mxu0 %v4083
        %5701 = vmatpush1.bf16.msra.mxu0 %v4082
        %5702 = vmatprep.subr.bf16.mxu0 %v4091
        %5703 = vmatpush1.bf16.msra.mxu0 %v4090
        %5704 = vmatprep.subr.bf16.mxu0 %v4099
        %5705 = vmatpush1.bf16.msra.mxu0 %v4098
        %5706 = vmatprep.subr.bf16.mxu0 %v4107
        %5707 = vmatpush1.bf16.msra.mxu0 %v4106
        %5708 = vmatprep.subr.bf16.mxu0 %v4115
        %5709 = vmatpush1.bf16.msra.mxu0 %v4114
        %5710 = vmatprep.mubr.bf16.mxu0 %v5677
        %5711 = vmatmul.mubr.bf16.gmra.mrb[0].mxu0 %v5676
        %v5712 = vpop.f32.mrb[0].mxu0
        %v5713 = vadd.f32 0.0, %v5712
        %v5714 = vpop.f32.mrb[0].mxu0
        %v5715 = vadd.f32 0.0, %v5714
        %v5716 = vpop.f32.mrb[0].mxu0
        %v5717 = vpop.f32.mrb[0].mxu0
        %5718 = vdwg.mxu0
        %5719 = vmatprep.subr.bf16.mxu0 %v3997
        %5720 = vmatpush1.bf16.msra.mxu0 %v3996
        %5721 = vmatprep.subr.bf16.mxu0 %v4005
        %5722 = vmatpush1.bf16.msra.mxu0 %v4004
        %5723 = vmatprep.subr.bf16.mxu0 %v4013
        %5724 = vmatpush1.bf16.msra.mxu0 %v4012
        %5725 = vmatprep.subr.bf16.mxu0 %v4021
        %5726 = vmatpush1.bf16.msra.mxu0 %v4020
        %5727 = vmatprep.subr.bf16.mxu0 %v4029
        %5728 = vmatpush1.bf16.msra.mxu0 %v4028
        %5729 = vmatprep.subr.bf16.mxu0 %v4037
        %5730 = vmatpush1.bf16.msra.mxu0 %v4036
        %5731 = vmatprep.subr.bf16.mxu0 %v4045
        %5732 = vmatpush1.bf16.msra.mxu0 %v4044
        %5733 = vmatprep.subr.bf16.mxu0 %v4053
        %5734 = vmatpush1.bf16.msra.mxu0 %v4052
        %5735 = vmatprep.subr.bf16.mxu0 %v4061
        %5736 = vmatpush1.bf16.msra.mxu0 %v4060
        %5737 = vmatprep.subr.bf16.mxu0 %v4069
        %5738 = vmatpush1.bf16.msra.mxu0 %v4068
        %5739 = vmatprep.subr.bf16.mxu0 %v4077
        %5740 = vmatpush1.bf16.msra.mxu0 %v4076
        %5741 = vmatprep.subr.bf16.mxu0 %v4085
        %5742 = vmatpush1.bf16.msra.mxu0 %v4084
        %5743 = vmatprep.subr.bf16.mxu0 %v4093
        %5744 = vmatpush1.bf16.msra.mxu0 %v4092
        %5745 = vmatprep.subr.bf16.mxu0 %v4101
        %5746 = vmatpush1.bf16.msra.mxu0 %v4100
        %5747 = vmatprep.subr.bf16.mxu0 %v4109
        %5748 = vmatpush1.bf16.msra.mxu0 %v4108
        %5749 = vmatprep.subr.bf16.mxu0 %v4117
        %5750 = vmatpush1.bf16.msra.mxu0 %v4116
        %5751 = vmatprep.mubr.bf16.mxu0 %v5677
        %5752 = vmatmul.mubr.bf16.gmra.mrb[0].mxu0 %v5676
        %v5753 = vpop.f32.mrb[0].mxu0
        %v5754 = vadd.f32 0.0, %v5753
        %v5755 = vpop.f32.mrb[0].mxu0
        %v5756 = vadd.f32 0.0, %v5755
        %v5757 = vpop.f32.mrb[0].mxu0
        %v5758 = vpop.f32.mrb[0].mxu0
        %5759 = vdwg.mxu0
        %5760 = vmatprep.subr.bf16.mxu0 %v3999
        %5761 = vmatpush1.bf16.msra.mxu0 %v3998
        %5762 = vmatprep.subr.bf16.mxu0 %v4007
        %5763 = vmatpush1.bf16.msra.mxu0 %v4006
        %5764 = vmatprep.subr.bf16.mxu0 %v4015
        %5765 = vmatpush1.bf16.msra.mxu0 %v4014
        %5766 = vmatprep.subr.bf16.mxu0 %v4023
        %5767 = vmatpush1.bf16.msra.mxu0 %v4022
        %5768 = vmatprep.subr.bf16.mxu0 %v4031
        %5769 = vmatpush1.bf16.msra.mxu0 %v4030
        %5770 = vmatprep.subr.bf16.mxu0 %v4039
        %5771 = vmatpush1.bf16.msra.mxu0 %v4038
        %5772 = vmatprep.subr.bf16.mxu0 %v4047
        %5773 = vmatpush1.bf16.msra.mxu0 %v4046
        %5774 = vmatprep.subr.bf16.mxu0 %v4055
        %5775 = vmatpush1.bf16.msra.mxu0 %v4054
        %5776 = vmatprep.subr.bf16.mxu0 %v4063
        %5777 = vmatpush1.bf16.msra.mxu0 %v4062
        %5778 = vmatprep.subr.bf16.mxu0 %v4071
        %5779 = vmatpush1.bf16.msra.mxu0 %v4070
        %5780 = vmatprep.subr.bf16.mxu0 %v4079
        %5781 = vmatpush1.bf16.msra.mxu0 %v4078
        %5782 = vmatprep.subr.bf16.mxu0 %v4087
        %5783 = vmatpush1.bf16.msra.mxu0 %v4086
        %5784 = vmatprep.subr.bf16.mxu0 %v4095
        %5785 = vmatpush1.bf16.msra.mxu0 %v4094
        %5786 = vmatprep.subr.bf16.mxu0 %v4103
        %5787 = vmatpush1.bf16.msra.mxu0 %v4102
        %5788 = vmatprep.subr.bf16.mxu0 %v4111
        %5789 = vmatpush1.bf16.msra.mxu0 %v4110
        %5790 = vmatprep.subr.bf16.mxu0 %v4119
        %5791 = vmatpush1.bf16.msra.mxu0 %v4118
        %5792 = vmatprep.mubr.bf16.mxu0 %v5677
        %5793 = vmatmul.mubr.bf16.gmra.mrb[0].mxu0 %v5676
        %v5794 = vpop.f32.mrb[0].mxu0
        %v5795 = vadd.f32 0.0, %v5794
        %v5796 = vpop.f32.mrb[0].mxu0
        %v5797 = vadd.f32 0.0, %v5796
        %v5798 = vpop.f32.mrb[0].mxu0
        %v5799 = vpop.f32.mrb[0].mxu0
        %5800 = vdwg.mxu0
        %5801 = vmatprep.subr.bf16.mxu0 %v4001
        %5802 = vmatpush1.bf16.msra.mxu0 %v4000
        %5803 = vmatprep.subr.bf16.mxu0 %v4009
        %5804 = vmatpush1.bf16.msra.mxu0 %v4008
        %5805 = vmatprep.subr.bf16.mxu0 %v4017
        %5806 = vmatpush1.bf16.msra.mxu0 %v4016
        %5807 = vmatprep.subr.bf16.mxu0 %v4025
        %5808 = vmatpush1.bf16.msra.mxu0 %v4024
        %5809 = vmatprep.subr.bf16.mxu0 %v4033
        %5810 = vmatpush1.bf16.msra.mxu0 %v4032
        %5811 = vmatprep.subr.bf16.mxu0 %v4041
        %5812 = vmatpush1.bf16.msra.mxu0 %v4040
        %5813 = vmatprep.subr.bf16.mxu0 %v4049
        %5814 = vmatpush1.bf16.msra.mxu0 %v4048
        %5815 = vmatprep.subr.bf16.mxu0 %v4057
        %5816 = vmatpush1.bf16.msra.mxu0 %v4056
        %5817 = vmatprep.subr.bf16.mxu0 %v4065
        %5818 = vmatpush1.bf16.msra.mxu0 %v4064
        %5819 = vmatprep.subr.bf16.mxu0 %v4073
        %5820 = vmatpush1.bf16.msra.mxu0 %v4072
        %5821 = vmatprep.subr.bf16.mxu0 %v4081
        %5822 = vmatpush1.bf16.msra.mxu0 %v4080
        %5823 = vmatprep.subr.bf16.mxu0 %v4089
        %5824 = vmatpush1.bf16.msra.mxu0 %v4088
        %5825 = vmatprep.subr.bf16.mxu0 %v4097
        %5826 = vmatpush1.bf16.msra.mxu0 %v4096
        %5827 = vmatprep.subr.bf16.mxu0 %v4105
        %5828 = vmatpush1.bf16.msra.mxu0 %v4104
        %5829 = vmatprep.subr.bf16.mxu0 %v4113
        %5830 = vmatpush1.bf16.msra.mxu0 %v4112
        %5831 = vmatprep.subr.bf16.mxu0 %v4121
        %5832 = vmatpush1.bf16.msra.mxu0 %v4120
        %5833 = vmatprep.mubr.bf16.mxu0 %v5677
        %5834 = vmatmul.mubr.bf16.gmra.mrb[0].mxu0 %v5676
        %v5835 = vpop.f32.mrb[0].mxu0
        %v5836 = vadd.f32 0.0, %v5835
        %v5837 = vpop.f32.mrb[0].mxu0
        %v5838 = vadd.f32 0.0, %v5837
        %v5839 = vpop.f32.mrb[0].mxu0
        %v5840 = vpop.f32.mrb[0].mxu0
        %5841 = vdwg.mxu0
        %v5842 = vadd.f32 %v5668, %v5713
        %v5843 = vadd.f32 %v5669, %v5715
        %v5844 = vadd.f32 %v5670, %v5754
        %v5845 = vadd.f32 %v5671, %v5756
        %v5846 = vadd.f32 %v5672, %v5795
        %v5847 = vadd.f32 %v5673, %v5797
        %v5848 = vadd.f32 %v5674, %v5836
        %v5849 = vadd.f32 %v5675, %v5838
        %v5850 = vxor.u32 %v5842, 2147483648
        %v5851 = vxor.u32 %v5843, 2147483648
        %v5852 = vmul.f32 %v5850, 1.442695
        %v5853 = vpow.pop %v5852
        %v5854 = vmul.f32 %v5851, 1.442695
        %v5855 = vpow.pop %v5854
        %v5856 = vadd.f32 %v5853, 1.0
        %v5857 = vadd.f32 %v5855, 1.0
        %v5858 = vrcp.pop %v5856
        %v5859 = vmul.f32 1.0, %v5858
        %v5860 = vrcp.pop %v5857
        %v5861 = vmul.f32 1.0, %v5860
        %v5862 = vxor.u32 %v5844, 2147483648
        %v5863 = vxor.u32 %v5845, 2147483648
        %v5864 = vmul.f32 %v5862, 1.442695
        %v5865 = vpow.pop %v5864
        %v5866 = vmul.f32 %v5863, 1.442695
        %v5867 = vpow.pop %v5866
        %v5868 = vadd.f32 %v5865, 1.0
        %v5869 = vadd.f32 %v5867, 1.0
        %v5870 = vrcp.pop %v5868
        %v5871 = vmul.f32 1.0, %v5870
        %v5872 = vrcp.pop %v5869
        %v5873 = vmul.f32 1.0, %v5872
        %v5874 = vtanh.pop %v5846
        %v5875 = vtanh.pop %v5847
        %v5876 = vxor.u32 %v5848, 2147483648
        %v5877 = vxor.u32 %v5849, 2147483648
        %v5878 = vmul.f32 %v5876, 1.442695
        %v5879 = vpow.pop %v5878
        %v5880 = vmul.f32 %v5877, 1.442695
        %v5881 = vpow.pop %v5880
        %v5882 = vadd.f32 %v5879, 1.0
        %v5883 = vadd.f32 %v5881, 1.0
        %v5884 = vrcp.pop %v5882
        %v5885 = vmul.f32 1.0, %v5884
        %v5886 = vrcp.pop %v5883
        %v5887 = vmul.f32 1.0, %v5886
        %v5888 = vmul.f32 %v5871, %v5654
        %v5889 = vmul.f32 %v5873, %v5655
        %v5890 = vmul.f32 %v5859, %v5874
        %v5891 = vmul.f32 %v5861, %v5875
        %v5892 = vadd.f32 %v5888, %v5890
        %v5893 = vadd.f32 %v5889, %v5891
        %v5894 = vtanh.pop %v5892
        %v5895 = vtanh.pop %v5893
        %v5896 = vmul.f32 %v5885, %v5894
        %v5897 = vmul.f32 %v5887, %v5895
        %s5898 = smul.u32 6, 2
        %s5899 = smul.addr %s5898, 8
        %s5900 = scalar_lea.vmem [#allocation3], %s5899
        %5901 = vst [vmem:[%s5900] sm:$0xff] %v5896
        %5902 = vst [vmem:[%s5900 + $0x8] sm:$0xff] %v5897
        %s5903 = smul.u32 7, 8
        %s5904 = smul.addr %s5903, 8
        %s5905 = scalar_lea.vmem [#allocation2], %s5904
        %v5906 = vld [vmem:[%s5905] sm:$0xff]
        %v5907 = vld [vmem:[%s5905 + $0x8] sm:$0xff]
        %v5908 = vld [vmem:[%s5905 + $0x10] sm:$0xff]
        %v5909 = vld [vmem:[%s5905 + $0x18] sm:$0xff]
        %v5910 = vld [vmem:[%s5905 + $0x20] sm:$0xff]
        %v5911 = vld [vmem:[%s5905 + $0x28] sm:$0xff]
        %v5912 = vld [vmem:[%s5905 + $0x30] sm:$0xff]
        %v5913 = vld [vmem:[%s5905 + $0x38] sm:$0xff]
        %v5914 = vpack.c.bf16 %v5896, %v5896
        %v5915 = vpack.c.bf16 %v5897, %v5897
        %5916 = vmatprep.subr.bf16.mxu0 %v3995
        %5917 = vmatpush1.bf16.msra.mxu0 %v3994
        %5918 = vmatprep.subr.bf16.mxu0 %v4003
        %5919 = vmatpush1.bf16.msra.mxu0 %v4002
        %5920 = vmatprep.subr.bf16.mxu0 %v4011
        %5921 = vmatpush1.bf16.msra.mxu0 %v4010
        %5922 = vmatprep.subr.bf16.mxu0 %v4019
        %5923 = vmatpush1.bf16.msra.mxu0 %v4018
        %5924 = vmatprep.subr.bf16.mxu0 %v4027
        %5925 = vmatpush1.bf16.msra.mxu0 %v4026
        %5926 = vmatprep.subr.bf16.mxu0 %v4035
        %5927 = vmatpush1.bf16.msra.mxu0 %v4034
        %5928 = vmatprep.subr.bf16.mxu0 %v4043
        %5929 = vmatpush1.bf16.msra.mxu0 %v4042
        %5930 = vmatprep.subr.bf16.mxu0 %v4051
        %5931 = vmatpush1.bf16.msra.mxu0 %v4050
        %5932 = vmatprep.subr.bf16.mxu0 %v4059
        %5933 = vmatpush1.bf16.msra.mxu0 %v4058
        %5934 = vmatprep.subr.bf16.mxu0 %v4067
        %5935 = vmatpush1.bf16.msra.mxu0 %v4066
        %5936 = vmatprep.subr.bf16.mxu0 %v4075
        %5937 = vmatpush1.bf16.msra.mxu0 %v4074
        %5938 = vmatprep.subr.bf16.mxu0 %v4083
        %5939 = vmatpush1.bf16.msra.mxu0 %v4082
        %5940 = vmatprep.subr.bf16.mxu0 %v4091
        %5941 = vmatpush1.bf16.msra.mxu0 %v4090
        %5942 = vmatprep.subr.bf16.mxu0 %v4099
        %5943 = vmatpush1.bf16.msra.mxu0 %v4098
        %5944 = vmatprep.subr.bf16.mxu0 %v4107
        %5945 = vmatpush1.bf16.msra.mxu0 %v4106
        %5946 = vmatprep.subr.bf16.mxu0 %v4115
        %5947 = vmatpush1.bf16.msra.mxu0 %v4114
        %5948 = vmatprep.mubr.bf16.mxu0 %v5915
        %5949 = vmatmul.mubr.bf16.gmra.mrb[0].mxu0 %v5914
        %v5950 = vpop.f32.mrb[0].mxu0
        %v5951 = vadd.f32 0.0, %v5950
        %v5952 = vpop.f32.mrb[0].mxu0
        %v5953 = vadd.f32 0.0, %v5952
        %v5954 = vpop.f32.mrb[0].mxu0
        %v5955 = vpop.f32.mrb[0].mxu0
        %5956 = vdwg.mxu0
        %5957 = vmatprep.subr.bf16.mxu0 %v3997
        %5958 = vmatpush1.bf16.msra.mxu0 %v3996
        %5959 = vmatprep.subr.bf16.mxu0 %v4005
        %5960 = vmatpush1.bf16.msra.mxu0 %v4004
        %5961 = vmatprep.subr.bf16.mxu0 %v4013
        %5962 = vmatpush1.bf16.msra.mxu0 %v4012
        %5963 = vmatprep.subr.bf16.mxu0 %v4021
        %5964 = vmatpush1.bf16.msra.mxu0 %v4020
        %5965 = vmatprep.subr.bf16.mxu0 %v4029
        %5966 = vmatpush1.bf16.msra.mxu0 %v4028
        %5967 = vmatprep.subr.bf16.mxu0 %v4037
        %5968 = vmatpush1.bf16.msra.mxu0 %v4036
        %5969 = vmatprep.subr.bf16.mxu0 %v4045
        %5970 = vmatpush1.bf16.msra.mxu0 %v4044
        %5971 = vmatprep.subr.bf16.mxu0 %v4053
        %5972 = vmatpush1.bf16.msra.mxu0 %v4052
        %5973 = vmatprep.subr.bf16.mxu0 %v4061
        %5974 = vmatpush1.bf16.msra.mxu0 %v4060
        %5975 = vmatprep.subr.bf16.mxu0 %v4069
        %5976 = vmatpush1.bf16.msra.mxu0 %v4068
        %5977 = vmatprep.subr.bf16.mxu0 %v4077
        %5978 = vmatpush1.bf16.msra.mxu0 %v4076
        %5979 = vmatprep.subr.bf16.mxu0 %v4085
        %5980 = vmatpush1.bf16.msra.mxu0 %v4084
        %5981 = vmatprep.subr.bf16.mxu0 %v4093
        %5982 = vmatpush1.bf16.msra.mxu0 %v4092
        %5983 = vmatprep.subr.bf16.mxu0 %v4101
        %5984 = vmatpush1.bf16.msra.mxu0 %v4100
        %5985 = vmatprep.subr.bf16.mxu0 %v4109
        %5986 = vmatpush1.bf16.msra.mxu0 %v4108
        %5987 = vmatprep.subr.bf16.mxu0 %v4117
        %5988 = vmatpush1.bf16.msra.mxu0 %v4116
        %5989 = vmatprep.mubr.bf16.mxu0 %v5915
        %5990 = vmatmul.mubr.bf16.gmra.mrb[0].mxu0 %v5914
        %v5991 = vpop.f32.mrb[0].mxu0
        %v5992 = vadd.f32 0.0, %v5991
        %v5993 = vpop.f32.mrb[0].mxu0
        %v5994 = vadd.f32 0.0, %v5993
        %v5995 = vpop.f32.mrb[0].mxu0
        %v5996 = vpop.f32.mrb[0].mxu0
        %5997 = vdwg.mxu0
        %5998 = vmatprep.subr.bf16.mxu0 %v3999
        %5999 = vmatpush1.bf16.msra.mxu0 %v3998
        %6000 = vmatprep.subr.bf16.mxu0 %v4007
        %6001 = vmatpush1.bf16.msra.mxu0 %v4006
        %6002 = vmatprep.subr.bf16.mxu0 %v4015
        %6003 = vmatpush1.bf16.msra.mxu0 %v4014
        %6004 = vmatprep.subr.bf16.mxu0 %v4023
        %6005 = vmatpush1.bf16.msra.mxu0 %v4022
        %6006 = vmatprep.subr.bf16.mxu0 %v4031
        %6007 = vmatpush1.bf16.msra.mxu0 %v4030
        %6008 = vmatprep.subr.bf16.mxu0 %v4039
        %6009 = vmatpush1.bf16.msra.mxu0 %v4038
        %6010 = vmatprep.subr.bf16.mxu0 %v4047
        %6011 = vmatpush1.bf16.msra.mxu0 %v4046
        %6012 = vmatprep.subr.bf16.mxu0 %v4055
        %6013 = vmatpush1.bf16.msra.mxu0 %v4054
        %6014 = vmatprep.subr.bf16.mxu0 %v4063
        %6015 = vmatpush1.bf16.msra.mxu0 %v4062
        %6016 = vmatprep.subr.bf16.mxu0 %v4071
        %6017 = vmatpush1.bf16.msra.mxu0 %v4070
        %6018 = vmatprep.subr.bf16.mxu0 %v4079
        %6019 = vmatpush1.bf16.msra.mxu0 %v4078
        %6020 = vmatprep.subr.bf16.mxu0 %v4087
        %6021 = vmatpush1.bf16.msra.mxu0 %v4086
        %6022 = vmatprep.subr.bf16.mxu0 %v4095
        %6023 = vmatpush1.bf16.msra.mxu0 %v4094
        %6024 = vmatprep.subr.bf16.mxu0 %v4103
        %6025 = vmatpush1.bf16.msra.mxu0 %v4102
        %6026 = vmatprep.subr.bf16.mxu0 %v4111
        %6027 = vmatpush1.bf16.msra.mxu0 %v4110
        %6028 = vmatprep.subr.bf16.mxu0 %v4119
        %6029 = vmatpush1.bf16.msra.mxu0 %v4118
        %6030 = vmatprep.mubr.bf16.mxu0 %v5915
        %6031 = vmatmul.mubr.bf16.gmra.mrb[0].mxu0 %v5914
        %v6032 = vpop.f32.mrb[0].mxu0
        %v6033 = vadd.f32 0.0, %v6032
        %v6034 = vpop.f32.mrb[0].mxu0
        %v6035 = vadd.f32 0.0, %v6034
        %v6036 = vpop.f32.mrb[0].mxu0
        %v6037 = vpop.f32.mrb[0].mxu0
        %6038 = vdwg.mxu0
        %6039 = vmatprep.subr.bf16.mxu0 %v4001
        %6040 = vmatpush1.bf16.msra.mxu0 %v4000
        %6041 = vmatprep.subr.bf16.mxu0 %v4009
        %6042 = vmatpush1.bf16.msra.mxu0 %v4008
        %6043 = vmatprep.subr.bf16.mxu0 %v4017
        %6044 = vmatpush1.bf16.msra.mxu0 %v4016
        %6045 = vmatprep.subr.bf16.mxu0 %v4025
        %6046 = vmatpush1.bf16.msra.mxu0 %v4024
        %6047 = vmatprep.subr.bf16.mxu0 %v4033
        %6048 = vmatpush1.bf16.msra.mxu0 %v4032
        %6049 = vmatprep.subr.bf16.mxu0 %v4041
        %6050 = vmatpush1.bf16.msra.mxu0 %v4040
        %6051 = vmatprep.subr.bf16.mxu0 %v4049
        %6052 = vmatpush1.bf16.msra.mxu0 %v4048
        %6053 = vmatprep.subr.bf16.mxu0 %v4057
        %6054 = vmatpush1.bf16.msra.mxu0 %v4056
        %6055 = vmatprep.subr.bf16.mxu0 %v4065
        %6056 = vmatpush1.bf16.msra.mxu0 %v4064
        %6057 = vmatprep.subr.bf16.mxu0 %v4073
        %6058 = vmatpush1.bf16.msra.mxu0 %v4072
        %6059 = vmatprep.subr.bf16.mxu0 %v4081
        %6060 = vmatpush1.bf16.msra.mxu0 %v4080
        %6061 = vmatprep.subr.bf16.mxu0 %v4089
        %6062 = vmatpush1.bf16.msra.mxu0 %v4088
        %6063 = vmatprep.subr.bf16.mxu0 %v4097
        %6064 = vmatpush1.bf16.msra.mxu0 %v4096
        %6065 = vmatprep.subr.bf16.mxu0 %v4105
        %6066 = vmatpush1.bf16.msra.mxu0 %v4104
        %6067 = vmatprep.subr.bf16.mxu0 %v4113
        %6068 = vmatpush1.bf16.msra.mxu0 %v4112
        %6069 = vmatprep.subr.bf16.mxu0 %v4121
        %6070 = vmatpush1.bf16.msra.mxu0 %v4120
        %6071 = vmatprep.mubr.bf16.mxu0 %v5915
        %6072 = vmatmul.mubr.bf16.gmra.mrb[0].mxu0 %v5914
        %v6073 = vpop.f32.mrb[0].mxu0
        %v6074 = vadd.f32 0.0, %v6073
        %v6075 = vpop.f32.mrb[0].mxu0
        %v6076 = vadd.f32 0.0, %v6075
        %v6077 = vpop.f32.mrb[0].mxu0
        %v6078 = vpop.f32.mrb[0].mxu0
        %6079 = vdwg.mxu0
        %v6080 = vadd.f32 %v5906, %v5951
        %v6081 = vadd.f32 %v5907, %v5953
        %v6082 = vadd.f32 %v5908, %v5992
        %v6083 = vadd.f32 %v5909, %v5994
        %v6084 = vadd.f32 %v5910, %v6033
        %v6085 = vadd.f32 %v5911, %v6035
        %v6086 = vadd.f32 %v5912, %v6074
        %v6087 = vadd.f32 %v5913, %v6076
        %v6088 = vxor.u32 %v6080, 2147483648
        %v6089 = vxor.u32 %v6081, 2147483648
        %v6090 = vmul.f32 %v6088, 1.442695
        %v6091 = vpow.pop %v6090
        %v6092 = vmul.f32 %v6089, 1.442695
        %v6093 = vpow.pop %v6092
        %v6094 = vadd.f32 %v6091, 1.0
        %v6095 = vadd.f32 %v6093, 1.0
        %v6096 = vrcp.pop %v6094
        %v6097 = vmul.f32 1.0, %v6096
        %v6098 = vrcp.pop %v6095
        %v6099 = vmul.f32 1.0, %v6098
        %v6100 = vxor.u32 %v6082, 2147483648
        %v6101 = vxor.u32 %v6083, 2147483648
        %v6102 = vmul.f32 %v6100, 1.442695
        %v6103 = vpow.pop %v6102
        %v6104 = vmul.f32 %v6101, 1.442695
        %v6105 = vpow.pop %v6104
        %v6106 = vadd.f32 %v6103, 1.0
        %v6107 = vadd.f32 %v6105, 1.0
        %v6108 = vrcp.pop %v6106
        %v6109 = vmul.f32 1.0, %v6108
        %v6110 = vrcp.pop %v6107
        %v6111 = vmul.f32 1.0, %v6110
        %v6112 = vtanh.pop %v6084
        %v6113 = vtanh.pop %v6085
        %v6114 = vxor.u32 %v6086, 2147483648
        %v6115 = vxor.u32 %v6087, 2147483648
        %v6116 = vmul.f32 %v6114, 1.442695
        %v6117 = vpow.pop %v6116
        %v6118 = vmul.f32 %v6115, 1.442695
        %v6119 = vpow.pop %v6118
        %v6120 = vadd.f32 %v6117, 1.0
        %v6121 = vadd.f32 %v6119, 1.0
        %v6122 = vrcp.pop %v6120
        %v6123 = vmul.f32 1.0, %v6122
        %v6124 = vrcp.pop %v6121
        %v6125 = vmul.f32 1.0, %v6124
        %v6126 = vmul.f32 %v6109, %v5892
        %v6127 = vmul.f32 %v6111, %v5893
        %v6128 = vmul.f32 %v6097, %v6112
        %v6129 = vmul.f32 %v6099, %v6113
        %v6130 = vadd.f32 %v6126, %v6128
        %v6131 = vadd.f32 %v6127, %v6129
        %v6132 = vtanh.pop %v6130
        %v6133 = vtanh.pop %v6131
        %v6134 = vmul.f32 %v6123, %v6132
        %v6135 = vmul.f32 %v6125, %v6133
        %s6136 = smul.u32 7, 2
        %s6137 = smul.addr %s6136, 8
        %s6138 = scalar_lea.vmem [#allocation3], %s6137
        %6139 = vst [vmem:[%s6138] sm:$0xff] %v6134
        %6140 = vst [vmem:[%s6138 + $0x8] sm:$0xff] %v6135
        %6141 = vst [vmem:[%s628] sm:$0xff] %v6134
        %6142 = vst [vmem:[%s628 + $0x8] sm:$0xff] %v6135
        %6143 = vst [vmem:[%s635] sm:$0xff] %v6130
        %6144 = vst [vmem:[%s635 + $0x8] sm:$0xff] %v6131
        %v6145 = vld [vmem:[#allocation3] sm:$0xff]
        %v6146 = vld [vmem:[#allocation3 + $0x8] sm:$0xff]
        %v6147 = vld [vmem:[#allocation3 + $0x10] sm:$0xff]
        %v6148 = vld [vmem:[#allocation3 + $0x18] sm:$0xff]
        %v6149 = vld [vmem:[#allocation3 + $0x20] sm:$0xff]
        %v6150 = vld [vmem:[#allocation3 + $0x28] sm:$0xff]
        %v6151 = vld [vmem:[#allocation3 + $0x30] sm:$0xff]
        %v6152 = vld [vmem:[#allocation3 + $0x38] sm:$0xff]
        %v6153 = vld [vmem:[#allocation3 + $0x40] sm:$0xff]
        %v6154 = vld [vmem:[#allocation3 + $0x48] sm:$0xff]
        %v6155 = vld [vmem:[#allocation3 + $0x50] sm:$0xff]
        %v6156 = vld [vmem:[#allocation3 + $0x58] sm:$0xff]
        %v6157 = vld [vmem:[#allocation3 + $0x60] sm:$0xff]
        %v6158 = vld [vmem:[#allocation3 + $0x68] sm:$0xff]
        %v6159 = vld [vmem:[#allocation3 + $0x70] sm:$0xff]
        %v6160 = vld [vmem:[#allocation3 + $0x78] sm:$0xff]
        %v6161 = vpack.c.bf16 %v6147, %v6145
        %v6162 = vpack.c.bf16 %v6148, %v6146
        %v6163 = vpack.c.bf16 %v6151, %v6149
        %v6164 = vpack.c.bf16 %v6152, %v6150
        %v6165 = vpack.c.bf16 %v6155, %v6153
        %v6166 = vpack.c.bf16 %v6156, %v6154
        %v6167 = vpack.c.bf16 %v6159, %v6157
        %v6168 = vpack.c.bf16 %v6160, %v6158
        %v6169 = vld [vmem:[#allocation10] sm:$0xff]
        %v6170 = vld [vmem:[#allocation10 + $0x8] sm:$0xff]
        %v6171 = vld [vmem:[#allocation10 + $0x10] sm:$0xff]
        %v6172 = vld [vmem:[#allocation10 + $0x18] sm:$0xff]
        %v6173 = vld [vmem:[#allocation10 + $0x20] sm:$0xff]
        %v6174 = vld [vmem:[#allocation10 + $0x28] sm:$0xff]
        %v6175 = vld [vmem:[#allocation10 + $0x30] sm:$0xff]
        %v6176 = vld [vmem:[#allocation10 + $0x38] sm:$0xff]
        %v6177 = vld [vmem:[#allocation10 + $0x40] sm:$0xff]
        %v6178 = vld [vmem:[#allocation10 + $0x48] sm:$0xff]
        %v6179 = vld [vmem:[#allocation10 + $0x50] sm:$0xff]
        %v6180 = vld [vmem:[#allocation10 + $0x58] sm:$0xff]
        %v6181 = vld [vmem:[#allocation10 + $0x60] sm:$0xff]
        %v6182 = vld [vmem:[#allocation10 + $0x68] sm:$0xff]
        %v6183 = vld [vmem:[#allocation10 + $0x70] sm:$0xff]
        %v6184 = vld [vmem:[#allocation10 + $0x78] sm:$0xff]
        %v6185 = vld [vmem:[#allocation10 + $0x80] sm:$0xff]
        %v6186 = vld [vmem:[#allocation10 + $0x88] sm:$0xff]
        %v6187 = vld [vmem:[#allocation10 + $0x90] sm:$0xff]
        %v6188 = vld [vmem:[#allocation10 + $0x98] sm:$0xff]
        %v6189 = vld [vmem:[#allocation10 + $0xa0] sm:$0xff]
        %v6190 = vld [vmem:[#allocation10 + $0xa8] sm:$0xff]
        %v6191 = vld [vmem:[#allocation10 + $0xb0] sm:$0xff]
        %v6192 = vld [vmem:[#allocation10 + $0xb8] sm:$0xff]
        %v6193 = vld [vmem:[#allocation10 + $0xc0] sm:$0xff]
        %v6194 = vld [vmem:[#allocation10 + $0xc8] sm:$0xff]
        %v6195 = vld [vmem:[#allocation10 + $0xd0] sm:$0xff]
        %v6196 = vld [vmem:[#allocation10 + $0xd8] sm:$0xff]
        %v6197 = vld [vmem:[#allocation10 + $0xe0] sm:$0xff]
        %v6198 = vld [vmem:[#allocation10 + $0xe8] sm:$0xff]
        %v6199 = vld [vmem:[#allocation10 + $0xf0] sm:$0xff]
        %v6200 = vld [vmem:[#allocation10 + $0xf8] sm:$0xff]
        %v6201 = vld [vmem:[#allocation10 + $0x100] sm:$0xff]
        %v6202 = vld [vmem:[#allocation10 + $0x108] sm:$0xff]
        %v6203 = vld [vmem:[#allocation10 + $0x110] sm:$0xff]
        %v6204 = vld [vmem:[#allocation10 + $0x118] sm:$0xff]
        %v6205 = vld [vmem:[#allocation10 + $0x120] sm:$0xff]
        %v6206 = vld [vmem:[#allocation10 + $0x128] sm:$0xff]
        %v6207 = vld [vmem:[#allocation10 + $0x130] sm:$0xff]
        %v6208 = vld [vmem:[#allocation10 + $0x138] sm:$0xff]
        %v6209 = vld [vmem:[#allocation10 + $0x140] sm:$0xff]
        %v6210 = vld [vmem:[#allocation10 + $0x148] sm:$0xff]
        %v6211 = vld [vmem:[#allocation10 + $0x150] sm:$0xff]
        %v6212 = vld [vmem:[#allocation10 + $0x158] sm:$0xff]
        %v6213 = vld [vmem:[#allocation10 + $0x160] sm:$0xff]
        %v6214 = vld [vmem:[#allocation10 + $0x168] sm:$0xff]
        %v6215 = vld [vmem:[#allocation10 + $0x170] sm:$0xff]
        %v6216 = vld [vmem:[#allocation10 + $0x178] sm:$0xff]
        %v6217 = vld [vmem:[#allocation10 + $0x180] sm:$0xff]
        %v6218 = vld [vmem:[#allocation10 + $0x188] sm:$0xff]
        %v6219 = vld [vmem:[#allocation10 + $0x190] sm:$0xff]
        %v6220 = vld [vmem:[#allocation10 + $0x198] sm:$0xff]
        %v6221 = vld [vmem:[#allocation10 + $0x1a0] sm:$0xff]
        %v6222 = vld [vmem:[#allocation10 + $0x1a8] sm:$0xff]
        %v6223 = vld [vmem:[#allocation10 + $0x1b0] sm:$0xff]
        %v6224 = vld [vmem:[#allocation10 + $0x1b8] sm:$0xff]
        %v6225 = vld [vmem:[#allocation10 + $0x1c0] sm:$0xff]
        %v6226 = vld [vmem:[#allocation10 + $0x1c8] sm:$0xff]
        %v6227 = vld [vmem:[#allocation10 + $0x1d0] sm:$0xff]
        %v6228 = vld [vmem:[#allocation10 + $0x1d8] sm:$0xff]
        %v6229 = vld [vmem:[#allocation10 + $0x1e0] sm:$0xff]
        %v6230 = vld [vmem:[#allocation10 + $0x1e8] sm:$0xff]
        %v6231 = vld [vmem:[#allocation10 + $0x1f0] sm:$0xff]
        %v6232 = vld [vmem:[#allocation10 + $0x1f8] sm:$0xff]
        %v6233 = vld [vmem:[%s11] sm:$0xf]
        %v6235 = vlaneseq
        %v6236 = vshrl.u32 %v6235, 7
        %v6237 = vsub.s32 0, %v6236
        %v6238 = vrot.slane %v6233, %v6237
        %v6239 = vlaneseq
        %v6240 = vshrl.u32 %v6239, 7
        %v6241 = vsub.s32 1, %v6240
        %v6242 = vrot.slane %v6233, %v6241
        %v6243 = vlaneseq
        %v6244 = vshrl.u32 %v6243, 7
        %v6245 = vsub.s32 2, %v6244
        %v6246 = vrot.slane %v6233, %v6245
        %v6247 = vlaneseq
        %v6248 = vshrl.u32 %v6247, 7
        %v6249 = vsub.s32 3, %v6248
        %v6250 = vrot.slane %v6233, %v6249
        %v6319 = vunpack.c.l.b16 %v6169
        %v6320 = vunpack.c.h.b16 %v6169
        %v6321 = vunpack.c.l.b16 %v6170
        %v6322 = vunpack.c.h.b16 %v6170
        %v6323 = vunpack.c.l.b16 %v6171
        %v6324 = vunpack.c.h.b16 %v6171
        %v6325 = vunpack.c.l.b16 %v6172
        %v6326 = vunpack.c.h.b16 %v6172
        %v6327 = vunpack.c.l.b16 %v6173
        %v6328 = vunpack.c.h.b16 %v6173
        %v6329 = vunpack.c.l.b16 %v6174
        %v6330 = vunpack.c.h.b16 %v6174
        %v6331 = vunpack.c.l.b16 %v6175
        %v6332 = vunpack.c.h.b16 %v6175
        %v6333 = vunpack.c.l.b16 %v6176
        %v6334 = vunpack.c.h.b16 %v6176
        %v6335 = vunpack.c.l.b16 %v6177
        %v6336 = vunpack.c.h.b16 %v6177
        %v6337 = vunpack.c.l.b16 %v6178
        %v6338 = vunpack.c.h.b16 %v6178
        %v6339 = vunpack.c.l.b16 %v6179
        %v6340 = vunpack.c.h.b16 %v6179
        %v6341 = vunpack.c.l.b16 %v6180
        %v6342 = vunpack.c.h.b16 %v6180
        %v6343 = vunpack.c.l.b16 %v6181
        %v6344 = vunpack.c.h.b16 %v6181
        %v6345 = vunpack.c.l.b16 %v6182
        %v6346 = vunpack.c.h.b16 %v6182
        %v6347 = vunpack.c.l.b16 %v6183
        %v6348 = vunpack.c.h.b16 %v6183
        %v6349 = vunpack.c.l.b16 %v6184
        %v6350 = vunpack.c.h.b16 %v6184
        %v6351 = vunpack.c.l.b16 %v6185
        %v6352 = vunpack.c.h.b16 %v6185
        %v6353 = vunpack.c.l.b16 %v6186
        %v6354 = vunpack.c.h.b16 %v6186
        %v6355 = vunpack.c.l.b16 %v6187
        %v6356 = vunpack.c.h.b16 %v6187
        %v6357 = vunpack.c.l.b16 %v6188
        %v6358 = vunpack.c.h.b16 %v6188
        %v6359 = vunpack.c.l.b16 %v6189
        %v6360 = vunpack.c.h.b16 %v6189
        %v6361 = vunpack.c.l.b16 %v6190
        %v6362 = vunpack.c.h.b16 %v6190
        %v6363 = vunpack.c.l.b16 %v6191
        %v6364 = vunpack.c.h.b16 %v6191
        %v6365 = vunpack.c.l.b16 %v6192
        %v6366 = vunpack.c.h.b16 %v6192
        %v6367 = vunpack.c.l.b16 %v6193
        %v6368 = vunpack.c.h.b16 %v6193
        %v6369 = vunpack.c.l.b16 %v6194
        %v6370 = vunpack.c.h.b16 %v6194
        %v6371 = vunpack.c.l.b16 %v6195
        %v6372 = vunpack.c.h.b16 %v6195
        %v6373 = vunpack.c.l.b16 %v6196
        %v6374 = vunpack.c.h.b16 %v6196
        %v6375 = vunpack.c.l.b16 %v6197
        %v6376 = vunpack.c.h.b16 %v6197
        %v6377 = vunpack.c.l.b16 %v6198
        %v6378 = vunpack.c.h.b16 %v6198
        %v6379 = vunpack.c.l.b16 %v6199
        %v6380 = vunpack.c.h.b16 %v6199
        %v6381 = vunpack.c.l.b16 %v6200
        %v6382 = vunpack.c.h.b16 %v6200
        %v6383 = vunpack.c.l.b16 %v6201
        %v6384 = vunpack.c.h.b16 %v6201
        %v6385 = vunpack.c.l.b16 %v6202
        %v6386 = vunpack.c.h.b16 %v6202
        %v6387 = vunpack.c.l.b16 %v6203
        %v6388 = vunpack.c.h.b16 %v6203
        %v6389 = vunpack.c.l.b16 %v6204
        %v6390 = vunpack.c.h.b16 %v6204
        %v6391 = vunpack.c.l.b16 %v6205
        %v6392 = vunpack.c.h.b16 %v6205
        %v6393 = vunpack.c.l.b16 %v6206
        %v6394 = vunpack.c.h.b16 %v6206
        %v6395 = vunpack.c.l.b16 %v6207
        %v6396 = vunpack.c.h.b16 %v6207
        %v6397 = vunpack.c.l.b16 %v6208
        %v6398 = vunpack.c.h.b16 %v6208
        %v6399 = vunpack.c.l.b16 %v6209
        %v6400 = vunpack.c.h.b16 %v6209
        %v6401 = vunpack.c.l.b16 %v6210
        %v6402 = vunpack.c.h.b16 %v6210
        %v6403 = vunpack.c.l.b16 %v6211
        %v6404 = vunpack.c.h.b16 %v6211
        %v6405 = vunpack.c.l.b16 %v6212
        %v6406 = vunpack.c.h.b16 %v6212
        %v6407 = vunpack.c.l.b16 %v6213
        %v6408 = vunpack.c.h.b16 %v6213
        %v6409 = vunpack.c.l.b16 %v6214
        %v6410 = vunpack.c.h.b16 %v6214
        %v6411 = vunpack.c.l.b16 %v6215
        %v6412 = vunpack.c.h.b16 %v6215
        %v6413 = vunpack.c.l.b16 %v6216
        %v6414 = vunpack.c.h.b16 %v6216
        %v6415 = vunpack.c.l.b16 %v6217
        %v6416 = vunpack.c.h.b16 %v6217
        %v6417 = vunpack.c.l.b16 %v6218
        %v6418 = vunpack.c.h.b16 %v6218
        %v6419 = vunpack.c.l.b16 %v6219
        %v6420 = vunpack.c.h.b16 %v6219
        %v6421 = vunpack.c.l.b16 %v6220
        %v6422 = vunpack.c.h.b16 %v6220
        %v6423 = vunpack.c.l.b16 %v6221
        %v6424 = vunpack.c.h.b16 %v6221
        %v6425 = vunpack.c.l.b16 %v6222
        %v6426 = vunpack.c.h.b16 %v6222
        %v6427 = vunpack.c.l.b16 %v6223
        %v6428 = vunpack.c.h.b16 %v6223
        %v6429 = vunpack.c.l.b16 %v6224
        %v6430 = vunpack.c.h.b16 %v6224
        %v6431 = vunpack.c.l.b16 %v6225
        %v6432 = vunpack.c.h.b16 %v6225
        %v6433 = vunpack.c.l.b16 %v6226
        %v6434 = vunpack.c.h.b16 %v6226
        %v6435 = vunpack.c.l.b16 %v6227
        %v6436 = vunpack.c.h.b16 %v6227
        %v6437 = vunpack.c.l.b16 %v6228
        %v6438 = vunpack.c.h.b16 %v6228
        %v6439 = vunpack.c.l.b16 %v6229
        %v6440 = vunpack.c.h.b16 %v6229
        %v6441 = vunpack.c.l.b16 %v6230
        %v6442 = vunpack.c.h.b16 %v6230
        %v6443 = vunpack.c.l.b16 %v6231
        %v6444 = vunpack.c.h.b16 %v6231
        %v6445 = vunpack.c.l.b16 %v6232
        %v6446 = vunpack.c.h.b16 %v6232
        %v6447 = vpack.c.b16 %v6323, %v6319
        %v6448 = vpack.c.b16 %v6324, %v6320
        %v6449 = vpack.c.b16 %v6325, %v6321
        %v6450 = vpack.c.b16 %v6326, %v6322
        %v6451 = vpack.c.b16 %v6331, %v6327
        %v6452 = vpack.c.b16 %v6332, %v6328
        %v6453 = vpack.c.b16 %v6333, %v6329
        %v6454 = vpack.c.b16 %v6334, %v6330
        %v6455 = vpack.c.b16 %v6339, %v6335
        %v6456 = vpack.c.b16 %v6340, %v6336
        %v6457 = vpack.c.b16 %v6341, %v6337
        %v6458 = vpack.c.b16 %v6342, %v6338
        %v6459 = vpack.c.b16 %v6347, %v6343
        %v6460 = vpack.c.b16 %v6348, %v6344
        %v6461 = vpack.c.b16 %v6349, %v6345
        %v6462 = vpack.c.b16 %v6350, %v6346
        %v6463 = vpack.c.b16 %v6355, %v6351
        %v6464 = vpack.c.b16 %v6356, %v6352
        %v6465 = vpack.c.b16 %v6357, %v6353
        %v6466 = vpack.c.b16 %v6358, %v6354
        %v6467 = vpack.c.b16 %v6363, %v6359
        %v6468 = vpack.c.b16 %v6364, %v6360
        %v6469 = vpack.c.b16 %v6365, %v6361
        %v6470 = vpack.c.b16 %v6366, %v6362
        %v6471 = vpack.c.b16 %v6371, %v6367
        %v6472 = vpack.c.b16 %v6372, %v6368
        %v6473 = vpack.c.b16 %v6373, %v6369
        %v6474 = vpack.c.b16 %v6374, %v6370
        %v6475 = vpack.c.b16 %v6379, %v6375
        %v6476 = vpack.c.b16 %v6380, %v6376
        %v6477 = vpack.c.b16 %v6381, %v6377
        %v6478 = vpack.c.b16 %v6382, %v6378
        %v6479 = vpack.c.b16 %v6387, %v6383
        %v6480 = vpack.c.b16 %v6388, %v6384
        %v6481 = vpack.c.b16 %v6389, %v6385
        %v6482 = vpack.c.b16 %v6390, %v6386
        %v6483 = vpack.c.b16 %v6395, %v6391
        %v6484 = vpack.c.b16 %v6396, %v6392
        %v6485 = vpack.c.b16 %v6397, %v6393
        %v6486 = vpack.c.b16 %v6398, %v6394
        %v6487 = vpack.c.b16 %v6403, %v6399
        %v6488 = vpack.c.b16 %v6404, %v6400
        %v6489 = vpack.c.b16 %v6405, %v6401
        %v6490 = vpack.c.b16 %v6406, %v6402
        %v6491 = vpack.c.b16 %v6411, %v6407
        %v6492 = vpack.c.b16 %v6412, %v6408
        %v6493 = vpack.c.b16 %v6413, %v6409
        %v6494 = vpack.c.b16 %v6414, %v6410
        %v6495 = vpack.c.b16 %v6419, %v6415
        %v6496 = vpack.c.b16 %v6420, %v6416
        %v6497 = vpack.c.b16 %v6421, %v6417
        %v6498 = vpack.c.b16 %v6422, %v6418
        %v6499 = vpack.c.b16 %v6427, %v6423
        %v6500 = vpack.c.b16 %v6428, %v6424
        %v6501 = vpack.c.b16 %v6429, %v6425
        %v6502 = vpack.c.b16 %v6430, %v6426
        %v6503 = vpack.c.b16 %v6435, %v6431
        %v6504 = vpack.c.b16 %v6436, %v6432
        %v6505 = vpack.c.b16 %v6437, %v6433
        %v6506 = vpack.c.b16 %v6438, %v6434
        %v6507 = vpack.c.b16 %v6443, %v6439
        %v6508 = vpack.c.b16 %v6444, %v6440
        %v6509 = vpack.c.b16 %v6445, %v6441
        %v6510 = vpack.c.b16 %v6446, %v6442
        %6575 = vmatprep.subr.bf16.mxu0 %v6448
        %6576 = vmatpush1.bf16.msra.mxu0 %v6447
        %6577 = vmatprep.subr.bf16.mxu0 %v6452
        %6578 = vmatpush1.bf16.msra.mxu0 %v6451
        %6579 = vmatprep.subr.bf16.mxu0 %v6456
        %6580 = vmatpush1.bf16.msra.mxu0 %v6455
        %6581 = vmatprep.subr.bf16.mxu0 %v6460
        %6582 = vmatpush1.bf16.msra.mxu0 %v6459
        %6583 = vmatprep.subr.bf16.mxu0 %v6464
        %6584 = vmatpush1.bf16.msra.mxu0 %v6463
        %6585 = vmatprep.subr.bf16.mxu0 %v6468
        %6586 = vmatpush1.bf16.msra.mxu0 %v6467
        %6587 = vmatprep.subr.bf16.mxu0 %v6472
        %6588 = vmatpush1.bf16.msra.mxu0 %v6471
        %6589 = vmatprep.subr.bf16.mxu0 %v6476
        %6590 = vmatpush1.bf16.msra.mxu0 %v6475
        %6591 = vmatprep.subr.bf16.mxu0 %v6480
        %6592 = vmatpush1.bf16.msra.mxu0 %v6479
        %6593 = vmatprep.subr.bf16.mxu0 %v6484
        %6594 = vmatpush1.bf16.msra.mxu0 %v6483
        %6595 = vmatprep.subr.bf16.mxu0 %v6488
        %6596 = vmatpush1.bf16.msra.mxu0 %v6487
        %6597 = vmatprep.subr.bf16.mxu0 %v6492
        %6598 = vmatpush1.bf16.msra.mxu0 %v6491
        %6599 = vmatprep.subr.bf16.mxu0 %v6496
        %6600 = vmatpush1.bf16.msra.mxu0 %v6495
        %6601 = vmatprep.subr.bf16.mxu0 %v6500
        %6602 = vmatpush1.bf16.msra.mxu0 %v6499
        %6603 = vmatprep.subr.bf16.mxu0 %v6504
        %6604 = vmatpush1.bf16.msra.mxu0 %v6503
        %6605 = vmatprep.subr.bf16.mxu0 %v6508
        %6606 = vmatpush1.bf16.msra.mxu0 %v6507
        %6607 = vmatprep.mubr.bf16.mxu0 %v6162
        %6608 = vmatmul.mubr.bf16.gmra.mrb[0].mxu0 %v6161
        %v6609 = vpop.f32.mrb[0].mxu0
        %v6610 = vadd.f32 %v6238, %v6609
        %v6611 = vpop.f32.mrb[0].mxu0
        %v6612 = vadd.f32 %v6242, %v6611
        %v6613 = vpop.f32.mrb[0].mxu0
        %v6614 = vadd.f32 %v6238, %v6613
        %v6615 = vpop.f32.mrb[0].mxu0
        %v6616 = vadd.f32 %v6242, %v6615
        %6617 = vmatprep.mubr.bf16.mxu0 %v6164
        %6618 = vmatmul.mubr.bf16.gmra.mrb[0].mxu0 %v6163
        %v6619 = vpop.f32.mrb[0].mxu0
        %v6620 = vadd.f32 %v6238, %v6619
        %v6621 = vpop.f32.mrb[0].mxu0
        %v6622 = vadd.f32 %v6242, %v6621
        %v6623 = vpop.f32.mrb[0].mxu0
        %v6624 = vadd.f32 %v6238, %v6623
        %v6625 = vpop.f32.mrb[0].mxu0
        %v6626 = vadd.f32 %v6242, %v6625
        %6627 = vmatprep.mubr.bf16.mxu0 %v6166
        %6628 = vmatmul.mubr.bf16.gmra.mrb[0].mxu0 %v6165
        %v6629 = vpop.f32.mrb[0].mxu0
        %v6630 = vadd.f32 %v6238, %v6629
        %v6631 = vpop.f32.mrb[0].mxu0
        %v6632 = vadd.f32 %v6242, %v6631
        %v6633 = vpop.f32.mrb[0].mxu0
        %v6634 = vadd.f32 %v6238, %v6633
        %v6635 = vpop.f32.mrb[0].mxu0
        %v6636 = vadd.f32 %v6242, %v6635
        %6637 = vmatprep.mubr.bf16.mxu0 %v6168
        %6638 = vmatmul.mubr.bf16.gmra.mrb[0].mxu0 %v6167
        %v6639 = vpop.f32.mrb[0].mxu0
        %v6640 = vadd.f32 %v6238, %v6639
        %v6641 = vpop.f32.mrb[0].mxu0
        %v6642 = vadd.f32 %v6242, %v6641
        %v6643 = vpop.f32.mrb[0].mxu0
        %v6644 = vadd.f32 %v6238, %v6643
        %v6645 = vpop.f32.mrb[0].mxu0
        %v6646 = vadd.f32 %v6242, %v6645
        %6647 = vdwg.mxu0
        %6648 = vmatprep.subr.bf16.mxu0 %v6450
        %6649 = vmatpush1.bf16.msra.mxu0 %v6449
        %6650 = vmatprep.subr.bf16.mxu0 %v6454
        %6651 = vmatpush1.bf16.msra.mxu0 %v6453
        %6652 = vmatprep.subr.bf16.mxu0 %v6458
        %6653 = vmatpush1.bf16.msra.mxu0 %v6457
        %6654 = vmatprep.subr.bf16.mxu0 %v6462
        %6655 = vmatpush1.bf16.msra.mxu0 %v6461
        %6656 = vmatprep.subr.bf16.mxu0 %v6466
        %6657 = vmatpush1.bf16.msra.mxu0 %v6465
        %6658 = vmatprep.subr.bf16.mxu0 %v6470
        %6659 = vmatpush1.bf16.msra.mxu0 %v6469
        %6660 = vmatprep.subr.bf16.mxu0 %v6474
        %6661 = vmatpush1.bf16.msra.mxu0 %v6473
        %6662 = vmatprep.subr.bf16.mxu0 %v6478
        %6663 = vmatpush1.bf16.msra.mxu0 %v6477
        %6664 = vmatprep.subr.bf16.mxu0 %v6482
        %6665 = vmatpush1.bf16.msra.mxu0 %v6481
        %6666 = vmatprep.subr.bf16.mxu0 %v6486
        %6667 = vmatpush1.bf16.msra.mxu0 %v6485
        %6668 = vmatprep.subr.bf16.mxu0 %v6490
        %6669 = vmatpush1.bf16.msra.mxu0 %v6489
        %6670 = vmatprep.subr.bf16.mxu0 %v6494
        %6671 = vmatpush1.bf16.msra.mxu0 %v6493
        %6672 = vmatprep.subr.bf16.mxu0 %v6498
        %6673 = vmatpush1.bf16.msra.mxu0 %v6497
        %6674 = vmatprep.subr.bf16.mxu0 %v6502
        %6675 = vmatpush1.bf16.msra.mxu0 %v6501
        %6676 = vmatprep.subr.bf16.mxu0 %v6506
        %6677 = vmatpush1.bf16.msra.mxu0 %v6505
        %6678 = vmatprep.subr.bf16.mxu0 %v6510
        %6679 = vmatpush1.bf16.msra.mxu0 %v6509
        %6680 = vmatprep.mubr.bf16.mxu0 %v6162
        %6681 = vmatmul.mubr.bf16.gmra.mrb[0].mxu0 %v6161
        %v6682 = vpop.f32.mrb[0].mxu0
        %v6683 = vadd.f32 %v6246, %v6682
        %v6684 = vpop.f32.mrb[0].mxu0
        %v6685 = vadd.f32 %v6250, %v6684
        %v6686 = vpop.f32.mrb[0].mxu0
        %v6687 = vadd.f32 %v6246, %v6686
        %v6688 = vpop.f32.mrb[0].mxu0
        %v6689 = vadd.f32 %v6250, %v6688
        %6690 = vmatprep.mubr.bf16.mxu0 %v6164
        %6691 = vmatmul.mubr.bf16.gmra.mrb[0].mxu0 %v6163
        %v6692 = vpop.f32.mrb[0].mxu0
        %v6693 = vadd.f32 %v6246, %v6692
        %v6694 = vpop.f32.mrb[0].mxu0
        %v6695 = vadd.f32 %v6250, %v6694
        %v6696 = vpop.f32.mrb[0].mxu0
        %v6697 = vadd.f32 %v6246, %v6696
        %v6698 = vpop.f32.mrb[0].mxu0
        %v6699 = vadd.f32 %v6250, %v6698
        %6700 = vmatprep.mubr.bf16.mxu0 %v6166
        %6701 = vmatmul.mubr.bf16.gmra.mrb[0].mxu0 %v6165
        %v6702 = vpop.f32.mrb[0].mxu0
        %v6703 = vadd.f32 %v6246, %v6702
        %v6704 = vpop.f32.mrb[0].mxu0
        %v6705 = vadd.f32 %v6250, %v6704
        %v6706 = vpop.f32.mrb[0].mxu0
        %v6707 = vadd.f32 %v6246, %v6706
        %v6708 = vpop.f32.mrb[0].mxu0
        %v6709 = vadd.f32 %v6250, %v6708
        %6710 = vmatprep.mubr.bf16.mxu0 %v6168
        %6711 = vmatmul.mubr.bf16.gmra.mrb[0].mxu0 %v6167
        %v6712 = vpop.f32.mrb[0].mxu0
        %v6713 = vadd.f32 %v6246, %v6712
        %v6714 = vpop.f32.mrb[0].mxu0
        %v6715 = vadd.f32 %v6250, %v6714
        %v6716 = vpop.f32.mrb[0].mxu0
        %v6717 = vadd.f32 %v6246, %v6716
        %v6718 = vpop.f32.mrb[0].mxu0
        %v6719 = vadd.f32 %v6250, %v6718
        %6720 = vdwg.mxu0
        %v6721 = vmax.f32 %v6610, 0.0
        %v6722 = vmax.f32 %v6612, 0.0
        %v6723 = vmax.f32 %v6683, 0.0
        %v6724 = vmax.f32 %v6685, 0.0
        %v6725 = vmax.f32 %v6614, 0.0
        %v6726 = vmax.f32 %v6616, 0.0
        %v6727 = vmax.f32 %v6687, 0.0
        %v6728 = vmax.f32 %v6689, 0.0
        %v6729 = vmax.f32 %v6620, 0.0
        %v6730 = vmax.f32 %v6622, 0.0
        %v6731 = vmax.f32 %v6693, 0.0
        %v6732 = vmax.f32 %v6695, 0.0
        %v6733 = vmax.f32 %v6624, 0.0
        %v6734 = vmax.f32 %v6626, 0.0
        %v6735 = vmax.f32 %v6697, 0.0
        %v6736 = vmax.f32 %v6699, 0.0
        %v6737 = vmax.f32 %v6630, 0.0
        %v6738 = vmax.f32 %v6632, 0.0
        %v6739 = vmax.f32 %v6703, 0.0
        %v6740 = vmax.f32 %v6705, 0.0
        %v6741 = vmax.f32 %v6634, 0.0
        %v6742 = vmax.f32 %v6636, 0.0
        %v6743 = vmax.f32 %v6707, 0.0
        %v6744 = vmax.f32 %v6709, 0.0
        %v6745 = vmax.f32 %v6640, 0.0
        %v6746 = vmax.f32 %v6642, 0.0
        %v6747 = vmax.f32 %v6713, 0.0
        %v6748 = vmax.f32 %v6715, 0.0
        %v6749 = vmax.f32 %v6644, 0.0
        %v6750 = vmax.f32 %v6646, 0.0
        %v6751 = vmax.f32 %v6717, 0.0
        %v6752 = vmax.f32 %v6719, 0.0
        %v6753 = vpack.c.bf16 %v6725, %v6721
        %v6754 = vpack.c.bf16 %v6726, %v6722
        %v6755 = vpack.c.bf16 %v6727, %v6723
        %v6756 = vpack.c.bf16 %v6728, %v6724
        %v6757 = vpack.c.bf16 %v6733, %v6729
        %v6758 = vpack.c.bf16 %v6734, %v6730
        %v6759 = vpack.c.bf16 %v6735, %v6731
        %v6760 = vpack.c.bf16 %v6736, %v6732
        %v6761 = vpack.c.bf16 %v6741, %v6737
        %v6762 = vpack.c.bf16 %v6742, %v6738
        %v6763 = vpack.c.bf16 %v6743, %v6739
        %v6764 = vpack.c.bf16 %v6744, %v6740
        %v6765 = vpack.c.bf16 %v6749, %v6745
        %v6766 = vpack.c.bf16 %v6750, %v6746
        %v6767 = vpack.c.bf16 %v6751, %v6747
        %v6768 = vpack.c.bf16 %v6752, %v6748
        %v6769 = vld [vmem:[#allocation12] sm:$0xf]
        %v6770 = vld [vmem:[#allocation12 + $0x4] sm:$0xf]
        %v6771 = vld [vmem:[#allocation12 + $0x8] sm:$0xf]
        %v6772 = vld [vmem:[#allocation12 + $0xc] sm:$0xf]
        %v6773 = vld [vmem:[#allocation12 + $0x10] sm:$0xf]
        %v6774 = vld [vmem:[#allocation12 + $0x14] sm:$0xf]
        %v6775 = vld [vmem:[#allocation12 + $0x18] sm:$0xf]
        %v6776 = vld [vmem:[#allocation12 + $0x1c] sm:$0xf]
        %v6777 = vld [vmem:[#allocation12 + $0x20] sm:$0xf]
        %v6778 = vld [vmem:[#allocation12 + $0x24] sm:$0xf]
        %v6779 = vld [vmem:[#allocation12 + $0x28] sm:$0xf]
        %v6780 = vld [vmem:[#allocation12 + $0x2c] sm:$0xf]
        %v6781 = vld [vmem:[#allocation12 + $0x30] sm:$0xf]
        %v6782 = vld [vmem:[#allocation12 + $0x34] sm:$0xf]
        %v6783 = vld [vmem:[#allocation12 + $0x38] sm:$0xf]
        %v6784 = vld [vmem:[#allocation12 + $0x3c] sm:$0xf]
        %v6785 = vld [vmem:[#allocation12 + $0x40] sm:$0xf]
        %v6786 = vld [vmem:[#allocation12 + $0x44] sm:$0xf]
        %v6787 = vld [vmem:[#allocation12 + $0x48] sm:$0xf]
        %v6788 = vld [vmem:[#allocation12 + $0x4c] sm:$0xf]
        %v6789 = vld [vmem:[#allocation12 + $0x50] sm:$0xf]
        %v6790 = vld [vmem:[#allocation12 + $0x54] sm:$0xf]
        %v6791 = vld [vmem:[#allocation12 + $0x58] sm:$0xf]
        %v6792 = vld [vmem:[#allocation12 + $0x5c] sm:$0xf]
        %v6793 = vld [vmem:[#allocation12 + $0x60] sm:$0xf]
        %v6794 = vld [vmem:[#allocation12 + $0x64] sm:$0xf]
        %v6795 = vld [vmem:[#allocation12 + $0x68] sm:$0xf]
        %v6796 = vld [vmem:[#allocation12 + $0x6c] sm:$0xf]
        %v6797 = vld [vmem:[#allocation12 + $0x70] sm:$0xf]
        %v6798 = vld [vmem:[#allocation12 + $0x74] sm:$0xf]
        %v6799 = vld [vmem:[#allocation12 + $0x78] sm:$0xf]
        %v6800 = vld [vmem:[#allocation12 + $0x7c] sm:$0xf]
        %v6801 = vld [vmem:[#allocation12 + $0x80] sm:$0xf]
        %v6802 = vld [vmem:[#allocation12 + $0x84] sm:$0xf]
        %v6803 = vld [vmem:[#allocation12 + $0x88] sm:$0xf]
        %v6804 = vld [vmem:[#allocation12 + $0x8c] sm:$0xf]
        %v6805 = vld [vmem:[#allocation12 + $0x90] sm:$0xf]
        %v6806 = vld [vmem:[#allocation12 + $0x94] sm:$0xf]
        %v6807 = vld [vmem:[#allocation12 + $0x98] sm:$0xf]
        %v6808 = vld [vmem:[#allocation12 + $0x9c] sm:$0xf]
        %v6809 = vld [vmem:[#allocation12 + $0xa0] sm:$0xf]
        %v6810 = vld [vmem:[#allocation12 + $0xa4] sm:$0xf]
        %v6811 = vld [vmem:[#allocation12 + $0xa8] sm:$0xf]
        %v6812 = vld [vmem:[#allocation12 + $0xac] sm:$0xf]
        %v6813 = vld [vmem:[#allocation12 + $0xb0] sm:$0xf]
        %v6814 = vld [vmem:[#allocation12 + $0xb4] sm:$0xf]
        %v6815 = vld [vmem:[#allocation12 + $0xb8] sm:$0xf]
        %v6816 = vld [vmem:[#allocation12 + $0xbc] sm:$0xf]
        %v6817 = vld [vmem:[#allocation12 + $0xc0] sm:$0xf]
        %v6818 = vld [vmem:[#allocation12 + $0xc4] sm:$0xf]
        %v6819 = vld [vmem:[#allocation12 + $0xc8] sm:$0xf]
        %v6820 = vld [vmem:[#allocation12 + $0xcc] sm:$0xf]
        %v6821 = vld [vmem:[#allocation12 + $0xd0] sm:$0xf]
        %v6822 = vld [vmem:[#allocation12 + $0xd4] sm:$0xf]
        %v6823 = vld [vmem:[#allocation12 + $0xd8] sm:$0xf]
        %v6824 = vld [vmem:[#allocation12 + $0xdc] sm:$0xf]
        %v6825 = vld [vmem:[#allocation12 + $0xe0] sm:$0xf]
        %v6826 = vld [vmem:[#allocation12 + $0xe4] sm:$0xf]
        %v6827 = vld [vmem:[#allocation12 + $0xe8] sm:$0xf]
        %v6828 = vld [vmem:[#allocation12 + $0xec] sm:$0xf]
        %v6829 = vld [vmem:[#allocation12 + $0xf0] sm:$0xf]
        %v6830 = vld [vmem:[#allocation12 + $0xf4] sm:$0xf]
        %v6831 = vld [vmem:[#allocation12 + $0xf8] sm:$0xf]
        %v6832 = vld [vmem:[#allocation12 + $0xfc] sm:$0xf]
        %v6833 = vld [vmem:[%s13] sm:$0x1]
        %v6835 = vlaneseq
        %v6836 = vshrl.u32 %v6835, 7
        %v6837 = vsub.s32 0, %v6836
        %v6838 = vrot.slane %v6833, %v6837
        %v6904 = vunpack.c.l.b16 %v6769
        %v6905 = vunpack.c.l.b16 %v6770
        %v6906 = vunpack.c.l.b16 %v6771
        %v6907 = vunpack.c.l.b16 %v6772
        %v6908 = vunpack.c.l.b16 %v6773
        %v6909 = vunpack.c.l.b16 %v6774
        %v6910 = vunpack.c.l.b16 %v6775
        %v6911 = vunpack.c.l.b16 %v6776
        %v6912 = vunpack.c.l.b16 %v6777
        %v6913 = vunpack.c.l.b16 %v6778
        %v6914 = vunpack.c.l.b16 %v6779
        %v6915 = vunpack.c.l.b16 %v6780
        %v6916 = vunpack.c.l.b16 %v6781
        %v6917 = vunpack.c.l.b16 %v6782
        %v6918 = vunpack.c.l.b16 %v6783
        %v6919 = vunpack.c.l.b16 %v6784
        %v6920 = vunpack.c.l.b16 %v6785
        %v6921 = vunpack.c.l.b16 %v6786
        %v6922 = vunpack.c.l.b16 %v6787
        %v6923 = vunpack.c.l.b16 %v6788
        %v6924 = vunpack.c.l.b16 %v6789
        %v6925 = vunpack.c.l.b16 %v6790
        %v6926 = vunpack.c.l.b16 %v6791
        %v6927 = vunpack.c.l.b16 %v6792
        %v6928 = vunpack.c.l.b16 %v6793
        %v6929 = vunpack.c.l.b16 %v6794
        %v6930 = vunpack.c.l.b16 %v6795
        %v6931 = vunpack.c.l.b16 %v6796
        %v6932 = vunpack.c.l.b16 %v6797
        %v6933 = vunpack.c.l.b16 %v6798
        %v6934 = vunpack.c.l.b16 %v6799
        %v6935 = vunpack.c.l.b16 %v6800
        %v6936 = vunpack.c.l.b16 %v6801
        %v6937 = vunpack.c.l.b16 %v6802
        %v6938 = vunpack.c.l.b16 %v6803
        %v6939 = vunpack.c.l.b16 %v6804
        %v6940 = vunpack.c.l.b16 %v6805
        %v6941 = vunpack.c.l.b16 %v6806
        %v6942 = vunpack.c.l.b16 %v6807
        %v6943 = vunpack.c.l.b16 %v6808
        %v6944 = vunpack.c.l.b16 %v6809
        %v6945 = vunpack.c.l.b16 %v6810
        %v6946 = vunpack.c.l.b16 %v6811
        %v6947 = vunpack.c.l.b16 %v6812
        %v6948 = vunpack.c.l.b16 %v6813
        %v6949 = vunpack.c.l.b16 %v6814
        %v6950 = vunpack.c.l.b16 %v6815
        %v6951 = vunpack.c.l.b16 %v6816
        %v6952 = vunpack.c.l.b16 %v6817
        %v6953 = vunpack.c.l.b16 %v6818
        %v6954 = vunpack.c.l.b16 %v6819
        %v6955 = vunpack.c.l.b16 %v6820
        %v6956 = vunpack.c.l.b16 %v6821
        %v6957 = vunpack.c.l.b16 %v6822
        %v6958 = vunpack.c.l.b16 %v6823
        %v6959 = vunpack.c.l.b16 %v6824
        %v6960 = vunpack.c.l.b16 %v6825
        %v6961 = vunpack.c.l.b16 %v6826
        %v6962 = vunpack.c.l.b16 %v6827
        %v6963 = vunpack.c.l.b16 %v6828
        %v6964 = vunpack.c.l.b16 %v6829
        %v6965 = vunpack.c.l.b16 %v6830
        %v6966 = vunpack.c.l.b16 %v6831
        %v6967 = vunpack.c.l.b16 %v6832
        %v6968 = vpack.c.b16 %v6905, %v6904
        %v6969 = vpack.c.b16 %v6907, %v6906
        %v6970 = vpack.c.b16 %v6909, %v6908
        %v6971 = vpack.c.b16 %v6911, %v6910
        %v6972 = vpack.c.b16 %v6913, %v6912
        %v6973 = vpack.c.b16 %v6915, %v6914
        %v6974 = vpack.c.b16 %v6917, %v6916
        %v6975 = vpack.c.b16 %v6919, %v6918
        %v6976 = vpack.c.b16 %v6921, %v6920
        %v6977 = vpack.c.b16 %v6923, %v6922
        %v6978 = vpack.c.b16 %v6925, %v6924
        %v6979 = vpack.c.b16 %v6927, %v6926
        %v6980 = vpack.c.b16 %v6929, %v6928
        %v6981 = vpack.c.b16 %v6931, %v6930
        %v6982 = vpack.c.b16 %v6933, %v6932
        %v6983 = vpack.c.b16 %v6935, %v6934
        %v6984 = vpack.c.b16 %v6937, %v6936
        %v6985 = vpack.c.b16 %v6939, %v6938
        %v6986 = vpack.c.b16 %v6941, %v6940
        %v6987 = vpack.c.b16 %v6943, %v6942
        %v6988 = vpack.c.b16 %v6945, %v6944
        %v6989 = vpack.c.b16 %v6947, %v6946
        %v6990 = vpack.c.b16 %v6949, %v6948
        %v6991 = vpack.c.b16 %v6951, %v6950
        %v6992 = vpack.c.b16 %v6953, %v6952
        %v6993 = vpack.c.b16 %v6955, %v6954
        %v6994 = vpack.c.b16 %v6957, %v6956
        %v6995 = vpack.c.b16 %v6959, %v6958
        %v6996 = vpack.c.b16 %v6961, %v6960
        %v6997 = vpack.c.b16 %v6963, %v6962
        %v6998 = vpack.c.b16 %v6965, %v6964
        %v6999 = vpack.c.b16 %v6967, %v6966
        %7032 = vmatprep.subr.bf16.mxu0 0
        %7033 = vmatpush1.bf16.msra.mxu0 %v6968
        %7034 = vmatprep.subr.bf16.mxu0 0
        %7035 = vmatpush1.bf16.msra.mxu0 %v6969
        %7036 = vmatprep.subr.bf16.mxu0 0
        %7037 = vmatpush1.bf16.msra.mxu0 %v6970
        %7038 = vmatprep.subr.bf16.mxu0 0
        %7039 = vmatpush1.bf16.msra.mxu0 %v6971
        %7040 = vmatprep.subr.bf16.mxu0 0
        %7041 = vmatpush1.bf16.msra.mxu0 %v6972
        %7042 = vmatprep.subr.bf16.mxu0 0
        %7043 = vmatpush1.bf16.msra.mxu0 %v6973
        %7044 = vmatprep.subr.bf16.mxu0 0
        %7045 = vmatpush1.bf16.msra.mxu0 %v6974
        %7046 = vmatprep.subr.bf16.mxu0 0
        %7047 = vmatpush1.bf16.msra.mxu0 %v6975
        %7048 = vmatprep.subr.bf16.mxu0 0
        %7049 = vmatpush1.bf16.msra.mxu0 %v6976
        %7050 = vmatprep.subr.bf16.mxu0 0
        %7051 = vmatpush1.bf16.msra.mxu0 %v6977
        %7052 = vmatprep.subr.bf16.mxu0 0
        %7053 = vmatpush1.bf16.msra.mxu0 %v6978
        %7054 = vmatprep.subr.bf16.mxu0 0
        %7055 = vmatpush1.bf16.msra.mxu0 %v6979
        %7056 = vmatprep.subr.bf16.mxu0 0
        %7057 = vmatpush1.bf16.msra.mxu0 %v6980
        %7058 = vmatprep.subr.bf16.mxu0 0
        %7059 = vmatpush1.bf16.msra.mxu0 %v6981
        %7060 = vmatprep.subr.bf16.mxu0 0
        %7061 = vmatpush1.bf16.msra.mxu0 %v6982
        %7062 = vmatprep.subr.bf16.mxu0 0
        %7063 = vmatpush1.bf16.msra.mxu0 %v6983
        %7064 = vmatprep.mubr.bf16.mxu0 %v6754
        %7065 = vmatmul.mubr.bf16.gmra.mrb[0].mxu0 %v6753
        %v7066 = vpop.f32.mrb[0].mxu0
        %v7067 = vadd.f32 %v6838, %v7066
        %v7068 = vpop.f32.mrb[0].mxu0
        %v7069 = vpop.f32.mrb[0].mxu0
        %v7070 = vadd.f32 %v6838, %v7069
        %v7071 = vpop.f32.mrb[0].mxu0
        %7072 = vmatprep.mubr.bf16.mxu0 %v6758
        %7073 = vmatmul.mubr.bf16.gmra.mrb[0].mxu0 %v6757
        %v7074 = vpop.f32.mrb[0].mxu0
        %v7075 = vadd.f32 %v6838, %v7074
        %v7076 = vpop.f32.mrb[0].mxu0
        %v7077 = vpop.f32.mrb[0].mxu0
        %v7078 = vadd.f32 %v6838, %v7077
        %v7079 = vpop.f32.mrb[0].mxu0
        %7080 = vmatprep.mubr.bf16.mxu0 %v6762
        %7081 = vmatmul.mubr.bf16.gmra.mrb[0].mxu0 %v6761
        %v7082 = vpop.f32.mrb[0].mxu0
        %v7083 = vadd.f32 %v6838, %v7082
        %v7084 = vpop.f32.mrb[0].mxu0
        %v7085 = vpop.f32.mrb[0].mxu0
        %v7086 = vadd.f32 %v6838, %v7085
        %v7087 = vpop.f32.mrb[0].mxu0
        %7088 = vmatprep.mubr.bf16.mxu0 %v6766
        %7089 = vmatmul.mubr.bf16.gmra.mrb[0].mxu0 %v6765
        %v7090 = vpop.f32.mrb[0].mxu0
        %v7091 = vadd.f32 %v6838, %v7090
        %v7092 = vpop.f32.mrb[0].mxu0
        %v7093 = vpop.f32.mrb[0].mxu0
        %v7094 = vadd.f32 %v6838, %v7093
        %v7095 = vpop.f32.mrb[0].mxu0
        %7096 = vdwg.mxu0
        %7097 = vmatprep.subr.bf16.mxu0 0
        %7098 = vmatpush1.bf16.msra.mxu0 %v6984
        %7099 = vmatprep.subr.bf16.mxu0 0
        %7100 = vmatpush1.bf16.msra.mxu0 %v6985
        %7101 = vmatprep.subr.bf16.mxu0 0
        %7102 = vmatpush1.bf16.msra.mxu0 %v6986
        %7103 = vmatprep.subr.bf16.mxu0 0
        %7104 = vmatpush1.bf16.msra.mxu0 %v6987
        %7105 = vmatprep.subr.bf16.mxu0 0
        %7106 = vmatpush1.bf16.msra.mxu0 %v6988
        %7107 = vmatprep.subr.bf16.mxu0 0
        %7108 = vmatpush1.bf16.msra.mxu0 %v6989
        %7109 = vmatprep.subr.bf16.mxu0 0
        %7110 = vmatpush1.bf16.msra.mxu0 %v6990
        %7111 = vmatprep.subr.bf16.mxu0 0
        %7112 = vmatpush1.bf16.msra.mxu0 %v6991
        %7113 = vmatprep.subr.bf16.mxu0 0
        %7114 = vmatpush1.bf16.msra.mxu0 %v6992
        %7115 = vmatprep.subr.bf16.mxu0 0
        %7116 = vmatpush1.bf16.msra.mxu0 %v6993
        %7117 = vmatprep.subr.bf16.mxu0 0
        %7118 = vmatpush1.bf16.msra.mxu0 %v6994
        %7119 = vmatprep.subr.bf16.mxu0 0
        %7120 = vmatpush1.bf16.msra.mxu0 %v6995
        %7121 = vmatprep.subr.bf16.mxu0 0
        %7122 = vmatpush1.bf16.msra.mxu0 %v6996
        %7123 = vmatprep.subr.bf16.mxu0 0
        %7124 = vmatpush1.bf16.msra.mxu0 %v6997
        %7125 = vmatprep.subr.bf16.mxu0 0
        %7126 = vmatpush1.bf16.msra.mxu0 %v6998
        %7127 = vmatprep.subr.bf16.mxu0 0
        %7128 = vmatpush1.bf16.msra.mxu0 %v6999
        %7129 = vmatprep.mubr.bf16.mxu0 %v6756
        %7130 = vmatmul.mubr.bf16.gmra.mrb[0].mxu0 %v6755
        %v7131 = vpop.f32.mrb[0].mxu0
        %v7132 = vadd.f32 %v7067, %v7131
        %v7133 = vpop.f32.mrb[0].mxu0
        %v7134 = vpop.f32.mrb[0].mxu0
        %v7135 = vadd.f32 %v7070, %v7134
        %v7136 = vpop.f32.mrb[0].mxu0
        %7137 = vmatprep.mubr.bf16.mxu0 %v6760
        %7138 = vmatmul.mubr.bf16.gmra.mrb[0].mxu0 %v6759
        %v7139 = vpop.f32.mrb[0].mxu0
        %v7140 = vadd.f32 %v7075, %v7139
        %v7141 = vpop.f32.mrb[0].mxu0
        %v7142 = vpop.f32.mrb[0].mxu0
        %v7143 = vadd.f32 %v7078, %v7142
        %v7144 = vpop.f32.mrb[0].mxu0
        %7145 = vmatprep.mubr.bf16.mxu0 %v6764
        %7146 = vmatmul.mubr.bf16.gmra.mrb[0].mxu0 %v6763
        %v7147 = vpop.f32.mrb[0].mxu0
        %v7148 = vadd.f32 %v7083, %v7147
        %v7149 = vpop.f32.mrb[0].mxu0
        %v7150 = vpop.f32.mrb[0].mxu0
        %v7151 = vadd.f32 %v7086, %v7150
        %v7152 = vpop.f32.mrb[0].mxu0
        %7153 = vmatprep.mubr.bf16.mxu0 %v6768
        %7154 = vmatmul.mubr.bf16.gmra.mrb[0].mxu0 %v6767
        %v7155 = vpop.f32.mrb[0].mxu0
        %v7156 = vadd.f32 %v7091, %v7155
        %v7157 = vpop.f32.mrb[0].mxu0
        %v7158 = vpop.f32.mrb[0].mxu0
        %v7159 = vadd.f32 %v7094, %v7158
        %v7160 = vpop.f32.mrb[0].mxu0
        %7161 = vdwg.mxu0
        %v7162 = vlaneseq
        %v7163 = vand.u32 %v7162, 127
        %vm7164 = vcmp.eq.s32.totalorder %v7163, 0
        %vm7165 = vcmp.ge.s32.totalorder %v7163, 1
        %vm7166 = vcmp.lt.s32.totalorder %v7163, 9
        %vm7167 = vmand %vm7165, %vm7166
        %v7168 = vsel %vm7167, %v7132, -1e+30
        %v7169 = vsel %vm7167, %v7135, -1e+30
        %v7170 = vsel %vm7167, %v7140, -1e+30
        %v7171 = vsel %vm7167, %v7143, -1e+30
        %v7172 = vsel %vm7167, %v7148, -1e+30
        %v7173 = vsel %vm7167, %v7151, -1e+30
        %v7174 = vsel %vm7167, %v7156, -1e+30
        %v7175 = vsel %vm7167, %v7159, -1e+30
        %7176 = vmax.xlane.f32.xlu0 %v7168
        %v7177 = vpop.xlane.xlu0 %7176
        %7178 = vmax.xlane.f32.xlu0 %v7169
        %v7179 = vpop.xlane.xlu0 %7178
        %7180 = vmax.xlane.f32.xlu0 %v7170
        %v7181 = vpop.xlane.xlu0 %7180
        %7182 = vmax.xlane.f32.xlu0 %v7171
        %v7183 = vpop.xlane.xlu0 %7182
        %7184 = vmax.xlane.f32.xlu0 %v7172
        %v7185 = vpop.xlane.xlu0 %7184
        %7186 = vmax.xlane.f32.xlu0 %v7173
        %v7187 = vpop.xlane.xlu0 %7186
        %7188 = vmax.xlane.f32.xlu0 %v7174
        %v7189 = vpop.xlane.xlu0 %7188
        %7190 = vmax.xlane.f32.xlu0 %v7175
        %v7191 = vpop.xlane.xlu0 %7190
        %v7192 = vsub.f32 %v7168, %v7177
        %v7193 = vsub.f32 %v7169, %v7179
        %v7194 = vsub.f32 %v7170, %v7181
        %v7195 = vsub.f32 %v7171, %v7183
        %v7196 = vsub.f32 %v7172, %v7185
        %v7197 = vsub.f32 %v7173, %v7187
        %v7198 = vsub.f32 %v7174, %v7189
        %v7199 = vsub.f32 %v7175, %v7191
        %v7200 = vmul.f32 %v7192, 1.442695
        %v7201 = vpow.pop %v7200
        %v7202 = vmul.f32 %v7193, 1.442695
        %v7203 = vpow.pop %v7202
        %v7204 = vmul.f32 %v7194, 1.442695
        %v7205 = vpow.pop %v7204
        %v7206 = vmul.f32 %v7195, 1.442695
        %v7207 = vpow.pop %v7206
        %v7208 = vmul.f32 %v7196, 1.442695
        %v7209 = vpow.pop %v7208
        %v7210 = vmul.f32 %v7197, 1.442695
        %v7211 = vpow.pop %v7210
        %v7212 = vmul.f32 %v7198, 1.442695
        %v7213 = vpow.pop %v7212
        %v7214 = vmul.f32 %v7199, 1.442695
        %v7215 = vpow.pop %v7214
        %7216 = vadd.xlane.f32.xlu0 %v7201
        %v7217 = vpop.xlane.xlu0 %7216
        %7218 = vadd.xlane.f32.xlu0 %v7203
        %v7219 = vpop.xlane.xlu0 %7218
        %7220 = vadd.xlane.f32.xlu0 %v7205
        %v7221 = vpop.xlane.xlu0 %7220
        %7222 = vadd.xlane.f32.xlu0 %v7207
        %v7223 = vpop.xlane.xlu0 %7222
        %7224 = vadd.xlane.f32.xlu0 %v7209
        %v7225 = vpop.xlane.xlu0 %7224
        %7226 = vadd.xlane.f32.xlu0 %v7211
        %v7227 = vpop.xlane.xlu0 %7226
        %7228 = vadd.xlane.f32.xlu0 %v7213
        %v7229 = vpop.xlane.xlu0 %7228
        %7230 = vadd.xlane.f32.xlu0 %v7215
        %v7231 = vpop.xlane.xlu0 %7230
        %v7232 = vrcp.pop %v7217
        %v7233 = vmul.f32 %v7201, %v7232
        %v7234 = vrcp.pop %v7219
        %v7235 = vmul.f32 %v7203, %v7234
        %v7236 = vrcp.pop %v7221
        %v7237 = vmul.f32 %v7205, %v7236
        %v7238 = vrcp.pop %v7223
        %v7239 = vmul.f32 %v7207, %v7238
        %v7240 = vrcp.pop %v7225
        %v7241 = vmul.f32 %v7209, %v7240
        %v7242 = vrcp.pop %v7227
        %v7243 = vmul.f32 %v7211, %v7242
        %v7244 = vrcp.pop %v7229
        %v7245 = vmul.f32 %v7213, %v7244
        %v7246 = vrcp.pop %v7231
        %v7247 = vmul.f32 %v7215, %v7246
        %v7248 = vsel %vm7164, %v7132, %v7233
        %v7249 = vsel %vm7164, %v7135, %v7235
        %v7250 = vsel %vm7164, %v7140, %v7237
        %v7251 = vsel %vm7164, %v7143, %v7239
        %v7252 = vsel %vm7164, %v7148, %v7241
        %v7253 = vsel %vm7164, %v7151, %v7243
        %v7254 = vsel %vm7164, %v7156, %v7245
        %v7255 = vsel %vm7164, %v7159, %v7247
        %7256 = vst [vmem:[%s621] sm:$0xff] %v7248
        %7257 = vst [vmem:[%s621 + $0x8] sm:$0xff] %v7249
        %7258 = vst [vmem:[%s621 + $0x10] sm:$0xff] %v7250
        %7259 = vst [vmem:[%s621 + $0x18] sm:$0xff] %v7251
        %7260 = vst [vmem:[%s621 + $0x20] sm:$0xff] %v7252
        %7261 = vst [vmem:[%s621 + $0x28] sm:$0xff] %v7253
        %7262 = vst [vmem:[%s621 + $0x30] sm:$0xff] %v7254
        %7263 = vst [vmem:[%s621 + $0x38] sm:$0xff] %v7255
        %s7264 = sand.u32 %s354, 1
        %s7265 = scalar_lea.sflag [#allocation6], %s7264
        %s7266 = sand.u32 %s354, 1
        %s7267 = smul.addr %s7266, 64
        %s7268 = scalar_lea.vmem [#allocation13], %s7267
        %s7269 = sand.u32 %s37, 1
        %s7270 = scalar_lea.sflag [#allocation15], %s7269
        %s7271 = sand.u32 %s380, 1
        %s7272 = smul.addr %s7271, 16
        %s7273 = scalar_lea.vmem [#allocation14], %s7272
        %s7274 = sand.u32 %s37, 1
        %s7275 = scalar_lea.sflag [#allocation15], %s7274
        %s7276 = sand.u32 %s406, 1
        %s7277 = smul.addr %s7276, 16
        %s7278 = scalar_lea.vmem [#allocation16], %s7277
        // Predicated region
        $region97: #{tpu_custom_call.1} parent=75 // pred_check
          %p7279 = pneg %p364
        $region98: #{tpu_custom_call.1} parent=75 // pred_check_branch
          %7281 = sbr.rel (%p7279) target = $region100
        $region99: #{tpu_custom_call.1} parent=75 // pred_region
          %s7283 = ssub.s32 1024, 1024
          %7284 = vsyncadd %s7265, %s7283
          %s7285 = smul.addr %s37, 8
          %s7286 = smul.addr %s7285, 128
          %s7287 = scalar_lea.hbm %s14, %s7286
          %s7288 = sshll.u32 %s7268, 4
          %s7289 = int_to_ptr.vmem [resolvable:$true] %s7288
          %7294 = dma.vmem_to_hbm [thread:$0]  %s7289, 1024, %s7287, %s7265, 128, 128, 8
        $region100: #{tpu_custom_call.1} parent=75 // pred_fallthru
          _
        // Predicated region
        $region101: #{tpu_custom_call.1} parent=75 // pred_check
          %p7295 = pneg %p390
        $region102: #{tpu_custom_call.1} parent=75 // pred_check_branch
          %7297 = sbr.rel (%p7295) target = $region104
        $region103: #{tpu_custom_call.1} parent=75 // pred_region
          %s7299 = ssub.s32 256, 256
          %7300 = vsyncadd %s7270, %s7299
          %s7301 = smul.addr %s37, 2
          %s7302 = smul.addr %s7301, 128
          %s7303 = scalar_lea.hbm %s15, %s7302
          %s7305 = sshll.u32 %s7273, 4
          %s7306 = int_to_ptr.vmem [resolvable:$true] %s7305
          %7308 = dma.vmem_to_hbm [thread:$0]  %s7306, 256, %s7303, %s7270
        $region104: #{tpu_custom_call.1} parent=75 // pred_fallthru
          _
        // Predicated region
        $region105: #{tpu_custom_call.1} parent=75 // pred_check
          %p7309 = pneg %p416
        $region106: #{tpu_custom_call.1} parent=75 // pred_check_branch
          %7311 = sbr.rel (%p7309) target = $region108
        $region107: #{tpu_custom_call.1} parent=75 // pred_region
          %s7313 = ssub.s32 256, 256
          %7314 = vsyncadd %s7275, %s7313
          %s7315 = smul.addr %s37, 2
          %s7316 = smul.addr %s7315, 128
          %s7317 = scalar_lea.hbm %s16, %s7316
          %s7319 = sshll.u32 %s7278, 4
          %s7320 = int_to_ptr.vmem [resolvable:$true] %s7319
          %7322 = dma.vmem_to_hbm [thread:$0]  %s7320, 256, %s7317, %s7275
        $region108: #{tpu_custom_call.1} parent=75 // pred_fallthru
          _
      $region76: #{tpu_custom_call.1} parent=5 // pred_fallthru
        _
      %p7323 = scmp.le.s32.totalorder 2, %s32
      // Predicated region
      $region109: #{tpu_custom_call.1} parent=5 // pred_check
        %p7324 = pneg %p7323
      $region110: #{tpu_custom_call.1} parent=5 // pred_check_branch
        %7326 = sbr.rel (%p7324) target = $region112
      $region111: #{tpu_custom_call.1} parent=5 // pred_region
        %s7327 = ssub.s32 %s32, 2
        // Predicated region
        $region113: #{tpu_custom_call.1} parent=111 // pred_check
          %p7328 = pneg %p370
        $region114: #{tpu_custom_call.1} parent=111 // pred_check_branch
          %7330 = sbr.rel (%p7328) target = $region116
        $region115: #{tpu_custom_call.1} parent=111 // pred_region
          %s7331 = sand.u32 %s355, 1
          %s7332 = scalar_lea.sflag [#allocation6], %s7331
          %s7333 = sand.u32 %s355, 1
          %s7334 = smul.addr %s7333, 64
          %s7335 = scalar_lea.vmem [#allocation13], %s7334
          %7336 = dma.done %s7332, 1024
        $region116: #{tpu_custom_call.1} parent=111 // pred_fallthru
          _
        // Predicated region
        $region117: #{tpu_custom_call.1} parent=111 // pred_check
          %p7337 = pneg %p396
        $region118: #{tpu_custom_call.1} parent=111 // pred_check_branch
          %7339 = sbr.rel (%p7337) target = $region120
        $region119: #{tpu_custom_call.1} parent=111 // pred_region
          %s7340 = sand.u32 %s38, 1
          %s7341 = scalar_lea.sflag [#allocation15], %s7340
          %s7342 = sand.u32 %s381, 1
          %s7343 = smul.addr %s7342, 16
          %s7344 = scalar_lea.vmem [#allocation14], %s7343
          %7345 = dma.done %s7341, 256
        $region120: #{tpu_custom_call.1} parent=111 // pred_fallthru
          _
        // Predicated region
        $region121: #{tpu_custom_call.1} parent=111 // pred_check
          %p7346 = pneg %p422
        $region122: #{tpu_custom_call.1} parent=111 // pred_check_branch
          %7348 = sbr.rel (%p7346) target = $region124
        $region123: #{tpu_custom_call.1} parent=111 // pred_region
          %s7349 = sand.u32 %s38, 1
          %s7350 = scalar_lea.sflag [#allocation15], %s7349
          %s7351 = sand.u32 %s407, 1
          %s7352 = smul.addr %s7351, 16
          %s7353 = scalar_lea.vmem [#allocation16], %s7352
          %7354 = dma.done %s7350, 256
        $region124: #{tpu_custom_call.1} parent=111 // pred_fallthru
          _
      $region112: #{tpu_custom_call.1} parent=5 // pred_fallthru
        _
    $region6: #{tpu_custom_call.1} parent=1 // loop_footer
      %s36 = sadd.s32 1, %s32
    $region7: #{tpu_custom_call.1} parent=1 // loop_footer_branch
      %31 = sbr.rel target = $region3
    $region8: #{tpu_custom_call.1} parent=1 // loop_exit
      _
    %7355 = vsyncpa [#allocation5], 1
    %s7356 = scalar_lea.sflag [#allocation5], 1
    %7357 = vsyncpa %s7356, 1
    %7358 = vsyncpa [#allocation8], 1
    %7359 = vsyncpa [#allocation11], 1
    %7360 = vsyncpa [#allocation6], 1
    %s7361 = scalar_lea.sflag [#allocation6], 1
    %7362 = vsyncpa %s7361, 1
    %7363 = vsyncpa [#allocation15], 1
    %s7364 = scalar_lea.sflag [#allocation15], 1
    %7365 = vsyncpa %s7364, 1

</llo_original>
